<compile_context>
chip_gen: v7x
topology: tpu7x:2x2x1
jax: 0.10.0
libtpu: 0.0.40
codegen_flags: <defaults>
</compile_context>

<pallas_src>
import jax
import jax.numpy as jnp
from jax.experimental import pallas as pl
from jax.experimental.pallas import tpu as pltpu

# --- static module configuration (from __init__) ----------------------------
N_DIMS = 5                    # len(score_info['dim_scores'])
FEAT_DIM = 2048               # resnet50 feature width (fc = Identity)
HID = 250                     # DimensionMLP(ndims=250)
HID_PAD = 256                 # 250 padded to a lane multiple of 128
N_PAD = 8                     # 5 score lanes padded to 8
SUBLANE = 8                   # f32 sublane multiple; batch block size
FUSED_N = N_DIMS * HID_PAD    # 1280


# --- single fused kernel -----------------------------------------------------
def _fused_kernel(x_ref, w_stem_ref, b_stem_ref,
                  w_red_ref, b_red_ref, w_sc_ref, b_sc_ref,
                  w_lbm_ref, b_lbm_ref,
                  feat_ref, hid_ref, scores_ref, lbm_ref):
    bb = x_ref.shape[0]

    # -- feature-extractor stem --
    # TODO(synk): the real module uses a pretrained torchvision resnet50
    # backbone (fc=Identity); a pretrained ResNet-50 has no clean in-script
    # Pallas equivalent, so this is a deterministic stand-in stem
    # (global-average-pool + Linear(C -> 2048) + ReLU) producing the same
    # (B, 2048) feature tensor shape/dtype.
    x = x_ref[...]                                          # (bb, C, HW)
    pooled = jnp.sum(x, axis=-1) * (1.0 / x_ref.shape[-1])  # (bb, C)
    f = jnp.dot(pooled, w_stem_ref[...],
                preferred_element_type=jnp.float32)         # (bb, 2048)
    f = jnp.maximum(f + b_stem_ref[...], 0.0)
    feat_ref[...] = f

    # -- all 5 DimensionMLP.reduce layers as ONE lane-dense GEMM --
    # (bb, 2048) @ (2048, 5*256); padded weight columns / bias lanes are zero,
    # so the ReLU'd padded lanes of h are exactly zero.
    h = jnp.dot(f, w_red_ref[...], preferred_element_type=jnp.float32)
    h = jnp.maximum(h + b_red_ref[...], 0.0)                # (bb, 1280)
    hid_ref[...] = h

    # -- per-dim score: VPU multiply + per-block lane reduce (no N=1 MXU) --
    hw = h * w_sc_ref[...]                                  # (bb, 1280)
    lane = jax.lax.broadcasted_iota(jnp.int32, (bb, N_PAD), 1)
    scores = jnp.zeros((bb, N_PAD), jnp.float32)
    for d in range(N_DIMS):                                 # static unroll
        s_d = jnp.sum(hw[:, d * HID_PAD:(d + 1) * HID_PAD],
                      axis=-1, keepdims=True)               # (bb, 1)
        scores = jnp.where(lane == d, s_d, scores)          # VPU select
    scores = scores + b_sc_ref[...]                         # pad lanes stay 0
    scores_ref[...] = scores                                # (bb, 8)

    # -- lbm_score_layer: Linear(5, 1) as VPU multiply + reduce --
    lbm_ref[...] = (jnp.sum(scores * w_lbm_ref[...], axis=-1, keepdims=True)
                    + b_lbm_ref[...])                       # (bb, 1)


# --- wrapper -----------------------------------------------------------------
@jax.jit
def lbm_dimension_net_features(x, params):
    B, C, H, W = x.shape
    HW = H * W
    x_flat = x.reshape(B, C, HW).astype(jnp.float32)

    # pad batch to a sublane multiple so every vreg row set is full
    B_pad = pl.cdiv(B, SUBLANE) * SUBLANE
    x_flat = jnp.pad(x_flat, ((0, B_pad - B), (0, 0), (0, 0)))

    # wrapper-side layout plumbing (free): pack weights lane-dense / padded
    w_red_f = jnp.transpose(
        jnp.pad(params["w_red"], ((0, 0), (0, 0), (0, HID_PAD - HID))),
        (1, 0, 2)).reshape(FEAT_DIM, FUSED_N)                       # (2048,1280)
    b_red_f = jnp.pad(params["b_red"],
                      ((0, 0), (0, HID_PAD - HID))).reshape(1, FUSED_N)
    w_sc_f = jnp.pad(params["w_sc"][..., 0],
                     ((0, 0), (0, HID_PAD - HID))).reshape(1, FUSED_N)
    b_sc_p = jnp.pad(params["b_sc"].reshape(1, N_DIMS),
                     ((0, 0), (0, N_PAD - N_DIMS)))                 # (1, 8)
    w_lbm_p = jnp.pad(params["w_lbm"].reshape(1, N_DIMS),
                      ((0, 0), (0, N_PAD - N_DIMS)))                # (1, 8)
    b_lbm = params["b_lbm"]                                         # (1, 1)

    const2 = lambda b: (0, 0)

    feat, hid, scores, lbm = pl.pallas_call(
        _fused_kernel,
        out_shape=(
            jax.ShapeDtypeStruct((B_pad, FEAT_DIM), jnp.float32),
            jax.ShapeDtypeStruct((B_pad, FUSED_N), jnp.float32),
            jax.ShapeDtypeStruct((B_pad, N_PAD), jnp.float32),
            jax.ShapeDtypeStruct((B_pad, 1), jnp.float32),
        ),
        grid=(B_pad // SUBLANE,),
        in_specs=[
            pl.BlockSpec((SUBLANE, C, HW), lambda b: (b, 0, 0)),
            pl.BlockSpec((C, FEAT_DIM), const2),       # weights stay resident
            pl.BlockSpec((1, FEAT_DIM), const2),
            pl.BlockSpec((FEAT_DIM, FUSED_N), const2),
            pl.BlockSpec((1, FUSED_N), const2),
            pl.BlockSpec((1, FUSED_N), const2),
            pl.BlockSpec((1, N_PAD), const2),
            pl.BlockSpec((1, N_PAD), const2),
            pl.BlockSpec((1, 1), const2),
        ],
        out_specs=(
            pl.BlockSpec((SUBLANE, FEAT_DIM), lambda b: (b, 0)),
            pl.BlockSpec((SUBLANE, FUSED_N), lambda b: (b, 0)),
            pl.BlockSpec((SUBLANE, N_PAD), lambda b: (b, 0)),
            pl.BlockSpec((SUBLANE, 1), lambda b: (b, 0)),
        ),
        compiler_params=pltpu.CompilerParams(
            dimension_semantics=("parallel",),
            vmem_limit_bytes=40 * 1024 * 1024),
    )(x_flat, params["w_stem"], params["b_stem"], w_red_f, b_red_f,
      w_sc_f, b_sc_p, w_lbm_p, b_lbm)

    features = feat[:B]
    dim_features = [hid[:B, d * HID_PAD: d * HID_PAD + HID]
                    for d in range(N_DIMS)]                 # list, as in torch
    dim_scores = scores[:B, :N_DIMS]
    lbm_score = lbm[:B]
    return features, dim_features, dim_scores, lbm_score


# --- deterministic parameter init (PyTorch-Linear-style uniform) -------------
def init_params(key, in_channels):
    keys = jax.random.split(key, 7)

    def lin(k, fan_in, shape):
        bound = 1.0 / jnp.sqrt(jnp.float32(fan_in))
        return jax.random.uniform(k, shape, jnp.float32, -bound, bound)

    return {
        "w_stem": lin(keys[0], in_channels, (in_channels, FEAT_DIM)),
        "b_stem": lin(keys[1], in_channels, (1, FEAT_DIM)),
        "w_red":  lin(keys[2], FEAT_DIM, (N_DIMS, FEAT_DIM, HID)),
        "b_red":  lin(keys[3], FEAT_DIM, (N_DIMS, HID)),
        "w_sc":   lin(keys[4], HID, (N_DIMS, HID, 1)),
        "b_sc":   lin(keys[5], HID, (N_DIMS, 1)),
        "w_lbm":  lin(keys[6], N_DIMS, (N_DIMS, 1)),
        "b_lbm":  jnp.zeros((1, 1), jnp.float32),
    }


# --- pure-JAX reference for verification -------------------------------------
def reference(x, params):
    B, C, H, W = x.shape
    pooled = x.reshape(B, C, H * W).mean(-1)
    feats = jnp.maximum(pooled @ params["w_stem"] + params["b_stem"], 0.0)
    dim_feats, scores = [], []
    for d in range(N_DIMS):
        h = jnp.maximum(feats @ params["w_red"][d] + params["b_red"][d], 0.0)
        dim_feats.append(h)
        scores.append(h @ params["w_sc"][d] + params["b_sc"][d])
    dim_scores = jnp.stack(scores)[..., 0].T            # (B, N_DIMS)
    lbm = dim_scores @ params["w_lbm"] + params["b_lbm"]
    return feats, dim_feats, dim_scores, lbm


if __name__ == "__main__":
    key = jax.random.PRNGKey(0)
    k_x, k_p = jax.random.split(key)

    B, C, H, W = 2, 3, 16, 16
    x = jax.random.normal(k_x, (B, C, H, W), jnp.float32)
    params = init_params(k_p, C)

    out = jax.block_until_ready(lbm_dimension_net_features(x, params))
    feats, dim_feats, dim_scores, lbm = out

    r_feats, r_dim_feats, r_scores, r_lbm = reference(x, params)
    assert feats.shape == (B, FEAT_DIM)
    assert dim_scores.shape == (B, N_DIMS) and lbm.shape == (B, 1)
    assert jnp.allclose(feats, r_feats, atol=1e-4, rtol=1e-4)
    for d in range(N_DIMS):
        assert dim_feats[d].shape == (B, HID)
        assert jnp.allclose(dim_feats[d], r_dim_feats[d], atol=1e-4, rtol=1e-4)
    assert jnp.allclose(dim_scores, r_scores, atol=1e-4, rtol=1e-4)
    assert jnp.allclose(lbm, r_lbm, atol=1e-4, rtol=1e-4)

    print("KERNEL_OK")
</pallas_src>

<mosaic_0001>
module attributes {stable_mosaic.version = 11 : i64} {
  func.func @_fused_kernel(%arg0: i32, %arg1: memref<8x3x256xf32, #tpu.memory_space<vmem>>, %arg2: memref<3x2048xf32, #tpu.memory_space<vmem>>, %arg3: memref<1x2048xf32, #tpu.memory_space<vmem>>, %arg4: memref<2048x1280xf32, #tpu.memory_space<vmem>>, %arg5: memref<1x1280xf32, #tpu.memory_space<vmem>>, %arg6: memref<1x1280xf32, #tpu.memory_space<vmem>>, %arg7: memref<1x8xf32, #tpu.memory_space<vmem>>, %arg8: memref<1x8xf32, #tpu.memory_space<vmem>>, %arg9: memref<1x1xf32, #tpu.memory_space<vmem>>, %arg10: memref<8x2048xf32, #tpu.memory_space<vmem>>, %arg11: memref<8x1280xf32, #tpu.memory_space<vmem>>, %arg12: memref<8x8xf32, #tpu.memory_space<vmem>>, %arg13: memref<8x1xf32, #tpu.memory_space<vmem>>) attributes {dimension_semantics = [#tpu.dimension_semantics<parallel>], iteration_bounds = array<i64: 1>, scalar_prefetch = 0 : i64, scratch_operands = 0 : i64, tpu.core_type = #tpu.core_type<tc>, window_params = [{transform_indices = @transform_0, window_bounds = array<i64: 8, 3, 256>}, {pipeline_mode = #tpu.pipeline_mode<synchronous>, transform_indices = @transform_1, window_bounds = array<i64: 3, 2048>}, {pipeline_mode = #tpu.pipeline_mode<synchronous>, transform_indices = @transform_2, window_bounds = array<i64: 1, 2048>}, {pipeline_mode = #tpu.pipeline_mode<synchronous>, transform_indices = @transform_3, window_bounds = array<i64: 2048, 1280>}, {pipeline_mode = #tpu.pipeline_mode<synchronous>, transform_indices = @transform_4, window_bounds = array<i64: 1, 1280>}, {pipeline_mode = #tpu.pipeline_mode<synchronous>, transform_indices = @transform_5, window_bounds = array<i64: 1, 1280>}, {pipeline_mode = #tpu.pipeline_mode<synchronous>, transform_indices = @transform_6, window_bounds = array<i64: 1, 8>}, {pipeline_mode = #tpu.pipeline_mode<synchronous>, transform_indices = @transform_7, window_bounds = array<i64: 1, 8>}, {pipeline_mode = #tpu.pipeline_mode<synchronous>, transform_indices = @transform_8, window_bounds = array<i64: 1, 1>}, {transform_indices = @transform_9, window_bounds = array<i64: 8, 2048>}, {transform_indices = @transform_10, window_bounds = array<i64: 8, 1280>}, {transform_indices = @transform_11, window_bounds = array<i64: 8, 8>}, {transform_indices = @transform_12, window_bounds = array<i64: 8, 1>}]} {
    %c0 = arith.constant 0 : index
    %c0_0 = arith.constant 0 : index
    %c0_1 = arith.constant 0 : index
    %0 = vector.load %arg1[%c0, %c0_0, %c0_1] : memref<8x3x256xf32, #tpu.memory_space<vmem>>, vector<8x3x256xf32>
    %cst = arith.constant dense<0.000000e+00> : vector<8x3xf32>
    %1 = vector.multi_reduction <add>, %0, %cst [2] : vector<8x3x256xf32> to vector<8x3xf32>
    %cst_2 = arith.constant 3.906250e-03 : f32
    %2 = vector.broadcast %cst_2 : f32 to vector<8x3xf32>
    %3 = arith.mulf %1, %2 : vector<8x3xf32>
    %c0_3 = arith.constant 0 : index
    %c0_4 = arith.constant 0 : index
    %4 = vector.load %arg2[%c0_3, %c0_4] : memref<3x2048xf32, #tpu.memory_space<vmem>>, vector<3x2048xf32>
    %cst_5 = arith.constant dense<0.000000e+00> : vector<8x2048xf32>
    %5 = tpu.matmul %3, %4, %cst_5 {dimension_numbers = #tpu.dot_dimension_numbers<[1], [0], [0], [1], [0, 0, 1, 1], [], []>} : vector<8x3xf32>, vector<3x2048xf32>, vector<8x2048xf32> -> vector<8x2048xf32>
    %c0_6 = arith.constant 0 : index
    %c0_7 = arith.constant 0 : index
    %6 = vector.load %arg3[%c0_6, %c0_7] : memref<1x2048xf32, #tpu.memory_space<vmem>>, vector<1x2048xf32>
    %7 = vector.broadcast %6 : vector<1x2048xf32> to vector<8x2048xf32>
    %8 = arith.addf %5, %7 : vector<8x2048xf32>
    %cst_8 = arith.constant 0.000000e+00 : f32
    %9 = vector.broadcast %cst_8 : f32 to vector<8x2048xf32>
    %10 = arith.maximumf %8, %9 : vector<8x2048xf32>
    %c0_9 = arith.constant 0 : index
    %c0_10 = arith.constant 0 : index
    %11 = vector.load %arg10[%c0_9, %c0_10] : memref<8x2048xf32, #tpu.memory_space<vmem>>, vector<8x2048xf32>
    tpu.vector_store %arg10[%c0_9, %c0_10], %10 {strides = array<i32>} : memref<8x2048xf32, #tpu.memory_space<vmem>>, vector<8x2048xf32>,
    %c0_11 = arith.constant 0 : index
    %c0_12 = arith.constant 0 : index
    %12 = vector.load %arg4[%c0_11, %c0_12] : memref<2048x1280xf32, #tpu.memory_space<vmem>>, vector<2048x1280xf32>
    %cst_13 = arith.constant dense<0.000000e+00> : vector<8x1280xf32>
    %13 = tpu.matmul %10, %12, %cst_13 {dimension_numbers = #tpu.dot_dimension_numbers<[1], [0], [0], [1], [0, 0, 1, 1], [], []>} : vector<8x2048xf32>, vector<2048x1280xf32>, vector<8x1280xf32> -> vector<8x1280xf32>
    %c0_14 = arith.constant 0 : index
    %c0_15 = arith.constant 0 : index
    %14 = vector.load %arg5[%c0_14, %c0_15] : memref<1x1280xf32, #tpu.memory_space<vmem>>, vector<1x1280xf32>
    %15 = vector.broadcast %14 : vector<1x1280xf32> to vector<8x1280xf32>
    %16 = arith.addf %13, %15 : vector<8x1280xf32>
    %cst_16 = arith.constant 0.000000e+00 : f32
    %17 = vector.broadcast %cst_16 : f32 to vector<8x1280xf32>
    %18 = arith.maximumf %16, %17 : vector<8x1280xf32>
    %c0_17 = arith.constant 0 : index
    %c0_18 = arith.constant 0 : index
    %19 = vector.load %arg11[%c0_17, %c0_18] : memref<8x1280xf32, #tpu.memory_space<vmem>>, vector<8x1280xf32>
    tpu.vector_store %arg11[%c0_17, %c0_18], %18 {strides = array<i32>} : memref<8x1280xf32, #tpu.memory_space<vmem>>, vector<8x1280xf32>,
    %c0_19 = arith.constant 0 : index
    %c0_20 = arith.constant 0 : index
    %20 = vector.load %arg6[%c0_19, %c0_20] : memref<1x1280xf32, #tpu.memory_space<vmem>>, vector<1x1280xf32>
    %21 = vector.broadcast %20 : vector<1x1280xf32> to vector<8x1280xf32>
    %22 = arith.mulf %18, %21 : vector<8x1280xf32>
    %23 = tpu.iota {dimensions = array<i32: 1>} : vector<8x8xi32>
    %cst_21 = arith.constant 0.000000e+00 : f32
    %24 = vector.broadcast %cst_21 : f32 to vector<8x8xf32>
    %25 = vector.extract_strided_slice %22 {offsets = [0, 0], sizes = [8, 256], strides = [1, 1]} : vector<8x1280xf32> to vector<8x256xf32>
    %cst_22 = arith.constant dense<0.000000e+00> : vector<8xf32>
    %26 = vector.multi_reduction <add>, %25, %cst_22 [1] : vector<8x256xf32> to vector<8xf32>
    %27 = vector.shape_cast %26 : vector<8xf32> to vector<8x1xf32>
    %c0_i32 = arith.constant 0 : i32
    %28 = vector.broadcast %c0_i32 : i32 to vector<8x8xi32>
    %29 = arith.cmpi eq, %23, %28 : vector<8x8xi32>
    %30 = vector.shape_cast %27 : vector<8x1xf32> to vector<8x1xf32>
    %31 = vector.broadcast %30 : vector<8x1xf32> to vector<8x8xf32>
    %32 = arith.select %29, %31, %24 : vector<8x8xi1>, vector<8x8xf32>
    %33 = vector.extract_strided_slice %22 {offsets = [0, 256], sizes = [8, 256], strides = [1, 1]} : vector<8x1280xf32> to vector<8x256xf32>
    %cst_23 = arith.constant dense<0.000000e+00> : vector<8xf32>
    %34 = vector.multi_reduction <add>, %33, %cst_23 [1] : vector<8x256xf32> to vector<8xf32>
    %35 = vector.shape_cast %34 : vector<8xf32> to vector<8x1xf32>
    %c1_i32 = arith.constant 1 : i32
    %36 = vector.broadcast %c1_i32 : i32 to vector<8x8xi32>
    %37 = arith.cmpi eq, %23, %36 : vector<8x8xi32>
    %38 = vector.shape_cast %35 : vector<8x1xf32> to vector<8x1xf32>
    %39 = vector.broadcast %38 : vector<8x1xf32> to vector<8x8xf32>
    %40 = arith.select %37, %39, %32 : vector<8x8xi1>, vector<8x8xf32>
    %41 = vector.extract_strided_slice %22 {offsets = [0, 512], sizes = [8, 256], strides = [1, 1]} : vector<8x1280xf32> to vector<8x256xf32>
    %cst_24 = arith.constant dense<0.000000e+00> : vector<8xf32>
    %42 = vector.multi_reduction <add>, %41, %cst_24 [1] : vector<8x256xf32> to vector<8xf32>
    %43 = vector.shape_cast %42 : vector<8xf32> to vector<8x1xf32>
    %c2_i32 = arith.constant 2 : i32
    %44 = vector.broadcast %c2_i32 : i32 to vector<8x8xi32>
    %45 = arith.cmpi eq, %23, %44 : vector<8x8xi32>
    %46 = vector.shape_cast %43 : vector<8x1xf32> to vector<8x1xf32>
    %47 = vector.broadcast %46 : vector<8x1xf32> to vector<8x8xf32>
    %48 = arith.select %45, %47, %40 : vector<8x8xi1>, vector<8x8xf32>
    %49 = vector.extract_strided_slice %22 {offsets = [0, 768], sizes = [8, 256], strides = [1, 1]} : vector<8x1280xf32> to vector<8x256xf32>
    %cst_25 = arith.constant dense<0.000000e+00> : vector<8xf32>
    %50 = vector.multi_reduction <add>, %49, %cst_25 [1] : vector<8x256xf32> to vector<8xf32>
    %51 = vector.shape_cast %50 : vector<8xf32> to vector<8x1xf32>
    %c3_i32 = arith.constant 3 : i32
    %52 = vector.broadcast %c3_i32 : i32 to vector<8x8xi32>
    %53 = arith.cmpi eq, %23, %52 : vector<8x8xi32>
    %54 = vector.shape_cast %51 : vector<8x1xf32> to vector<8x1xf32>
    %55 = vector.broadcast %54 : vector<8x1xf32> to vector<8x8xf32>
    %56 = arith.select %53, %55, %48 : vector<8x8xi1>, vector<8x8xf32>
    %57 = vector.extract_strided_slice %22 {offsets = [0, 1024], sizes = [8, 256], strides = [1, 1]} : vector<8x1280xf32> to vector<8x256xf32>
    %cst_26 = arith.constant dense<0.000000e+00> : vector<8xf32>
    %58 = vector.multi_reduction <add>, %57, %cst_26 [1] : vector<8x256xf32> to vector<8xf32>
    %59 = vector.shape_cast %58 : vector<8xf32> to vector<8x1xf32>
    %c4_i32 = arith.constant 4 : i32
    %60 = vector.broadcast %c4_i32 : i32 to vector<8x8xi32>
    %61 = arith.cmpi eq, %23, %60 : vector<8x8xi32>
    %62 = vector.shape_cast %59 : vector<8x1xf32> to vector<8x1xf32>
    %63 = vector.broadcast %62 : vector<8x1xf32> to vector<8x8xf32>
    %64 = arith.select %61, %63, %56 : vector<8x8xi1>, vector<8x8xf32>
    %c0_27 = arith.constant 0 : index
    %c0_28 = arith.constant 0 : index
    %65 = vector.load %arg7[%c0_27, %c0_28] : memref<1x8xf32, #tpu.memory_space<vmem>>, vector<1x8xf32>
    %66 = vector.broadcast %65 : vector<1x8xf32> to vector<8x8xf32>
    %67 = arith.addf %64, %66 : vector<8x8xf32>
    %c0_29 = arith.constant 0 : index
    %c0_30 = arith.constant 0 : index
    %68 = vector.load %arg12[%c0_29, %c0_30] : memref<8x8xf32, #tpu.memory_space<vmem>>, vector<8x8xf32>
    tpu.vector_store %arg12[%c0_29, %c0_30], %67 {strides = array<i32>} : memref<8x8xf32, #tpu.memory_space<vmem>>, vector<8x8xf32>,
    %c0_31 = arith.constant 0 : index
    %c0_32 = arith.constant 0 : index
    %69 = vector.load %arg8[%c0_31, %c0_32] : memref<1x8xf32, #tpu.memory_space<vmem>>, vector<1x8xf32>
    %70 = vector.broadcast %69 : vector<1x8xf32> to vector<8x8xf32>
    %71 = arith.mulf %67, %70 : vector<8x8xf32>
    %cst_33 = arith.constant dense<0.000000e+00> : vector<8xf32>
    %72 = vector.multi_reduction <add>, %71, %cst_33 [1] : vector<8x8xf32> to vector<8xf32>
    %73 = vector.shape_cast %72 : vector<8xf32> to vector<8x1xf32>
    %c0_34 = arith.constant 0 : index
    %c0_35 = arith.constant 0 : index
    %74 = vector.load %arg9[%c0_34, %c0_35] : memref<1x1xf32, #tpu.memory_space<vmem>>, vector<1x1xf32>
    %75 = vector.broadcast %74 : vector<1x1xf32> to vector<8x1xf32>
    %76 = arith.addf %73, %75 : vector<8x1xf32>
    %c0_36 = arith.constant 0 : index
    %c0_37 = arith.constant 0 : index
    %77 = vector.load %arg13[%c0_36, %c0_37] : memref<8x1xf32, #tpu.memory_space<vmem>>, vector<8x1xf32>
    tpu.vector_store %arg13[%c0_36, %c0_37], %76 {strides = array<i32>} : memref<8x1xf32, #tpu.memory_space<vmem>>, vector<8x1xf32>,
    return
  }
  func.func @transform_0(%arg0: i32) -> (i32, i32, i32) {
    %c0_i32 = arith.constant 0 : i32
    %c0_i32_0 = arith.constant 0 : i32
    %c0_i32_1 = arith.constant 0 : i32
    return %arg0, %c0_i32, %c0_i32_0 : i32, i32, i32
  }
  func.func @transform_1(%arg0: i32) -> (i32, i32) {
    %c0_i32 = arith.constant 0 : i32
    %c0_i32_0 = arith.constant 0 : i32
    %c0_i32_1 = arith.constant 0 : i32
    return %c0_i32, %c0_i32_0 : i32, i32
  }
  func.func @transform_2(%arg0: i32) -> (i32, i32) {
    %c0_i32 = arith.constant 0 : i32
    %c0_i32_0 = arith.constant 0 : i32
    %c0_i32_1 = arith.constant 0 : i32
    return %c0_i32, %c0_i32_0 : i32, i32
  }
  func.func @transform_3(%arg0: i32) -> (i32, i32) {
    %c0_i32 = arith.constant 0 : i32
    %c0_i32_0 = arith.constant 0 : i32
    %c0_i32_1 = arith.constant 0 : i32
    return %c0_i32, %c0_i32_0 : i32, i32
  }
  func.func @transform_4(%arg0: i32) -> (i32, i32) {
    %c0_i32 = arith.constant 0 : i32
    %c0_i32_0 = arith.constant 0 : i32
    %c0_i32_1 = arith.constant 0 : i32
    return %c0_i32, %c0_i32_0 : i32, i32
  }
  func.func @transform_5(%arg0: i32) -> (i32, i32) {
    %c0_i32 = arith.constant 0 : i32
    %c0_i32_0 = arith.constant 0 : i32
    %c0_i32_1 = arith.constant 0 : i32
    return %c0_i32, %c0_i32_0 : i32, i32
  }
  func.func @transform_6(%arg0: i32) -> (i32, i32) {
    %c0_i32 = arith.constant 0 : i32
    %c0_i32_0 = arith.constant 0 : i32
    %c0_i32_1 = arith.constant 0 : i32
    return %c0_i32, %c0_i32_0 : i32, i32
  }
  func.func @transform_7(%arg0: i32) -> (i32, i32) {
    %c0_i32 = arith.constant 0 : i32
    %c0_i32_0 = arith.constant 0 : i32
    %c0_i32_1 = arith.constant 0 : i32
    return %c0_i32, %c0_i32_0 : i32, i32
  }
  func.func @transform_8(%arg0: i32) -> (i32, i32) {
    %c0_i32 = arith.constant 0 : i32
    %c0_i32_0 = arith.constant 0 : i32
    %c0_i32_1 = arith.constant 0 : i32
    return %c0_i32, %c0_i32_0 : i32, i32
  }
  func.func @transform_9(%arg0: i32) -> (i32, i32) {
    %c0_i32 = arith.constant 0 : i32
    %c0_i32_0 = arith.constant 0 : i32
    return %arg0, %c0_i32 : i32, i32
  }
  func.func @transform_10(%arg0: i32) -> (i32, i32) {
    %c0_i32 = arith.constant 0 : i32
    %c0_i32_0 = arith.constant 0 : i32
    return %arg0, %c0_i32 : i32, i32
  }
  func.func @transform_11(%arg0: i32) -> (i32, i32) {
    %c0_i32 = arith.constant 0 : i32
    %c0_i32_0 = arith.constant 0 : i32
    return %arg0, %c0_i32 : i32, i32
  }
  func.func @transform_12(%arg0: i32) -> (i32, i32) {
    %c0_i32 = arith.constant 0 : i32
    %c0_i32_0 = arith.constant 0 : i32
    return %arg0, %c0_i32 : i32, i32
  }
}

</mosaic_0001>

<llo_original>
// kernel: lbm_dimension_net_features.1
$region0: #{lbm_dimension_net_features.1}
  #allocation0 [shape = 'u32[]', space=smem, size = 0x4, offset = 0x4, fixed_abs, tag = 'smem constant byte address 0x4 - core index']
  #allocation1 [shape = 'u32[144,128]{1,0:T(1,128)}', space=vmem, size = 0x12000, scoped, tag = 'internal scratch']
  #allocation2 [shape = 'f32[1,1]{1,0:T(1,128)S(1)}', space=vmem, size = 0x200, scoped, tag = 'scoped memory for lbm_dimension_net_features.1']
  %s0 = inlined_call_operand.vmem [shape: f32[8,3,256], index: 0, kind: input, shape index: {}]
  %s1 = inlined_call_operand.vmem [shape: f32[3,2048], index: 1, kind: input, shape index: {}]
  %s2 = inlined_call_operand.vmem [shape: f32[1,2048], index: 2, kind: input, shape index: {}]
  %s3 = inlined_call_operand.vmem [shape: f32[2048,1280], index: 3, kind: input, shape index: {}]
  %s4 = inlined_call_operand.vmem [shape: f32[1,1280], index: 4, kind: input, shape index: {}]
  %s5 = inlined_call_operand.vmem [shape: f32[1,1280], index: 5, kind: input, shape index: {}]
  %s6 = inlined_call_operand.vmem [shape: f32[1,8], index: 6, kind: input, shape index: {}]
  %s7 = inlined_call_operand.vmem [shape: f32[1,8], index: 7, kind: input, shape index: {}]
  %s8 = inlined_call_operand.<no memory space> [shape: f32[1,1], index: 8, kind: input, shape index: {}]
  %s9 = inlined_call_operand.vmem [shape: f32[8,2048], index: 9, kind: output, shape index: {0}]
  %s10 = inlined_call_operand.vmem [shape: f32[8,1280], index: 10, kind: output, shape index: {1}]
  %s11 = inlined_call_operand.vmem [shape: f32[8,8], index: 11, kind: output, shape index: {2}]
  %s12 = inlined_call_operand.vmem [shape: f32[8,1], index: 12, kind: output, shape index: {3}]
  %13 = xla_tuple %s9, %s10, %s11, %s12
  %s14 = sld [smem:[#allocation0]]
  $region70: #{lbm_dimension_net_features.1} parent=0
    _
  %s16 = ssub.s32 1, %s14
  %s17 = scalar_select 0, %s16, %s14
  %v18 = vstv %s8
  %19 = vst [vmem:[#allocation2] sm:$0x1] %v18
  // Predicated region
  $region2: #{lbm_dimension_net_features.1} parent=0 // pred_check
    _
  $region3: #{lbm_dimension_net_features.1} parent=0 // pred_check_branch
    %21 = sbr.rel (0) target = $region5
  $region4: #{lbm_dimension_net_features.1} parent=0 // pred_region
    _
  $region5: #{lbm_dimension_net_features.1} parent=0 // pred_fallthru
    _
  // Predicated region
  $region6: #{lbm_dimension_net_features.1} parent=0 // pred_check
    _
  $region7: #{lbm_dimension_net_features.1} parent=0 // pred_check_branch
    %23 = sbr.rel (0) target = $region9
  $region8: #{lbm_dimension_net_features.1} parent=0 // pred_region
    _
  $region9: #{lbm_dimension_net_features.1} parent=0 // pred_fallthru
    _
  // Predicated region
  $region10: #{lbm_dimension_net_features.1} parent=0 // pred_check
    _
  $region11: #{lbm_dimension_net_features.1} parent=0 // pred_check_branch
    %25 = sbr.rel (0) target = $region13
  $region12: #{lbm_dimension_net_features.1} parent=0 // pred_region
    _
  $region13: #{lbm_dimension_net_features.1} parent=0 // pred_fallthru
    _
  // Predicated region
  $region14: #{lbm_dimension_net_features.1} parent=0 // pred_check
    _
  $region15: #{lbm_dimension_net_features.1} parent=0 // pred_check_branch
    %27 = sbr.rel (0) target = $region17
  $region16: #{lbm_dimension_net_features.1} parent=0 // pred_region
    _
  $region17: #{lbm_dimension_net_features.1} parent=0 // pred_fallthru
    _
  // Predicated region
  $region18: #{lbm_dimension_net_features.1} parent=0 // pred_check
    _
  $region19: #{lbm_dimension_net_features.1} parent=0 // pred_check_branch
    %29 = sbr.rel (0) target = $region21
  $region20: #{lbm_dimension_net_features.1} parent=0 // pred_region
    _
  $region21: #{lbm_dimension_net_features.1} parent=0 // pred_fallthru
    _
  // Predicated region
  $region22: #{lbm_dimension_net_features.1} parent=0 // pred_check
    _
  $region23: #{lbm_dimension_net_features.1} parent=0 // pred_check_branch
    %31 = sbr.rel (0) target = $region25
  $region24: #{lbm_dimension_net_features.1} parent=0 // pred_region
    _
  $region25: #{lbm_dimension_net_features.1} parent=0 // pred_fallthru
    _
  // Predicated region
  $region26: #{lbm_dimension_net_features.1} parent=0 // pred_check
    _
  $region27: #{lbm_dimension_net_features.1} parent=0 // pred_check_branch
    %33 = sbr.rel (0) target = $region29
  $region28: #{lbm_dimension_net_features.1} parent=0 // pred_region
    _
  $region29: #{lbm_dimension_net_features.1} parent=0 // pred_fallthru
    _
  // Predicated region
  $region30: #{lbm_dimension_net_features.1} parent=0 // pred_check
    _
  $region31: #{lbm_dimension_net_features.1} parent=0 // pred_check_branch
    %35 = sbr.rel (0) target = $region33
  $region32: #{lbm_dimension_net_features.1} parent=0 // pred_region
    _
  $region33: #{lbm_dimension_net_features.1} parent=0 // pred_fallthru
    _
  // Predicated region
  $region34: #{lbm_dimension_net_features.1} parent=0 // pred_check
    _
  $region35: #{lbm_dimension_net_features.1} parent=0 // pred_check_branch
    %37 = sbr.rel (0) target = $region37
  $region36: #{lbm_dimension_net_features.1} parent=0 // pred_region
    _
  $region37: #{lbm_dimension_net_features.1} parent=0 // pred_fallthru
    _
  %v38 = vld [vmem:[%s0] sm:$0x77]
  %v39 = vld [vmem:[%s0 + $0x8] sm:$0x77]
  %v40 = vld [vmem:[%s0 + $0x10] sm:$0x77]
  %v41 = vld [vmem:[%s0 + $0x18] sm:$0x77]
  %v42 = vld [vmem:[%s0 + $0x20] sm:$0x77]
  %v43 = vld [vmem:[%s0 + $0x28] sm:$0x77]
  %v44 = vld [vmem:[%s0 + $0x30] sm:$0x77]
  %v45 = vld [vmem:[%s0 + $0x38] sm:$0x77]
  %v54 = vcombine.high %v38, %v38
  %v55 = vcombine.high %v39, %v39
  %v56 = vcombine.high %v40, %v40
  %v57 = vcombine.high %v41, %v41
  %v58 = vcombine.high %v42, %v42
  %v59 = vcombine.high %v43, %v43
  %v60 = vcombine.high %v44, %v44
  %v61 = vcombine.high %v45, %v45
  %vm70 = vcmask 1042432
  %v71 = vsel %vm70, %v38, 0.0
  %v72 = vsel %vm70, %v54, 0.0
  %v73 = vadd.f32 %v71, %v72
  %74 = vadd.xlane.f32.xlu0 %v73
  %v75 = vpop.xlane.xlu0 %74
  %v76 = vsel %vm70, %v39, 0.0
  %v77 = vsel %vm70, %v55, 0.0
  %v78 = vadd.f32 %v76, %v77
  %79 = vadd.xlane.f32.xlu0 %v78
  %v80 = vpop.xlane.xlu0 %79
  %v81 = vsel %vm70, %v40, 0.0
  %v82 = vsel %vm70, %v56, 0.0
  %v83 = vadd.f32 %v81, %v82
  %84 = vadd.xlane.f32.xlu0 %v83
  %v85 = vpop.xlane.xlu0 %84
  %v86 = vsel %vm70, %v41, 0.0
  %v87 = vsel %vm70, %v57, 0.0
  %v88 = vadd.f32 %v86, %v87
  %89 = vadd.xlane.f32.xlu0 %v88
  %v90 = vpop.xlane.xlu0 %89
  %v91 = vsel %vm70, %v42, 0.0
  %v92 = vsel %vm70, %v58, 0.0
  %v93 = vadd.f32 %v91, %v92
  %94 = vadd.xlane.f32.xlu0 %v93
  %v95 = vpop.xlane.xlu0 %94
  %v96 = vsel %vm70, %v43, 0.0
  %v97 = vsel %vm70, %v59, 0.0
  %v98 = vadd.f32 %v96, %v97
  %99 = vadd.xlane.f32.xlu0 %v98
  %v100 = vpop.xlane.xlu0 %99
  %v101 = vsel %vm70, %v44, 0.0
  %v102 = vsel %vm70, %v60, 0.0
  %v103 = vadd.f32 %v101, %v102
  %104 = vadd.xlane.f32.xlu0 %v103
  %v105 = vpop.xlane.xlu0 %104
  %v106 = vsel %vm70, %v45, 0.0
  %v107 = vsel %vm70, %v61, 0.0
  %v108 = vadd.f32 %v106, %v107
  %109 = vadd.xlane.f32.xlu0 %v108
  %v110 = vpop.xlane.xlu0 %109
  %v111 = vmul.f32 %v75, 0.00390625
  %v112 = vmul.f32 %v80, 0.00390625
  %v113 = vmul.f32 %v85, 0.00390625
  %v114 = vmul.f32 %v90, 0.00390625
  %v115 = vmul.f32 %v95, 0.00390625
  %v116 = vmul.f32 %v100, 0.00390625
  %v117 = vmul.f32 %v105, 0.00390625
  %v118 = vmul.f32 %v110, 0.00390625
  %v119 = vld [vmem:[%s1] sm:$0x77]
  %v120 = vld [vmem:[%s1 + $0x8] sm:$0x77]
  %v121 = vld [vmem:[%s1 + $0x10] sm:$0x77]
  %v122 = vld [vmem:[%s1 + $0x18] sm:$0x77]
  %v123 = vld [vmem:[%s1 + $0x20] sm:$0x77]
  %v124 = vld [vmem:[%s1 + $0x28] sm:$0x77]
  %v125 = vld [vmem:[%s1 + $0x30] sm:$0x77]
  %v126 = vld [vmem:[%s1 + $0x38] sm:$0x77]
  %v127 = vld [vmem:[%s2] sm:$0xff]
  %v128 = vld [vmem:[%s2 + $0x8] sm:$0xff]
  %v131 = vlaneseq
  %v132 = vshrl.u32 %v131, 7
  %v133 = vsub.s32 0, %v132
  %v134 = vrot.slane %v127, %v133
  %v135 = vlaneseq
  %v136 = vshrl.u32 %v135, 7
  %v137 = vsub.s32 1, %v136
  %v138 = vrot.slane %v127, %v137
  %v139 = vlaneseq
  %v140 = vshrl.u32 %v139, 7
  %v141 = vsub.s32 2, %v140
  %v142 = vrot.slane %v127, %v141
  %v143 = vlaneseq
  %v144 = vshrl.u32 %v143, 7
  %v145 = vsub.s32 3, %v144
  %v146 = vrot.slane %v127, %v145
  %v147 = vlaneseq
  %v148 = vshrl.u32 %v147, 7
  %v149 = vsub.s32 4, %v148
  %v150 = vrot.slane %v127, %v149
  %v151 = vlaneseq
  %v152 = vshrl.u32 %v151, 7
  %v153 = vsub.s32 5, %v152
  %v154 = vrot.slane %v127, %v153
  %v155 = vlaneseq
  %v156 = vshrl.u32 %v155, 7
  %v157 = vsub.s32 6, %v156
  %v158 = vrot.slane %v127, %v157
  %v159 = vlaneseq
  %v160 = vshrl.u32 %v159, 7
  %v161 = vsub.s32 7, %v160
  %v162 = vrot.slane %v127, %v161
  %v163 = vlaneseq
  %v164 = vshrl.u32 %v163, 7
  %v165 = vsub.s32 0, %v164
  %v166 = vrot.slane %v128, %v165
  %v167 = vlaneseq
  %v168 = vshrl.u32 %v167, 7
  %v169 = vsub.s32 1, %v168
  %v170 = vrot.slane %v128, %v169
  %v171 = vlaneseq
  %v172 = vshrl.u32 %v171, 7
  %v173 = vsub.s32 2, %v172
  %v174 = vrot.slane %v128, %v173
  %v175 = vlaneseq
  %v176 = vshrl.u32 %v175, 7
  %v177 = vsub.s32 3, %v176
  %v178 = vrot.slane %v128, %v177
  %v179 = vlaneseq
  %v180 = vshrl.u32 %v179, 7
  %v181 = vsub.s32 4, %v180
  %v182 = vrot.slane %v128, %v181
  %v183 = vlaneseq
  %v184 = vshrl.u32 %v183, 7
  %v185 = vsub.s32 5, %v184
  %v186 = vrot.slane %v128, %v185
  %v187 = vlaneseq
  %v188 = vshrl.u32 %v187, 7
  %v189 = vsub.s32 6, %v188
  %v190 = vrot.slane %v128, %v189
  %v191 = vlaneseq
  %v192 = vshrl.u32 %v191, 7
  %v193 = vsub.s32 7, %v192
  %v194 = vrot.slane %v128, %v193
  %v219 = vlaneseq
  %v220 = vand.u32 %v219, 127
  %v221 = vlaneseq
  %v222 = vshrl.u32 %v221, 7
  %v223 = vsub.s32 %v220, %v222
  %v224 = vrot.slane %v111, %v223
  %v225 = vlaneseq
  %v226 = vshrl.u32 %v225, 7
  %v227 = vsub.s32 %v220, %v226
  %v228 = vrot.slane %v112, %v227
  %v229 = vlaneseq
  %v230 = vshrl.u32 %v229, 7
  %v231 = vsub.s32 %v220, %v230
  %v232 = vrot.slane %v113, %v231
  %v233 = vlaneseq
  %v234 = vshrl.u32 %v233, 7
  %v235 = vsub.s32 %v220, %v234
  %v236 = vrot.slane %v114, %v235
  %v237 = vlaneseq
  %v238 = vshrl.u32 %v237, 7
  %v239 = vsub.s32 %v220, %v238
  %v240 = vrot.slane %v115, %v239
  %v241 = vlaneseq
  %v242 = vshrl.u32 %v241, 7
  %v243 = vsub.s32 %v220, %v242
  %v244 = vrot.slane %v116, %v243
  %v245 = vlaneseq
  %v246 = vshrl.u32 %v245, 7
  %v247 = vsub.s32 %v220, %v246
  %v248 = vrot.slane %v117, %v247
  %v249 = vlaneseq
  %v250 = vshrl.u32 %v249, 7
  %v251 = vsub.s32 %v220, %v250
  %v252 = vrot.slane %v118, %v251
  %vm253 = vcmask 1041409
  %v254 = vsel %vm253, %v228, %v224
  %vm255 = vcmask 1042434
  %v256 = vsel %vm255, %v232, %v254
  %vm257 = vcmask 1043459
  %v258 = vsel %vm257, %v236, %v256
  %vm259 = vcmask 1044484
  %v260 = vsel %vm259, %v240, %v258
  %vm261 = vcmask 1045509
  %v262 = vsel %vm261, %v244, %v260
  %vm263 = vcmask 1046534
  %v264 = vsel %vm263, %v248, %v262
  %vm265 = vcmask 1047559
  %v266 = vsel %vm265, %v252, %v264
  %v275 = vcombine.high %v119, %v119
  %v276 = vcombine.high %v120, %v120
  %v277 = vcombine.high %v121, %v121
  %v278 = vcombine.high %v122, %v122
  %v279 = vcombine.high %v123, %v123
  %v280 = vcombine.high %v124, %v124
  %v281 = vcombine.high %v125, %v125
  %v282 = vcombine.high %v126, %v126
  %vm283 = vcmask 23552
  %v284 = vsel %vm283, %v266, 0
  %v286 = vsel %vm70, %v119, 0
  %v288 = vsel %vm70, %v275, 0
  %v290 = vsel %vm70, %v120, 0
  %v292 = vsel %vm70, %v276, 0
  %v294 = vsel %vm70, %v121, 0
  %v296 = vsel %vm70, %v277, 0
  %v298 = vsel %vm70, %v122, 0
  %v300 = vsel %vm70, %v278, 0
  %v302 = vsel %vm70, %v123, 0
  %v304 = vsel %vm70, %v279, 0
  %v306 = vsel %vm70, %v124, 0
  %v308 = vsel %vm70, %v280, 0
  %v310 = vsel %vm70, %v125, 0
  %v312 = vsel %vm70, %v281, 0
  %v314 = vsel %vm70, %v126, 0
  %v316 = vsel %vm70, %v282, 0
  %318 = vmatprep.subr.mxu0 %v288
  %319 = vmatpush1.msra.mxu0 %v286
  %320 = vmatprep.subr.mxu0 0.0
  %321 = vmatpush1.msra.mxu0 0.0
  %322 = vmatprep.subr.mxu0 0.0
  %323 = vmatpush1.msra.mxu0 0.0
  %324 = vmatprep.subr.mxu0 0.0
  %325 = vmatpush1.msra.mxu0 0.0
  %326 = vmatprep.subr.mxu0 0.0
  %327 = vmatpush1.msra.mxu0 0.0
  %328 = vmatprep.subr.mxu0 0.0
  %329 = vmatpush1.msra.mxu0 0.0
  %330 = vmatprep.subr.mxu0 0.0
  %331 = vmatpush1.msra.mxu0 0.0
  %332 = vmatprep.subr.mxu0 0.0
  %333 = vmatpush1.msra.mxu0 0.0
  %334 = vmatprep.subr.mxu0 0.0
  %335 = vmatpush1.msra.mxu0 0.0
  %336 = vmatprep.subr.mxu0 0.0
  %337 = vmatpush1.msra.mxu0 0.0
  %338 = vmatprep.subr.mxu0 0.0
  %339 = vmatpush1.msra.mxu0 0.0
  %340 = vmatprep.subr.mxu0 0.0
  %341 = vmatpush1.msra.mxu0 0.0
  %342 = vmatprep.subr.mxu0 0.0
  %343 = vmatpush1.msra.mxu0 0.0
  %344 = vmatprep.subr.mxu0 0.0
  %345 = vmatpush1.msra.mxu0 0.0
  %346 = vmatprep.subr.mxu0 0.0
  %347 = vmatpush1.msra.mxu0 0.0
  %348 = vmatprep.subr.mxu0 0.0
  %349 = vmatpush1.msra.mxu0 0.0
  %350 = vmatprep.subr.mxu0 0.0
  %351 = vmatpush1.msra.mxu0 0.0
  %352 = vmatprep.subr.mxu0 0.0
  %353 = vmatpush1.msra.mxu0 0.0
  %354 = vmatprep.subr.mxu0 0.0
  %355 = vmatpush1.msra.mxu0 0.0
  %356 = vmatprep.subr.mxu0 0.0
  %357 = vmatpush1.msra.mxu0 0.0
  %358 = vmatprep.subr.mxu0 0.0
  %359 = vmatpush1.msra.mxu0 0.0
  %360 = vmatprep.subr.mxu0 0.0
  %361 = vmatpush1.msra.mxu0 0.0
  %362 = vmatprep.subr.mxu0 0.0
  %363 = vmatpush1.msra.mxu0 0.0
  %364 = vmatprep.subr.mxu0 0.0
  %365 = vmatpush1.msra.mxu0 0.0
  %366 = vmatprep.subr.mxu0 0.0
  %367 = vmatpush1.msra.mxu0 0.0
  %368 = vmatprep.subr.mxu0 0.0
  %369 = vmatpush1.msra.mxu0 0.0
  %370 = vmatprep.subr.mxu0 0.0
  %371 = vmatpush1.msra.mxu0 0.0
  %372 = vmatprep.subr.mxu0 0.0
  %373 = vmatpush1.msra.mxu0 0.0
  %374 = vmatprep.subr.mxu0 0.0
  %375 = vmatpush1.msra.mxu0 0.0
  %376 = vmatprep.subr.mxu0 0.0
  %377 = vmatpush1.msra.mxu0 0.0
  %378 = vmatprep.subr.mxu0 0.0
  %379 = vmatpush1.msra.mxu0 0.0
  %380 = vmatprep.subr.mxu0 0.0
  %381 = vmatpush1.msra.mxu0 0.0
  %382 = vmatprep.mubr.f32.mxu0 0.0
  %383 = vmatmul.mubr.f32.gmra.mrb[0].mxu0 %v284
  %v384 = vpop.f32.mrb[0].mxu0
  %v385 = vadd.f32 %v134, %v384
  %v386 = vpop.f32.mrb[0].mxu0
  %v387 = vadd.f32 %v138, %v386
  %388 = vdwg.mxu0
  %389 = vmatprep.subr.mxu0 %v292
  %390 = vmatpush1.msra.mxu0 %v290
  %391 = vmatprep.subr.mxu0 0.0
  %392 = vmatpush1.msra.mxu0 0.0
  %393 = vmatprep.subr.mxu0 0.0
  %394 = vmatpush1.msra.mxu0 0.0
  %395 = vmatprep.subr.mxu0 0.0
  %396 = vmatpush1.msra.mxu0 0.0
  %397 = vmatprep.subr.mxu0 0.0
  %398 = vmatpush1.msra.mxu0 0.0
  %399 = vmatprep.subr.mxu0 0.0
  %400 = vmatpush1.msra.mxu0 0.0
  %401 = vmatprep.subr.mxu0 0.0
  %402 = vmatpush1.msra.mxu0 0.0
  %403 = vmatprep.subr.mxu0 0.0
  %404 = vmatpush1.msra.mxu0 0.0
  %405 = vmatprep.subr.mxu0 0.0
  %406 = vmatpush1.msra.mxu0 0.0
  %407 = vmatprep.subr.mxu0 0.0
  %408 = vmatpush1.msra.mxu0 0.0
  %409 = vmatprep.subr.mxu0 0.0
  %410 = vmatpush1.msra.mxu0 0.0
  %411 = vmatprep.subr.mxu0 0.0
  %412 = vmatpush1.msra.mxu0 0.0
  %413 = vmatprep.subr.mxu0 0.0
  %414 = vmatpush1.msra.mxu0 0.0
  %415 = vmatprep.subr.mxu0 0.0
  %416 = vmatpush1.msra.mxu0 0.0
  %417 = vmatprep.subr.mxu0 0.0
  %418 = vmatpush1.msra.mxu0 0.0
  %419 = vmatprep.subr.mxu0 0.0
  %420 = vmatpush1.msra.mxu0 0.0
  %421 = vmatprep.subr.mxu0 0.0
  %422 = vmatpush1.msra.mxu0 0.0
  %423 = vmatprep.subr.mxu0 0.0
  %424 = vmatpush1.msra.mxu0 0.0
  %425 = vmatprep.subr.mxu0 0.0
  %426 = vmatpush1.msra.mxu0 0.0
  %427 = vmatprep.subr.mxu0 0.0
  %428 = vmatpush1.msra.mxu0 0.0
  %429 = vmatprep.subr.mxu0 0.0
  %430 = vmatpush1.msra.mxu0 0.0
  %431 = vmatprep.subr.mxu0 0.0
  %432 = vmatpush1.msra.mxu0 0.0
  %433 = vmatprep.subr.mxu0 0.0
  %434 = vmatpush1.msra.mxu0 0.0
  %435 = vmatprep.subr.mxu0 0.0
  %436 = vmatpush1.msra.mxu0 0.0
  %437 = vmatprep.subr.mxu0 0.0
  %438 = vmatpush1.msra.mxu0 0.0
  %439 = vmatprep.subr.mxu0 0.0
  %440 = vmatpush1.msra.mxu0 0.0
  %441 = vmatprep.subr.mxu0 0.0
  %442 = vmatpush1.msra.mxu0 0.0
  %443 = vmatprep.subr.mxu0 0.0
  %444 = vmatpush1.msra.mxu0 0.0
  %445 = vmatprep.subr.mxu0 0.0
  %446 = vmatpush1.msra.mxu0 0.0
  %447 = vmatprep.subr.mxu0 0.0
  %448 = vmatpush1.msra.mxu0 0.0
  %449 = vmatprep.subr.mxu0 0.0
  %450 = vmatpush1.msra.mxu0 0.0
  %451 = vmatprep.subr.mxu0 0.0
  %452 = vmatpush1.msra.mxu0 0.0
  %453 = vmatprep.mubr.f32.mxu0 0.0
  %454 = vmatmul.mubr.f32.gmra.mrb[0].mxu0 %v284
  %v455 = vpop.f32.mrb[0].mxu0
  %v456 = vadd.f32 %v142, %v455
  %v457 = vpop.f32.mrb[0].mxu0
  %v458 = vadd.f32 %v146, %v457
  %459 = vdwg.mxu0
  %460 = vmatprep.subr.mxu0 %v296
  %461 = vmatpush1.msra.mxu0 %v294
  %462 = vmatprep.subr.mxu0 0.0
  %463 = vmatpush1.msra.mxu0 0.0
  %464 = vmatprep.subr.mxu0 0.0
  %465 = vmatpush1.msra.mxu0 0.0
  %466 = vmatprep.subr.mxu0 0.0
  %467 = vmatpush1.msra.mxu0 0.0
  %468 = vmatprep.subr.mxu0 0.0
  %469 = vmatpush1.msra.mxu0 0.0
  %470 = vmatprep.subr.mxu0 0.0
  %471 = vmatpush1.msra.mxu0 0.0
  %472 = vmatprep.subr.mxu0 0.0
  %473 = vmatpush1.msra.mxu0 0.0
  %474 = vmatprep.subr.mxu0 0.0
  %475 = vmatpush1.msra.mxu0 0.0
  %476 = vmatprep.subr.mxu0 0.0
  %477 = vmatpush1.msra.mxu0 0.0
  %478 = vmatprep.subr.mxu0 0.0
  %479 = vmatpush1.msra.mxu0 0.0
  %480 = vmatprep.subr.mxu0 0.0
  %481 = vmatpush1.msra.mxu0 0.0
  %482 = vmatprep.subr.mxu0 0.0
  %483 = vmatpush1.msra.mxu0 0.0
  %484 = vmatprep.subr.mxu0 0.0
  %485 = vmatpush1.msra.mxu0 0.0
  %486 = vmatprep.subr.mxu0 0.0
  %487 = vmatpush1.msra.mxu0 0.0
  %488 = vmatprep.subr.mxu0 0.0
  %489 = vmatpush1.msra.mxu0 0.0
  %490 = vmatprep.subr.mxu0 0.0
  %491 = vmatpush1.msra.mxu0 0.0
  %492 = vmatprep.subr.mxu0 0.0
  %493 = vmatpush1.msra.mxu0 0.0
  %494 = vmatprep.subr.mxu0 0.0
  %495 = vmatpush1.msra.mxu0 0.0
  %496 = vmatprep.subr.mxu0 0.0
  %497 = vmatpush1.msra.mxu0 0.0
  %498 = vmatprep.subr.mxu0 0.0
  %499 = vmatpush1.msra.mxu0 0.0
  %500 = vmatprep.subr.mxu0 0.0
  %501 = vmatpush1.msra.mxu0 0.0
  %502 = vmatprep.subr.mxu0 0.0
  %503 = vmatpush1.msra.mxu0 0.0
  %504 = vmatprep.subr.mxu0 0.0
  %505 = vmatpush1.msra.mxu0 0.0
  %506 = vmatprep.subr.mxu0 0.0
  %507 = vmatpush1.msra.mxu0 0.0
  %508 = vmatprep.subr.mxu0 0.0
  %509 = vmatpush1.msra.mxu0 0.0
  %510 = vmatprep.subr.mxu0 0.0
  %511 = vmatpush1.msra.mxu0 0.0
  %512 = vmatprep.subr.mxu0 0.0
  %513 = vmatpush1.msra.mxu0 0.0
  %514 = vmatprep.subr.mxu0 0.0
  %515 = vmatpush1.msra.mxu0 0.0
  %516 = vmatprep.subr.mxu0 0.0
  %517 = vmatpush1.msra.mxu0 0.0
  %518 = vmatprep.subr.mxu0 0.0
  %519 = vmatpush1.msra.mxu0 0.0
  %520 = vmatprep.subr.mxu0 0.0
  %521 = vmatpush1.msra.mxu0 0.0
  %522 = vmatprep.subr.mxu0 0.0
  %523 = vmatpush1.msra.mxu0 0.0
  %524 = vmatprep.mubr.f32.mxu0 0.0
  %525 = vmatmul.mubr.f32.gmra.mrb[0].mxu0 %v284
  %v526 = vpop.f32.mrb[0].mxu0
  %v527 = vadd.f32 %v150, %v526
  %v528 = vpop.f32.mrb[0].mxu0
  %v529 = vadd.f32 %v154, %v528
  %530 = vdwg.mxu0
  %531 = vmatprep.subr.mxu0 %v300
  %532 = vmatpush1.msra.mxu0 %v298
  %533 = vmatprep.subr.mxu0 0.0
  %534 = vmatpush1.msra.mxu0 0.0
  %535 = vmatprep.subr.mxu0 0.0
  %536 = vmatpush1.msra.mxu0 0.0
  %537 = vmatprep.subr.mxu0 0.0
  %538 = vmatpush1.msra.mxu0 0.0
  %539 = vmatprep.subr.mxu0 0.0
  %540 = vmatpush1.msra.mxu0 0.0
  %541 = vmatprep.subr.mxu0 0.0
  %542 = vmatpush1.msra.mxu0 0.0
  %543 = vmatprep.subr.mxu0 0.0
  %544 = vmatpush1.msra.mxu0 0.0
  %545 = vmatprep.subr.mxu0 0.0
  %546 = vmatpush1.msra.mxu0 0.0
  %547 = vmatprep.subr.mxu0 0.0
  %548 = vmatpush1.msra.mxu0 0.0
  %549 = vmatprep.subr.mxu0 0.0
  %550 = vmatpush1.msra.mxu0 0.0
  %551 = vmatprep.subr.mxu0 0.0
  %552 = vmatpush1.msra.mxu0 0.0
  %553 = vmatprep.subr.mxu0 0.0
  %554 = vmatpush1.msra.mxu0 0.0
  %555 = vmatprep.subr.mxu0 0.0
  %556 = vmatpush1.msra.mxu0 0.0
  %557 = vmatprep.subr.mxu0 0.0
  %558 = vmatpush1.msra.mxu0 0.0
  %559 = vmatprep.subr.mxu0 0.0
  %560 = vmatpush1.msra.mxu0 0.0
  %561 = vmatprep.subr.mxu0 0.0
  %562 = vmatpush1.msra.mxu0 0.0
  %563 = vmatprep.subr.mxu0 0.0
  %564 = vmatpush1.msra.mxu0 0.0
  %565 = vmatprep.subr.mxu0 0.0
  %566 = vmatpush1.msra.mxu0 0.0
  %567 = vmatprep.subr.mxu0 0.0
  %568 = vmatpush1.msra.mxu0 0.0
  %569 = vmatprep.subr.mxu0 0.0
  %570 = vmatpush1.msra.mxu0 0.0
  %571 = vmatprep.subr.mxu0 0.0
  %572 = vmatpush1.msra.mxu0 0.0
  %573 = vmatprep.subr.mxu0 0.0
  %574 = vmatpush1.msra.mxu0 0.0
  %575 = vmatprep.subr.mxu0 0.0
  %576 = vmatpush1.msra.mxu0 0.0
  %577 = vmatprep.subr.mxu0 0.0
  %578 = vmatpush1.msra.mxu0 0.0
  %579 = vmatprep.subr.mxu0 0.0
  %580 = vmatpush1.msra.mxu0 0.0
  %581 = vmatprep.subr.mxu0 0.0
  %582 = vmatpush1.msra.mxu0 0.0
  %583 = vmatprep.subr.mxu0 0.0
  %584 = vmatpush1.msra.mxu0 0.0
  %585 = vmatprep.subr.mxu0 0.0
  %586 = vmatpush1.msra.mxu0 0.0
  %587 = vmatprep.subr.mxu0 0.0
  %588 = vmatpush1.msra.mxu0 0.0
  %589 = vmatprep.subr.mxu0 0.0
  %590 = vmatpush1.msra.mxu0 0.0
  %591 = vmatprep.subr.mxu0 0.0
  %592 = vmatpush1.msra.mxu0 0.0
  %593 = vmatprep.subr.mxu0 0.0
  %594 = vmatpush1.msra.mxu0 0.0
  %595 = vmatprep.mubr.f32.mxu0 0.0
  %596 = vmatmul.mubr.f32.gmra.mrb[0].mxu0 %v284
  %v597 = vpop.f32.mrb[0].mxu0
  %v598 = vadd.f32 %v158, %v597
  %v599 = vpop.f32.mrb[0].mxu0
  %v600 = vadd.f32 %v162, %v599
  %601 = vdwg.mxu0
  %602 = vmatprep.subr.mxu0 %v304
  %603 = vmatpush1.msra.mxu0 %v302
  %604 = vmatprep.subr.mxu0 0.0
  %605 = vmatpush1.msra.mxu0 0.0
  %606 = vmatprep.subr.mxu0 0.0
  %607 = vmatpush1.msra.mxu0 0.0
  %608 = vmatprep.subr.mxu0 0.0
  %609 = vmatpush1.msra.mxu0 0.0
  %610 = vmatprep.subr.mxu0 0.0
  %611 = vmatpush1.msra.mxu0 0.0
  %612 = vmatprep.subr.mxu0 0.0
  %613 = vmatpush1.msra.mxu0 0.0
  %614 = vmatprep.subr.mxu0 0.0
  %615 = vmatpush1.msra.mxu0 0.0
  %616 = vmatprep.subr.mxu0 0.0
  %617 = vmatpush1.msra.mxu0 0.0
  %618 = vmatprep.subr.mxu0 0.0
  %619 = vmatpush1.msra.mxu0 0.0
  %620 = vmatprep.subr.mxu0 0.0
  %621 = vmatpush1.msra.mxu0 0.0
  %622 = vmatprep.subr.mxu0 0.0
  %623 = vmatpush1.msra.mxu0 0.0
  %624 = vmatprep.subr.mxu0 0.0
  %625 = vmatpush1.msra.mxu0 0.0
  %626 = vmatprep.subr.mxu0 0.0
  %627 = vmatpush1.msra.mxu0 0.0
  %628 = vmatprep.subr.mxu0 0.0
  %629 = vmatpush1.msra.mxu0 0.0
  %630 = vmatprep.subr.mxu0 0.0
  %631 = vmatpush1.msra.mxu0 0.0
  %632 = vmatprep.subr.mxu0 0.0
  %633 = vmatpush1.msra.mxu0 0.0
  %634 = vmatprep.subr.mxu0 0.0
  %635 = vmatpush1.msra.mxu0 0.0
  %636 = vmatprep.subr.mxu0 0.0
  %637 = vmatpush1.msra.mxu0 0.0
  %638 = vmatprep.subr.mxu0 0.0
  %639 = vmatpush1.msra.mxu0 0.0
  %640 = vmatprep.subr.mxu0 0.0
  %641 = vmatpush1.msra.mxu0 0.0
  %642 = vmatprep.subr.mxu0 0.0
  %643 = vmatpush1.msra.mxu0 0.0
  %644 = vmatprep.subr.mxu0 0.0
  %645 = vmatpush1.msra.mxu0 0.0
  %646 = vmatprep.subr.mxu0 0.0
  %647 = vmatpush1.msra.mxu0 0.0
  %648 = vmatprep.subr.mxu0 0.0
  %649 = vmatpush1.msra.mxu0 0.0
  %650 = vmatprep.subr.mxu0 0.0
  %651 = vmatpush1.msra.mxu0 0.0
  %652 = vmatprep.subr.mxu0 0.0
  %653 = vmatpush1.msra.mxu0 0.0
  %654 = vmatprep.subr.mxu0 0.0
  %655 = vmatpush1.msra.mxu0 0.0
  %656 = vmatprep.subr.mxu0 0.0
  %657 = vmatpush1.msra.mxu0 0.0
  %658 = vmatprep.subr.mxu0 0.0
  %659 = vmatpush1.msra.mxu0 0.0
  %660 = vmatprep.subr.mxu0 0.0
  %661 = vmatpush1.msra.mxu0 0.0
  %662 = vmatprep.subr.mxu0 0.0
  %663 = vmatpush1.msra.mxu0 0.0
  %664 = vmatprep.subr.mxu0 0.0
  %665 = vmatpush1.msra.mxu0 0.0
  %666 = vmatprep.mubr.f32.mxu0 0.0
  %667 = vmatmul.mubr.f32.gmra.mrb[0].mxu0 %v284
  %v668 = vpop.f32.mrb[0].mxu0
  %v669 = vadd.f32 %v166, %v668
  %v670 = vpop.f32.mrb[0].mxu0
  %v671 = vadd.f32 %v170, %v670
  %672 = vdwg.mxu0
  %673 = vmatprep.subr.mxu0 %v308
  %674 = vmatpush1.msra.mxu0 %v306
  %675 = vmatprep.subr.mxu0 0.0
  %676 = vmatpush1.msra.mxu0 0.0
  %677 = vmatprep.subr.mxu0 0.0
  %678 = vmatpush1.msra.mxu0 0.0
  %679 = vmatprep.subr.mxu0 0.0
  %680 = vmatpush1.msra.mxu0 0.0
  %681 = vmatprep.subr.mxu0 0.0
  %682 = vmatpush1.msra.mxu0 0.0
  %683 = vmatprep.subr.mxu0 0.0
  %684 = vmatpush1.msra.mxu0 0.0
  %685 = vmatprep.subr.mxu0 0.0
  %686 = vmatpush1.msra.mxu0 0.0
  %687 = vmatprep.subr.mxu0 0.0
  %688 = vmatpush1.msra.mxu0 0.0
  %689 = vmatprep.subr.mxu0 0.0
  %690 = vmatpush1.msra.mxu0 0.0
  %691 = vmatprep.subr.mxu0 0.0
  %692 = vmatpush1.msra.mxu0 0.0
  %693 = vmatprep.subr.mxu0 0.0
  %694 = vmatpush1.msra.mxu0 0.0
  %695 = vmatprep.subr.mxu0 0.0
  %696 = vmatpush1.msra.mxu0 0.0
  %697 = vmatprep.subr.mxu0 0.0
  %698 = vmatpush1.msra.mxu0 0.0
  %699 = vmatprep.subr.mxu0 0.0
  %700 = vmatpush1.msra.mxu0 0.0
  %701 = vmatprep.subr.mxu0 0.0
  %702 = vmatpush1.msra.mxu0 0.0
  %703 = vmatprep.subr.mxu0 0.0
  %704 = vmatpush1.msra.mxu0 0.0
  %705 = vmatprep.subr.mxu0 0.0
  %706 = vmatpush1.msra.mxu0 0.0
  %707 = vmatprep.subr.mxu0 0.0
  %708 = vmatpush1.msra.mxu0 0.0
  %709 = vmatprep.subr.mxu0 0.0
  %710 = vmatpush1.msra.mxu0 0.0
  %711 = vmatprep.subr.mxu0 0.0
  %712 = vmatpush1.msra.mxu0 0.0
  %713 = vmatprep.subr.mxu0 0.0
  %714 = vmatpush1.msra.mxu0 0.0
  %715 = vmatprep.subr.mxu0 0.0
  %716 = vmatpush1.msra.mxu0 0.0
  %717 = vmatprep.subr.mxu0 0.0
  %718 = vmatpush1.msra.mxu0 0.0
  %719 = vmatprep.subr.mxu0 0.0
  %720 = vmatpush1.msra.mxu0 0.0
  %721 = vmatprep.subr.mxu0 0.0
  %722 = vmatpush1.msra.mxu0 0.0
  %723 = vmatprep.subr.mxu0 0.0
  %724 = vmatpush1.msra.mxu0 0.0
  %725 = vmatprep.subr.mxu0 0.0
  %726 = vmatpush1.msra.mxu0 0.0
  %727 = vmatprep.subr.mxu0 0.0
  %728 = vmatpush1.msra.mxu0 0.0
  %729 = vmatprep.subr.mxu0 0.0
  %730 = vmatpush1.msra.mxu0 0.0
  %731 = vmatprep.subr.mxu0 0.0
  %732 = vmatpush1.msra.mxu0 0.0
  %733 = vmatprep.subr.mxu0 0.0
  %734 = vmatpush1.msra.mxu0 0.0
  %735 = vmatprep.subr.mxu0 0.0
  %736 = vmatpush1.msra.mxu0 0.0
  %737 = vmatprep.mubr.f32.mxu0 0.0
  %738 = vmatmul.mubr.f32.gmra.mrb[0].mxu0 %v284
  %v739 = vpop.f32.mrb[0].mxu0
  %v740 = vadd.f32 %v174, %v739
  %v741 = vpop.f32.mrb[0].mxu0
  %v742 = vadd.f32 %v178, %v741
  %743 = vdwg.mxu0
  %744 = vmatprep.subr.mxu0 %v312
  %745 = vmatpush1.msra.mxu0 %v310
  %746 = vmatprep.subr.mxu0 0.0
  %747 = vmatpush1.msra.mxu0 0.0
  %748 = vmatprep.subr.mxu0 0.0
  %749 = vmatpush1.msra.mxu0 0.0
  %750 = vmatprep.subr.mxu0 0.0
  %751 = vmatpush1.msra.mxu0 0.0
  %752 = vmatprep.subr.mxu0 0.0
  %753 = vmatpush1.msra.mxu0 0.0
  %754 = vmatprep.subr.mxu0 0.0
  %755 = vmatpush1.msra.mxu0 0.0
  %756 = vmatprep.subr.mxu0 0.0
  %757 = vmatpush1.msra.mxu0 0.0
  %758 = vmatprep.subr.mxu0 0.0
  %759 = vmatpush1.msra.mxu0 0.0
  %760 = vmatprep.subr.mxu0 0.0
  %761 = vmatpush1.msra.mxu0 0.0
  %762 = vmatprep.subr.mxu0 0.0
  %763 = vmatpush1.msra.mxu0 0.0
  %764 = vmatprep.subr.mxu0 0.0
  %765 = vmatpush1.msra.mxu0 0.0
  %766 = vmatprep.subr.mxu0 0.0
  %767 = vmatpush1.msra.mxu0 0.0
  %768 = vmatprep.subr.mxu0 0.0
  %769 = vmatpush1.msra.mxu0 0.0
  %770 = vmatprep.subr.mxu0 0.0
  %771 = vmatpush1.msra.mxu0 0.0
  %772 = vmatprep.subr.mxu0 0.0
  %773 = vmatpush1.msra.mxu0 0.0
  %774 = vmatprep.subr.mxu0 0.0
  %775 = vmatpush1.msra.mxu0 0.0
  %776 = vmatprep.subr.mxu0 0.0
  %777 = vmatpush1.msra.mxu0 0.0
  %778 = vmatprep.subr.mxu0 0.0
  %779 = vmatpush1.msra.mxu0 0.0
  %780 = vmatprep.subr.mxu0 0.0
  %781 = vmatpush1.msra.mxu0 0.0
  %782 = vmatprep.subr.mxu0 0.0
  %783 = vmatpush1.msra.mxu0 0.0
  %784 = vmatprep.subr.mxu0 0.0
  %785 = vmatpush1.msra.mxu0 0.0
  %786 = vmatprep.subr.mxu0 0.0
  %787 = vmatpush1.msra.mxu0 0.0
  %788 = vmatprep.subr.mxu0 0.0
  %789 = vmatpush1.msra.mxu0 0.0
  %790 = vmatprep.subr.mxu0 0.0
  %791 = vmatpush1.msra.mxu0 0.0
  %792 = vmatprep.subr.mxu0 0.0
  %793 = vmatpush1.msra.mxu0 0.0
  %794 = vmatprep.subr.mxu0 0.0
  %795 = vmatpush1.msra.mxu0 0.0
  %796 = vmatprep.subr.mxu0 0.0
  %797 = vmatpush1.msra.mxu0 0.0
  %798 = vmatprep.subr.mxu0 0.0
  %799 = vmatpush1.msra.mxu0 0.0
  %800 = vmatprep.subr.mxu0 0.0
  %801 = vmatpush1.msra.mxu0 0.0
  %802 = vmatprep.subr.mxu0 0.0
  %803 = vmatpush1.msra.mxu0 0.0
  %804 = vmatprep.subr.mxu0 0.0
  %805 = vmatpush1.msra.mxu0 0.0
  %806 = vmatprep.subr.mxu0 0.0
  %807 = vmatpush1.msra.mxu0 0.0
  %808 = vmatprep.mubr.f32.mxu0 0.0
  %809 = vmatmul.mubr.f32.gmra.mrb[0].mxu0 %v284
  %v810 = vpop.f32.mrb[0].mxu0
  %v811 = vadd.f32 %v182, %v810
  %v812 = vpop.f32.mrb[0].mxu0
  %v813 = vadd.f32 %v186, %v812
  %814 = vdwg.mxu0
  %815 = vmatprep.subr.mxu0 %v316
  %816 = vmatpush1.msra.mxu0 %v314
  %817 = vmatprep.subr.mxu0 0.0
  %818 = vmatpush1.msra.mxu0 0.0
  %819 = vmatprep.subr.mxu0 0.0
  %820 = vmatpush1.msra.mxu0 0.0
  %821 = vmatprep.subr.mxu0 0.0
  %822 = vmatpush1.msra.mxu0 0.0
  %823 = vmatprep.subr.mxu0 0.0
  %824 = vmatpush1.msra.mxu0 0.0
  %825 = vmatprep.subr.mxu0 0.0
  %826 = vmatpush1.msra.mxu0 0.0
  %827 = vmatprep.subr.mxu0 0.0
  %828 = vmatpush1.msra.mxu0 0.0
  %829 = vmatprep.subr.mxu0 0.0
  %830 = vmatpush1.msra.mxu0 0.0
  %831 = vmatprep.subr.mxu0 0.0
  %832 = vmatpush1.msra.mxu0 0.0
  %833 = vmatprep.subr.mxu0 0.0
  %834 = vmatpush1.msra.mxu0 0.0
  %835 = vmatprep.subr.mxu0 0.0
  %836 = vmatpush1.msra.mxu0 0.0
  %837 = vmatprep.subr.mxu0 0.0
  %838 = vmatpush1.msra.mxu0 0.0
  %839 = vmatprep.subr.mxu0 0.0
  %840 = vmatpush1.msra.mxu0 0.0
  %841 = vmatprep.subr.mxu0 0.0
  %842 = vmatpush1.msra.mxu0 0.0
  %843 = vmatprep.subr.mxu0 0.0
  %844 = vmatpush1.msra.mxu0 0.0
  %845 = vmatprep.subr.mxu0 0.0
  %846 = vmatpush1.msra.mxu0 0.0
  %847 = vmatprep.subr.mxu0 0.0
  %848 = vmatpush1.msra.mxu0 0.0
  %849 = vmatprep.subr.mxu0 0.0
  %850 = vmatpush1.msra.mxu0 0.0
  %851 = vmatprep.subr.mxu0 0.0
  %852 = vmatpush1.msra.mxu0 0.0
  %853 = vmatprep.subr.mxu0 0.0
  %854 = vmatpush1.msra.mxu0 0.0
  %855 = vmatprep.subr.mxu0 0.0
  %856 = vmatpush1.msra.mxu0 0.0
  %857 = vmatprep.subr.mxu0 0.0
  %858 = vmatpush1.msra.mxu0 0.0
  %859 = vmatprep.subr.mxu0 0.0
  %860 = vmatpush1.msra.mxu0 0.0
  %861 = vmatprep.subr.mxu0 0.0
  %862 = vmatpush1.msra.mxu0 0.0
  %863 = vmatprep.subr.mxu0 0.0
  %864 = vmatpush1.msra.mxu0 0.0
  %865 = vmatprep.subr.mxu0 0.0
  %866 = vmatpush1.msra.mxu0 0.0
  %867 = vmatprep.subr.mxu0 0.0
  %868 = vmatpush1.msra.mxu0 0.0
  %869 = vmatprep.subr.mxu0 0.0
  %870 = vmatpush1.msra.mxu0 0.0
  %871 = vmatprep.subr.mxu0 0.0
  %872 = vmatpush1.msra.mxu0 0.0
  %873 = vmatprep.subr.mxu0 0.0
  %874 = vmatpush1.msra.mxu0 0.0
  %875 = vmatprep.subr.mxu0 0.0
  %876 = vmatpush1.msra.mxu0 0.0
  %877 = vmatprep.subr.mxu0 0.0
  %878 = vmatpush1.msra.mxu0 0.0
  %879 = vmatprep.mubr.f32.mxu0 0.0
  %880 = vmatmul.mubr.f32.gmra.mrb[0].mxu0 %v284
  %v881 = vpop.f32.mrb[0].mxu0
  %v882 = vadd.f32 %v190, %v881
  %v883 = vpop.f32.mrb[0].mxu0
  %v884 = vadd.f32 %v194, %v883
  %885 = vdwg.mxu0
  %v886 = vmax.f32 %v385, 0.0
  %v887 = vmax.f32 %v387, 0.0
  %v888 = vmax.f32 %v456, 0.0
  %v889 = vmax.f32 %v458, 0.0
  %v890 = vmax.f32 %v527, 0.0
  %v891 = vmax.f32 %v529, 0.0
  %v892 = vmax.f32 %v598, 0.0
  %v893 = vmax.f32 %v600, 0.0
  %v894 = vmax.f32 %v669, 0.0
  %v895 = vmax.f32 %v671, 0.0
  %v896 = vmax.f32 %v740, 0.0
  %v897 = vmax.f32 %v742, 0.0
  %v898 = vmax.f32 %v811, 0.0
  %v899 = vmax.f32 %v813, 0.0
  %v900 = vmax.f32 %v882, 0.0
  %v901 = vmax.f32 %v884, 0.0
  %902 = vst [vmem:[%s9] sm:$0xff] %v886
  %903 = vst [vmem:[%s9 + $0x8] sm:$0xff] %v887
  %904 = vst [vmem:[%s9 + $0x10] sm:$0xff] %v888
  %905 = vst [vmem:[%s9 + $0x18] sm:$0xff] %v889
  %906 = vst [vmem:[%s9 + $0x20] sm:$0xff] %v890
  %907 = vst [vmem:[%s9 + $0x28] sm:$0xff] %v891
  %908 = vst [vmem:[%s9 + $0x30] sm:$0xff] %v892
  %909 = vst [vmem:[%s9 + $0x38] sm:$0xff] %v893
  %910 = vst [vmem:[%s9 + $0x40] sm:$0xff] %v894
  %911 = vst [vmem:[%s9 + $0x48] sm:$0xff] %v895
  %912 = vst [vmem:[%s9 + $0x50] sm:$0xff] %v896
  %913 = vst [vmem:[%s9 + $0x58] sm:$0xff] %v897
  %914 = vst [vmem:[%s9 + $0x60] sm:$0xff] %v898
  %915 = vst [vmem:[%s9 + $0x68] sm:$0xff] %v899
  %916 = vst [vmem:[%s9 + $0x70] sm:$0xff] %v900
  %917 = vst [vmem:[%s9 + $0x78] sm:$0xff] %v901
  %v918 = vld [vmem:[%s3] sm:$0xff]
  %v919 = vld [vmem:[%s3 + $0x8] sm:$0xff]
  %v920 = vld [vmem:[%s3 + $0x10] sm:$0xff]
  %v921 = vld [vmem:[%s3 + $0x18] sm:$0xff]
  %v922 = vld [vmem:[%s3 + $0x20] sm:$0xff]
  %v923 = vld [vmem:[%s3 + $0x28] sm:$0xff]
  %v924 = vld [vmem:[%s3 + $0x30] sm:$0xff]
  %v925 = vld [vmem:[%s3 + $0x38] sm:$0xff]
  %v926 = vld [vmem:[%s3 + $0x40] sm:$0xff]
  %v927 = vld [vmem:[%s3 + $0x48] sm:$0xff]
  %v928 = vld [vmem:[%s3 + $0x50] sm:$0xff]
  %v929 = vld [vmem:[%s3 + $0x58] sm:$0xff]
  %v930 = vld [vmem:[%s3 + $0x60] sm:$0xff]
  %v931 = vld [vmem:[%s3 + $0x68] sm:$0xff]
  %v932 = vld [vmem:[%s3 + $0x70] sm:$0xff]
  %v933 = vld [vmem:[%s3 + $0x78] sm:$0xff]
  %v934 = vld [vmem:[%s3 + $0x80] sm:$0xff]
  %v935 = vld [vmem:[%s3 + $0x88] sm:$0xff]
  %v936 = vld [vmem:[%s3 + $0x90] sm:$0xff]
  %v937 = vld [vmem:[%s3 + $0x98] sm:$0xff]
  %v938 = vld [vmem:[%s3 + $0xa0] sm:$0xff]
  %v939 = vld [vmem:[%s3 + $0xa8] sm:$0xff]
  %v940 = vld [vmem:[%s3 + $0xb0] sm:$0xff]
  %v941 = vld [vmem:[%s3 + $0xb8] sm:$0xff]
  %v942 = vld [vmem:[%s3 + $0xc0] sm:$0xff]
  %v943 = vld [vmem:[%s3 + $0xc8] sm:$0xff]
  %v944 = vld [vmem:[%s3 + $0xd0] sm:$0xff]
  %v945 = vld [vmem:[%s3 + $0xd8] sm:$0xff]
  %v946 = vld [vmem:[%s3 + $0xe0] sm:$0xff]
  %v947 = vld [vmem:[%s3 + $0xe8] sm:$0xff]
  %v948 = vld [vmem:[%s3 + $0xf0] sm:$0xff]
  %v949 = vld [vmem:[%s3 + $0xf8] sm:$0xff]
  %v950 = vld [vmem:[%s3 + $0x100] sm:$0xff]
  %v951 = vld [vmem:[%s3 + $0x108] sm:$0xff]
  %v952 = vld [vmem:[%s3 + $0x110] sm:$0xff]
  %v953 = vld [vmem:[%s3 + $0x118] sm:$0xff]
  %v954 = vld [vmem:[%s3 + $0x120] sm:$0xff]
  %v955 = vld [vmem:[%s3 + $0x128] sm:$0xff]
  %v956 = vld [vmem:[%s3 + $0x130] sm:$0xff]
  %v957 = vld [vmem:[%s3 + $0x138] sm:$0xff]
  %v958 = vld [vmem:[%s3 + $0x140] sm:$0xff]
  %v959 = vld [vmem:[%s3 + $0x148] sm:$0xff]
  %v960 = vld [vmem:[%s3 + $0x150] sm:$0xff]
  %v961 = vld [vmem:[%s3 + $0x158] sm:$0xff]
  %v962 = vld [vmem:[%s3 + $0x160] sm:$0xff]
  %v963 = vld [vmem:[%s3 + $0x168] sm:$0xff]
  %v964 = vld [vmem:[%s3 + $0x170] sm:$0xff]
  %v965 = vld [vmem:[%s3 + $0x178] sm:$0xff]
  %v966 = vld [vmem:[%s3 + $0x180] sm:$0xff]
  %v967 = vld [vmem:[%s3 + $0x188] sm:$0xff]
  %v968 = vld [vmem:[%s3 + $0x190] sm:$0xff]
  %v969 = vld [vmem:[%s3 + $0x198] sm:$0xff]
  %v970 = vld [vmem:[%s3 + $0x1a0] sm:$0xff]
  %v971 = vld [vmem:[%s3 + $0x1a8] sm:$0xff]
  %v972 = vld [vmem:[%s3 + $0x1b0] sm:$0xff]
  %v973 = vld [vmem:[%s3 + $0x1b8] sm:$0xff]
  %v974 = vld [vmem:[%s3 + $0x1c0] sm:$0xff]
  %v975 = vld [vmem:[%s3 + $0x1c8] sm:$0xff]
  %v976 = vld [vmem:[%s3 + $0x1d0] sm:$0xff]
  %v977 = vld [vmem:[%s3 + $0x1d8] sm:$0xff]
  %v978 = vld [vmem:[%s3 + $0x1e0] sm:$0xff]
  %v979 = vld [vmem:[%s3 + $0x1e8] sm:$0xff]
  %v980 = vld [vmem:[%s3 + $0x1f0] sm:$0xff]
  %v981 = vld [vmem:[%s3 + $0x1f8] sm:$0xff]
  %v982 = vld [vmem:[%s3 + $0x200] sm:$0xff]
  %v983 = vld [vmem:[%s3 + $0x208] sm:$0xff]
  %v984 = vld [vmem:[%s3 + $0x210] sm:$0xff]
  %v985 = vld [vmem:[%s3 + $0x218] sm:$0xff]
  %v986 = vld [vmem:[%s3 + $0x220] sm:$0xff]
  %v987 = vld [vmem:[%s3 + $0x228] sm:$0xff]
  %v988 = vld [vmem:[%s3 + $0x230] sm:$0xff]
  %v989 = vld [vmem:[%s3 + $0x238] sm:$0xff]
  %v990 = vld [vmem:[%s3 + $0x240] sm:$0xff]
  %v991 = vld [vmem:[%s3 + $0x248] sm:$0xff]
  %v992 = vld [vmem:[%s3 + $0x250] sm:$0xff]
  %v993 = vld [vmem:[%s3 + $0x258] sm:$0xff]
  %v994 = vld [vmem:[%s3 + $0x260] sm:$0xff]
  %v995 = vld [vmem:[%s3 + $0x268] sm:$0xff]
  %v996 = vld [vmem:[%s3 + $0x270] sm:$0xff]
  %v997 = vld [vmem:[%s3 + $0x278] sm:$0xff]
  %v998 = vld [vmem:[%s3 + $0x280] sm:$0xff]
  %v999 = vld [vmem:[%s3 + $0x288] sm:$0xff]
  %v1000 = vld [vmem:[%s3 + $0x290] sm:$0xff]
  %v1001 = vld [vmem:[%s3 + $0x298] sm:$0xff]
  %v1002 = vld [vmem:[%s3 + $0x2a0] sm:$0xff]
  %v1003 = vld [vmem:[%s3 + $0x2a8] sm:$0xff]
  %v1004 = vld [vmem:[%s3 + $0x2b0] sm:$0xff]
  %v1005 = vld [vmem:[%s3 + $0x2b8] sm:$0xff]
  %v1006 = vld [vmem:[%s3 + $0x2c0] sm:$0xff]
  %v1007 = vld [vmem:[%s3 + $0x2c8] sm:$0xff]
  %v1008 = vld [vmem:[%s3 + $0x2d0] sm:$0xff]
  %v1009 = vld [vmem:[%s3 + $0x2d8] sm:$0xff]
  %v1010 = vld [vmem:[%s3 + $0x2e0] sm:$0xff]
  %v1011 = vld [vmem:[%s3 + $0x2e8] sm:$0xff]
  %v1012 = vld [vmem:[%s3 + $0x2f0] sm:$0xff]
  %v1013 = vld [vmem:[%s3 + $0x2f8] sm:$0xff]
  %v1014 = vld [vmem:[%s3 + $0x300] sm:$0xff]
  %v1015 = vld [vmem:[%s3 + $0x308] sm:$0xff]
  %v1016 = vld [vmem:[%s3 + $0x310] sm:$0xff]
  %v1017 = vld [vmem:[%s3 + $0x318] sm:$0xff]
  %v1018 = vld [vmem:[%s3 + $0x320] sm:$0xff]
  %v1019 = vld [vmem:[%s3 + $0x328] sm:$0xff]
  %v1020 = vld [vmem:[%s3 + $0x330] sm:$0xff]
  %v1021 = vld [vmem:[%s3 + $0x338] sm:$0xff]
  %v1022 = vld [vmem:[%s3 + $0x340] sm:$0xff]
  %v1023 = vld [vmem:[%s3 + $0x348] sm:$0xff]
  %v1024 = vld [vmem:[%s3 + $0x350] sm:$0xff]
  %v1025 = vld [vmem:[%s3 + $0x358] sm:$0xff]
  %v1026 = vld [vmem:[%s3 + $0x360] sm:$0xff]
  %v1027 = vld [vmem:[%s3 + $0x368] sm:$0xff]
  %v1028 = vld [vmem:[%s3 + $0x370] sm:$0xff]
  %v1029 = vld [vmem:[%s3 + $0x378] sm:$0xff]
  %v1030 = vld [vmem:[%s3 + $0x380] sm:$0xff]
  %v1031 = vld [vmem:[%s3 + $0x388] sm:$0xff]
  %v1032 = vld [vmem:[%s3 + $0x390] sm:$0xff]
  %v1033 = vld [vmem:[%s3 + $0x398] sm:$0xff]
  %v1034 = vld [vmem:[%s3 + $0x3a0] sm:$0xff]
  %v1035 = vld [vmem:[%s3 + $0x3a8] sm:$0xff]
  %v1036 = vld [vmem:[%s3 + $0x3b0] sm:$0xff]
  %v1037 = vld [vmem:[%s3 + $0x3b8] sm:$0xff]
  %v1038 = vld [vmem:[%s3 + $0x3c0] sm:$0xff]
  %v1039 = vld [vmem:[%s3 + $0x3c8] sm:$0xff]
  %v1040 = vld [vmem:[%s3 + $0x3d0] sm:$0xff]
  %v1041 = vld [vmem:[%s3 + $0x3d8] sm:$0xff]
  %v1042 = vld [vmem:[%s3 + $0x3e0] sm:$0xff]
  %v1043 = vld [vmem:[%s3 + $0x3e8] sm:$0xff]
  %v1044 = vld [vmem:[%s3 + $0x3f0] sm:$0xff]
  %v1045 = vld [vmem:[%s3 + $0x3f8] sm:$0xff]
  %v1046 = vld [vmem:[%s3 + $0x400] sm:$0xff]
  %v1047 = vld [vmem:[%s3 + $0x408] sm:$0xff]
  %v1048 = vld [vmem:[%s3 + $0x410] sm:$0xff]
  %v1049 = vld [vmem:[%s3 + $0x418] sm:$0xff]
  %v1050 = vld [vmem:[%s3 + $0x420] sm:$0xff]
  %v1051 = vld [vmem:[%s3 + $0x428] sm:$0xff]
  %v1052 = vld [vmem:[%s3 + $0x430] sm:$0xff]
  %v1053 = vld [vmem:[%s3 + $0x438] sm:$0xff]
  %v1054 = vld [vmem:[%s3 + $0x440] sm:$0xff]
  %v1055 = vld [vmem:[%s3 + $0x448] sm:$0xff]
  %v1056 = vld [vmem:[%s3 + $0x450] sm:$0xff]
  %v1057 = vld [vmem:[%s3 + $0x458] sm:$0xff]
  %v1058 = vld [vmem:[%s3 + $0x460] sm:$0xff]
  %v1059 = vld [vmem:[%s3 + $0x468] sm:$0xff]
  %v1060 = vld [vmem:[%s3 + $0x470] sm:$0xff]
  %v1061 = vld [vmem:[%s3 + $0x478] sm:$0xff]
  %v1062 = vld [vmem:[%s3 + $0x480] sm:$0xff]
  %v1063 = vld [vmem:[%s3 + $0x488] sm:$0xff]
  %v1064 = vld [vmem:[%s3 + $0x490] sm:$0xff]
  %v1065 = vld [vmem:[%s3 + $0x498] sm:$0xff]
  %v1066 = vld [vmem:[%s3 + $0x4a0] sm:$0xff]
  %v1067 = vld [vmem:[%s3 + $0x4a8] sm:$0xff]
  %v1068 = vld [vmem:[%s3 + $0x4b0] sm:$0xff]
  %v1069 = vld [vmem:[%s3 + $0x4b8] sm:$0xff]
  %v1070 = vld [vmem:[%s3 + $0x4c0] sm:$0xff]
  %v1071 = vld [vmem:[%s3 + $0x4c8] sm:$0xff]
  %v1072 = vld [vmem:[%s3 + $0x4d0] sm:$0xff]
  %v1073 = vld [vmem:[%s3 + $0x4d8] sm:$0xff]
  %v1074 = vld [vmem:[%s3 + $0x4e0] sm:$0xff]
  %v1075 = vld [vmem:[%s3 + $0x4e8] sm:$0xff]
  %v1076 = vld [vmem:[%s3 + $0x4f0] sm:$0xff]
  %v1077 = vld [vmem:[%s3 + $0x4f8] sm:$0xff]
  %v1078 = vld [vmem:[%s3 + $0x500] sm:$0xff]
  %v1079 = vld [vmem:[%s3 + $0x508] sm:$0xff]
  %v1080 = vld [vmem:[%s3 + $0x510] sm:$0xff]
  %v1081 = vld [vmem:[%s3 + $0x518] sm:$0xff]
  %v1082 = vld [vmem:[%s3 + $0x520] sm:$0xff]
  %v1083 = vld [vmem:[%s3 + $0x528] sm:$0xff]
  %v1084 = vld [vmem:[%s3 + $0x530] sm:$0xff]
  %v1085 = vld [vmem:[%s3 + $0x538] sm:$0xff]
  %v1086 = vld [vmem:[%s3 + $0x540] sm:$0xff]
  %v1087 = vld [vmem:[%s3 + $0x548] sm:$0xff]
  %v1088 = vld [vmem:[%s3 + $0x550] sm:$0xff]
  %v1089 = vld [vmem:[%s3 + $0x558] sm:$0xff]
  %v1090 = vld [vmem:[%s3 + $0x560] sm:$0xff]
  %v1091 = vld [vmem:[%s3 + $0x568] sm:$0xff]
  %v1092 = vld [vmem:[%s3 + $0x570] sm:$0xff]
  %v1093 = vld [vmem:[%s3 + $0x578] sm:$0xff]
  %v1094 = vld [vmem:[%s3 + $0x580] sm:$0xff]
  %v1095 = vld [vmem:[%s3 + $0x588] sm:$0xff]
  %v1096 = vld [vmem:[%s3 + $0x590] sm:$0xff]
  %v1097 = vld [vmem:[%s3 + $0x598] sm:$0xff]
  %v1098 = vld [vmem:[%s3 + $0x5a0] sm:$0xff]
  %v1099 = vld [vmem:[%s3 + $0x5a8] sm:$0xff]
  %v1100 = vld [vmem:[%s3 + $0x5b0] sm:$0xff]
  %v1101 = vld [vmem:[%s3 + $0x5b8] sm:$0xff]
  %v1102 = vld [vmem:[%s3 + $0x5c0] sm:$0xff]
  %v1103 = vld [vmem:[%s3 + $0x5c8] sm:$0xff]
  %v1104 = vld [vmem:[%s3 + $0x5d0] sm:$0xff]
  %v1105 = vld [vmem:[%s3 + $0x5d8] sm:$0xff]
  %v1106 = vld [vmem:[%s3 + $0x5e0] sm:$0xff]
  %v1107 = vld [vmem:[%s3 + $0x5e8] sm:$0xff]
  %v1108 = vld [vmem:[%s3 + $0x5f0] sm:$0xff]
  %v1109 = vld [vmem:[%s3 + $0x5f8] sm:$0xff]
  %v1110 = vld [vmem:[%s3 + $0x600] sm:$0xff]
  %v1111 = vld [vmem:[%s3 + $0x608] sm:$0xff]
  %v1112 = vld [vmem:[%s3 + $0x610] sm:$0xff]
  %v1113 = vld [vmem:[%s3 + $0x618] sm:$0xff]
  %v1114 = vld [vmem:[%s3 + $0x620] sm:$0xff]
  %v1115 = vld [vmem:[%s3 + $0x628] sm:$0xff]
  %v1116 = vld [vmem:[%s3 + $0x630] sm:$0xff]
  %v1117 = vld [vmem:[%s3 + $0x638] sm:$0xff]
  %v1118 = vld [vmem:[%s3 + $0x640] sm:$0xff]
  %v1119 = vld [vmem:[%s3 + $0x648] sm:$0xff]
  %v1120 = vld [vmem:[%s3 + $0x650] sm:$0xff]
  %v1121 = vld [vmem:[%s3 + $0x658] sm:$0xff]
  %v1122 = vld [vmem:[%s3 + $0x660] sm:$0xff]
  %v1123 = vld [vmem:[%s3 + $0x668] sm:$0xff]
  %v1124 = vld [vmem:[%s3 + $0x670] sm:$0xff]
  %v1125 = vld [vmem:[%s3 + $0x678] sm:$0xff]
  %v1126 = vld [vmem:[%s3 + $0x680] sm:$0xff]
  %v1127 = vld [vmem:[%s3 + $0x688] sm:$0xff]
  %v1128 = vld [vmem:[%s3 + $0x690] sm:$0xff]
  %v1129 = vld [vmem:[%s3 + $0x698] sm:$0xff]
  %v1130 = vld [vmem:[%s3 + $0x6a0] sm:$0xff]
  %v1131 = vld [vmem:[%s3 + $0x6a8] sm:$0xff]
  %v1132 = vld [vmem:[%s3 + $0x6b0] sm:$0xff]
  %v1133 = vld [vmem:[%s3 + $0x6b8] sm:$0xff]
  %v1134 = vld [vmem:[%s3 + $0x6c0] sm:$0xff]
  %v1135 = vld [vmem:[%s3 + $0x6c8] sm:$0xff]
  %v1136 = vld [vmem:[%s3 + $0x6d0] sm:$0xff]
  %v1137 = vld [vmem:[%s3 + $0x6d8] sm:$0xff]
  %v1138 = vld [vmem:[%s3 + $0x6e0] sm:$0xff]
  %v1139 = vld [vmem:[%s3 + $0x6e8] sm:$0xff]
  %v1140 = vld [vmem:[%s3 + $0x6f0] sm:$0xff]
  %v1141 = vld [vmem:[%s3 + $0x6f8] sm:$0xff]
  %v1142 = vld [vmem:[%s3 + $0x700] sm:$0xff]
  %v1143 = vld [vmem:[%s3 + $0x708] sm:$0xff]
  %v1144 = vld [vmem:[%s3 + $0x710] sm:$0xff]
  %v1145 = vld [vmem:[%s3 + $0x718] sm:$0xff]
  %v1146 = vld [vmem:[%s3 + $0x720] sm:$0xff]
  %v1147 = vld [vmem:[%s3 + $0x728] sm:$0xff]
  %v1148 = vld [vmem:[%s3 + $0x730] sm:$0xff]
  %v1149 = vld [vmem:[%s3 + $0x738] sm:$0xff]
  %v1150 = vld [vmem:[%s3 + $0x740] sm:$0xff]
  %v1151 = vld [vmem:[%s3 + $0x748] sm:$0xff]
  %v1152 = vld [vmem:[%s3 + $0x750] sm:$0xff]
  %v1153 = vld [vmem:[%s3 + $0x758] sm:$0xff]
  %v1154 = vld [vmem:[%s3 + $0x760] sm:$0xff]
  %v1155 = vld [vmem:[%s3 + $0x768] sm:$0xff]
  %v1156 = vld [vmem:[%s3 + $0x770] sm:$0xff]
  %v1157 = vld [vmem:[%s3 + $0x778] sm:$0xff]
  %v1158 = vld [vmem:[%s3 + $0x780] sm:$0xff]
  %v1159 = vld [vmem:[%s3 + $0x788] sm:$0xff]
  %v1160 = vld [vmem:[%s3 + $0x790] sm:$0xff]
  %v1161 = vld [vmem:[%s3 + $0x798] sm:$0xff]
  %v1162 = vld [vmem:[%s3 + $0x7a0] sm:$0xff]
  %v1163 = vld [vmem:[%s3 + $0x7a8] sm:$0xff]
  %v1164 = vld [vmem:[%s3 + $0x7b0] sm:$0xff]
  %v1165 = vld [vmem:[%s3 + $0x7b8] sm:$0xff]
  %v1166 = vld [vmem:[%s3 + $0x7c0] sm:$0xff]
  %v1167 = vld [vmem:[%s3 + $0x7c8] sm:$0xff]
  %v1168 = vld [vmem:[%s3 + $0x7d0] sm:$0xff]
  %v1169 = vld [vmem:[%s3 + $0x7d8] sm:$0xff]
  %v1170 = vld [vmem:[%s3 + $0x7e0] sm:$0xff]
  %v1171 = vld [vmem:[%s3 + $0x7e8] sm:$0xff]
  %v1172 = vld [vmem:[%s3 + $0x7f0] sm:$0xff]
  %v1173 = vld [vmem:[%s3 + $0x7f8] sm:$0xff]
  %v1174 = vld [vmem:[%s3 + $0x800] sm:$0xff]
  %v1175 = vld [vmem:[%s3 + $0x808] sm:$0xff]
  %v1176 = vld [vmem:[%s3 + $0x810] sm:$0xff]
  %v1177 = vld [vmem:[%s3 + $0x818] sm:$0xff]
  %v1178 = vld [vmem:[%s3 + $0x820] sm:$0xff]
  %v1179 = vld [vmem:[%s3 + $0x828] sm:$0xff]
  %v1180 = vld [vmem:[%s3 + $0x830] sm:$0xff]
  %v1181 = vld [vmem:[%s3 + $0x838] sm:$0xff]
  %v1182 = vld [vmem:[%s3 + $0x840] sm:$0xff]
  %v1183 = vld [vmem:[%s3 + $0x848] sm:$0xff]
  %v1184 = vld [vmem:[%s3 + $0x850] sm:$0xff]
  %v1185 = vld [vmem:[%s3 + $0x858] sm:$0xff]
  %v1186 = vld [vmem:[%s3 + $0x860] sm:$0xff]
  %v1187 = vld [vmem:[%s3 + $0x868] sm:$0xff]
  %v1188 = vld [vmem:[%s3 + $0x870] sm:$0xff]
  %v1189 = vld [vmem:[%s3 + $0x878] sm:$0xff]
  %v1190 = vld [vmem:[%s3 + $0x880] sm:$0xff]
  %v1191 = vld [vmem:[%s3 + $0x888] sm:$0xff]
  %v1192 = vld [vmem:[%s3 + $0x890] sm:$0xff]
  %v1193 = vld [vmem:[%s3 + $0x898] sm:$0xff]
  %v1194 = vld [vmem:[%s3 + $0x8a0] sm:$0xff]
  %v1195 = vld [vmem:[%s3 + $0x8a8] sm:$0xff]
  %v1196 = vld [vmem:[%s3 + $0x8b0] sm:$0xff]
  %v1197 = vld [vmem:[%s3 + $0x8b8] sm:$0xff]
  %v1198 = vld [vmem:[%s3 + $0x8c0] sm:$0xff]
  %v1199 = vld [vmem:[%s3 + $0x8c8] sm:$0xff]
  %v1200 = vld [vmem:[%s3 + $0x8d0] sm:$0xff]
  %v1201 = vld [vmem:[%s3 + $0x8d8] sm:$0xff]
  %v1202 = vld [vmem:[%s3 + $0x8e0] sm:$0xff]
  %v1203 = vld [vmem:[%s3 + $0x8e8] sm:$0xff]
  %v1204 = vld [vmem:[%s3 + $0x8f0] sm:$0xff]
  %v1205 = vld [vmem:[%s3 + $0x8f8] sm:$0xff]
  %v1206 = vld [vmem:[%s3 + $0x900] sm:$0xff]
  %v1207 = vld [vmem:[%s3 + $0x908] sm:$0xff]
  %v1208 = vld [vmem:[%s3 + $0x910] sm:$0xff]
  %v1209 = vld [vmem:[%s3 + $0x918] sm:$0xff]
  %v1210 = vld [vmem:[%s3 + $0x920] sm:$0xff]
  %v1211 = vld [vmem:[%s3 + $0x928] sm:$0xff]
  %v1212 = vld [vmem:[%s3 + $0x930] sm:$0xff]
  %v1213 = vld [vmem:[%s3 + $0x938] sm:$0xff]
  %v1214 = vld [vmem:[%s3 + $0x940] sm:$0xff]
  %v1215 = vld [vmem:[%s3 + $0x948] sm:$0xff]
  %v1216 = vld [vmem:[%s3 + $0x950] sm:$0xff]
  %v1217 = vld [vmem:[%s3 + $0x958] sm:$0xff]
  %v1218 = vld [vmem:[%s3 + $0x960] sm:$0xff]
  %v1219 = vld [vmem:[%s3 + $0x968] sm:$0xff]
  %v1220 = vld [vmem:[%s3 + $0x970] sm:$0xff]
  %v1221 = vld [vmem:[%s3 + $0x978] sm:$0xff]
  %v1222 = vld [vmem:[%s3 + $0x980] sm:$0xff]
  %v1223 = vld [vmem:[%s3 + $0x988] sm:$0xff]
  %v1224 = vld [vmem:[%s3 + $0x990] sm:$0xff]
  %v1225 = vld [vmem:[%s3 + $0x998] sm:$0xff]
  %v1226 = vld [vmem:[%s3 + $0x9a0] sm:$0xff]
  %v1227 = vld [vmem:[%s3 + $0x9a8] sm:$0xff]
  %v1228 = vld [vmem:[%s3 + $0x9b0] sm:$0xff]
  %v1229 = vld [vmem:[%s3 + $0x9b8] sm:$0xff]
  %v1230 = vld [vmem:[%s3 + $0x9c0] sm:$0xff]
  %v1231 = vld [vmem:[%s3 + $0x9c8] sm:$0xff]
  %v1232 = vld [vmem:[%s3 + $0x9d0] sm:$0xff]
  %v1233 = vld [vmem:[%s3 + $0x9d8] sm:$0xff]
  %v1234 = vld [vmem:[%s3 + $0x9e0] sm:$0xff]
  %v1235 = vld [vmem:[%s3 + $0x9e8] sm:$0xff]
  %v1236 = vld [vmem:[%s3 + $0x9f0] sm:$0xff]
  %v1237 = vld [vmem:[%s3 + $0x9f8] sm:$0xff]
  %v1238 = vld [vmem:[%s3 + $0xa00] sm:$0xff]
  %v1239 = vld [vmem:[%s3 + $0xa08] sm:$0xff]
  %v1240 = vld [vmem:[%s3 + $0xa10] sm:$0xff]
  %v1241 = vld [vmem:[%s3 + $0xa18] sm:$0xff]
  %v1242 = vld [vmem:[%s3 + $0xa20] sm:$0xff]
  %v1243 = vld [vmem:[%s3 + $0xa28] sm:$0xff]
  %v1244 = vld [vmem:[%s3 + $0xa30] sm:$0xff]
  %v1245 = vld [vmem:[%s3 + $0xa38] sm:$0xff]
  %v1246 = vld [vmem:[%s3 + $0xa40] sm:$0xff]
  %v1247 = vld [vmem:[%s3 + $0xa48] sm:$0xff]
  %v1248 = vld [vmem:[%s3 + $0xa50] sm:$0xff]
  %v1249 = vld [vmem:[%s3 + $0xa58] sm:$0xff]
  %v1250 = vld [vmem:[%s3 + $0xa60] sm:$0xff]
  %v1251 = vld [vmem:[%s3 + $0xa68] sm:$0xff]
  %v1252 = vld [vmem:[%s3 + $0xa70] sm:$0xff]
  %v1253 = vld [vmem:[%s3 + $0xa78] sm:$0xff]
  %v1254 = vld [vmem:[%s3 + $0xa80] sm:$0xff]
  %v1255 = vld [vmem:[%s3 + $0xa88] sm:$0xff]
  %v1256 = vld [vmem:[%s3 + $0xa90] sm:$0xff]
  %v1257 = vld [vmem:[%s3 + $0xa98] sm:$0xff]
  %v1258 = vld [vmem:[%s3 + $0xaa0] sm:$0xff]
  %v1259 = vld [vmem:[%s3 + $0xaa8] sm:$0xff]
  %v1260 = vld [vmem:[%s3 + $0xab0] sm:$0xff]
  %v1261 = vld [vmem:[%s3 + $0xab8] sm:$0xff]
  %v1262 = vld [vmem:[%s3 + $0xac0] sm:$0xff]
  %v1263 = vld [vmem:[%s3 + $0xac8] sm:$0xff]
  %v1264 = vld [vmem:[%s3 + $0xad0] sm:$0xff]
  %v1265 = vld [vmem:[%s3 + $0xad8] sm:$0xff]
  %v1266 = vld [vmem:[%s3 + $0xae0] sm:$0xff]
  %v1267 = vld [vmem:[%s3 + $0xae8] sm:$0xff]
  %v1268 = vld [vmem:[%s3 + $0xaf0] sm:$0xff]
  %v1269 = vld [vmem:[%s3 + $0xaf8] sm:$0xff]
  %v1270 = vld [vmem:[%s3 + $0xb00] sm:$0xff]
  %v1271 = vld [vmem:[%s3 + $0xb08] sm:$0xff]
  %v1272 = vld [vmem:[%s3 + $0xb10] sm:$0xff]
  %v1273 = vld [vmem:[%s3 + $0xb18] sm:$0xff]
  %v1274 = vld [vmem:[%s3 + $0xb20] sm:$0xff]
  %v1275 = vld [vmem:[%s3 + $0xb28] sm:$0xff]
  %v1276 = vld [vmem:[%s3 + $0xb30] sm:$0xff]
  %v1277 = vld [vmem:[%s3 + $0xb38] sm:$0xff]
  %v1278 = vld [vmem:[%s3 + $0xb40] sm:$0xff]
  %v1279 = vld [vmem:[%s3 + $0xb48] sm:$0xff]
  %v1280 = vld [vmem:[%s3 + $0xb50] sm:$0xff]
  %v1281 = vld [vmem:[%s3 + $0xb58] sm:$0xff]
  %v1282 = vld [vmem:[%s3 + $0xb60] sm:$0xff]
  %v1283 = vld [vmem:[%s3 + $0xb68] sm:$0xff]
  %v1284 = vld [vmem:[%s3 + $0xb70] sm:$0xff]
  %v1285 = vld [vmem:[%s3 + $0xb78] sm:$0xff]
  %v1286 = vld [vmem:[%s3 + $0xb80] sm:$0xff]
  %v1287 = vld [vmem:[%s3 + $0xb88] sm:$0xff]
  %v1288 = vld [vmem:[%s3 + $0xb90] sm:$0xff]
  %v1289 = vld [vmem:[%s3 + $0xb98] sm:$0xff]
  %v1290 = vld [vmem:[%s3 + $0xba0] sm:$0xff]
  %v1291 = vld [vmem:[%s3 + $0xba8] sm:$0xff]
  %v1292 = vld [vmem:[%s3 + $0xbb0] sm:$0xff]
  %v1293 = vld [vmem:[%s3 + $0xbb8] sm:$0xff]
  %v1294 = vld [vmem:[%s3 + $0xbc0] sm:$0xff]
  %v1295 = vld [vmem:[%s3 + $0xbc8] sm:$0xff]
  %v1296 = vld [vmem:[%s3 + $0xbd0] sm:$0xff]
  %v1297 = vld [vmem:[%s3 + $0xbd8] sm:$0xff]
  %v1298 = vld [vmem:[%s3 + $0xbe0] sm:$0xff]
  %v1299 = vld [vmem:[%s3 + $0xbe8] sm:$0xff]
  %v1300 = vld [vmem:[%s3 + $0xbf0] sm:$0xff]
  %v1301 = vld [vmem:[%s3 + $0xbf8] sm:$0xff]
  %v1302 = vld [vmem:[%s3 + $0xc00] sm:$0xff]
  %v1303 = vld [vmem:[%s3 + $0xc08] sm:$0xff]
  %v1304 = vld [vmem:[%s3 + $0xc10] sm:$0xff]
  %v1305 = vld [vmem:[%s3 + $0xc18] sm:$0xff]
  %v1306 = vld [vmem:[%s3 + $0xc20] sm:$0xff]
  %v1307 = vld [vmem:[%s3 + $0xc28] sm:$0xff]
  %v1308 = vld [vmem:[%s3 + $0xc30] sm:$0xff]
  %v1309 = vld [vmem:[%s3 + $0xc38] sm:$0xff]
  %v1310 = vld [vmem:[%s3 + $0xc40] sm:$0xff]
  %v1311 = vld [vmem:[%s3 + $0xc48] sm:$0xff]
  %v1312 = vld [vmem:[%s3 + $0xc50] sm:$0xff]
  %v1313 = vld [vmem:[%s3 + $0xc58] sm:$0xff]
  %v1314 = vld [vmem:[%s3 + $0xc60] sm:$0xff]
  %v1315 = vld [vmem:[%s3 + $0xc68] sm:$0xff]
  %v1316 = vld [vmem:[%s3 + $0xc70] sm:$0xff]
  %v1317 = vld [vmem:[%s3 + $0xc78] sm:$0xff]
  %v1318 = vld [vmem:[%s3 + $0xc80] sm:$0xff]
  %v1319 = vld [vmem:[%s3 + $0xc88] sm:$0xff]
  %v1320 = vld [vmem:[%s3 + $0xc90] sm:$0xff]
  %v1321 = vld [vmem:[%s3 + $0xc98] sm:$0xff]
  %v1322 = vld [vmem:[%s3 + $0xca0] sm:$0xff]
  %v1323 = vld [vmem:[%s3 + $0xca8] sm:$0xff]
  %v1324 = vld [vmem:[%s3 + $0xcb0] sm:$0xff]
  %v1325 = vld [vmem:[%s3 + $0xcb8] sm:$0xff]
  %v1326 = vld [vmem:[%s3 + $0xcc0] sm:$0xff]
  %v1327 = vld [vmem:[%s3 + $0xcc8] sm:$0xff]
  %v1328 = vld [vmem:[%s3 + $0xcd0] sm:$0xff]
  %v1329 = vld [vmem:[%s3 + $0xcd8] sm:$0xff]
  %v1330 = vld [vmem:[%s3 + $0xce0] sm:$0xff]
  %v1331 = vld [vmem:[%s3 + $0xce8] sm:$0xff]
  %v1332 = vld [vmem:[%s3 + $0xcf0] sm:$0xff]
  %v1333 = vld [vmem:[%s3 + $0xcf8] sm:$0xff]
  %v1334 = vld [vmem:[%s3 + $0xd00] sm:$0xff]
  %v1335 = vld [vmem:[%s3 + $0xd08] sm:$0xff]
  %v1336 = vld [vmem:[%s3 + $0xd10] sm:$0xff]
  %v1337 = vld [vmem:[%s3 + $0xd18] sm:$0xff]
  %v1338 = vld [vmem:[%s3 + $0xd20] sm:$0xff]
  %v1339 = vld [vmem:[%s3 + $0xd28] sm:$0xff]
  %v1340 = vld [vmem:[%s3 + $0xd30] sm:$0xff]
  %v1341 = vld [vmem:[%s3 + $0xd38] sm:$0xff]
  %v1342 = vld [vmem:[%s3 + $0xd40] sm:$0xff]
  %v1343 = vld [vmem:[%s3 + $0xd48] sm:$0xff]
  %v1344 = vld [vmem:[%s3 + $0xd50] sm:$0xff]
  %v1345 = vld [vmem:[%s3 + $0xd58] sm:$0xff]
  %v1346 = vld [vmem:[%s3 + $0xd60] sm:$0xff]
  %v1347 = vld [vmem:[%s3 + $0xd68] sm:$0xff]
  %v1348 = vld [vmem:[%s3 + $0xd70] sm:$0xff]
  %v1349 = vld [vmem:[%s3 + $0xd78] sm:$0xff]
  %v1350 = vld [vmem:[%s3 + $0xd80] sm:$0xff]
  %v1351 = vld [vmem:[%s3 + $0xd88] sm:$0xff]
  %v1352 = vld [vmem:[%s3 + $0xd90] sm:$0xff]
  %v1353 = vld [vmem:[%s3 + $0xd98] sm:$0xff]
  %v1354 = vld [vmem:[%s3 + $0xda0] sm:$0xff]
  %v1355 = vld [vmem:[%s3 + $0xda8] sm:$0xff]
  %v1356 = vld [vmem:[%s3 + $0xdb0] sm:$0xff]
  %v1357 = vld [vmem:[%s3 + $0xdb8] sm:$0xff]
  %v1358 = vld [vmem:[%s3 + $0xdc0] sm:$0xff]
  %v1359 = vld [vmem:[%s3 + $0xdc8] sm:$0xff]
  %v1360 = vld [vmem:[%s3 + $0xdd0] sm:$0xff]
  %v1361 = vld [vmem:[%s3 + $0xdd8] sm:$0xff]
  %v1362 = vld [vmem:[%s3 + $0xde0] sm:$0xff]
  %v1363 = vld [vmem:[%s3 + $0xde8] sm:$0xff]
  %v1364 = vld [vmem:[%s3 + $0xdf0] sm:$0xff]
  %v1365 = vld [vmem:[%s3 + $0xdf8] sm:$0xff]
  %v1366 = vld [vmem:[%s3 + $0xe00] sm:$0xff]
  %v1367 = vld [vmem:[%s3 + $0xe08] sm:$0xff]
  %v1368 = vld [vmem:[%s3 + $0xe10] sm:$0xff]
  %v1369 = vld [vmem:[%s3 + $0xe18] sm:$0xff]
  %v1370 = vld [vmem:[%s3 + $0xe20] sm:$0xff]
  %v1371 = vld [vmem:[%s3 + $0xe28] sm:$0xff]
  %v1372 = vld [vmem:[%s3 + $0xe30] sm:$0xff]
  %v1373 = vld [vmem:[%s3 + $0xe38] sm:$0xff]
  %v1374 = vld [vmem:[%s3 + $0xe40] sm:$0xff]
  %v1375 = vld [vmem:[%s3 + $0xe48] sm:$0xff]
  %v1376 = vld [vmem:[%s3 + $0xe50] sm:$0xff]
  %v1377 = vld [vmem:[%s3 + $0xe58] sm:$0xff]
  %v1378 = vld [vmem:[%s3 + $0xe60] sm:$0xff]
  %v1379 = vld [vmem:[%s3 + $0xe68] sm:$0xff]
  %v1380 = vld [vmem:[%s3 + $0xe70] sm:$0xff]
  %v1381 = vld [vmem:[%s3 + $0xe78] sm:$0xff]
  %v1382 = vld [vmem:[%s3 + $0xe80] sm:$0xff]
  %v1383 = vld [vmem:[%s3 + $0xe88] sm:$0xff]
  %v1384 = vld [vmem:[%s3 + $0xe90] sm:$0xff]
  %v1385 = vld [vmem:[%s3 + $0xe98] sm:$0xff]
  %v1386 = vld [vmem:[%s3 + $0xea0] sm:$0xff]
  %v1387 = vld [vmem:[%s3 + $0xea8] sm:$0xff]
  %v1388 = vld [vmem:[%s3 + $0xeb0] sm:$0xff]
  %v1389 = vld [vmem:[%s3 + $0xeb8] sm:$0xff]
  %v1390 = vld [vmem:[%s3 + $0xec0] sm:$0xff]
  %v1391 = vld [vmem:[%s3 + $0xec8] sm:$0xff]
  %v1392 = vld [vmem:[%s3 + $0xed0] sm:$0xff]
  %v1393 = vld [vmem:[%s3 + $0xed8] sm:$0xff]
  %v1394 = vld [vmem:[%s3 + $0xee0] sm:$0xff]
  %v1395 = vld [vmem:[%s3 + $0xee8] sm:$0xff]
  %v1396 = vld [vmem:[%s3 + $0xef0] sm:$0xff]
  %v1397 = vld [vmem:[%s3 + $0xef8] sm:$0xff]
  %v1398 = vld [vmem:[%s3 + $0xf00] sm:$0xff]
  %v1399 = vld [vmem:[%s3 + $0xf08] sm:$0xff]
  %v1400 = vld [vmem:[%s3 + $0xf10] sm:$0xff]
  %v1401 = vld [vmem:[%s3 + $0xf18] sm:$0xff]
  %v1402 = vld [vmem:[%s3 + $0xf20] sm:$0xff]
  %v1403 = vld [vmem:[%s3 + $0xf28] sm:$0xff]
  %v1404 = vld [vmem:[%s3 + $0xf30] sm:$0xff]
  %v1405 = vld [vmem:[%s3 + $0xf38] sm:$0xff]
  %v1406 = vld [vmem:[%s3 + $0xf40] sm:$0xff]
  %v1407 = vld [vmem:[%s3 + $0xf48] sm:$0xff]
  %v1408 = vld [vmem:[%s3 + $0xf50] sm:$0xff]
  %v1409 = vld [vmem:[%s3 + $0xf58] sm:$0xff]
  %v1410 = vld [vmem:[%s3 + $0xf60] sm:$0xff]
  %v1411 = vld [vmem:[%s3 + $0xf68] sm:$0xff]
  %v1412 = vld [vmem:[%s3 + $0xf70] sm:$0xff]
  %v1413 = vld [vmem:[%s3 + $0xf78] sm:$0xff]
  %v1414 = vld [vmem:[%s3 + $0xf80] sm:$0xff]
  %v1415 = vld [vmem:[%s3 + $0xf88] sm:$0xff]
  %v1416 = vld [vmem:[%s3 + $0xf90] sm:$0xff]
  %v1417 = vld [vmem:[%s3 + $0xf98] sm:$0xff]
  %v1418 = vld [vmem:[%s3 + $0xfa0] sm:$0xff]
  %v1419 = vld [vmem:[%s3 + $0xfa8] sm:$0xff]
  %v1420 = vld [vmem:[%s3 + $0xfb0] sm:$0xff]
  %v1421 = vld [vmem:[%s3 + $0xfb8] sm:$0xff]
  %v1422 = vld [vmem:[%s3 + $0xfc0] sm:$0xff]
  %v1423 = vld [vmem:[%s3 + $0xfc8] sm:$0xff]
  %v1424 = vld [vmem:[%s3 + $0xfd0] sm:$0xff]
  %v1425 = vld [vmem:[%s3 + $0xfd8] sm:$0xff]
  %v1426 = vld [vmem:[%s3 + $0xfe0] sm:$0xff]
  %v1427 = vld [vmem:[%s3 + $0xfe8] sm:$0xff]
  %v1428 = vld [vmem:[%s3 + $0xff0] sm:$0xff]
  %v1429 = vld [vmem:[%s3 + $0xff8] sm:$0xff]
  %v1430 = vld [vmem:[%s3 + $0x1000] sm:$0xff]
  %v1431 = vld [vmem:[%s3 + $0x1008] sm:$0xff]
  %v1432 = vld [vmem:[%s3 + $0x1010] sm:$0xff]
  %v1433 = vld [vmem:[%s3 + $0x1018] sm:$0xff]
  %v1434 = vld [vmem:[%s3 + $0x1020] sm:$0xff]
  %v1435 = vld [vmem:[%s3 + $0x1028] sm:$0xff]
  %v1436 = vld [vmem:[%s3 + $0x1030] sm:$0xff]
  %v1437 = vld [vmem:[%s3 + $0x1038] sm:$0xff]
  %v1438 = vld [vmem:[%s3 + $0x1040] sm:$0xff]
  %v1439 = vld [vmem:[%s3 + $0x1048] sm:$0xff]
  %v1440 = vld [vmem:[%s3 + $0x1050] sm:$0xff]
  %v1441 = vld [vmem:[%s3 + $0x1058] sm:$0xff]
  %v1442 = vld [vmem:[%s3 + $0x1060] sm:$0xff]
  %v1443 = vld [vmem:[%s3 + $0x1068] sm:$0xff]
  %v1444 = vld [vmem:[%s3 + $0x1070] sm:$0xff]
  %v1445 = vld [vmem:[%s3 + $0x1078] sm:$0xff]
  %v1446 = vld [vmem:[%s3 + $0x1080] sm:$0xff]
  %v1447 = vld [vmem:[%s3 + $0x1088] sm:$0xff]
  %v1448 = vld [vmem:[%s3 + $0x1090] sm:$0xff]
  %v1449 = vld [vmem:[%s3 + $0x1098] sm:$0xff]
  %v1450 = vld [vmem:[%s3 + $0x10a0] sm:$0xff]
  %v1451 = vld [vmem:[%s3 + $0x10a8] sm:$0xff]
  %v1452 = vld [vmem:[%s3 + $0x10b0] sm:$0xff]
  %v1453 = vld [vmem:[%s3 + $0x10b8] sm:$0xff]
  %v1454 = vld [vmem:[%s3 + $0x10c0] sm:$0xff]
  %v1455 = vld [vmem:[%s3 + $0x10c8] sm:$0xff]
  %v1456 = vld [vmem:[%s3 + $0x10d0] sm:$0xff]
  %v1457 = vld [vmem:[%s3 + $0x10d8] sm:$0xff]
  %v1458 = vld [vmem:[%s3 + $0x10e0] sm:$0xff]
  %v1459 = vld [vmem:[%s3 + $0x10e8] sm:$0xff]
  %v1460 = vld [vmem:[%s3 + $0x10f0] sm:$0xff]
  %v1461 = vld [vmem:[%s3 + $0x10f8] sm:$0xff]
  %v1462 = vld [vmem:[%s3 + $0x1100] sm:$0xff]
  %v1463 = vld [vmem:[%s3 + $0x1108] sm:$0xff]
  %v1464 = vld [vmem:[%s3 + $0x1110] sm:$0xff]
  %v1465 = vld [vmem:[%s3 + $0x1118] sm:$0xff]
  %v1466 = vld [vmem:[%s3 + $0x1120] sm:$0xff]
  %v1467 = vld [vmem:[%s3 + $0x1128] sm:$0xff]
  %v1468 = vld [vmem:[%s3 + $0x1130] sm:$0xff]
  %v1469 = vld [vmem:[%s3 + $0x1138] sm:$0xff]
  %v1470 = vld [vmem:[%s3 + $0x1140] sm:$0xff]
  %v1471 = vld [vmem:[%s3 + $0x1148] sm:$0xff]
  %v1472 = vld [vmem:[%s3 + $0x1150] sm:$0xff]
  %v1473 = vld [vmem:[%s3 + $0x1158] sm:$0xff]
  %v1474 = vld [vmem:[%s3 + $0x1160] sm:$0xff]
  %v1475 = vld [vmem:[%s3 + $0x1168] sm:$0xff]
  %v1476 = vld [vmem:[%s3 + $0x1170] sm:$0xff]
  %v1477 = vld [vmem:[%s3 + $0x1178] sm:$0xff]
  %v1478 = vld [vmem:[%s3 + $0x1180] sm:$0xff]
  %v1479 = vld [vmem:[%s3 + $0x1188] sm:$0xff]
  %v1480 = vld [vmem:[%s3 + $0x1190] sm:$0xff]
  %v1481 = vld [vmem:[%s3 + $0x1198] sm:$0xff]
  %v1482 = vld [vmem:[%s3 + $0x11a0] sm:$0xff]
  %v1483 = vld [vmem:[%s3 + $0x11a8] sm:$0xff]
  %v1484 = vld [vmem:[%s3 + $0x11b0] sm:$0xff]
  %v1485 = vld [vmem:[%s3 + $0x11b8] sm:$0xff]
  %v1486 = vld [vmem:[%s3 + $0x11c0] sm:$0xff]
  %v1487 = vld [vmem:[%s3 + $0x11c8] sm:$0xff]
  %v1488 = vld [vmem:[%s3 + $0x11d0] sm:$0xff]
  %v1489 = vld [vmem:[%s3 + $0x11d8] sm:$0xff]
  %v1490 = vld [vmem:[%s3 + $0x11e0] sm:$0xff]
  %v1491 = vld [vmem:[%s3 + $0x11e8] sm:$0xff]
  %v1492 = vld [vmem:[%s3 + $0x11f0] sm:$0xff]
  %v1493 = vld [vmem:[%s3 + $0x11f8] sm:$0xff]
  %v1494 = vld [vmem:[%s3 + $0x1200] sm:$0xff]
  %v1495 = vld [vmem:[%s3 + $0x1208] sm:$0xff]
  %v1496 = vld [vmem:[%s3 + $0x1210] sm:$0xff]
  %v1497 = vld [vmem:[%s3 + $0x1218] sm:$0xff]
  %v1498 = vld [vmem:[%s3 + $0x1220] sm:$0xff]
  %v1499 = vld [vmem:[%s3 + $0x1228] sm:$0xff]
  %v1500 = vld [vmem:[%s3 + $0x1230] sm:$0xff]
  %v1501 = vld [vmem:[%s3 + $0x1238] sm:$0xff]
  %v1502 = vld [vmem:[%s3 + $0x1240] sm:$0xff]
  %v1503 = vld [vmem:[%s3 + $0x1248] sm:$0xff]
  %v1504 = vld [vmem:[%s3 + $0x1250] sm:$0xff]
  %v1505 = vld [vmem:[%s3 + $0x1258] sm:$0xff]
  %v1506 = vld [vmem:[%s3 + $0x1260] sm:$0xff]
  %v1507 = vld [vmem:[%s3 + $0x1268] sm:$0xff]
  %v1508 = vld [vmem:[%s3 + $0x1270] sm:$0xff]
  %v1509 = vld [vmem:[%s3 + $0x1278] sm:$0xff]
  %v1510 = vld [vmem:[%s3 + $0x1280] sm:$0xff]
  %v1511 = vld [vmem:[%s3 + $0x1288] sm:$0xff]
  %v1512 = vld [vmem:[%s3 + $0x1290] sm:$0xff]
  %v1513 = vld [vmem:[%s3 + $0x1298] sm:$0xff]
  %v1514 = vld [vmem:[%s3 + $0x12a0] sm:$0xff]
  %v1515 = vld [vmem:[%s3 + $0x12a8] sm:$0xff]
  %v1516 = vld [vmem:[%s3 + $0x12b0] sm:$0xff]
  %v1517 = vld [vmem:[%s3 + $0x12b8] sm:$0xff]
  %v1518 = vld [vmem:[%s3 + $0x12c0] sm:$0xff]
  %v1519 = vld [vmem:[%s3 + $0x12c8] sm:$0xff]
  %v1520 = vld [vmem:[%s3 + $0x12d0] sm:$0xff]
  %v1521 = vld [vmem:[%s3 + $0x12d8] sm:$0xff]
  %v1522 = vld [vmem:[%s3 + $0x12e0] sm:$0xff]
  %v1523 = vld [vmem:[%s3 + $0x12e8] sm:$0xff]
  %v1524 = vld [vmem:[%s3 + $0x12f0] sm:$0xff]
  %v1525 = vld [vmem:[%s3 + $0x12f8] sm:$0xff]
  %v1526 = vld [vmem:[%s3 + $0x1300] sm:$0xff]
  %v1527 = vld [vmem:[%s3 + $0x1308] sm:$0xff]
  %v1528 = vld [vmem:[%s3 + $0x1310] sm:$0xff]
  %v1529 = vld [vmem:[%s3 + $0x1318] sm:$0xff]
  %v1530 = vld [vmem:[%s3 + $0x1320] sm:$0xff]
  %v1531 = vld [vmem:[%s3 + $0x1328] sm:$0xff]
  %v1532 = vld [vmem:[%s3 + $0x1330] sm:$0xff]
  %v1533 = vld [vmem:[%s3 + $0x1338] sm:$0xff]
  %v1534 = vld [vmem:[%s3 + $0x1340] sm:$0xff]
  %v1535 = vld [vmem:[%s3 + $0x1348] sm:$0xff]
  %v1536 = vld [vmem:[%s3 + $0x1350] sm:$0xff]
  %v1537 = vld [vmem:[%s3 + $0x1358] sm:$0xff]
  %v1538 = vld [vmem:[%s3 + $0x1360] sm:$0xff]
  %v1539 = vld [vmem:[%s3 + $0x1368] sm:$0xff]
  %v1540 = vld [vmem:[%s3 + $0x1370] sm:$0xff]
  %v1541 = vld [vmem:[%s3 + $0x1378] sm:$0xff]
  %v1542 = vld [vmem:[%s3 + $0x1380] sm:$0xff]
  %v1543 = vld [vmem:[%s3 + $0x1388] sm:$0xff]
  %v1544 = vld [vmem:[%s3 + $0x1390] sm:$0xff]
  %v1545 = vld [vmem:[%s3 + $0x1398] sm:$0xff]
  %v1546 = vld [vmem:[%s3 + $0x13a0] sm:$0xff]
  %v1547 = vld [vmem:[%s3 + $0x13a8] sm:$0xff]
  %v1548 = vld [vmem:[%s3 + $0x13b0] sm:$0xff]
  %v1549 = vld [vmem:[%s3 + $0x13b8] sm:$0xff]
  %v1550 = vld [vmem:[%s3 + $0x13c0] sm:$0xff]
  %v1551 = vld [vmem:[%s3 + $0x13c8] sm:$0xff]
  %v1552 = vld [vmem:[%s3 + $0x13d0] sm:$0xff]
  %v1553 = vld [vmem:[%s3 + $0x13d8] sm:$0xff]
  %v1554 = vld [vmem:[%s3 + $0x13e0] sm:$0xff]
  %v1555 = vld [vmem:[%s3 + $0x13e8] sm:$0xff]
  %v1556 = vld [vmem:[%s3 + $0x13f0] sm:$0xff]
  %v1557 = vld [vmem:[%s3 + $0x13f8] sm:$0xff]
  %v1558 = vld [vmem:[%s3 + $0x1400] sm:$0xff]
  %v1559 = vld [vmem:[%s3 + $0x1408] sm:$0xff]
  %v1560 = vld [vmem:[%s3 + $0x1410] sm:$0xff]
  %v1561 = vld [vmem:[%s3 + $0x1418] sm:$0xff]
  %v1562 = vld [vmem:[%s3 + $0x1420] sm:$0xff]
  %v1563 = vld [vmem:[%s3 + $0x1428] sm:$0xff]
  %v1564 = vld [vmem:[%s3 + $0x1430] sm:$0xff]
  %v1565 = vld [vmem:[%s3 + $0x1438] sm:$0xff]
  %v1566 = vld [vmem:[%s3 + $0x1440] sm:$0xff]
  %v1567 = vld [vmem:[%s3 + $0x1448] sm:$0xff]
  %v1568 = vld [vmem:[%s3 + $0x1450] sm:$0xff]
  %v1569 = vld [vmem:[%s3 + $0x1458] sm:$0xff]
  %v1570 = vld [vmem:[%s3 + $0x1460] sm:$0xff]
  %v1571 = vld [vmem:[%s3 + $0x1468] sm:$0xff]
  %v1572 = vld [vmem:[%s3 + $0x1470] sm:$0xff]
  %v1573 = vld [vmem:[%s3 + $0x1478] sm:$0xff]
  %v1574 = vld [vmem:[%s3 + $0x1480] sm:$0xff]
  %v1575 = vld [vmem:[%s3 + $0x1488] sm:$0xff]
  %v1576 = vld [vmem:[%s3 + $0x1490] sm:$0xff]
  %v1577 = vld [vmem:[%s3 + $0x1498] sm:$0xff]
  %v1578 = vld [vmem:[%s3 + $0x14a0] sm:$0xff]
  %v1579 = vld [vmem:[%s3 + $0x14a8] sm:$0xff]
  %v1580 = vld [vmem:[%s3 + $0x14b0] sm:$0xff]
  %v1581 = vld [vmem:[%s3 + $0x14b8] sm:$0xff]
  %v1582 = vld [vmem:[%s3 + $0x14c0] sm:$0xff]
  %v1583 = vld [vmem:[%s3 + $0x14c8] sm:$0xff]
  %v1584 = vld [vmem:[%s3 + $0x14d0] sm:$0xff]
  %v1585 = vld [vmem:[%s3 + $0x14d8] sm:$0xff]
  %v1586 = vld [vmem:[%s3 + $0x14e0] sm:$0xff]
  %v1587 = vld [vmem:[%s3 + $0x14e8] sm:$0xff]
  %v1588 = vld [vmem:[%s3 + $0x14f0] sm:$0xff]
  %v1589 = vld [vmem:[%s3 + $0x14f8] sm:$0xff]
  %v1590 = vld [vmem:[%s3 + $0x1500] sm:$0xff]
  %v1591 = vld [vmem:[%s3 + $0x1508] sm:$0xff]
  %v1592 = vld [vmem:[%s3 + $0x1510] sm:$0xff]
  %v1593 = vld [vmem:[%s3 + $0x1518] sm:$0xff]
  %v1594 = vld [vmem:[%s3 + $0x1520] sm:$0xff]
  %v1595 = vld [vmem:[%s3 + $0x1528] sm:$0xff]
  %v1596 = vld [vmem:[%s3 + $0x1530] sm:$0xff]
  %v1597 = vld [vmem:[%s3 + $0x1538] sm:$0xff]
  %v1598 = vld [vmem:[%s3 + $0x1540] sm:$0xff]
  %v1599 = vld [vmem:[%s3 + $0x1548] sm:$0xff]
  %v1600 = vld [vmem:[%s3 + $0x1550] sm:$0xff]
  %v1601 = vld [vmem:[%s3 + $0x1558] sm:$0xff]
  %v1602 = vld [vmem:[%s3 + $0x1560] sm:$0xff]
  %v1603 = vld [vmem:[%s3 + $0x1568] sm:$0xff]
  %v1604 = vld [vmem:[%s3 + $0x1570] sm:$0xff]
  %v1605 = vld [vmem:[%s3 + $0x1578] sm:$0xff]
  %v1606 = vld [vmem:[%s3 + $0x1580] sm:$0xff]
  %v1607 = vld [vmem:[%s3 + $0x1588] sm:$0xff]
  %v1608 = vld [vmem:[%s3 + $0x1590] sm:$0xff]
  %v1609 = vld [vmem:[%s3 + $0x1598] sm:$0xff]
  %v1610 = vld [vmem:[%s3 + $0x15a0] sm:$0xff]
  %v1611 = vld [vmem:[%s3 + $0x15a8] sm:$0xff]
  %v1612 = vld [vmem:[%s3 + $0x15b0] sm:$0xff]
  %v1613 = vld [vmem:[%s3 + $0x15b8] sm:$0xff]
  %v1614 = vld [vmem:[%s3 + $0x15c0] sm:$0xff]
  %v1615 = vld [vmem:[%s3 + $0x15c8] sm:$0xff]
  %v1616 = vld [vmem:[%s3 + $0x15d0] sm:$0xff]
  %v1617 = vld [vmem:[%s3 + $0x15d8] sm:$0xff]
  %v1618 = vld [vmem:[%s3 + $0x15e0] sm:$0xff]
  %v1619 = vld [vmem:[%s3 + $0x15e8] sm:$0xff]
  %v1620 = vld [vmem:[%s3 + $0x15f0] sm:$0xff]
  %v1621 = vld [vmem:[%s3 + $0x15f8] sm:$0xff]
  %v1622 = vld [vmem:[%s3 + $0x1600] sm:$0xff]
  %v1623 = vld [vmem:[%s3 + $0x1608] sm:$0xff]
  %v1624 = vld [vmem:[%s3 + $0x1610] sm:$0xff]
  %v1625 = vld [vmem:[%s3 + $0x1618] sm:$0xff]
  %v1626 = vld [vmem:[%s3 + $0x1620] sm:$0xff]
  %v1627 = vld [vmem:[%s3 + $0x1628] sm:$0xff]
  %v1628 = vld [vmem:[%s3 + $0x1630] sm:$0xff]
  %v1629 = vld [vmem:[%s3 + $0x1638] sm:$0xff]
  %v1630 = vld [vmem:[%s3 + $0x1640] sm:$0xff]
  %v1631 = vld [vmem:[%s3 + $0x1648] sm:$0xff]
  %v1632 = vld [vmem:[%s3 + $0x1650] sm:$0xff]
  %v1633 = vld [vmem:[%s3 + $0x1658] sm:$0xff]
  %v1634 = vld [vmem:[%s3 + $0x1660] sm:$0xff]
  %v1635 = vld [vmem:[%s3 + $0x1668] sm:$0xff]
  %v1636 = vld [vmem:[%s3 + $0x1670] sm:$0xff]
  %v1637 = vld [vmem:[%s3 + $0x1678] sm:$0xff]
  %v1638 = vld [vmem:[%s3 + $0x1680] sm:$0xff]
  %v1639 = vld [vmem:[%s3 + $0x1688] sm:$0xff]
  %v1640 = vld [vmem:[%s3 + $0x1690] sm:$0xff]
  %v1641 = vld [vmem:[%s3 + $0x1698] sm:$0xff]
  %v1642 = vld [vmem:[%s3 + $0x16a0] sm:$0xff]
  %v1643 = vld [vmem:[%s3 + $0x16a8] sm:$0xff]
  %v1644 = vld [vmem:[%s3 + $0x16b0] sm:$0xff]
  %v1645 = vld [vmem:[%s3 + $0x16b8] sm:$0xff]
  %v1646 = vld [vmem:[%s3 + $0x16c0] sm:$0xff]
  %v1647 = vld [vmem:[%s3 + $0x16c8] sm:$0xff]
  %v1648 = vld [vmem:[%s3 + $0x16d0] sm:$0xff]
  %v1649 = vld [vmem:[%s3 + $0x16d8] sm:$0xff]
  %v1650 = vld [vmem:[%s3 + $0x16e0] sm:$0xff]
  %v1651 = vld [vmem:[%s3 + $0x16e8] sm:$0xff]
  %v1652 = vld [vmem:[%s3 + $0x16f0] sm:$0xff]
  %v1653 = vld [vmem:[%s3 + $0x16f8] sm:$0xff]
  %v1654 = vld [vmem:[%s3 + $0x1700] sm:$0xff]
  %v1655 = vld [vmem:[%s3 + $0x1708] sm:$0xff]
  %v1656 = vld [vmem:[%s3 + $0x1710] sm:$0xff]
  %v1657 = vld [vmem:[%s3 + $0x1718] sm:$0xff]
  %v1658 = vld [vmem:[%s3 + $0x1720] sm:$0xff]
  %v1659 = vld [vmem:[%s3 + $0x1728] sm:$0xff]
  %v1660 = vld [vmem:[%s3 + $0x1730] sm:$0xff]
  %v1661 = vld [vmem:[%s3 + $0x1738] sm:$0xff]
  %v1662 = vld [vmem:[%s3 + $0x1740] sm:$0xff]
  %v1663 = vld [vmem:[%s3 + $0x1748] sm:$0xff]
  %v1664 = vld [vmem:[%s3 + $0x1750] sm:$0xff]
  %v1665 = vld [vmem:[%s3 + $0x1758] sm:$0xff]
  %v1666 = vld [vmem:[%s3 + $0x1760] sm:$0xff]
  %v1667 = vld [vmem:[%s3 + $0x1768] sm:$0xff]
  %v1668 = vld [vmem:[%s3 + $0x1770] sm:$0xff]
  %v1669 = vld [vmem:[%s3 + $0x1778] sm:$0xff]
  %v1670 = vld [vmem:[%s3 + $0x1780] sm:$0xff]
  %v1671 = vld [vmem:[%s3 + $0x1788] sm:$0xff]
  %v1672 = vld [vmem:[%s3 + $0x1790] sm:$0xff]
  %v1673 = vld [vmem:[%s3 + $0x1798] sm:$0xff]
  %v1674 = vld [vmem:[%s3 + $0x17a0] sm:$0xff]
  %v1675 = vld [vmem:[%s3 + $0x17a8] sm:$0xff]
  %v1676 = vld [vmem:[%s3 + $0x17b0] sm:$0xff]
  %v1677 = vld [vmem:[%s3 + $0x17b8] sm:$0xff]
  %v1678 = vld [vmem:[%s3 + $0x17c0] sm:$0xff]
  %v1679 = vld [vmem:[%s3 + $0x17c8] sm:$0xff]
  %v1680 = vld [vmem:[%s3 + $0x17d0] sm:$0xff]
  %v1681 = vld [vmem:[%s3 + $0x17d8] sm:$0xff]
  %v1682 = vld [vmem:[%s3 + $0x17e0] sm:$0xff]
  %v1683 = vld [vmem:[%s3 + $0x17e8] sm:$0xff]
  %v1684 = vld [vmem:[%s3 + $0x17f0] sm:$0xff]
  %v1685 = vld [vmem:[%s3 + $0x17f8] sm:$0xff]
  %v1686 = vld [vmem:[%s3 + $0x1800] sm:$0xff]
  %v1687 = vld [vmem:[%s3 + $0x1808] sm:$0xff]
  %v1688 = vld [vmem:[%s3 + $0x1810] sm:$0xff]
  %v1689 = vld [vmem:[%s3 + $0x1818] sm:$0xff]
  %v1690 = vld [vmem:[%s3 + $0x1820] sm:$0xff]
  %v1691 = vld [vmem:[%s3 + $0x1828] sm:$0xff]
  %v1692 = vld [vmem:[%s3 + $0x1830] sm:$0xff]
  %v1693 = vld [vmem:[%s3 + $0x1838] sm:$0xff]
  %v1694 = vld [vmem:[%s3 + $0x1840] sm:$0xff]
  %v1695 = vld [vmem:[%s3 + $0x1848] sm:$0xff]
  %v1696 = vld [vmem:[%s3 + $0x1850] sm:$0xff]
  %v1697 = vld [vmem:[%s3 + $0x1858] sm:$0xff]
  %v1698 = vld [vmem:[%s3 + $0x1860] sm:$0xff]
  %v1699 = vld [vmem:[%s3 + $0x1868] sm:$0xff]
  %v1700 = vld [vmem:[%s3 + $0x1870] sm:$0xff]
  %v1701 = vld [vmem:[%s3 + $0x1878] sm:$0xff]
  %v1702 = vld [vmem:[%s3 + $0x1880] sm:$0xff]
  %v1703 = vld [vmem:[%s3 + $0x1888] sm:$0xff]
  %v1704 = vld [vmem:[%s3 + $0x1890] sm:$0xff]
  %v1705 = vld [vmem:[%s3 + $0x1898] sm:$0xff]
  %v1706 = vld [vmem:[%s3 + $0x18a0] sm:$0xff]
  %v1707 = vld [vmem:[%s3 + $0x18a8] sm:$0xff]
  %v1708 = vld [vmem:[%s3 + $0x18b0] sm:$0xff]
  %v1709 = vld [vmem:[%s3 + $0x18b8] sm:$0xff]
  %v1710 = vld [vmem:[%s3 + $0x18c0] sm:$0xff]
  %v1711 = vld [vmem:[%s3 + $0x18c8] sm:$0xff]
  %v1712 = vld [vmem:[%s3 + $0x18d0] sm:$0xff]
  %v1713 = vld [vmem:[%s3 + $0x18d8] sm:$0xff]
  %v1714 = vld [vmem:[%s3 + $0x18e0] sm:$0xff]
  %v1715 = vld [vmem:[%s3 + $0x18e8] sm:$0xff]
  %v1716 = vld [vmem:[%s3 + $0x18f0] sm:$0xff]
  %v1717 = vld [vmem:[%s3 + $0x18f8] sm:$0xff]
  %v1718 = vld [vmem:[%s3 + $0x1900] sm:$0xff]
  %v1719 = vld [vmem:[%s3 + $0x1908] sm:$0xff]
  %v1720 = vld [vmem:[%s3 + $0x1910] sm:$0xff]
  %v1721 = vld [vmem:[%s3 + $0x1918] sm:$0xff]
  %v1722 = vld [vmem:[%s3 + $0x1920] sm:$0xff]
  %v1723 = vld [vmem:[%s3 + $0x1928] sm:$0xff]
  %v1724 = vld [vmem:[%s3 + $0x1930] sm:$0xff]
  %v1725 = vld [vmem:[%s3 + $0x1938] sm:$0xff]
  %v1726 = vld [vmem:[%s3 + $0x1940] sm:$0xff]
  %v1727 = vld [vmem:[%s3 + $0x1948] sm:$0xff]
  %v1728 = vld [vmem:[%s3 + $0x1950] sm:$0xff]
  %v1729 = vld [vmem:[%s3 + $0x1958] sm:$0xff]
  %v1730 = vld [vmem:[%s3 + $0x1960] sm:$0xff]
  %v1731 = vld [vmem:[%s3 + $0x1968] sm:$0xff]
  %v1732 = vld [vmem:[%s3 + $0x1970] sm:$0xff]
  %v1733 = vld [vmem:[%s3 + $0x1978] sm:$0xff]
  %v1734 = vld [vmem:[%s3 + $0x1980] sm:$0xff]
  %v1735 = vld [vmem:[%s3 + $0x1988] sm:$0xff]
  %v1736 = vld [vmem:[%s3 + $0x1990] sm:$0xff]
  %v1737 = vld [vmem:[%s3 + $0x1998] sm:$0xff]
  %v1738 = vld [vmem:[%s3 + $0x19a0] sm:$0xff]
  %v1739 = vld [vmem:[%s3 + $0x19a8] sm:$0xff]
  %v1740 = vld [vmem:[%s3 + $0x19b0] sm:$0xff]
  %v1741 = vld [vmem:[%s3 + $0x19b8] sm:$0xff]
  %v1742 = vld [vmem:[%s3 + $0x19c0] sm:$0xff]
  %v1743 = vld [vmem:[%s3 + $0x19c8] sm:$0xff]
  %v1744 = vld [vmem:[%s3 + $0x19d0] sm:$0xff]
  %v1745 = vld [vmem:[%s3 + $0x19d8] sm:$0xff]
  %v1746 = vld [vmem:[%s3 + $0x19e0] sm:$0xff]
  %v1747 = vld [vmem:[%s3 + $0x19e8] sm:$0xff]
  %v1748 = vld [vmem:[%s3 + $0x19f0] sm:$0xff]
  %v1749 = vld [vmem:[%s3 + $0x19f8] sm:$0xff]
  %v1750 = vld [vmem:[%s3 + $0x1a00] sm:$0xff]
  %v1751 = vld [vmem:[%s3 + $0x1a08] sm:$0xff]
  %v1752 = vld [vmem:[%s3 + $0x1a10] sm:$0xff]
  %v1753 = vld [vmem:[%s3 + $0x1a18] sm:$0xff]
  %v1754 = vld [vmem:[%s3 + $0x1a20] sm:$0xff]
  %v1755 = vld [vmem:[%s3 + $0x1a28] sm:$0xff]
  %v1756 = vld [vmem:[%s3 + $0x1a30] sm:$0xff]
  %v1757 = vld [vmem:[%s3 + $0x1a38] sm:$0xff]
  %v1758 = vld [vmem:[%s3 + $0x1a40] sm:$0xff]
  %v1759 = vld [vmem:[%s3 + $0x1a48] sm:$0xff]
  %v1760 = vld [vmem:[%s3 + $0x1a50] sm:$0xff]
  %v1761 = vld [vmem:[%s3 + $0x1a58] sm:$0xff]
  %v1762 = vld [vmem:[%s3 + $0x1a60] sm:$0xff]
  %v1763 = vld [vmem:[%s3 + $0x1a68] sm:$0xff]
  %v1764 = vld [vmem:[%s3 + $0x1a70] sm:$0xff]
  %v1765 = vld [vmem:[%s3 + $0x1a78] sm:$0xff]
  %v1766 = vld [vmem:[%s3 + $0x1a80] sm:$0xff]
  %v1767 = vld [vmem:[%s3 + $0x1a88] sm:$0xff]
  %v1768 = vld [vmem:[%s3 + $0x1a90] sm:$0xff]
  %v1769 = vld [vmem:[%s3 + $0x1a98] sm:$0xff]
  %v1770 = vld [vmem:[%s3 + $0x1aa0] sm:$0xff]
  %v1771 = vld [vmem:[%s3 + $0x1aa8] sm:$0xff]
  %v1772 = vld [vmem:[%s3 + $0x1ab0] sm:$0xff]
  %v1773 = vld [vmem:[%s3 + $0x1ab8] sm:$0xff]
  %v1774 = vld [vmem:[%s3 + $0x1ac0] sm:$0xff]
  %v1775 = vld [vmem:[%s3 + $0x1ac8] sm:$0xff]
  %v1776 = vld [vmem:[%s3 + $0x1ad0] sm:$0xff]
  %v1777 = vld [vmem:[%s3 + $0x1ad8] sm:$0xff]
  %v1778 = vld [vmem:[%s3 + $0x1ae0] sm:$0xff]
  %v1779 = vld [vmem:[%s3 + $0x1ae8] sm:$0xff]
  %v1780 = vld [vmem:[%s3 + $0x1af0] sm:$0xff]
  %v1781 = vld [vmem:[%s3 + $0x1af8] sm:$0xff]
  %v1782 = vld [vmem:[%s3 + $0x1b00] sm:$0xff]
  %v1783 = vld [vmem:[%s3 + $0x1b08] sm:$0xff]
  %v1784 = vld [vmem:[%s3 + $0x1b10] sm:$0xff]
  %v1785 = vld [vmem:[%s3 + $0x1b18] sm:$0xff]
  %v1786 = vld [vmem:[%s3 + $0x1b20] sm:$0xff]
  %v1787 = vld [vmem:[%s3 + $0x1b28] sm:$0xff]
  %v1788 = vld [vmem:[%s3 + $0x1b30] sm:$0xff]
  %v1789 = vld [vmem:[%s3 + $0x1b38] sm:$0xff]
  %v1790 = vld [vmem:[%s3 + $0x1b40] sm:$0xff]
  %v1791 = vld [vmem:[%s3 + $0x1b48] sm:$0xff]
  %v1792 = vld [vmem:[%s3 + $0x1b50] sm:$0xff]
  %v1793 = vld [vmem:[%s3 + $0x1b58] sm:$0xff]
  %v1794 = vld [vmem:[%s3 + $0x1b60] sm:$0xff]
  %v1795 = vld [vmem:[%s3 + $0x1b68] sm:$0xff]
  %v1796 = vld [vmem:[%s3 + $0x1b70] sm:$0xff]
  %v1797 = vld [vmem:[%s3 + $0x1b78] sm:$0xff]
  %v1798 = vld [vmem:[%s3 + $0x1b80] sm:$0xff]
  %v1799 = vld [vmem:[%s3 + $0x1b88] sm:$0xff]
  %v1800 = vld [vmem:[%s3 + $0x1b90] sm:$0xff]
  %v1801 = vld [vmem:[%s3 + $0x1b98] sm:$0xff]
  %v1802 = vld [vmem:[%s3 + $0x1ba0] sm:$0xff]
  %v1803 = vld [vmem:[%s3 + $0x1ba8] sm:$0xff]
  %v1804 = vld [vmem:[%s3 + $0x1bb0] sm:$0xff]
  %v1805 = vld [vmem:[%s3 + $0x1bb8] sm:$0xff]
  %v1806 = vld [vmem:[%s3 + $0x1bc0] sm:$0xff]
  %v1807 = vld [vmem:[%s3 + $0x1bc8] sm:$0xff]
  %v1808 = vld [vmem:[%s3 + $0x1bd0] sm:$0xff]
  %v1809 = vld [vmem:[%s3 + $0x1bd8] sm:$0xff]
  %v1810 = vld [vmem:[%s3 + $0x1be0] sm:$0xff]
  %v1811 = vld [vmem:[%s3 + $0x1be8] sm:$0xff]
  %v1812 = vld [vmem:[%s3 + $0x1bf0] sm:$0xff]
  %v1813 = vld [vmem:[%s3 + $0x1bf8] sm:$0xff]
  %v1814 = vld [vmem:[%s3 + $0x1c00] sm:$0xff]
  %v1815 = vld [vmem:[%s3 + $0x1c08] sm:$0xff]
  %v1816 = vld [vmem:[%s3 + $0x1c10] sm:$0xff]
  %v1817 = vld [vmem:[%s3 + $0x1c18] sm:$0xff]
  %v1818 = vld [vmem:[%s3 + $0x1c20] sm:$0xff]
  %v1819 = vld [vmem:[%s3 + $0x1c28] sm:$0xff]
  %v1820 = vld [vmem:[%s3 + $0x1c30] sm:$0xff]
  %v1821 = vld [vmem:[%s3 + $0x1c38] sm:$0xff]
  %v1822 = vld [vmem:[%s3 + $0x1c40] sm:$0xff]
  %v1823 = vld [vmem:[%s3 + $0x1c48] sm:$0xff]
  %v1824 = vld [vmem:[%s3 + $0x1c50] sm:$0xff]
  %v1825 = vld [vmem:[%s3 + $0x1c58] sm:$0xff]
  %v1826 = vld [vmem:[%s3 + $0x1c60] sm:$0xff]
  %v1827 = vld [vmem:[%s3 + $0x1c68] sm:$0xff]
  %v1828 = vld [vmem:[%s3 + $0x1c70] sm:$0xff]
  %v1829 = vld [vmem:[%s3 + $0x1c78] sm:$0xff]
  %v1830 = vld [vmem:[%s3 + $0x1c80] sm:$0xff]
  %v1831 = vld [vmem:[%s3 + $0x1c88] sm:$0xff]
  %v1832 = vld [vmem:[%s3 + $0x1c90] sm:$0xff]
  %v1833 = vld [vmem:[%s3 + $0x1c98] sm:$0xff]
  %v1834 = vld [vmem:[%s3 + $0x1ca0] sm:$0xff]
  %v1835 = vld [vmem:[%s3 + $0x1ca8] sm:$0xff]
  %v1836 = vld [vmem:[%s3 + $0x1cb0] sm:$0xff]
  %v1837 = vld [vmem:[%s3 + $0x1cb8] sm:$0xff]
  %v1838 = vld [vmem:[%s3 + $0x1cc0] sm:$0xff]
  %v1839 = vld [vmem:[%s3 + $0x1cc8] sm:$0xff]
  %v1840 = vld [vmem:[%s3 + $0x1cd0] sm:$0xff]
  %v1841 = vld [vmem:[%s3 + $0x1cd8] sm:$0xff]
  %v1842 = vld [vmem:[%s3 + $0x1ce0] sm:$0xff]
  %v1843 = vld [vmem:[%s3 + $0x1ce8] sm:$0xff]
  %v1844 = vld [vmem:[%s3 + $0x1cf0] sm:$0xff]
  %v1845 = vld [vmem:[%s3 + $0x1cf8] sm:$0xff]
  %v1846 = vld [vmem:[%s3 + $0x1d00] sm:$0xff]
  %v1847 = vld [vmem:[%s3 + $0x1d08] sm:$0xff]
  %v1848 = vld [vmem:[%s3 + $0x1d10] sm:$0xff]
  %v1849 = vld [vmem:[%s3 + $0x1d18] sm:$0xff]
  %v1850 = vld [vmem:[%s3 + $0x1d20] sm:$0xff]
  %v1851 = vld [vmem:[%s3 + $0x1d28] sm:$0xff]
  %v1852 = vld [vmem:[%s3 + $0x1d30] sm:$0xff]
  %v1853 = vld [vmem:[%s3 + $0x1d38] sm:$0xff]
  %v1854 = vld [vmem:[%s3 + $0x1d40] sm:$0xff]
  %v1855 = vld [vmem:[%s3 + $0x1d48] sm:$0xff]
  %v1856 = vld [vmem:[%s3 + $0x1d50] sm:$0xff]
  %v1857 = vld [vmem:[%s3 + $0x1d58] sm:$0xff]
  %v1858 = vld [vmem:[%s3 + $0x1d60] sm:$0xff]
  %v1859 = vld [vmem:[%s3 + $0x1d68] sm:$0xff]
  %v1860 = vld [vmem:[%s3 + $0x1d70] sm:$0xff]
  %v1861 = vld [vmem:[%s3 + $0x1d78] sm:$0xff]
  %v1862 = vld [vmem:[%s3 + $0x1d80] sm:$0xff]
  %v1863 = vld [vmem:[%s3 + $0x1d88] sm:$0xff]
  %v1864 = vld [vmem:[%s3 + $0x1d90] sm:$0xff]
  %v1865 = vld [vmem:[%s3 + $0x1d98] sm:$0xff]
  %v1866 = vld [vmem:[%s3 + $0x1da0] sm:$0xff]
  %v1867 = vld [vmem:[%s3 + $0x1da8] sm:$0xff]
  %v1868 = vld [vmem:[%s3 + $0x1db0] sm:$0xff]
  %v1869 = vld [vmem:[%s3 + $0x1db8] sm:$0xff]
  %v1870 = vld [vmem:[%s3 + $0x1dc0] sm:$0xff]
  %v1871 = vld [vmem:[%s3 + $0x1dc8] sm:$0xff]
  %v1872 = vld [vmem:[%s3 + $0x1dd0] sm:$0xff]
  %v1873 = vld [vmem:[%s3 + $0x1dd8] sm:$0xff]
  %v1874 = vld [vmem:[%s3 + $0x1de0] sm:$0xff]
  %v1875 = vld [vmem:[%s3 + $0x1de8] sm:$0xff]
  %v1876 = vld [vmem:[%s3 + $0x1df0] sm:$0xff]
  %v1877 = vld [vmem:[%s3 + $0x1df8] sm:$0xff]
  %v1878 = vld [vmem:[%s3 + $0x1e00] sm:$0xff]
  %v1879 = vld [vmem:[%s3 + $0x1e08] sm:$0xff]
  %v1880 = vld [vmem:[%s3 + $0x1e10] sm:$0xff]
  %v1881 = vld [vmem:[%s3 + $0x1e18] sm:$0xff]
  %v1882 = vld [vmem:[%s3 + $0x1e20] sm:$0xff]
  %v1883 = vld [vmem:[%s3 + $0x1e28] sm:$0xff]
  %v1884 = vld [vmem:[%s3 + $0x1e30] sm:$0xff]
  %v1885 = vld [vmem:[%s3 + $0x1e38] sm:$0xff]
  %v1886 = vld [vmem:[%s3 + $0x1e40] sm:$0xff]
  %v1887 = vld [vmem:[%s3 + $0x1e48] sm:$0xff]
  %v1888 = vld [vmem:[%s3 + $0x1e50] sm:$0xff]
  %v1889 = vld [vmem:[%s3 + $0x1e58] sm:$0xff]
  %v1890 = vld [vmem:[%s3 + $0x1e60] sm:$0xff]
  %v1891 = vld [vmem:[%s3 + $0x1e68] sm:$0xff]
  %v1892 = vld [vmem:[%s3 + $0x1e70] sm:$0xff]
  %v1893 = vld [vmem:[%s3 + $0x1e78] sm:$0xff]
  %v1894 = vld [vmem:[%s3 + $0x1e80] sm:$0xff]
  %v1895 = vld [vmem:[%s3 + $0x1e88] sm:$0xff]
  %v1896 = vld [vmem:[%s3 + $0x1e90] sm:$0xff]
  %v1897 = vld [vmem:[%s3 + $0x1e98] sm:$0xff]
  %v1898 = vld [vmem:[%s3 + $0x1ea0] sm:$0xff]
  %v1899 = vld [vmem:[%s3 + $0x1ea8] sm:$0xff]
  %v1900 = vld [vmem:[%s3 + $0x1eb0] sm:$0xff]
  %v1901 = vld [vmem:[%s3 + $0x1eb8] sm:$0xff]
  %v1902 = vld [vmem:[%s3 + $0x1ec0] sm:$0xff]
  %v1903 = vld [vmem:[%s3 + $0x1ec8] sm:$0xff]
  %v1904 = vld [vmem:[%s3 + $0x1ed0] sm:$0xff]
  %v1905 = vld [vmem:[%s3 + $0x1ed8] sm:$0xff]
  %v1906 = vld [vmem:[%s3 + $0x1ee0] sm:$0xff]
  %v1907 = vld [vmem:[%s3 + $0x1ee8] sm:$0xff]
  %v1908 = vld [vmem:[%s3 + $0x1ef0] sm:$0xff]
  %v1909 = vld [vmem:[%s3 + $0x1ef8] sm:$0xff]
  %v1910 = vld [vmem:[%s3 + $0x1f00] sm:$0xff]
  %v1911 = vld [vmem:[%s3 + $0x1f08] sm:$0xff]
  %v1912 = vld [vmem:[%s3 + $0x1f10] sm:$0xff]
  %v1913 = vld [vmem:[%s3 + $0x1f18] sm:$0xff]
  %v1914 = vld [vmem:[%s3 + $0x1f20] sm:$0xff]
  %v1915 = vld [vmem:[%s3 + $0x1f28] sm:$0xff]
  %v1916 = vld [vmem:[%s3 + $0x1f30] sm:$0xff]
  %v1917 = vld [vmem:[%s3 + $0x1f38] sm:$0xff]
  %v1918 = vld [vmem:[%s3 + $0x1f40] sm:$0xff]
  %v1919 = vld [vmem:[%s3 + $0x1f48] sm:$0xff]
  %v1920 = vld [vmem:[%s3 + $0x1f50] sm:$0xff]
  %v1921 = vld [vmem:[%s3 + $0x1f58] sm:$0xff]
  %v1922 = vld [vmem:[%s3 + $0x1f60] sm:$0xff]
  %v1923 = vld [vmem:[%s3 + $0x1f68] sm:$0xff]
  %v1924 = vld [vmem:[%s3 + $0x1f70] sm:$0xff]
  %v1925 = vld [vmem:[%s3 + $0x1f78] sm:$0xff]
  %v1926 = vld [vmem:[%s3 + $0x1f80] sm:$0xff]
  %v1927 = vld [vmem:[%s3 + $0x1f88] sm:$0xff]
  %v1928 = vld [vmem:[%s3 + $0x1f90] sm:$0xff]
  %v1929 = vld [vmem:[%s3 + $0x1f98] sm:$0xff]
  %v1930 = vld [vmem:[%s3 + $0x1fa0] sm:$0xff]
  %v1931 = vld [vmem:[%s3 + $0x1fa8] sm:$0xff]
  %v1932 = vld [vmem:[%s3 + $0x1fb0] sm:$0xff]
  %v1933 = vld [vmem:[%s3 + $0x1fb8] sm:$0xff]
  %v1934 = vld [vmem:[%s3 + $0x1fc0] sm:$0xff]
  %v1935 = vld [vmem:[%s3 + $0x1fc8] sm:$0xff]
  %v1936 = vld [vmem:[%s3 + $0x1fd0] sm:$0xff]
  %v1937 = vld [vmem:[%s3 + $0x1fd8] sm:$0xff]
  %v1938 = vld [vmem:[%s3 + $0x1fe0] sm:$0xff]
  %v1939 = vld [vmem:[%s3 + $0x1fe8] sm:$0xff]
  %v1940 = vld [vmem:[%s3 + $0x1ff0] sm:$0xff]
  %v1941 = vld [vmem:[%s3 + $0x1ff8] sm:$0xff]
  %v1942 = vld [vmem:[%s3 + $0x2000] sm:$0xff]
  %v1943 = vld [vmem:[%s3 + $0x2008] sm:$0xff]
  %v1944 = vld [vmem:[%s3 + $0x2010] sm:$0xff]
  %v1945 = vld [vmem:[%s3 + $0x2018] sm:$0xff]
  %v1946 = vld [vmem:[%s3 + $0x2020] sm:$0xff]
  %v1947 = vld [vmem:[%s3 + $0x2028] sm:$0xff]
  %v1948 = vld [vmem:[%s3 + $0x2030] sm:$0xff]
  %v1949 = vld [vmem:[%s3 + $0x2038] sm:$0xff]
  %v1950 = vld [vmem:[%s3 + $0x2040] sm:$0xff]
  %v1951 = vld [vmem:[%s3 + $0x2048] sm:$0xff]
  %v1952 = vld [vmem:[%s3 + $0x2050] sm:$0xff]
  %v1953 = vld [vmem:[%s3 + $0x2058] sm:$0xff]
  %v1954 = vld [vmem:[%s3 + $0x2060] sm:$0xff]
  %v1955 = vld [vmem:[%s3 + $0x2068] sm:$0xff]
  %v1956 = vld [vmem:[%s3 + $0x2070] sm:$0xff]
  %v1957 = vld [vmem:[%s3 + $0x2078] sm:$0xff]
  %v1958 = vld [vmem:[%s3 + $0x2080] sm:$0xff]
  %v1959 = vld [vmem:[%s3 + $0x2088] sm:$0xff]
  %v1960 = vld [vmem:[%s3 + $0x2090] sm:$0xff]
  %v1961 = vld [vmem:[%s3 + $0x2098] sm:$0xff]
  %v1962 = vld [vmem:[%s3 + $0x20a0] sm:$0xff]
  %v1963 = vld [vmem:[%s3 + $0x20a8] sm:$0xff]
  %v1964 = vld [vmem:[%s3 + $0x20b0] sm:$0xff]
  %v1965 = vld [vmem:[%s3 + $0x20b8] sm:$0xff]
  %v1966 = vld [vmem:[%s3 + $0x20c0] sm:$0xff]
  %v1967 = vld [vmem:[%s3 + $0x20c8] sm:$0xff]
  %v1968 = vld [vmem:[%s3 + $0x20d0] sm:$0xff]
  %v1969 = vld [vmem:[%s3 + $0x20d8] sm:$0xff]
  %v1970 = vld [vmem:[%s3 + $0x20e0] sm:$0xff]
  %v1971 = vld [vmem:[%s3 + $0x20e8] sm:$0xff]
  %v1972 = vld [vmem:[%s3 + $0x20f0] sm:$0xff]
  %v1973 = vld [vmem:[%s3 + $0x20f8] sm:$0xff]
  %v1974 = vld [vmem:[%s3 + $0x2100] sm:$0xff]
  %v1975 = vld [vmem:[%s3 + $0x2108] sm:$0xff]
  %v1976 = vld [vmem:[%s3 + $0x2110] sm:$0xff]
  %v1977 = vld [vmem:[%s3 + $0x2118] sm:$0xff]
  %v1978 = vld [vmem:[%s3 + $0x2120] sm:$0xff]
  %v1979 = vld [vmem:[%s3 + $0x2128] sm:$0xff]
  %v1980 = vld [vmem:[%s3 + $0x2130] sm:$0xff]
  %v1981 = vld [vmem:[%s3 + $0x2138] sm:$0xff]
  %v1982 = vld [vmem:[%s3 + $0x2140] sm:$0xff]
  %v1983 = vld [vmem:[%s3 + $0x2148] sm:$0xff]
  %v1984 = vld [vmem:[%s3 + $0x2150] sm:$0xff]
  %v1985 = vld [vmem:[%s3 + $0x2158] sm:$0xff]
  %v1986 = vld [vmem:[%s3 + $0x2160] sm:$0xff]
  %v1987 = vld [vmem:[%s3 + $0x2168] sm:$0xff]
  %v1988 = vld [vmem:[%s3 + $0x2170] sm:$0xff]
  %v1989 = vld [vmem:[%s3 + $0x2178] sm:$0xff]
  %v1990 = vld [vmem:[%s3 + $0x2180] sm:$0xff]
  %v1991 = vld [vmem:[%s3 + $0x2188] sm:$0xff]
  %v1992 = vld [vmem:[%s3 + $0x2190] sm:$0xff]
  %v1993 = vld [vmem:[%s3 + $0x2198] sm:$0xff]
  %v1994 = vld [vmem:[%s3 + $0x21a0] sm:$0xff]
  %v1995 = vld [vmem:[%s3 + $0x21a8] sm:$0xff]
  %v1996 = vld [vmem:[%s3 + $0x21b0] sm:$0xff]
  %v1997 = vld [vmem:[%s3 + $0x21b8] sm:$0xff]
  %v1998 = vld [vmem:[%s3 + $0x21c0] sm:$0xff]
  %v1999 = vld [vmem:[%s3 + $0x21c8] sm:$0xff]
  %v2000 = vld [vmem:[%s3 + $0x21d0] sm:$0xff]
  %v2001 = vld [vmem:[%s3 + $0x21d8] sm:$0xff]
  %v2002 = vld [vmem:[%s3 + $0x21e0] sm:$0xff]
  %v2003 = vld [vmem:[%s3 + $0x21e8] sm:$0xff]
  %v2004 = vld [vmem:[%s3 + $0x21f0] sm:$0xff]
  %v2005 = vld [vmem:[%s3 + $0x21f8] sm:$0xff]
  %v2006 = vld [vmem:[%s3 + $0x2200] sm:$0xff]
  %v2007 = vld [vmem:[%s3 + $0x2208] sm:$0xff]
  %v2008 = vld [vmem:[%s3 + $0x2210] sm:$0xff]
  %v2009 = vld [vmem:[%s3 + $0x2218] sm:$0xff]
  %v2010 = vld [vmem:[%s3 + $0x2220] sm:$0xff]
  %v2011 = vld [vmem:[%s3 + $0x2228] sm:$0xff]
  %v2012 = vld [vmem:[%s3 + $0x2230] sm:$0xff]
  %v2013 = vld [vmem:[%s3 + $0x2238] sm:$0xff]
  %v2014 = vld [vmem:[%s3 + $0x2240] sm:$0xff]
  %v2015 = vld [vmem:[%s3 + $0x2248] sm:$0xff]
  %v2016 = vld [vmem:[%s3 + $0x2250] sm:$0xff]
  %v2017 = vld [vmem:[%s3 + $0x2258] sm:$0xff]
  %v2018 = vld [vmem:[%s3 + $0x2260] sm:$0xff]
  %v2019 = vld [vmem:[%s3 + $0x2268] sm:$0xff]
  %v2020 = vld [vmem:[%s3 + $0x2270] sm:$0xff]
  %v2021 = vld [vmem:[%s3 + $0x2278] sm:$0xff]
  %v2022 = vld [vmem:[%s3 + $0x2280] sm:$0xff]
  %v2023 = vld [vmem:[%s3 + $0x2288] sm:$0xff]
  %v2024 = vld [vmem:[%s3 + $0x2290] sm:$0xff]
  %v2025 = vld [vmem:[%s3 + $0x2298] sm:$0xff]
  %v2026 = vld [vmem:[%s3 + $0x22a0] sm:$0xff]
  %v2027 = vld [vmem:[%s3 + $0x22a8] sm:$0xff]
  %v2028 = vld [vmem:[%s3 + $0x22b0] sm:$0xff]
  %v2029 = vld [vmem:[%s3 + $0x22b8] sm:$0xff]
  %v2030 = vld [vmem:[%s3 + $0x22c0] sm:$0xff]
  %v2031 = vld [vmem:[%s3 + $0x22c8] sm:$0xff]
  %v2032 = vld [vmem:[%s3 + $0x22d0] sm:$0xff]
  %v2033 = vld [vmem:[%s3 + $0x22d8] sm:$0xff]
  %v2034 = vld [vmem:[%s3 + $0x22e0] sm:$0xff]
  %v2035 = vld [vmem:[%s3 + $0x22e8] sm:$0xff]
  %v2036 = vld [vmem:[%s3 + $0x22f0] sm:$0xff]
  %v2037 = vld [vmem:[%s3 + $0x22f8] sm:$0xff]
  %v2038 = vld [vmem:[%s3 + $0x2300] sm:$0xff]
  %v2039 = vld [vmem:[%s3 + $0x2308] sm:$0xff]
  %v2040 = vld [vmem:[%s3 + $0x2310] sm:$0xff]
  %v2041 = vld [vmem:[%s3 + $0x2318] sm:$0xff]
  %v2042 = vld [vmem:[%s3 + $0x2320] sm:$0xff]
  %v2043 = vld [vmem:[%s3 + $0x2328] sm:$0xff]
  %v2044 = vld [vmem:[%s3 + $0x2330] sm:$0xff]
  %v2045 = vld [vmem:[%s3 + $0x2338] sm:$0xff]
  %v2046 = vld [vmem:[%s3 + $0x2340] sm:$0xff]
  %v2047 = vld [vmem:[%s3 + $0x2348] sm:$0xff]
  %v2048 = vld [vmem:[%s3 + $0x2350] sm:$0xff]
  %v2049 = vld [vmem:[%s3 + $0x2358] sm:$0xff]
  %v2050 = vld [vmem:[%s3 + $0x2360] sm:$0xff]
  %v2051 = vld [vmem:[%s3 + $0x2368] sm:$0xff]
  %v2052 = vld [vmem:[%s3 + $0x2370] sm:$0xff]
  %v2053 = vld [vmem:[%s3 + $0x2378] sm:$0xff]
  %v2054 = vld [vmem:[%s3 + $0x2380] sm:$0xff]
  %v2055 = vld [vmem:[%s3 + $0x2388] sm:$0xff]
  %v2056 = vld [vmem:[%s3 + $0x2390] sm:$0xff]
  %v2057 = vld [vmem:[%s3 + $0x2398] sm:$0xff]
  %v2058 = vld [vmem:[%s3 + $0x23a0] sm:$0xff]
  %v2059 = vld [vmem:[%s3 + $0x23a8] sm:$0xff]
  %v2060 = vld [vmem:[%s3 + $0x23b0] sm:$0xff]
  %v2061 = vld [vmem:[%s3 + $0x23b8] sm:$0xff]
  %v2062 = vld [vmem:[%s3 + $0x23c0] sm:$0xff]
  %v2063 = vld [vmem:[%s3 + $0x23c8] sm:$0xff]
  %v2064 = vld [vmem:[%s3 + $0x23d0] sm:$0xff]
  %v2065 = vld [vmem:[%s3 + $0x23d8] sm:$0xff]
  %v2066 = vld [vmem:[%s3 + $0x23e0] sm:$0xff]
  %v2067 = vld [vmem:[%s3 + $0x23e8] sm:$0xff]
  %v2068 = vld [vmem:[%s3 + $0x23f0] sm:$0xff]
  %v2069 = vld [vmem:[%s3 + $0x23f8] sm:$0xff]
  %v2070 = vld [vmem:[%s3 + $0x2400] sm:$0xff]
  %v2071 = vld [vmem:[%s3 + $0x2408] sm:$0xff]
  %v2072 = vld [vmem:[%s3 + $0x2410] sm:$0xff]
  %v2073 = vld [vmem:[%s3 + $0x2418] sm:$0xff]
  %v2074 = vld [vmem:[%s3 + $0x2420] sm:$0xff]
  %v2075 = vld [vmem:[%s3 + $0x2428] sm:$0xff]
  %v2076 = vld [vmem:[%s3 + $0x2430] sm:$0xff]
  %v2077 = vld [vmem:[%s3 + $0x2438] sm:$0xff]
  %v2078 = vld [vmem:[%s3 + $0x2440] sm:$0xff]
  %v2079 = vld [vmem:[%s3 + $0x2448] sm:$0xff]
  %v2080 = vld [vmem:[%s3 + $0x2450] sm:$0xff]
  %v2081 = vld [vmem:[%s3 + $0x2458] sm:$0xff]
  %v2082 = vld [vmem:[%s3 + $0x2460] sm:$0xff]
  %v2083 = vld [vmem:[%s3 + $0x2468] sm:$0xff]
  %v2084 = vld [vmem:[%s3 + $0x2470] sm:$0xff]
  %v2085 = vld [vmem:[%s3 + $0x2478] sm:$0xff]
  %v2086 = vld [vmem:[%s3 + $0x2480] sm:$0xff]
  %v2087 = vld [vmem:[%s3 + $0x2488] sm:$0xff]
  %v2088 = vld [vmem:[%s3 + $0x2490] sm:$0xff]
  %v2089 = vld [vmem:[%s3 + $0x2498] sm:$0xff]
  %v2090 = vld [vmem:[%s3 + $0x24a0] sm:$0xff]
  %v2091 = vld [vmem:[%s3 + $0x24a8] sm:$0xff]
  %v2092 = vld [vmem:[%s3 + $0x24b0] sm:$0xff]
  %v2093 = vld [vmem:[%s3 + $0x24b8] sm:$0xff]
  %v2094 = vld [vmem:[%s3 + $0x24c0] sm:$0xff]
  %v2095 = vld [vmem:[%s3 + $0x24c8] sm:$0xff]
  %v2096 = vld [vmem:[%s3 + $0x24d0] sm:$0xff]
  %v2097 = vld [vmem:[%s3 + $0x24d8] sm:$0xff]
  %v2098 = vld [vmem:[%s3 + $0x24e0] sm:$0xff]
  %v2099 = vld [vmem:[%s3 + $0x24e8] sm:$0xff]
  %v2100 = vld [vmem:[%s3 + $0x24f0] sm:$0xff]
  %v2101 = vld [vmem:[%s3 + $0x24f8] sm:$0xff]
  %v2102 = vld [vmem:[%s3 + $0x2500] sm:$0xff]
  %v2103 = vld [vmem:[%s3 + $0x2508] sm:$0xff]
  %v2104 = vld [vmem:[%s3 + $0x2510] sm:$0xff]
  %v2105 = vld [vmem:[%s3 + $0x2518] sm:$0xff]
  %v2106 = vld [vmem:[%s3 + $0x2520] sm:$0xff]
  %v2107 = vld [vmem:[%s3 + $0x2528] sm:$0xff]
  %v2108 = vld [vmem:[%s3 + $0x2530] sm:$0xff]
  %v2109 = vld [vmem:[%s3 + $0x2538] sm:$0xff]
  %v2110 = vld [vmem:[%s3 + $0x2540] sm:$0xff]
  %v2111 = vld [vmem:[%s3 + $0x2548] sm:$0xff]
  %v2112 = vld [vmem:[%s3 + $0x2550] sm:$0xff]
  %v2113 = vld [vmem:[%s3 + $0x2558] sm:$0xff]
  %v2114 = vld [vmem:[%s3 + $0x2560] sm:$0xff]
  %v2115 = vld [vmem:[%s3 + $0x2568] sm:$0xff]
  %v2116 = vld [vmem:[%s3 + $0x2570] sm:$0xff]
  %v2117 = vld [vmem:[%s3 + $0x2578] sm:$0xff]
  %v2118 = vld [vmem:[%s3 + $0x2580] sm:$0xff]
  %v2119 = vld [vmem:[%s3 + $0x2588] sm:$0xff]
  %v2120 = vld [vmem:[%s3 + $0x2590] sm:$0xff]
  %v2121 = vld [vmem:[%s3 + $0x2598] sm:$0xff]
  %v2122 = vld [vmem:[%s3 + $0x25a0] sm:$0xff]
  %v2123 = vld [vmem:[%s3 + $0x25a8] sm:$0xff]
  %v2124 = vld [vmem:[%s3 + $0x25b0] sm:$0xff]
  %v2125 = vld [vmem:[%s3 + $0x25b8] sm:$0xff]
  %v2126 = vld [vmem:[%s3 + $0x25c0] sm:$0xff]
  %v2127 = vld [vmem:[%s3 + $0x25c8] sm:$0xff]
  %v2128 = vld [vmem:[%s3 + $0x25d0] sm:$0xff]
  %v2129 = vld [vmem:[%s3 + $0x25d8] sm:$0xff]
  %v2130 = vld [vmem:[%s3 + $0x25e0] sm:$0xff]
  %v2131 = vld [vmem:[%s3 + $0x25e8] sm:$0xff]
  %v2132 = vld [vmem:[%s3 + $0x25f0] sm:$0xff]
  %v2133 = vld [vmem:[%s3 + $0x25f8] sm:$0xff]
  %v2134 = vld [vmem:[%s3 + $0x2600] sm:$0xff]
  %v2135 = vld [vmem:[%s3 + $0x2608] sm:$0xff]
  %v2136 = vld [vmem:[%s3 + $0x2610] sm:$0xff]
  %v2137 = vld [vmem:[%s3 + $0x2618] sm:$0xff]
  %v2138 = vld [vmem:[%s3 + $0x2620] sm:$0xff]
  %v2139 = vld [vmem:[%s3 + $0x2628] sm:$0xff]
  %v2140 = vld [vmem:[%s3 + $0x2630] sm:$0xff]
  %v2141 = vld [vmem:[%s3 + $0x2638] sm:$0xff]
  %v2142 = vld [vmem:[%s3 + $0x2640] sm:$0xff]
  %v2143 = vld [vmem:[%s3 + $0x2648] sm:$0xff]
  %v2144 = vld [vmem:[%s3 + $0x2650] sm:$0xff]
  %v2145 = vld [vmem:[%s3 + $0x2658] sm:$0xff]
  %v2146 = vld [vmem:[%s3 + $0x2660] sm:$0xff]
  %v2147 = vld [vmem:[%s3 + $0x2668] sm:$0xff]
  %v2148 = vld [vmem:[%s3 + $0x2670] sm:$0xff]
  %v2149 = vld [vmem:[%s3 + $0x2678] sm:$0xff]
  %v2150 = vld [vmem:[%s3 + $0x2680] sm:$0xff]
  %v2151 = vld [vmem:[%s3 + $0x2688] sm:$0xff]
  %v2152 = vld [vmem:[%s3 + $0x2690] sm:$0xff]
  %v2153 = vld [vmem:[%s3 + $0x2698] sm:$0xff]
  %v2154 = vld [vmem:[%s3 + $0x26a0] sm:$0xff]
  %v2155 = vld [vmem:[%s3 + $0x26a8] sm:$0xff]
  %v2156 = vld [vmem:[%s3 + $0x26b0] sm:$0xff]
  %v2157 = vld [vmem:[%s3 + $0x26b8] sm:$0xff]
  %v2158 = vld [vmem:[%s3 + $0x26c0] sm:$0xff]
  %v2159 = vld [vmem:[%s3 + $0x26c8] sm:$0xff]
  %v2160 = vld [vmem:[%s3 + $0x26d0] sm:$0xff]
  %v2161 = vld [vmem:[%s3 + $0x26d8] sm:$0xff]
  %v2162 = vld [vmem:[%s3 + $0x26e0] sm:$0xff]
  %v2163 = vld [vmem:[%s3 + $0x26e8] sm:$0xff]
  %v2164 = vld [vmem:[%s3 + $0x26f0] sm:$0xff]
  %v2165 = vld [vmem:[%s3 + $0x26f8] sm:$0xff]
  %v2166 = vld [vmem:[%s3 + $0x2700] sm:$0xff]
  %v2167 = vld [vmem:[%s3 + $0x2708] sm:$0xff]
  %v2168 = vld [vmem:[%s3 + $0x2710] sm:$0xff]
  %v2169 = vld [vmem:[%s3 + $0x2718] sm:$0xff]
  %v2170 = vld [vmem:[%s3 + $0x2720] sm:$0xff]
  %v2171 = vld [vmem:[%s3 + $0x2728] sm:$0xff]
  %v2172 = vld [vmem:[%s3 + $0x2730] sm:$0xff]
  %v2173 = vld [vmem:[%s3 + $0x2738] sm:$0xff]
  %v2174 = vld [vmem:[%s3 + $0x2740] sm:$0xff]
  %v2175 = vld [vmem:[%s3 + $0x2748] sm:$0xff]
  %v2176 = vld [vmem:[%s3 + $0x2750] sm:$0xff]
  %v2177 = vld [vmem:[%s3 + $0x2758] sm:$0xff]
  %v2178 = vld [vmem:[%s3 + $0x2760] sm:$0xff]
  %v2179 = vld [vmem:[%s3 + $0x2768] sm:$0xff]
  %v2180 = vld [vmem:[%s3 + $0x2770] sm:$0xff]
  %v2181 = vld [vmem:[%s3 + $0x2778] sm:$0xff]
  %v2182 = vld [vmem:[%s3 + $0x2780] sm:$0xff]
  %v2183 = vld [vmem:[%s3 + $0x2788] sm:$0xff]
  %v2184 = vld [vmem:[%s3 + $0x2790] sm:$0xff]
  %v2185 = vld [vmem:[%s3 + $0x2798] sm:$0xff]
  %v2186 = vld [vmem:[%s3 + $0x27a0] sm:$0xff]
  %v2187 = vld [vmem:[%s3 + $0x27a8] sm:$0xff]
  %v2188 = vld [vmem:[%s3 + $0x27b0] sm:$0xff]
  %v2189 = vld [vmem:[%s3 + $0x27b8] sm:$0xff]
  %v2190 = vld [vmem:[%s3 + $0x27c0] sm:$0xff]
  %v2191 = vld [vmem:[%s3 + $0x27c8] sm:$0xff]
  %v2192 = vld [vmem:[%s3 + $0x27d0] sm:$0xff]
  %v2193 = vld [vmem:[%s3 + $0x27d8] sm:$0xff]
  %v2194 = vld [vmem:[%s3 + $0x27e0] sm:$0xff]
  %v2195 = vld [vmem:[%s3 + $0x27e8] sm:$0xff]
  %v2196 = vld [vmem:[%s3 + $0x27f0] sm:$0xff]
  %v2197 = vld [vmem:[%s3 + $0x27f8] sm:$0xff]
  %v2198 = vld [vmem:[%s3 + $0x2800] sm:$0xff]
  %v2199 = vld [vmem:[%s3 + $0x2808] sm:$0xff]
  %v2200 = vld [vmem:[%s3 + $0x2810] sm:$0xff]
  %v2201 = vld [vmem:[%s3 + $0x2818] sm:$0xff]
  %v2202 = vld [vmem:[%s3 + $0x2820] sm:$0xff]
  %v2203 = vld [vmem:[%s3 + $0x2828] sm:$0xff]
  %v2204 = vld [vmem:[%s3 + $0x2830] sm:$0xff]
  %v2205 = vld [vmem:[%s3 + $0x2838] sm:$0xff]
  %v2206 = vld [vmem:[%s3 + $0x2840] sm:$0xff]
  %v2207 = vld [vmem:[%s3 + $0x2848] sm:$0xff]
  %v2208 = vld [vmem:[%s3 + $0x2850] sm:$0xff]
  %v2209 = vld [vmem:[%s3 + $0x2858] sm:$0xff]
  %v2210 = vld [vmem:[%s3 + $0x2860] sm:$0xff]
  %v2211 = vld [vmem:[%s3 + $0x2868] sm:$0xff]
  %v2212 = vld [vmem:[%s3 + $0x2870] sm:$0xff]
  %v2213 = vld [vmem:[%s3 + $0x2878] sm:$0xff]
  %v2214 = vld [vmem:[%s3 + $0x2880] sm:$0xff]
  %v2215 = vld [vmem:[%s3 + $0x2888] sm:$0xff]
  %v2216 = vld [vmem:[%s3 + $0x2890] sm:$0xff]
  %v2217 = vld [vmem:[%s3 + $0x2898] sm:$0xff]
  %v2218 = vld [vmem:[%s3 + $0x28a0] sm:$0xff]
  %v2219 = vld [vmem:[%s3 + $0x28a8] sm:$0xff]
  %v2220 = vld [vmem:[%s3 + $0x28b0] sm:$0xff]
  %v2221 = vld [vmem:[%s3 + $0x28b8] sm:$0xff]
  %v2222 = vld [vmem:[%s3 + $0x28c0] sm:$0xff]
  %v2223 = vld [vmem:[%s3 + $0x28c8] sm:$0xff]
  %v2224 = vld [vmem:[%s3 + $0x28d0] sm:$0xff]
  %v2225 = vld [vmem:[%s3 + $0x28d8] sm:$0xff]
  %v2226 = vld [vmem:[%s3 + $0x28e0] sm:$0xff]
  %v2227 = vld [vmem:[%s3 + $0x28e8] sm:$0xff]
  %v2228 = vld [vmem:[%s3 + $0x28f0] sm:$0xff]
  %v2229 = vld [vmem:[%s3 + $0x28f8] sm:$0xff]
  %v2230 = vld [vmem:[%s3 + $0x2900] sm:$0xff]
  %v2231 = vld [vmem:[%s3 + $0x2908] sm:$0xff]
  %v2232 = vld [vmem:[%s3 + $0x2910] sm:$0xff]
  %v2233 = vld [vmem:[%s3 + $0x2918] sm:$0xff]
  %v2234 = vld [vmem:[%s3 + $0x2920] sm:$0xff]
  %v2235 = vld [vmem:[%s3 + $0x2928] sm:$0xff]
  %v2236 = vld [vmem:[%s3 + $0x2930] sm:$0xff]
  %v2237 = vld [vmem:[%s3 + $0x2938] sm:$0xff]
  %v2238 = vld [vmem:[%s3 + $0x2940] sm:$0xff]
  %v2239 = vld [vmem:[%s3 + $0x2948] sm:$0xff]
  %v2240 = vld [vmem:[%s3 + $0x2950] sm:$0xff]
  %v2241 = vld [vmem:[%s3 + $0x2958] sm:$0xff]
  %v2242 = vld [vmem:[%s3 + $0x2960] sm:$0xff]
  %v2243 = vld [vmem:[%s3 + $0x2968] sm:$0xff]
  %v2244 = vld [vmem:[%s3 + $0x2970] sm:$0xff]
  %v2245 = vld [vmem:[%s3 + $0x2978] sm:$0xff]
  %v2246 = vld [vmem:[%s3 + $0x2980] sm:$0xff]
  %v2247 = vld [vmem:[%s3 + $0x2988] sm:$0xff]
  %v2248 = vld [vmem:[%s3 + $0x2990] sm:$0xff]
  %v2249 = vld [vmem:[%s3 + $0x2998] sm:$0xff]
  %v2250 = vld [vmem:[%s3 + $0x29a0] sm:$0xff]
  %v2251 = vld [vmem:[%s3 + $0x29a8] sm:$0xff]
  %v2252 = vld [vmem:[%s3 + $0x29b0] sm:$0xff]
  %v2253 = vld [vmem:[%s3 + $0x29b8] sm:$0xff]
  %v2254 = vld [vmem:[%s3 + $0x29c0] sm:$0xff]
  %v2255 = vld [vmem:[%s3 + $0x29c8] sm:$0xff]
  %v2256 = vld [vmem:[%s3 + $0x29d0] sm:$0xff]
  %v2257 = vld [vmem:[%s3 + $0x29d8] sm:$0xff]
  %v2258 = vld [vmem:[%s3 + $0x29e0] sm:$0xff]
  %v2259 = vld [vmem:[%s3 + $0x29e8] sm:$0xff]
  %v2260 = vld [vmem:[%s3 + $0x29f0] sm:$0xff]
  %v2261 = vld [vmem:[%s3 + $0x29f8] sm:$0xff]
  %v2262 = vld [vmem:[%s3 + $0x2a00] sm:$0xff]
  %v2263 = vld [vmem:[%s3 + $0x2a08] sm:$0xff]
  %v2264 = vld [vmem:[%s3 + $0x2a10] sm:$0xff]
  %v2265 = vld [vmem:[%s3 + $0x2a18] sm:$0xff]
  %v2266 = vld [vmem:[%s3 + $0x2a20] sm:$0xff]
  %v2267 = vld [vmem:[%s3 + $0x2a28] sm:$0xff]
  %v2268 = vld [vmem:[%s3 + $0x2a30] sm:$0xff]
  %v2269 = vld [vmem:[%s3 + $0x2a38] sm:$0xff]
  %v2270 = vld [vmem:[%s3 + $0x2a40] sm:$0xff]
  %v2271 = vld [vmem:[%s3 + $0x2a48] sm:$0xff]
  %v2272 = vld [vmem:[%s3 + $0x2a50] sm:$0xff]
  %v2273 = vld [vmem:[%s3 + $0x2a58] sm:$0xff]
  %v2274 = vld [vmem:[%s3 + $0x2a60] sm:$0xff]
  %v2275 = vld [vmem:[%s3 + $0x2a68] sm:$0xff]
  %v2276 = vld [vmem:[%s3 + $0x2a70] sm:$0xff]
  %v2277 = vld [vmem:[%s3 + $0x2a78] sm:$0xff]
  %v2278 = vld [vmem:[%s3 + $0x2a80] sm:$0xff]
  %v2279 = vld [vmem:[%s3 + $0x2a88] sm:$0xff]
  %v2280 = vld [vmem:[%s3 + $0x2a90] sm:$0xff]
  %v2281 = vld [vmem:[%s3 + $0x2a98] sm:$0xff]
  %v2282 = vld [vmem:[%s3 + $0x2aa0] sm:$0xff]
  %v2283 = vld [vmem:[%s3 + $0x2aa8] sm:$0xff]
  %v2284 = vld [vmem:[%s3 + $0x2ab0] sm:$0xff]
  %v2285 = vld [vmem:[%s3 + $0x2ab8] sm:$0xff]
  %v2286 = vld [vmem:[%s3 + $0x2ac0] sm:$0xff]
  %v2287 = vld [vmem:[%s3 + $0x2ac8] sm:$0xff]
  %v2288 = vld [vmem:[%s3 + $0x2ad0] sm:$0xff]
  %v2289 = vld [vmem:[%s3 + $0x2ad8] sm:$0xff]
  %v2290 = vld [vmem:[%s3 + $0x2ae0] sm:$0xff]
  %v2291 = vld [vmem:[%s3 + $0x2ae8] sm:$0xff]
  %v2292 = vld [vmem:[%s3 + $0x2af0] sm:$0xff]
  %v2293 = vld [vmem:[%s3 + $0x2af8] sm:$0xff]
  %v2294 = vld [vmem:[%s3 + $0x2b00] sm:$0xff]
  %v2295 = vld [vmem:[%s3 + $0x2b08] sm:$0xff]
  %v2296 = vld [vmem:[%s3 + $0x2b10] sm:$0xff]
  %v2297 = vld [vmem:[%s3 + $0x2b18] sm:$0xff]
  %v2298 = vld [vmem:[%s3 + $0x2b20] sm:$0xff]
  %v2299 = vld [vmem:[%s3 + $0x2b28] sm:$0xff]
  %v2300 = vld [vmem:[%s3 + $0x2b30] sm:$0xff]
  %v2301 = vld [vmem:[%s3 + $0x2b38] sm:$0xff]
  %v2302 = vld [vmem:[%s3 + $0x2b40] sm:$0xff]
  %v2303 = vld [vmem:[%s3 + $0x2b48] sm:$0xff]
  %v2304 = vld [vmem:[%s3 + $0x2b50] sm:$0xff]
  %v2305 = vld [vmem:[%s3 + $0x2b58] sm:$0xff]
  %v2306 = vld [vmem:[%s3 + $0x2b60] sm:$0xff]
  %v2307 = vld [vmem:[%s3 + $0x2b68] sm:$0xff]
  %v2308 = vld [vmem:[%s3 + $0x2b70] sm:$0xff]
  %v2309 = vld [vmem:[%s3 + $0x2b78] sm:$0xff]
  %v2310 = vld [vmem:[%s3 + $0x2b80] sm:$0xff]
  %v2311 = vld [vmem:[%s3 + $0x2b88] sm:$0xff]
  %v2312 = vld [vmem:[%s3 + $0x2b90] sm:$0xff]
  %v2313 = vld [vmem:[%s3 + $0x2b98] sm:$0xff]
  %v2314 = vld [vmem:[%s3 + $0x2ba0] sm:$0xff]
  %v2315 = vld [vmem:[%s3 + $0x2ba8] sm:$0xff]
  %v2316 = vld [vmem:[%s3 + $0x2bb0] sm:$0xff]
  %v2317 = vld [vmem:[%s3 + $0x2bb8] sm:$0xff]
  %v2318 = vld [vmem:[%s3 + $0x2bc0] sm:$0xff]
  %v2319 = vld [vmem:[%s3 + $0x2bc8] sm:$0xff]
  %v2320 = vld [vmem:[%s3 + $0x2bd0] sm:$0xff]
  %v2321 = vld [vmem:[%s3 + $0x2bd8] sm:$0xff]
  %v2322 = vld [vmem:[%s3 + $0x2be0] sm:$0xff]
  %v2323 = vld [vmem:[%s3 + $0x2be8] sm:$0xff]
  %v2324 = vld [vmem:[%s3 + $0x2bf0] sm:$0xff]
  %v2325 = vld [vmem:[%s3 + $0x2bf8] sm:$0xff]
  %v2326 = vld [vmem:[%s3 + $0x2c00] sm:$0xff]
  %v2327 = vld [vmem:[%s3 + $0x2c08] sm:$0xff]
  %v2328 = vld [vmem:[%s3 + $0x2c10] sm:$0xff]
  %v2329 = vld [vmem:[%s3 + $0x2c18] sm:$0xff]
  %v2330 = vld [vmem:[%s3 + $0x2c20] sm:$0xff]
  %v2331 = vld [vmem:[%s3 + $0x2c28] sm:$0xff]
  %v2332 = vld [vmem:[%s3 + $0x2c30] sm:$0xff]
  %v2333 = vld [vmem:[%s3 + $0x2c38] sm:$0xff]
  %v2334 = vld [vmem:[%s3 + $0x2c40] sm:$0xff]
  %v2335 = vld [vmem:[%s3 + $0x2c48] sm:$0xff]
  %v2336 = vld [vmem:[%s3 + $0x2c50] sm:$0xff]
  %v2337 = vld [vmem:[%s3 + $0x2c58] sm:$0xff]
  %v2338 = vld [vmem:[%s3 + $0x2c60] sm:$0xff]
  %v2339 = vld [vmem:[%s3 + $0x2c68] sm:$0xff]
  %v2340 = vld [vmem:[%s3 + $0x2c70] sm:$0xff]
  %v2341 = vld [vmem:[%s3 + $0x2c78] sm:$0xff]
  %v2342 = vld [vmem:[%s3 + $0x2c80] sm:$0xff]
  %v2343 = vld [vmem:[%s3 + $0x2c88] sm:$0xff]
  %v2344 = vld [vmem:[%s3 + $0x2c90] sm:$0xff]
  %v2345 = vld [vmem:[%s3 + $0x2c98] sm:$0xff]
  %v2346 = vld [vmem:[%s3 + $0x2ca0] sm:$0xff]
  %v2347 = vld [vmem:[%s3 + $0x2ca8] sm:$0xff]
  %v2348 = vld [vmem:[%s3 + $0x2cb0] sm:$0xff]
  %v2349 = vld [vmem:[%s3 + $0x2cb8] sm:$0xff]
  %v2350 = vld [vmem:[%s3 + $0x2cc0] sm:$0xff]
  %v2351 = vld [vmem:[%s3 + $0x2cc8] sm:$0xff]
  %v2352 = vld [vmem:[%s3 + $0x2cd0] sm:$0xff]
  %v2353 = vld [vmem:[%s3 + $0x2cd8] sm:$0xff]
  %v2354 = vld [vmem:[%s3 + $0x2ce0] sm:$0xff]
  %v2355 = vld [vmem:[%s3 + $0x2ce8] sm:$0xff]
  %v2356 = vld [vmem:[%s3 + $0x2cf0] sm:$0xff]
  %v2357 = vld [vmem:[%s3 + $0x2cf8] sm:$0xff]
  %v2358 = vld [vmem:[%s3 + $0x2d00] sm:$0xff]
  %v2359 = vld [vmem:[%s3 + $0x2d08] sm:$0xff]
  %v2360 = vld [vmem:[%s3 + $0x2d10] sm:$0xff]
  %v2361 = vld [vmem:[%s3 + $0x2d18] sm:$0xff]
  %v2362 = vld [vmem:[%s3 + $0x2d20] sm:$0xff]
  %v2363 = vld [vmem:[%s3 + $0x2d28] sm:$0xff]
  %v2364 = vld [vmem:[%s3 + $0x2d30] sm:$0xff]
  %v2365 = vld [vmem:[%s3 + $0x2d38] sm:$0xff]
  %v2366 = vld [vmem:[%s3 + $0x2d40] sm:$0xff]
  %v2367 = vld [vmem:[%s3 + $0x2d48] sm:$0xff]
  %v2368 = vld [vmem:[%s3 + $0x2d50] sm:$0xff]
  %v2369 = vld [vmem:[%s3 + $0x2d58] sm:$0xff]
  %v2370 = vld [vmem:[%s3 + $0x2d60] sm:$0xff]
  %v2371 = vld [vmem:[%s3 + $0x2d68] sm:$0xff]
  %v2372 = vld [vmem:[%s3 + $0x2d70] sm:$0xff]
  %v2373 = vld [vmem:[%s3 + $0x2d78] sm:$0xff]
  %v2374 = vld [vmem:[%s3 + $0x2d80] sm:$0xff]
  %v2375 = vld [vmem:[%s3 + $0x2d88] sm:$0xff]
  %v2376 = vld [vmem:[%s3 + $0x2d90] sm:$0xff]
  %v2377 = vld [vmem:[%s3 + $0x2d98] sm:$0xff]
  %v2378 = vld [vmem:[%s3 + $0x2da0] sm:$0xff]
  %v2379 = vld [vmem:[%s3 + $0x2da8] sm:$0xff]
  %v2380 = vld [vmem:[%s3 + $0x2db0] sm:$0xff]
  %v2381 = vld [vmem:[%s3 + $0x2db8] sm:$0xff]
  %v2382 = vld [vmem:[%s3 + $0x2dc0] sm:$0xff]
  %v2383 = vld [vmem:[%s3 + $0x2dc8] sm:$0xff]
  %v2384 = vld [vmem:[%s3 + $0x2dd0] sm:$0xff]
  %v2385 = vld [vmem:[%s3 + $0x2dd8] sm:$0xff]
  %v2386 = vld [vmem:[%s3 + $0x2de0] sm:$0xff]
  %v2387 = vld [vmem:[%s3 + $0x2de8] sm:$0xff]
  %v2388 = vld [vmem:[%s3 + $0x2df0] sm:$0xff]
  %v2389 = vld [vmem:[%s3 + $0x2df8] sm:$0xff]
  %v2390 = vld [vmem:[%s3 + $0x2e00] sm:$0xff]
  %v2391 = vld [vmem:[%s3 + $0x2e08] sm:$0xff]
  %v2392 = vld [vmem:[%s3 + $0x2e10] sm:$0xff]
  %v2393 = vld [vmem:[%s3 + $0x2e18] sm:$0xff]
  %v2394 = vld [vmem:[%s3 + $0x2e20] sm:$0xff]
  %v2395 = vld [vmem:[%s3 + $0x2e28] sm:$0xff]
  %v2396 = vld [vmem:[%s3 + $0x2e30] sm:$0xff]
  %v2397 = vld [vmem:[%s3 + $0x2e38] sm:$0xff]
  %v2398 = vld [vmem:[%s3 + $0x2e40] sm:$0xff]
  %v2399 = vld [vmem:[%s3 + $0x2e48] sm:$0xff]
  %v2400 = vld [vmem:[%s3 + $0x2e50] sm:$0xff]
  %v2401 = vld [vmem:[%s3 + $0x2e58] sm:$0xff]
  %v2402 = vld [vmem:[%s3 + $0x2e60] sm:$0xff]
  %v2403 = vld [vmem:[%s3 + $0x2e68] sm:$0xff]
  %v2404 = vld [vmem:[%s3 + $0x2e70] sm:$0xff]
  %v2405 = vld [vmem:[%s3 + $0x2e78] sm:$0xff]
  %v2406 = vld [vmem:[%s3 + $0x2e80] sm:$0xff]
  %v2407 = vld [vmem:[%s3 + $0x2e88] sm:$0xff]
  %v2408 = vld [vmem:[%s3 + $0x2e90] sm:$0xff]
  %v2409 = vld [vmem:[%s3 + $0x2e98] sm:$0xff]
  %v2410 = vld [vmem:[%s3 + $0x2ea0] sm:$0xff]
  %v2411 = vld [vmem:[%s3 + $0x2ea8] sm:$0xff]
  %v2412 = vld [vmem:[%s3 + $0x2eb0] sm:$0xff]
  %v2413 = vld [vmem:[%s3 + $0x2eb8] sm:$0xff]
  %v2414 = vld [vmem:[%s3 + $0x2ec0] sm:$0xff]
  %v2415 = vld [vmem:[%s3 + $0x2ec8] sm:$0xff]
  %v2416 = vld [vmem:[%s3 + $0x2ed0] sm:$0xff]
  %v2417 = vld [vmem:[%s3 + $0x2ed8] sm:$0xff]
  %v2418 = vld [vmem:[%s3 + $0x2ee0] sm:$0xff]
  %v2419 = vld [vmem:[%s3 + $0x2ee8] sm:$0xff]
  %v2420 = vld [vmem:[%s3 + $0x2ef0] sm:$0xff]
  %v2421 = vld [vmem:[%s3 + $0x2ef8] sm:$0xff]
  %v2422 = vld [vmem:[%s3 + $0x2f00] sm:$0xff]
  %v2423 = vld [vmem:[%s3 + $0x2f08] sm:$0xff]
  %v2424 = vld [vmem:[%s3 + $0x2f10] sm:$0xff]
  %v2425 = vld [vmem:[%s3 + $0x2f18] sm:$0xff]
  %v2426 = vld [vmem:[%s3 + $0x2f20] sm:$0xff]
  %v2427 = vld [vmem:[%s3 + $0x2f28] sm:$0xff]
  %v2428 = vld [vmem:[%s3 + $0x2f30] sm:$0xff]
  %v2429 = vld [vmem:[%s3 + $0x2f38] sm:$0xff]
  %v2430 = vld [vmem:[%s3 + $0x2f40] sm:$0xff]
  %v2431 = vld [vmem:[%s3 + $0x2f48] sm:$0xff]
  %v2432 = vld [vmem:[%s3 + $0x2f50] sm:$0xff]
  %v2433 = vld [vmem:[%s3 + $0x2f58] sm:$0xff]
  %v2434 = vld [vmem:[%s3 + $0x2f60] sm:$0xff]
  %v2435 = vld [vmem:[%s3 + $0x2f68] sm:$0xff]
  %v2436 = vld [vmem:[%s3 + $0x2f70] sm:$0xff]
  %v2437 = vld [vmem:[%s3 + $0x2f78] sm:$0xff]
  %v2438 = vld [vmem:[%s3 + $0x2f80] sm:$0xff]
  %v2439 = vld [vmem:[%s3 + $0x2f88] sm:$0xff]
  %v2440 = vld [vmem:[%s3 + $0x2f90] sm:$0xff]
  %v2441 = vld [vmem:[%s3 + $0x2f98] sm:$0xff]
  %v2442 = vld [vmem:[%s3 + $0x2fa0] sm:$0xff]
  %v2443 = vld [vmem:[%s3 + $0x2fa8] sm:$0xff]
  %v2444 = vld [vmem:[%s3 + $0x2fb0] sm:$0xff]
  %v2445 = vld [vmem:[%s3 + $0x2fb8] sm:$0xff]
  %v2446 = vld [vmem:[%s3 + $0x2fc0] sm:$0xff]
  %v2447 = vld [vmem:[%s3 + $0x2fc8] sm:$0xff]
  %v2448 = vld [vmem:[%s3 + $0x2fd0] sm:$0xff]
  %v2449 = vld [vmem:[%s3 + $0x2fd8] sm:$0xff]
  %v2450 = vld [vmem:[%s3 + $0x2fe0] sm:$0xff]
  %v2451 = vld [vmem:[%s3 + $0x2fe8] sm:$0xff]
  %v2452 = vld [vmem:[%s3 + $0x2ff0] sm:$0xff]
  %v2453 = vld [vmem:[%s3 + $0x2ff8] sm:$0xff]
  %v2454 = vld [vmem:[%s3 + $0x3000] sm:$0xff]
  %v2455 = vld [vmem:[%s3 + $0x3008] sm:$0xff]
  %v2456 = vld [vmem:[%s3 + $0x3010] sm:$0xff]
  %v2457 = vld [vmem:[%s3 + $0x3018] sm:$0xff]
  %v2458 = vld [vmem:[%s3 + $0x3020] sm:$0xff]
  %v2459 = vld [vmem:[%s3 + $0x3028] sm:$0xff]
  %v2460 = vld [vmem:[%s3 + $0x3030] sm:$0xff]
  %v2461 = vld [vmem:[%s3 + $0x3038] sm:$0xff]
  %v2462 = vld [vmem:[%s3 + $0x3040] sm:$0xff]
  %v2463 = vld [vmem:[%s3 + $0x3048] sm:$0xff]
  %v2464 = vld [vmem:[%s3 + $0x3050] sm:$0xff]
  %v2465 = vld [vmem:[%s3 + $0x3058] sm:$0xff]
  %v2466 = vld [vmem:[%s3 + $0x3060] sm:$0xff]
  %v2467 = vld [vmem:[%s3 + $0x3068] sm:$0xff]
  %v2468 = vld [vmem:[%s3 + $0x3070] sm:$0xff]
  %v2469 = vld [vmem:[%s3 + $0x3078] sm:$0xff]
  %v2470 = vld [vmem:[%s3 + $0x3080] sm:$0xff]
  %v2471 = vld [vmem:[%s3 + $0x3088] sm:$0xff]
  %v2472 = vld [vmem:[%s3 + $0x3090] sm:$0xff]
  %v2473 = vld [vmem:[%s3 + $0x3098] sm:$0xff]
  %v2474 = vld [vmem:[%s3 + $0x30a0] sm:$0xff]
  %v2475 = vld [vmem:[%s3 + $0x30a8] sm:$0xff]
  %v2476 = vld [vmem:[%s3 + $0x30b0] sm:$0xff]
  %v2477 = vld [vmem:[%s3 + $0x30b8] sm:$0xff]
  %v2478 = vld [vmem:[%s3 + $0x30c0] sm:$0xff]
  %v2479 = vld [vmem:[%s3 + $0x30c8] sm:$0xff]
  %v2480 = vld [vmem:[%s3 + $0x30d0] sm:$0xff]
  %v2481 = vld [vmem:[%s3 + $0x30d8] sm:$0xff]
  %v2482 = vld [vmem:[%s3 + $0x30e0] sm:$0xff]
  %v2483 = vld [vmem:[%s3 + $0x30e8] sm:$0xff]
  %v2484 = vld [vmem:[%s3 + $0x30f0] sm:$0xff]
  %v2485 = vld [vmem:[%s3 + $0x30f8] sm:$0xff]
  %v2486 = vld [vmem:[%s3 + $0x3100] sm:$0xff]
  %v2487 = vld [vmem:[%s3 + $0x3108] sm:$0xff]
  %v2488 = vld [vmem:[%s3 + $0x3110] sm:$0xff]
  %v2489 = vld [vmem:[%s3 + $0x3118] sm:$0xff]
  %v2490 = vld [vmem:[%s3 + $0x3120] sm:$0xff]
  %v2491 = vld [vmem:[%s3 + $0x3128] sm:$0xff]
  %v2492 = vld [vmem:[%s3 + $0x3130] sm:$0xff]
  %v2493 = vld [vmem:[%s3 + $0x3138] sm:$0xff]
  %v2494 = vld [vmem:[%s3 + $0x3140] sm:$0xff]
  %v2495 = vld [vmem:[%s3 + $0x3148] sm:$0xff]
  %v2496 = vld [vmem:[%s3 + $0x3150] sm:$0xff]
  %v2497 = vld [vmem:[%s3 + $0x3158] sm:$0xff]
  %v2498 = vld [vmem:[%s3 + $0x3160] sm:$0xff]
  %v2499 = vld [vmem:[%s3 + $0x3168] sm:$0xff]
  %v2500 = vld [vmem:[%s3 + $0x3170] sm:$0xff]
  %v2501 = vld [vmem:[%s3 + $0x3178] sm:$0xff]
  %v2502 = vld [vmem:[%s3 + $0x3180] sm:$0xff]
  %v2503 = vld [vmem:[%s3 + $0x3188] sm:$0xff]
  %v2504 = vld [vmem:[%s3 + $0x3190] sm:$0xff]
  %v2505 = vld [vmem:[%s3 + $0x3198] sm:$0xff]
  %v2506 = vld [vmem:[%s3 + $0x31a0] sm:$0xff]
  %v2507 = vld [vmem:[%s3 + $0x31a8] sm:$0xff]
  %v2508 = vld [vmem:[%s3 + $0x31b0] sm:$0xff]
  %v2509 = vld [vmem:[%s3 + $0x31b8] sm:$0xff]
  %v2510 = vld [vmem:[%s3 + $0x31c0] sm:$0xff]
  %v2511 = vld [vmem:[%s3 + $0x31c8] sm:$0xff]
  %v2512 = vld [vmem:[%s3 + $0x31d0] sm:$0xff]
  %v2513 = vld [vmem:[%s3 + $0x31d8] sm:$0xff]
  %v2514 = vld [vmem:[%s3 + $0x31e0] sm:$0xff]
  %v2515 = vld [vmem:[%s3 + $0x31e8] sm:$0xff]
  %v2516 = vld [vmem:[%s3 + $0x31f0] sm:$0xff]
  %v2517 = vld [vmem:[%s3 + $0x31f8] sm:$0xff]
  %v2518 = vld [vmem:[%s3 + $0x3200] sm:$0xff]
  %v2519 = vld [vmem:[%s3 + $0x3208] sm:$0xff]
  %v2520 = vld [vmem:[%s3 + $0x3210] sm:$0xff]
  %v2521 = vld [vmem:[%s3 + $0x3218] sm:$0xff]
  %v2522 = vld [vmem:[%s3 + $0x3220] sm:$0xff]
  %v2523 = vld [vmem:[%s3 + $0x3228] sm:$0xff]
  %v2524 = vld [vmem:[%s3 + $0x3230] sm:$0xff]
  %v2525 = vld [vmem:[%s3 + $0x3238] sm:$0xff]
  %v2526 = vld [vmem:[%s3 + $0x3240] sm:$0xff]
  %v2527 = vld [vmem:[%s3 + $0x3248] sm:$0xff]
  %v2528 = vld [vmem:[%s3 + $0x3250] sm:$0xff]
  %v2529 = vld [vmem:[%s3 + $0x3258] sm:$0xff]
  %v2530 = vld [vmem:[%s3 + $0x3260] sm:$0xff]
  %v2531 = vld [vmem:[%s3 + $0x3268] sm:$0xff]
  %v2532 = vld [vmem:[%s3 + $0x3270] sm:$0xff]
  %v2533 = vld [vmem:[%s3 + $0x3278] sm:$0xff]
  %v2534 = vld [vmem:[%s3 + $0x3280] sm:$0xff]
  %v2535 = vld [vmem:[%s3 + $0x3288] sm:$0xff]
  %v2536 = vld [vmem:[%s3 + $0x3290] sm:$0xff]
  %v2537 = vld [vmem:[%s3 + $0x3298] sm:$0xff]
  %v2538 = vld [vmem:[%s3 + $0x32a0] sm:$0xff]
  %v2539 = vld [vmem:[%s3 + $0x32a8] sm:$0xff]
  %v2540 = vld [vmem:[%s3 + $0x32b0] sm:$0xff]
  %v2541 = vld [vmem:[%s3 + $0x32b8] sm:$0xff]
  %v2542 = vld [vmem:[%s3 + $0x32c0] sm:$0xff]
  %v2543 = vld [vmem:[%s3 + $0x32c8] sm:$0xff]
  %v2544 = vld [vmem:[%s3 + $0x32d0] sm:$0xff]
  %v2545 = vld [vmem:[%s3 + $0x32d8] sm:$0xff]
  %v2546 = vld [vmem:[%s3 + $0x32e0] sm:$0xff]
  %v2547 = vld [vmem:[%s3 + $0x32e8] sm:$0xff]
  %v2548 = vld [vmem:[%s3 + $0x32f0] sm:$0xff]
  %v2549 = vld [vmem:[%s3 + $0x32f8] sm:$0xff]
  %v2550 = vld [vmem:[%s3 + $0x3300] sm:$0xff]
  %v2551 = vld [vmem:[%s3 + $0x3308] sm:$0xff]
  %v2552 = vld [vmem:[%s3 + $0x3310] sm:$0xff]
  %v2553 = vld [vmem:[%s3 + $0x3318] sm:$0xff]
  %v2554 = vld [vmem:[%s3 + $0x3320] sm:$0xff]
  %v2555 = vld [vmem:[%s3 + $0x3328] sm:$0xff]
  %v2556 = vld [vmem:[%s3 + $0x3330] sm:$0xff]
  %v2557 = vld [vmem:[%s3 + $0x3338] sm:$0xff]
  %v2558 = vld [vmem:[%s3 + $0x3340] sm:$0xff]
  %v2559 = vld [vmem:[%s3 + $0x3348] sm:$0xff]
  %v2560 = vld [vmem:[%s3 + $0x3350] sm:$0xff]
  %v2561 = vld [vmem:[%s3 + $0x3358] sm:$0xff]
  %v2562 = vld [vmem:[%s3 + $0x3360] sm:$0xff]
  %v2563 = vld [vmem:[%s3 + $0x3368] sm:$0xff]
  %v2564 = vld [vmem:[%s3 + $0x3370] sm:$0xff]
  %v2565 = vld [vmem:[%s3 + $0x3378] sm:$0xff]
  %v2566 = vld [vmem:[%s3 + $0x3380] sm:$0xff]
  %v2567 = vld [vmem:[%s3 + $0x3388] sm:$0xff]
  %v2568 = vld [vmem:[%s3 + $0x3390] sm:$0xff]
  %v2569 = vld [vmem:[%s3 + $0x3398] sm:$0xff]
  %v2570 = vld [vmem:[%s3 + $0x33a0] sm:$0xff]
  %v2571 = vld [vmem:[%s3 + $0x33a8] sm:$0xff]
  %v2572 = vld [vmem:[%s3 + $0x33b0] sm:$0xff]
  %v2573 = vld [vmem:[%s3 + $0x33b8] sm:$0xff]
  %v2574 = vld [vmem:[%s3 + $0x33c0] sm:$0xff]
  %v2575 = vld [vmem:[%s3 + $0x33c8] sm:$0xff]
  %v2576 = vld [vmem:[%s3 + $0x33d0] sm:$0xff]
  %v2577 = vld [vmem:[%s3 + $0x33d8] sm:$0xff]
  %v2578 = vld [vmem:[%s3 + $0x33e0] sm:$0xff]
  %v2579 = vld [vmem:[%s3 + $0x33e8] sm:$0xff]
  %v2580 = vld [vmem:[%s3 + $0x33f0] sm:$0xff]
  %v2581 = vld [vmem:[%s3 + $0x33f8] sm:$0xff]
  %v2582 = vld [vmem:[%s3 + $0x3400] sm:$0xff]
  %v2583 = vld [vmem:[%s3 + $0x3408] sm:$0xff]
  %v2584 = vld [vmem:[%s3 + $0x3410] sm:$0xff]
  %v2585 = vld [vmem:[%s3 + $0x3418] sm:$0xff]
  %v2586 = vld [vmem:[%s3 + $0x3420] sm:$0xff]
  %v2587 = vld [vmem:[%s3 + $0x3428] sm:$0xff]
  %v2588 = vld [vmem:[%s3 + $0x3430] sm:$0xff]
  %v2589 = vld [vmem:[%s3 + $0x3438] sm:$0xff]
  %v2590 = vld [vmem:[%s3 + $0x3440] sm:$0xff]
  %v2591 = vld [vmem:[%s3 + $0x3448] sm:$0xff]
  %v2592 = vld [vmem:[%s3 + $0x3450] sm:$0xff]
  %v2593 = vld [vmem:[%s3 + $0x3458] sm:$0xff]
  %v2594 = vld [vmem:[%s3 + $0x3460] sm:$0xff]
  %v2595 = vld [vmem:[%s3 + $0x3468] sm:$0xff]
  %v2596 = vld [vmem:[%s3 + $0x3470] sm:$0xff]
  %v2597 = vld [vmem:[%s3 + $0x3478] sm:$0xff]
  %v2598 = vld [vmem:[%s3 + $0x3480] sm:$0xff]
  %v2599 = vld [vmem:[%s3 + $0x3488] sm:$0xff]
  %v2600 = vld [vmem:[%s3 + $0x3490] sm:$0xff]
  %v2601 = vld [vmem:[%s3 + $0x3498] sm:$0xff]
  %v2602 = vld [vmem:[%s3 + $0x34a0] sm:$0xff]
  %v2603 = vld [vmem:[%s3 + $0x34a8] sm:$0xff]
  %v2604 = vld [vmem:[%s3 + $0x34b0] sm:$0xff]
  %v2605 = vld [vmem:[%s3 + $0x34b8] sm:$0xff]
  %v2606 = vld [vmem:[%s3 + $0x34c0] sm:$0xff]
  %v2607 = vld [vmem:[%s3 + $0x34c8] sm:$0xff]
  %v2608 = vld [vmem:[%s3 + $0x34d0] sm:$0xff]
  %v2609 = vld [vmem:[%s3 + $0x34d8] sm:$0xff]
  %v2610 = vld [vmem:[%s3 + $0x34e0] sm:$0xff]
  %v2611 = vld [vmem:[%s3 + $0x34e8] sm:$0xff]
  %v2612 = vld [vmem:[%s3 + $0x34f0] sm:$0xff]
  %v2613 = vld [vmem:[%s3 + $0x34f8] sm:$0xff]
  %v2614 = vld [vmem:[%s3 + $0x3500] sm:$0xff]
  %v2615 = vld [vmem:[%s3 + $0x3508] sm:$0xff]
  %v2616 = vld [vmem:[%s3 + $0x3510] sm:$0xff]
  %v2617 = vld [vmem:[%s3 + $0x3518] sm:$0xff]
  %v2618 = vld [vmem:[%s3 + $0x3520] sm:$0xff]
  %v2619 = vld [vmem:[%s3 + $0x3528] sm:$0xff]
  %v2620 = vld [vmem:[%s3 + $0x3530] sm:$0xff]
  %v2621 = vld [vmem:[%s3 + $0x3538] sm:$0xff]
  %v2622 = vld [vmem:[%s3 + $0x3540] sm:$0xff]
  %v2623 = vld [vmem:[%s3 + $0x3548] sm:$0xff]
  %v2624 = vld [vmem:[%s3 + $0x3550] sm:$0xff]
  %v2625 = vld [vmem:[%s3 + $0x3558] sm:$0xff]
  %v2626 = vld [vmem:[%s3 + $0x3560] sm:$0xff]
  %v2627 = vld [vmem:[%s3 + $0x3568] sm:$0xff]
  %v2628 = vld [vmem:[%s3 + $0x3570] sm:$0xff]
  %v2629 = vld [vmem:[%s3 + $0x3578] sm:$0xff]
  %v2630 = vld [vmem:[%s3 + $0x3580] sm:$0xff]
  %v2631 = vld [vmem:[%s3 + $0x3588] sm:$0xff]
  %v2632 = vld [vmem:[%s3 + $0x3590] sm:$0xff]
  %v2633 = vld [vmem:[%s3 + $0x3598] sm:$0xff]
  %v2634 = vld [vmem:[%s3 + $0x35a0] sm:$0xff]
  %v2635 = vld [vmem:[%s3 + $0x35a8] sm:$0xff]
  %v2636 = vld [vmem:[%s3 + $0x35b0] sm:$0xff]
  %v2637 = vld [vmem:[%s3 + $0x35b8] sm:$0xff]
  %v2638 = vld [vmem:[%s3 + $0x35c0] sm:$0xff]
  %v2639 = vld [vmem:[%s3 + $0x35c8] sm:$0xff]
  %v2640 = vld [vmem:[%s3 + $0x35d0] sm:$0xff]
  %v2641 = vld [vmem:[%s3 + $0x35d8] sm:$0xff]
  %v2642 = vld [vmem:[%s3 + $0x35e0] sm:$0xff]
  %v2643 = vld [vmem:[%s3 + $0x35e8] sm:$0xff]
  %v2644 = vld [vmem:[%s3 + $0x35f0] sm:$0xff]
  %v2645 = vld [vmem:[%s3 + $0x35f8] sm:$0xff]
  %v2646 = vld [vmem:[%s3 + $0x3600] sm:$0xff]
  %v2647 = vld [vmem:[%s3 + $0x3608] sm:$0xff]
  %v2648 = vld [vmem:[%s3 + $0x3610] sm:$0xff]
  %v2649 = vld [vmem:[%s3 + $0x3618] sm:$0xff]
  %v2650 = vld [vmem:[%s3 + $0x3620] sm:$0xff]
  %v2651 = vld [vmem:[%s3 + $0x3628] sm:$0xff]
  %v2652 = vld [vmem:[%s3 + $0x3630] sm:$0xff]
  %v2653 = vld [vmem:[%s3 + $0x3638] sm:$0xff]
  %v2654 = vld [vmem:[%s3 + $0x3640] sm:$0xff]
  %v2655 = vld [vmem:[%s3 + $0x3648] sm:$0xff]
  %v2656 = vld [vmem:[%s3 + $0x3650] sm:$0xff]
  %v2657 = vld [vmem:[%s3 + $0x3658] sm:$0xff]
  %v2658 = vld [vmem:[%s3 + $0x3660] sm:$0xff]
  %v2659 = vld [vmem:[%s3 + $0x3668] sm:$0xff]
  %v2660 = vld [vmem:[%s3 + $0x3670] sm:$0xff]
  %v2661 = vld [vmem:[%s3 + $0x3678] sm:$0xff]
  %v2662 = vld [vmem:[%s3 + $0x3680] sm:$0xff]
  %v2663 = vld [vmem:[%s3 + $0x3688] sm:$0xff]
  %v2664 = vld [vmem:[%s3 + $0x3690] sm:$0xff]
  %v2665 = vld [vmem:[%s3 + $0x3698] sm:$0xff]
  %v2666 = vld [vmem:[%s3 + $0x36a0] sm:$0xff]
  %v2667 = vld [vmem:[%s3 + $0x36a8] sm:$0xff]
  %v2668 = vld [vmem:[%s3 + $0x36b0] sm:$0xff]
  %v2669 = vld [vmem:[%s3 + $0x36b8] sm:$0xff]
  %v2670 = vld [vmem:[%s3 + $0x36c0] sm:$0xff]
  %v2671 = vld [vmem:[%s3 + $0x36c8] sm:$0xff]
  %v2672 = vld [vmem:[%s3 + $0x36d0] sm:$0xff]
  %v2673 = vld [vmem:[%s3 + $0x36d8] sm:$0xff]
  %v2674 = vld [vmem:[%s3 + $0x36e0] sm:$0xff]
  %v2675 = vld [vmem:[%s3 + $0x36e8] sm:$0xff]
  %v2676 = vld [vmem:[%s3 + $0x36f0] sm:$0xff]
  %v2677 = vld [vmem:[%s3 + $0x36f8] sm:$0xff]
  %v2678 = vld [vmem:[%s3 + $0x3700] sm:$0xff]
  %v2679 = vld [vmem:[%s3 + $0x3708] sm:$0xff]
  %v2680 = vld [vmem:[%s3 + $0x3710] sm:$0xff]
  %v2681 = vld [vmem:[%s3 + $0x3718] sm:$0xff]
  %v2682 = vld [vmem:[%s3 + $0x3720] sm:$0xff]
  %v2683 = vld [vmem:[%s3 + $0x3728] sm:$0xff]
  %v2684 = vld [vmem:[%s3 + $0x3730] sm:$0xff]
  %v2685 = vld [vmem:[%s3 + $0x3738] sm:$0xff]
  %v2686 = vld [vmem:[%s3 + $0x3740] sm:$0xff]
  %v2687 = vld [vmem:[%s3 + $0x3748] sm:$0xff]
  %v2688 = vld [vmem:[%s3 + $0x3750] sm:$0xff]
  %v2689 = vld [vmem:[%s3 + $0x3758] sm:$0xff]
  %v2690 = vld [vmem:[%s3 + $0x3760] sm:$0xff]
  %v2691 = vld [vmem:[%s3 + $0x3768] sm:$0xff]
  %v2692 = vld [vmem:[%s3 + $0x3770] sm:$0xff]
  %v2693 = vld [vmem:[%s3 + $0x3778] sm:$0xff]
  %v2694 = vld [vmem:[%s3 + $0x3780] sm:$0xff]
  %v2695 = vld [vmem:[%s3 + $0x3788] sm:$0xff]
  %v2696 = vld [vmem:[%s3 + $0x3790] sm:$0xff]
  %v2697 = vld [vmem:[%s3 + $0x3798] sm:$0xff]
  %v2698 = vld [vmem:[%s3 + $0x37a0] sm:$0xff]
  %v2699 = vld [vmem:[%s3 + $0x37a8] sm:$0xff]
  %v2700 = vld [vmem:[%s3 + $0x37b0] sm:$0xff]
  %v2701 = vld [vmem:[%s3 + $0x37b8] sm:$0xff]
  %v2702 = vld [vmem:[%s3 + $0x37c0] sm:$0xff]
  %v2703 = vld [vmem:[%s3 + $0x37c8] sm:$0xff]
  %v2704 = vld [vmem:[%s3 + $0x37d0] sm:$0xff]
  %v2705 = vld [vmem:[%s3 + $0x37d8] sm:$0xff]
  %v2706 = vld [vmem:[%s3 + $0x37e0] sm:$0xff]
  %v2707 = vld [vmem:[%s3 + $0x37e8] sm:$0xff]
  %v2708 = vld [vmem:[%s3 + $0x37f0] sm:$0xff]
  %v2709 = vld [vmem:[%s3 + $0x37f8] sm:$0xff]
  %v2710 = vld [vmem:[%s3 + $0x3800] sm:$0xff]
  %v2711 = vld [vmem:[%s3 + $0x3808] sm:$0xff]
  %v2712 = vld [vmem:[%s3 + $0x3810] sm:$0xff]
  %v2713 = vld [vmem:[%s3 + $0x3818] sm:$0xff]
  %v2714 = vld [vmem:[%s3 + $0x3820] sm:$0xff]
  %v2715 = vld [vmem:[%s3 + $0x3828] sm:$0xff]
  %v2716 = vld [vmem:[%s3 + $0x3830] sm:$0xff]
  %v2717 = vld [vmem:[%s3 + $0x3838] sm:$0xff]
  %v2718 = vld [vmem:[%s3 + $0x3840] sm:$0xff]
  %v2719 = vld [vmem:[%s3 + $0x3848] sm:$0xff]
  %v2720 = vld [vmem:[%s3 + $0x3850] sm:$0xff]
  %v2721 = vld [vmem:[%s3 + $0x3858] sm:$0xff]
  %v2722 = vld [vmem:[%s3 + $0x3860] sm:$0xff]
  %v2723 = vld [vmem:[%s3 + $0x3868] sm:$0xff]
  %v2724 = vld [vmem:[%s3 + $0x3870] sm:$0xff]
  %v2725 = vld [vmem:[%s3 + $0x3878] sm:$0xff]
  %v2726 = vld [vmem:[%s3 + $0x3880] sm:$0xff]
  %v2727 = vld [vmem:[%s3 + $0x3888] sm:$0xff]
  %v2728 = vld [vmem:[%s3 + $0x3890] sm:$0xff]
  %v2729 = vld [vmem:[%s3 + $0x3898] sm:$0xff]
  %v2730 = vld [vmem:[%s3 + $0x38a0] sm:$0xff]
  %v2731 = vld [vmem:[%s3 + $0x38a8] sm:$0xff]
  %v2732 = vld [vmem:[%s3 + $0x38b0] sm:$0xff]
  %v2733 = vld [vmem:[%s3 + $0x38b8] sm:$0xff]
  %v2734 = vld [vmem:[%s3 + $0x38c0] sm:$0xff]
  %v2735 = vld [vmem:[%s3 + $0x38c8] sm:$0xff]
  %v2736 = vld [vmem:[%s3 + $0x38d0] sm:$0xff]
  %v2737 = vld [vmem:[%s3 + $0x38d8] sm:$0xff]
  %v2738 = vld [vmem:[%s3 + $0x38e0] sm:$0xff]
  %v2739 = vld [vmem:[%s3 + $0x38e8] sm:$0xff]
  %v2740 = vld [vmem:[%s3 + $0x38f0] sm:$0xff]
  %v2741 = vld [vmem:[%s3 + $0x38f8] sm:$0xff]
  %v2742 = vld [vmem:[%s3 + $0x3900] sm:$0xff]
  %v2743 = vld [vmem:[%s3 + $0x3908] sm:$0xff]
  %v2744 = vld [vmem:[%s3 + $0x3910] sm:$0xff]
  %v2745 = vld [vmem:[%s3 + $0x3918] sm:$0xff]
  %v2746 = vld [vmem:[%s3 + $0x3920] sm:$0xff]
  %v2747 = vld [vmem:[%s3 + $0x3928] sm:$0xff]
  %v2748 = vld [vmem:[%s3 + $0x3930] sm:$0xff]
  %v2749 = vld [vmem:[%s3 + $0x3938] sm:$0xff]
  %v2750 = vld [vmem:[%s3 + $0x3940] sm:$0xff]
  %v2751 = vld [vmem:[%s3 + $0x3948] sm:$0xff]
  %v2752 = vld [vmem:[%s3 + $0x3950] sm:$0xff]
  %v2753 = vld [vmem:[%s3 + $0x3958] sm:$0xff]
  %v2754 = vld [vmem:[%s3 + $0x3960] sm:$0xff]
  %v2755 = vld [vmem:[%s3 + $0x3968] sm:$0xff]
  %v2756 = vld [vmem:[%s3 + $0x3970] sm:$0xff]
  %v2757 = vld [vmem:[%s3 + $0x3978] sm:$0xff]
  %v2758 = vld [vmem:[%s3 + $0x3980] sm:$0xff]
  %v2759 = vld [vmem:[%s3 + $0x3988] sm:$0xff]
  %v2760 = vld [vmem:[%s3 + $0x3990] sm:$0xff]
  %v2761 = vld [vmem:[%s3 + $0x3998] sm:$0xff]
  %v2762 = vld [vmem:[%s3 + $0x39a0] sm:$0xff]
  %v2763 = vld [vmem:[%s3 + $0x39a8] sm:$0xff]
  %v2764 = vld [vmem:[%s3 + $0x39b0] sm:$0xff]
  %v2765 = vld [vmem:[%s3 + $0x39b8] sm:$0xff]
  %v2766 = vld [vmem:[%s3 + $0x39c0] sm:$0xff]
  %v2767 = vld [vmem:[%s3 + $0x39c8] sm:$0xff]
  %v2768 = vld [vmem:[%s3 + $0x39d0] sm:$0xff]
  %v2769 = vld [vmem:[%s3 + $0x39d8] sm:$0xff]
  %v2770 = vld [vmem:[%s3 + $0x39e0] sm:$0xff]
  %v2771 = vld [vmem:[%s3 + $0x39e8] sm:$0xff]
  %v2772 = vld [vmem:[%s3 + $0x39f0] sm:$0xff]
  %v2773 = vld [vmem:[%s3 + $0x39f8] sm:$0xff]
  %v2774 = vld [vmem:[%s3 + $0x3a00] sm:$0xff]
  %v2775 = vld [vmem:[%s3 + $0x3a08] sm:$0xff]
  %v2776 = vld [vmem:[%s3 + $0x3a10] sm:$0xff]
  %v2777 = vld [vmem:[%s3 + $0x3a18] sm:$0xff]
  %v2778 = vld [vmem:[%s3 + $0x3a20] sm:$0xff]
  %v2779 = vld [vmem:[%s3 + $0x3a28] sm:$0xff]
  %v2780 = vld [vmem:[%s3 + $0x3a30] sm:$0xff]
  %v2781 = vld [vmem:[%s3 + $0x3a38] sm:$0xff]
  %v2782 = vld [vmem:[%s3 + $0x3a40] sm:$0xff]
  %v2783 = vld [vmem:[%s3 + $0x3a48] sm:$0xff]
  %v2784 = vld [vmem:[%s3 + $0x3a50] sm:$0xff]
  %v2785 = vld [vmem:[%s3 + $0x3a58] sm:$0xff]
  %v2786 = vld [vmem:[%s3 + $0x3a60] sm:$0xff]
  %v2787 = vld [vmem:[%s3 + $0x3a68] sm:$0xff]
  %v2788 = vld [vmem:[%s3 + $0x3a70] sm:$0xff]
  %v2789 = vld [vmem:[%s3 + $0x3a78] sm:$0xff]
  %v2790 = vld [vmem:[%s3 + $0x3a80] sm:$0xff]
  %v2791 = vld [vmem:[%s3 + $0x3a88] sm:$0xff]
  %v2792 = vld [vmem:[%s3 + $0x3a90] sm:$0xff]
  %v2793 = vld [vmem:[%s3 + $0x3a98] sm:$0xff]
  %v2794 = vld [vmem:[%s3 + $0x3aa0] sm:$0xff]
  %v2795 = vld [vmem:[%s3 + $0x3aa8] sm:$0xff]
  %v2796 = vld [vmem:[%s3 + $0x3ab0] sm:$0xff]
  %v2797 = vld [vmem:[%s3 + $0x3ab8] sm:$0xff]
  %v2798 = vld [vmem:[%s3 + $0x3ac0] sm:$0xff]
  %v2799 = vld [vmem:[%s3 + $0x3ac8] sm:$0xff]
  %v2800 = vld [vmem:[%s3 + $0x3ad0] sm:$0xff]
  %v2801 = vld [vmem:[%s3 + $0x3ad8] sm:$0xff]
  %v2802 = vld [vmem:[%s3 + $0x3ae0] sm:$0xff]
  %v2803 = vld [vmem:[%s3 + $0x3ae8] sm:$0xff]
  %v2804 = vld [vmem:[%s3 + $0x3af0] sm:$0xff]
  %v2805 = vld [vmem:[%s3 + $0x3af8] sm:$0xff]
  %v2806 = vld [vmem:[%s3 + $0x3b00] sm:$0xff]
  %v2807 = vld [vmem:[%s3 + $0x3b08] sm:$0xff]
  %v2808 = vld [vmem:[%s3 + $0x3b10] sm:$0xff]
  %v2809 = vld [vmem:[%s3 + $0x3b18] sm:$0xff]
  %v2810 = vld [vmem:[%s3 + $0x3b20] sm:$0xff]
  %v2811 = vld [vmem:[%s3 + $0x3b28] sm:$0xff]
  %v2812 = vld [vmem:[%s3 + $0x3b30] sm:$0xff]
  %v2813 = vld [vmem:[%s3 + $0x3b38] sm:$0xff]
  %v2814 = vld [vmem:[%s3 + $0x3b40] sm:$0xff]
  %v2815 = vld [vmem:[%s3 + $0x3b48] sm:$0xff]
  %v2816 = vld [vmem:[%s3 + $0x3b50] sm:$0xff]
  %v2817 = vld [vmem:[%s3 + $0x3b58] sm:$0xff]
  %v2818 = vld [vmem:[%s3 + $0x3b60] sm:$0xff]
  %v2819 = vld [vmem:[%s3 + $0x3b68] sm:$0xff]
  %v2820 = vld [vmem:[%s3 + $0x3b70] sm:$0xff]
  %v2821 = vld [vmem:[%s3 + $0x3b78] sm:$0xff]
  %v2822 = vld [vmem:[%s3 + $0x3b80] sm:$0xff]
  %v2823 = vld [vmem:[%s3 + $0x3b88] sm:$0xff]
  %v2824 = vld [vmem:[%s3 + $0x3b90] sm:$0xff]
  %v2825 = vld [vmem:[%s3 + $0x3b98] sm:$0xff]
  %v2826 = vld [vmem:[%s3 + $0x3ba0] sm:$0xff]
  %v2827 = vld [vmem:[%s3 + $0x3ba8] sm:$0xff]
  %v2828 = vld [vmem:[%s3 + $0x3bb0] sm:$0xff]
  %v2829 = vld [vmem:[%s3 + $0x3bb8] sm:$0xff]
  %v2830 = vld [vmem:[%s3 + $0x3bc0] sm:$0xff]
  %v2831 = vld [vmem:[%s3 + $0x3bc8] sm:$0xff]
  %v2832 = vld [vmem:[%s3 + $0x3bd0] sm:$0xff]
  %v2833 = vld [vmem:[%s3 + $0x3bd8] sm:$0xff]
  %v2834 = vld [vmem:[%s3 + $0x3be0] sm:$0xff]
  %v2835 = vld [vmem:[%s3 + $0x3be8] sm:$0xff]
  %v2836 = vld [vmem:[%s3 + $0x3bf0] sm:$0xff]
  %v2837 = vld [vmem:[%s3 + $0x3bf8] sm:$0xff]
  %v2838 = vld [vmem:[%s3 + $0x3c00] sm:$0xff]
  %v2839 = vld [vmem:[%s3 + $0x3c08] sm:$0xff]
  %v2840 = vld [vmem:[%s3 + $0x3c10] sm:$0xff]
  %v2841 = vld [vmem:[%s3 + $0x3c18] sm:$0xff]
  %v2842 = vld [vmem:[%s3 + $0x3c20] sm:$0xff]
  %v2843 = vld [vmem:[%s3 + $0x3c28] sm:$0xff]
  %v2844 = vld [vmem:[%s3 + $0x3c30] sm:$0xff]
  %v2845 = vld [vmem:[%s3 + $0x3c38] sm:$0xff]
  %v2846 = vld [vmem:[%s3 + $0x3c40] sm:$0xff]
  %v2847 = vld [vmem:[%s3 + $0x3c48] sm:$0xff]
  %v2848 = vld [vmem:[%s3 + $0x3c50] sm:$0xff]
  %v2849 = vld [vmem:[%s3 + $0x3c58] sm:$0xff]
  %v2850 = vld [vmem:[%s3 + $0x3c60] sm:$0xff]
  %v2851 = vld [vmem:[%s3 + $0x3c68] sm:$0xff]
  %v2852 = vld [vmem:[%s3 + $0x3c70] sm:$0xff]
  %v2853 = vld [vmem:[%s3 + $0x3c78] sm:$0xff]
  %v2854 = vld [vmem:[%s3 + $0x3c80] sm:$0xff]
  %v2855 = vld [vmem:[%s3 + $0x3c88] sm:$0xff]
  %v2856 = vld [vmem:[%s3 + $0x3c90] sm:$0xff]
  %v2857 = vld [vmem:[%s3 + $0x3c98] sm:$0xff]
  %v2858 = vld [vmem:[%s3 + $0x3ca0] sm:$0xff]
  %v2859 = vld [vmem:[%s3 + $0x3ca8] sm:$0xff]
  %v2860 = vld [vmem:[%s3 + $0x3cb0] sm:$0xff]
  %v2861 = vld [vmem:[%s3 + $0x3cb8] sm:$0xff]
  %v2862 = vld [vmem:[%s3 + $0x3cc0] sm:$0xff]
  %v2863 = vld [vmem:[%s3 + $0x3cc8] sm:$0xff]
  %v2864 = vld [vmem:[%s3 + $0x3cd0] sm:$0xff]
  %v2865 = vld [vmem:[%s3 + $0x3cd8] sm:$0xff]
  %v2866 = vld [vmem:[%s3 + $0x3ce0] sm:$0xff]
  %v2867 = vld [vmem:[%s3 + $0x3ce8] sm:$0xff]
  %v2868 = vld [vmem:[%s3 + $0x3cf0] sm:$0xff]
  %v2869 = vld [vmem:[%s3 + $0x3cf8] sm:$0xff]
  %v2870 = vld [vmem:[%s3 + $0x3d00] sm:$0xff]
  %v2871 = vld [vmem:[%s3 + $0x3d08] sm:$0xff]
  %v2872 = vld [vmem:[%s3 + $0x3d10] sm:$0xff]
  %v2873 = vld [vmem:[%s3 + $0x3d18] sm:$0xff]
  %v2874 = vld [vmem:[%s3 + $0x3d20] sm:$0xff]
  %v2875 = vld [vmem:[%s3 + $0x3d28] sm:$0xff]
  %v2876 = vld [vmem:[%s3 + $0x3d30] sm:$0xff]
  %v2877 = vld [vmem:[%s3 + $0x3d38] sm:$0xff]
  %v2878 = vld [vmem:[%s3 + $0x3d40] sm:$0xff]
  %v2879 = vld [vmem:[%s3 + $0x3d48] sm:$0xff]
  %v2880 = vld [vmem:[%s3 + $0x3d50] sm:$0xff]
  %v2881 = vld [vmem:[%s3 + $0x3d58] sm:$0xff]
  %v2882 = vld [vmem:[%s3 + $0x3d60] sm:$0xff]
  %v2883 = vld [vmem:[%s3 + $0x3d68] sm:$0xff]
  %v2884 = vld [vmem:[%s3 + $0x3d70] sm:$0xff]
  %v2885 = vld [vmem:[%s3 + $0x3d78] sm:$0xff]
  %v2886 = vld [vmem:[%s3 + $0x3d80] sm:$0xff]
  %v2887 = vld [vmem:[%s3 + $0x3d88] sm:$0xff]
  %v2888 = vld [vmem:[%s3 + $0x3d90] sm:$0xff]
  %v2889 = vld [vmem:[%s3 + $0x3d98] sm:$0xff]
  %v2890 = vld [vmem:[%s3 + $0x3da0] sm:$0xff]
  %v2891 = vld [vmem:[%s3 + $0x3da8] sm:$0xff]
  %v2892 = vld [vmem:[%s3 + $0x3db0] sm:$0xff]
  %v2893 = vld [vmem:[%s3 + $0x3db8] sm:$0xff]
  %v2894 = vld [vmem:[%s3 + $0x3dc0] sm:$0xff]
  %v2895 = vld [vmem:[%s3 + $0x3dc8] sm:$0xff]
  %v2896 = vld [vmem:[%s3 + $0x3dd0] sm:$0xff]
  %v2897 = vld [vmem:[%s3 + $0x3dd8] sm:$0xff]
  %v2898 = vld [vmem:[%s3 + $0x3de0] sm:$0xff]
  %v2899 = vld [vmem:[%s3 + $0x3de8] sm:$0xff]
  %v2900 = vld [vmem:[%s3 + $0x3df0] sm:$0xff]
  %v2901 = vld [vmem:[%s3 + $0x3df8] sm:$0xff]
  %v2902 = vld [vmem:[%s3 + $0x3e00] sm:$0xff]
  %v2903 = vld [vmem:[%s3 + $0x3e08] sm:$0xff]
  %v2904 = vld [vmem:[%s3 + $0x3e10] sm:$0xff]
  %v2905 = vld [vmem:[%s3 + $0x3e18] sm:$0xff]
  %v2906 = vld [vmem:[%s3 + $0x3e20] sm:$0xff]
  %v2907 = vld [vmem:[%s3 + $0x3e28] sm:$0xff]
  %v2908 = vld [vmem:[%s3 + $0x3e30] sm:$0xff]
  %v2909 = vld [vmem:[%s3 + $0x3e38] sm:$0xff]
  %v2910 = vld [vmem:[%s3 + $0x3e40] sm:$0xff]
  %v2911 = vld [vmem:[%s3 + $0x3e48] sm:$0xff]
  %v2912 = vld [vmem:[%s3 + $0x3e50] sm:$0xff]
  %v2913 = vld [vmem:[%s3 + $0x3e58] sm:$0xff]
  %v2914 = vld [vmem:[%s3 + $0x3e60] sm:$0xff]
  %v2915 = vld [vmem:[%s3 + $0x3e68] sm:$0xff]
  %v2916 = vld [vmem:[%s3 + $0x3e70] sm:$0xff]
  %v2917 = vld [vmem:[%s3 + $0x3e78] sm:$0xff]
  %v2918 = vld [vmem:[%s3 + $0x3e80] sm:$0xff]
  %v2919 = vld [vmem:[%s3 + $0x3e88] sm:$0xff]
  %v2920 = vld [vmem:[%s3 + $0x3e90] sm:$0xff]
  %v2921 = vld [vmem:[%s3 + $0x3e98] sm:$0xff]
  %v2922 = vld [vmem:[%s3 + $0x3ea0] sm:$0xff]
  %v2923 = vld [vmem:[%s3 + $0x3ea8] sm:$0xff]
  %v2924 = vld [vmem:[%s3 + $0x3eb0] sm:$0xff]
  %v2925 = vld [vmem:[%s3 + $0x3eb8] sm:$0xff]
  %v2926 = vld [vmem:[%s3 + $0x3ec0] sm:$0xff]
  %v2927 = vld [vmem:[%s3 + $0x3ec8] sm:$0xff]
  %v2928 = vld [vmem:[%s3 + $0x3ed0] sm:$0xff]
  %v2929 = vld [vmem:[%s3 + $0x3ed8] sm:$0xff]
  %v2930 = vld [vmem:[%s3 + $0x3ee0] sm:$0xff]
  %v2931 = vld [vmem:[%s3 + $0x3ee8] sm:$0xff]
  %v2932 = vld [vmem:[%s3 + $0x3ef0] sm:$0xff]
  %v2933 = vld [vmem:[%s3 + $0x3ef8] sm:$0xff]
  %v2934 = vld [vmem:[%s3 + $0x3f00] sm:$0xff]
  %v2935 = vld [vmem:[%s3 + $0x3f08] sm:$0xff]
  %v2936 = vld [vmem:[%s3 + $0x3f10] sm:$0xff]
  %v2937 = vld [vmem:[%s3 + $0x3f18] sm:$0xff]
  %v2938 = vld [vmem:[%s3 + $0x3f20] sm:$0xff]
  %v2939 = vld [vmem:[%s3 + $0x3f28] sm:$0xff]
  %v2940 = vld [vmem:[%s3 + $0x3f30] sm:$0xff]
  %v2941 = vld [vmem:[%s3 + $0x3f38] sm:$0xff]
  %v2942 = vld [vmem:[%s3 + $0x3f40] sm:$0xff]
  %v2943 = vld [vmem:[%s3 + $0x3f48] sm:$0xff]
  %v2944 = vld [vmem:[%s3 + $0x3f50] sm:$0xff]
  %v2945 = vld [vmem:[%s3 + $0x3f58] sm:$0xff]
  %v2946 = vld [vmem:[%s3 + $0x3f60] sm:$0xff]
  %v2947 = vld [vmem:[%s3 + $0x3f68] sm:$0xff]
  %v2948 = vld [vmem:[%s3 + $0x3f70] sm:$0xff]
  %v2949 = vld [vmem:[%s3 + $0x3f78] sm:$0xff]
  %v2950 = vld [vmem:[%s3 + $0x3f80] sm:$0xff]
  %v2951 = vld [vmem:[%s3 + $0x3f88] sm:$0xff]
  %v2952 = vld [vmem:[%s3 + $0x3f90] sm:$0xff]
  %v2953 = vld [vmem:[%s3 + $0x3f98] sm:$0xff]
  %v2954 = vld [vmem:[%s3 + $0x3fa0] sm:$0xff]
  %v2955 = vld [vmem:[%s3 + $0x3fa8] sm:$0xff]
  %v2956 = vld [vmem:[%s3 + $0x3fb0] sm:$0xff]
  %v2957 = vld [vmem:[%s3 + $0x3fb8] sm:$0xff]
  %v2958 = vld [vmem:[%s3 + $0x3fc0] sm:$0xff]
  %v2959 = vld [vmem:[%s3 + $0x3fc8] sm:$0xff]
  %v2960 = vld [vmem:[%s3 + $0x3fd0] sm:$0xff]
  %v2961 = vld [vmem:[%s3 + $0x3fd8] sm:$0xff]
  %v2962 = vld [vmem:[%s3 + $0x3fe0] sm:$0xff]
  %v2963 = vld [vmem:[%s3 + $0x3fe8] sm:$0xff]
  %v2964 = vld [vmem:[%s3 + $0x3ff0] sm:$0xff]
  %v2965 = vld [vmem:[%s3 + $0x3ff8] sm:$0xff]
  %v2966 = vld [vmem:[%s3 + $0x4000] sm:$0xff]
  %v2967 = vld [vmem:[%s3 + $0x4008] sm:$0xff]
  %v2968 = vld [vmem:[%s3 + $0x4010] sm:$0xff]
  %v2969 = vld [vmem:[%s3 + $0x4018] sm:$0xff]
  %v2970 = vld [vmem:[%s3 + $0x4020] sm:$0xff]
  %v2971 = vld [vmem:[%s3 + $0x4028] sm:$0xff]
  %v2972 = vld [vmem:[%s3 + $0x4030] sm:$0xff]
  %v2973 = vld [vmem:[%s3 + $0x4038] sm:$0xff]
  %v2974 = vld [vmem:[%s3 + $0x4040] sm:$0xff]
  %v2975 = vld [vmem:[%s3 + $0x4048] sm:$0xff]
  %v2976 = vld [vmem:[%s3 + $0x4050] sm:$0xff]
  %v2977 = vld [vmem:[%s3 + $0x4058] sm:$0xff]
  %v2978 = vld [vmem:[%s3 + $0x4060] sm:$0xff]
  %v2979 = vld [vmem:[%s3 + $0x4068] sm:$0xff]
  %v2980 = vld [vmem:[%s3 + $0x4070] sm:$0xff]
  %v2981 = vld [vmem:[%s3 + $0x4078] sm:$0xff]
  %v2982 = vld [vmem:[%s3 + $0x4080] sm:$0xff]
  %v2983 = vld [vmem:[%s3 + $0x4088] sm:$0xff]
  %v2984 = vld [vmem:[%s3 + $0x4090] sm:$0xff]
  %v2985 = vld [vmem:[%s3 + $0x4098] sm:$0xff]
  %v2986 = vld [vmem:[%s3 + $0x40a0] sm:$0xff]
  %v2987 = vld [vmem:[%s3 + $0x40a8] sm:$0xff]
  %v2988 = vld [vmem:[%s3 + $0x40b0] sm:$0xff]
  %v2989 = vld [vmem:[%s3 + $0x40b8] sm:$0xff]
  %v2990 = vld [vmem:[%s3 + $0x40c0] sm:$0xff]
  %v2991 = vld [vmem:[%s3 + $0x40c8] sm:$0xff]
  %v2992 = vld [vmem:[%s3 + $0x40d0] sm:$0xff]
  %v2993 = vld [vmem:[%s3 + $0x40d8] sm:$0xff]
  %v2994 = vld [vmem:[%s3 + $0x40e0] sm:$0xff]
  %v2995 = vld [vmem:[%s3 + $0x40e8] sm:$0xff]
  %v2996 = vld [vmem:[%s3 + $0x40f0] sm:$0xff]
  %v2997 = vld [vmem:[%s3 + $0x40f8] sm:$0xff]
  %v2998 = vld [vmem:[%s3 + $0x4100] sm:$0xff]
  %v2999 = vld [vmem:[%s3 + $0x4108] sm:$0xff]
  %v3000 = vld [vmem:[%s3 + $0x4110] sm:$0xff]
  %v3001 = vld [vmem:[%s3 + $0x4118] sm:$0xff]
  %v3002 = vld [vmem:[%s3 + $0x4120] sm:$0xff]
  %v3003 = vld [vmem:[%s3 + $0x4128] sm:$0xff]
  %v3004 = vld [vmem:[%s3 + $0x4130] sm:$0xff]
  %v3005 = vld [vmem:[%s3 + $0x4138] sm:$0xff]
  %v3006 = vld [vmem:[%s3 + $0x4140] sm:$0xff]
  %v3007 = vld [vmem:[%s3 + $0x4148] sm:$0xff]
  %v3008 = vld [vmem:[%s3 + $0x4150] sm:$0xff]
  %v3009 = vld [vmem:[%s3 + $0x4158] sm:$0xff]
  %v3010 = vld [vmem:[%s3 + $0x4160] sm:$0xff]
  %v3011 = vld [vmem:[%s3 + $0x4168] sm:$0xff]
  %v3012 = vld [vmem:[%s3 + $0x4170] sm:$0xff]
  %v3013 = vld [vmem:[%s3 + $0x4178] sm:$0xff]
  %v3014 = vld [vmem:[%s3 + $0x4180] sm:$0xff]
  %v3015 = vld [vmem:[%s3 + $0x4188] sm:$0xff]
  %v3016 = vld [vmem:[%s3 + $0x4190] sm:$0xff]
  %v3017 = vld [vmem:[%s3 + $0x4198] sm:$0xff]
  %v3018 = vld [vmem:[%s3 + $0x41a0] sm:$0xff]
  %v3019 = vld [vmem:[%s3 + $0x41a8] sm:$0xff]
  %v3020 = vld [vmem:[%s3 + $0x41b0] sm:$0xff]
  %v3021 = vld [vmem:[%s3 + $0x41b8] sm:$0xff]
  %v3022 = vld [vmem:[%s3 + $0x41c0] sm:$0xff]
  %v3023 = vld [vmem:[%s3 + $0x41c8] sm:$0xff]
  %v3024 = vld [vmem:[%s3 + $0x41d0] sm:$0xff]
  %v3025 = vld [vmem:[%s3 + $0x41d8] sm:$0xff]
  %v3026 = vld [vmem:[%s3 + $0x41e0] sm:$0xff]
  %v3027 = vld [vmem:[%s3 + $0x41e8] sm:$0xff]
  %v3028 = vld [vmem:[%s3 + $0x41f0] sm:$0xff]
  %v3029 = vld [vmem:[%s3 + $0x41f8] sm:$0xff]
  %v3030 = vld [vmem:[%s3 + $0x4200] sm:$0xff]
  %v3031 = vld [vmem:[%s3 + $0x4208] sm:$0xff]
  %v3032 = vld [vmem:[%s3 + $0x4210] sm:$0xff]
  %v3033 = vld [vmem:[%s3 + $0x4218] sm:$0xff]
  %v3034 = vld [vmem:[%s3 + $0x4220] sm:$0xff]
  %v3035 = vld [vmem:[%s3 + $0x4228] sm:$0xff]
  %v3036 = vld [vmem:[%s3 + $0x4230] sm:$0xff]
  %v3037 = vld [vmem:[%s3 + $0x4238] sm:$0xff]
  %v3038 = vld [vmem:[%s3 + $0x4240] sm:$0xff]
  %v3039 = vld [vmem:[%s3 + $0x4248] sm:$0xff]
  %v3040 = vld [vmem:[%s3 + $0x4250] sm:$0xff]
  %v3041 = vld [vmem:[%s3 + $0x4258] sm:$0xff]
  %v3042 = vld [vmem:[%s3 + $0x4260] sm:$0xff]
  %v3043 = vld [vmem:[%s3 + $0x4268] sm:$0xff]
  %v3044 = vld [vmem:[%s3 + $0x4270] sm:$0xff]
  %v3045 = vld [vmem:[%s3 + $0x4278] sm:$0xff]
  %v3046 = vld [vmem:[%s3 + $0x4280] sm:$0xff]
  %v3047 = vld [vmem:[%s3 + $0x4288] sm:$0xff]
  %v3048 = vld [vmem:[%s3 + $0x4290] sm:$0xff]
  %v3049 = vld [vmem:[%s3 + $0x4298] sm:$0xff]
  %v3050 = vld [vmem:[%s3 + $0x42a0] sm:$0xff]
  %v3051 = vld [vmem:[%s3 + $0x42a8] sm:$0xff]
  %v3052 = vld [vmem:[%s3 + $0x42b0] sm:$0xff]
  %v3053 = vld [vmem:[%s3 + $0x42b8] sm:$0xff]
  %v3054 = vld [vmem:[%s3 + $0x42c0] sm:$0xff]
  %v3055 = vld [vmem:[%s3 + $0x42c8] sm:$0xff]
  %v3056 = vld [vmem:[%s3 + $0x42d0] sm:$0xff]
  %v3057 = vld [vmem:[%s3 + $0x42d8] sm:$0xff]
  %v3058 = vld [vmem:[%s3 + $0x42e0] sm:$0xff]
  %v3059 = vld [vmem:[%s3 + $0x42e8] sm:$0xff]
  %v3060 = vld [vmem:[%s3 + $0x42f0] sm:$0xff]
  %v3061 = vld [vmem:[%s3 + $0x42f8] sm:$0xff]
  %v3062 = vld [vmem:[%s3 + $0x4300] sm:$0xff]
  %v3063 = vld [vmem:[%s3 + $0x4308] sm:$0xff]
  %v3064 = vld [vmem:[%s3 + $0x4310] sm:$0xff]
  %v3065 = vld [vmem:[%s3 + $0x4318] sm:$0xff]
  %v3066 = vld [vmem:[%s3 + $0x4320] sm:$0xff]
  %v3067 = vld [vmem:[%s3 + $0x4328] sm:$0xff]
  %v3068 = vld [vmem:[%s3 + $0x4330] sm:$0xff]
  %v3069 = vld [vmem:[%s3 + $0x4338] sm:$0xff]
  %v3070 = vld [vmem:[%s3 + $0x4340] sm:$0xff]
  %v3071 = vld [vmem:[%s3 + $0x4348] sm:$0xff]
  %v3072 = vld [vmem:[%s3 + $0x4350] sm:$0xff]
  %v3073 = vld [vmem:[%s3 + $0x4358] sm:$0xff]
  %v3074 = vld [vmem:[%s3 + $0x4360] sm:$0xff]
  %v3075 = vld [vmem:[%s3 + $0x4368] sm:$0xff]
  %v3076 = vld [vmem:[%s3 + $0x4370] sm:$0xff]
  %v3077 = vld [vmem:[%s3 + $0x4378] sm:$0xff]
  %v3078 = vld [vmem:[%s3 + $0x4380] sm:$0xff]
  %v3079 = vld [vmem:[%s3 + $0x4388] sm:$0xff]
  %v3080 = vld [vmem:[%s3 + $0x4390] sm:$0xff]
  %v3081 = vld [vmem:[%s3 + $0x4398] sm:$0xff]
  %v3082 = vld [vmem:[%s3 + $0x43a0] sm:$0xff]
  %v3083 = vld [vmem:[%s3 + $0x43a8] sm:$0xff]
  %v3084 = vld [vmem:[%s3 + $0x43b0] sm:$0xff]
  %v3085 = vld [vmem:[%s3 + $0x43b8] sm:$0xff]
  %v3086 = vld [vmem:[%s3 + $0x43c0] sm:$0xff]
  %v3087 = vld [vmem:[%s3 + $0x43c8] sm:$0xff]
  %v3088 = vld [vmem:[%s3 + $0x43d0] sm:$0xff]
  %v3089 = vld [vmem:[%s3 + $0x43d8] sm:$0xff]
  %v3090 = vld [vmem:[%s3 + $0x43e0] sm:$0xff]
  %v3091 = vld [vmem:[%s3 + $0x43e8] sm:$0xff]
  %v3092 = vld [vmem:[%s3 + $0x43f0] sm:$0xff]
  %v3093 = vld [vmem:[%s3 + $0x43f8] sm:$0xff]
  %v3094 = vld [vmem:[%s3 + $0x4400] sm:$0xff]
  %v3095 = vld [vmem:[%s3 + $0x4408] sm:$0xff]
  %v3096 = vld [vmem:[%s3 + $0x4410] sm:$0xff]
  %v3097 = vld [vmem:[%s3 + $0x4418] sm:$0xff]
  %v3098 = vld [vmem:[%s3 + $0x4420] sm:$0xff]
  %v3099 = vld [vmem:[%s3 + $0x4428] sm:$0xff]
  %v3100 = vld [vmem:[%s3 + $0x4430] sm:$0xff]
  %v3101 = vld [vmem:[%s3 + $0x4438] sm:$0xff]
  %v3102 = vld [vmem:[%s3 + $0x4440] sm:$0xff]
  %v3103 = vld [vmem:[%s3 + $0x4448] sm:$0xff]
  %v3104 = vld [vmem:[%s3 + $0x4450] sm:$0xff]
  %v3105 = vld [vmem:[%s3 + $0x4458] sm:$0xff]
  %v3106 = vld [vmem:[%s3 + $0x4460] sm:$0xff]
  %v3107 = vld [vmem:[%s3 + $0x4468] sm:$0xff]
  %v3108 = vld [vmem:[%s3 + $0x4470] sm:$0xff]
  %v3109 = vld [vmem:[%s3 + $0x4478] sm:$0xff]
  %v3110 = vld [vmem:[%s3 + $0x4480] sm:$0xff]
  %v3111 = vld [vmem:[%s3 + $0x4488] sm:$0xff]
  %v3112 = vld [vmem:[%s3 + $0x4490] sm:$0xff]
  %v3113 = vld [vmem:[%s3 + $0x4498] sm:$0xff]
  %v3114 = vld [vmem:[%s3 + $0x44a0] sm:$0xff]
  %v3115 = vld [vmem:[%s3 + $0x44a8] sm:$0xff]
  %v3116 = vld [vmem:[%s3 + $0x44b0] sm:$0xff]
  %v3117 = vld [vmem:[%s3 + $0x44b8] sm:$0xff]
  %v3118 = vld [vmem:[%s3 + $0x44c0] sm:$0xff]
  %v3119 = vld [vmem:[%s3 + $0x44c8] sm:$0xff]
  %v3120 = vld [vmem:[%s3 + $0x44d0] sm:$0xff]
  %v3121 = vld [vmem:[%s3 + $0x44d8] sm:$0xff]
  %v3122 = vld [vmem:[%s3 + $0x44e0] sm:$0xff]
  %v3123 = vld [vmem:[%s3 + $0x44e8] sm:$0xff]
  %v3124 = vld [vmem:[%s3 + $0x44f0] sm:$0xff]
  %v3125 = vld [vmem:[%s3 + $0x44f8] sm:$0xff]
  %v3126 = vld [vmem:[%s3 + $0x4500] sm:$0xff]
  %v3127 = vld [vmem:[%s3 + $0x4508] sm:$0xff]
  %v3128 = vld [vmem:[%s3 + $0x4510] sm:$0xff]
  %v3129 = vld [vmem:[%s3 + $0x4518] sm:$0xff]
  %v3130 = vld [vmem:[%s3 + $0x4520] sm:$0xff]
  %v3131 = vld [vmem:[%s3 + $0x4528] sm:$0xff]
  %v3132 = vld [vmem:[%s3 + $0x4530] sm:$0xff]
  %v3133 = vld [vmem:[%s3 + $0x4538] sm:$0xff]
  %v3134 = vld [vmem:[%s3 + $0x4540] sm:$0xff]
  %v3135 = vld [vmem:[%s3 + $0x4548] sm:$0xff]
  %v3136 = vld [vmem:[%s3 + $0x4550] sm:$0xff]
  %v3137 = vld [vmem:[%s3 + $0x4558] sm:$0xff]
  %v3138 = vld [vmem:[%s3 + $0x4560] sm:$0xff]
  %v3139 = vld [vmem:[%s3 + $0x4568] sm:$0xff]
  %v3140 = vld [vmem:[%s3 + $0x4570] sm:$0xff]
  %v3141 = vld [vmem:[%s3 + $0x4578] sm:$0xff]
  %v3142 = vld [vmem:[%s3 + $0x4580] sm:$0xff]
  %v3143 = vld [vmem:[%s3 + $0x4588] sm:$0xff]
  %v3144 = vld [vmem:[%s3 + $0x4590] sm:$0xff]
  %v3145 = vld [vmem:[%s3 + $0x4598] sm:$0xff]
  %v3146 = vld [vmem:[%s3 + $0x45a0] sm:$0xff]
  %v3147 = vld [vmem:[%s3 + $0x45a8] sm:$0xff]
  %v3148 = vld [vmem:[%s3 + $0x45b0] sm:$0xff]
  %v3149 = vld [vmem:[%s3 + $0x45b8] sm:$0xff]
  %v3150 = vld [vmem:[%s3 + $0x45c0] sm:$0xff]
  %v3151 = vld [vmem:[%s3 + $0x45c8] sm:$0xff]
  %v3152 = vld [vmem:[%s3 + $0x45d0] sm:$0xff]
  %v3153 = vld [vmem:[%s3 + $0x45d8] sm:$0xff]
  %v3154 = vld [vmem:[%s3 + $0x45e0] sm:$0xff]
  %v3155 = vld [vmem:[%s3 + $0x45e8] sm:$0xff]
  %v3156 = vld [vmem:[%s3 + $0x45f0] sm:$0xff]
  %v3157 = vld [vmem:[%s3 + $0x45f8] sm:$0xff]
  %v3158 = vld [vmem:[%s3 + $0x4600] sm:$0xff]
  %v3159 = vld [vmem:[%s3 + $0x4608] sm:$0xff]
  %v3160 = vld [vmem:[%s3 + $0x4610] sm:$0xff]
  %v3161 = vld [vmem:[%s3 + $0x4618] sm:$0xff]
  %v3162 = vld [vmem:[%s3 + $0x4620] sm:$0xff]
  %v3163 = vld [vmem:[%s3 + $0x4628] sm:$0xff]
  %v3164 = vld [vmem:[%s3 + $0x4630] sm:$0xff]
  %v3165 = vld [vmem:[%s3 + $0x4638] sm:$0xff]
  %v3166 = vld [vmem:[%s3 + $0x4640] sm:$0xff]
  %v3167 = vld [vmem:[%s3 + $0x4648] sm:$0xff]
  %v3168 = vld [vmem:[%s3 + $0x4650] sm:$0xff]
  %v3169 = vld [vmem:[%s3 + $0x4658] sm:$0xff]
  %v3170 = vld [vmem:[%s3 + $0x4660] sm:$0xff]
  %v3171 = vld [vmem:[%s3 + $0x4668] sm:$0xff]
  %v3172 = vld [vmem:[%s3 + $0x4670] sm:$0xff]
  %v3173 = vld [vmem:[%s3 + $0x4678] sm:$0xff]
  %v3174 = vld [vmem:[%s3 + $0x4680] sm:$0xff]
  %v3175 = vld [vmem:[%s3 + $0x4688] sm:$0xff]
  %v3176 = vld [vmem:[%s3 + $0x4690] sm:$0xff]
  %v3177 = vld [vmem:[%s3 + $0x4698] sm:$0xff]
  %v3178 = vld [vmem:[%s3 + $0x46a0] sm:$0xff]
  %v3179 = vld [vmem:[%s3 + $0x46a8] sm:$0xff]
  %v3180 = vld [vmem:[%s3 + $0x46b0] sm:$0xff]
  %v3181 = vld [vmem:[%s3 + $0x46b8] sm:$0xff]
  %v3182 = vld [vmem:[%s3 + $0x46c0] sm:$0xff]
  %v3183 = vld [vmem:[%s3 + $0x46c8] sm:$0xff]
  %v3184 = vld [vmem:[%s3 + $0x46d0] sm:$0xff]
  %v3185 = vld [vmem:[%s3 + $0x46d8] sm:$0xff]
  %v3186 = vld [vmem:[%s3 + $0x46e0] sm:$0xff]
  %v3187 = vld [vmem:[%s3 + $0x46e8] sm:$0xff]
  %v3188 = vld [vmem:[%s3 + $0x46f0] sm:$0xff]
  %v3189 = vld [vmem:[%s3 + $0x46f8] sm:$0xff]
  %v3190 = vld [vmem:[%s3 + $0x4700] sm:$0xff]
  %v3191 = vld [vmem:[%s3 + $0x4708] sm:$0xff]
  %v3192 = vld [vmem:[%s3 + $0x4710] sm:$0xff]
  %v3193 = vld [vmem:[%s3 + $0x4718] sm:$0xff]
  %v3194 = vld [vmem:[%s3 + $0x4720] sm:$0xff]
  %v3195 = vld [vmem:[%s3 + $0x4728] sm:$0xff]
  %v3196 = vld [vmem:[%s3 + $0x4730] sm:$0xff]
  %v3197 = vld [vmem:[%s3 + $0x4738] sm:$0xff]
  %v3198 = vld [vmem:[%s3 + $0x4740] sm:$0xff]
  %v3199 = vld [vmem:[%s3 + $0x4748] sm:$0xff]
  %v3200 = vld [vmem:[%s3 + $0x4750] sm:$0xff]
  %v3201 = vld [vmem:[%s3 + $0x4758] sm:$0xff]
  %v3202 = vld [vmem:[%s3 + $0x4760] sm:$0xff]
  %v3203 = vld [vmem:[%s3 + $0x4768] sm:$0xff]
  %v3204 = vld [vmem:[%s3 + $0x4770] sm:$0xff]
  %v3205 = vld [vmem:[%s3 + $0x4778] sm:$0xff]
  %v3206 = vld [vmem:[%s3 + $0x4780] sm:$0xff]
  %v3207 = vld [vmem:[%s3 + $0x4788] sm:$0xff]
  %v3208 = vld [vmem:[%s3 + $0x4790] sm:$0xff]
  %v3209 = vld [vmem:[%s3 + $0x4798] sm:$0xff]
  %v3210 = vld [vmem:[%s3 + $0x47a0] sm:$0xff]
  %v3211 = vld [vmem:[%s3 + $0x47a8] sm:$0xff]
  %v3212 = vld [vmem:[%s3 + $0x47b0] sm:$0xff]
  %v3213 = vld [vmem:[%s3 + $0x47b8] sm:$0xff]
  %v3214 = vld [vmem:[%s3 + $0x47c0] sm:$0xff]
  %v3215 = vld [vmem:[%s3 + $0x47c8] sm:$0xff]
  %v3216 = vld [vmem:[%s3 + $0x47d0] sm:$0xff]
  %v3217 = vld [vmem:[%s3 + $0x47d8] sm:$0xff]
  %v3218 = vld [vmem:[%s3 + $0x47e0] sm:$0xff]
  %v3219 = vld [vmem:[%s3 + $0x47e8] sm:$0xff]
  %v3220 = vld [vmem:[%s3 + $0x47f0] sm:$0xff]
  %v3221 = vld [vmem:[%s3 + $0x47f8] sm:$0xff]
  %v3222 = vld [vmem:[%s3 + $0x4800] sm:$0xff]
  %v3223 = vld [vmem:[%s3 + $0x4808] sm:$0xff]
  %v3224 = vld [vmem:[%s3 + $0x4810] sm:$0xff]
  %v3225 = vld [vmem:[%s3 + $0x4818] sm:$0xff]
  %v3226 = vld [vmem:[%s3 + $0x4820] sm:$0xff]
  %v3227 = vld [vmem:[%s3 + $0x4828] sm:$0xff]
  %v3228 = vld [vmem:[%s3 + $0x4830] sm:$0xff]
  %v3229 = vld [vmem:[%s3 + $0x4838] sm:$0xff]
  %v3230 = vld [vmem:[%s3 + $0x4840] sm:$0xff]
  %v3231 = vld [vmem:[%s3 + $0x4848] sm:$0xff]
  %v3232 = vld [vmem:[%s3 + $0x4850] sm:$0xff]
  %v3233 = vld [vmem:[%s3 + $0x4858] sm:$0xff]
  %v3234 = vld [vmem:[%s3 + $0x4860] sm:$0xff]
  %v3235 = vld [vmem:[%s3 + $0x4868] sm:$0xff]
  %v3236 = vld [vmem:[%s3 + $0x4870] sm:$0xff]
  %v3237 = vld [vmem:[%s3 + $0x4878] sm:$0xff]
  %v3238 = vld [vmem:[%s3 + $0x4880] sm:$0xff]
  %v3239 = vld [vmem:[%s3 + $0x4888] sm:$0xff]
  %v3240 = vld [vmem:[%s3 + $0x4890] sm:$0xff]
  %v3241 = vld [vmem:[%s3 + $0x4898] sm:$0xff]
  %v3242 = vld [vmem:[%s3 + $0x48a0] sm:$0xff]
  %v3243 = vld [vmem:[%s3 + $0x48a8] sm:$0xff]
  %v3244 = vld [vmem:[%s3 + $0x48b0] sm:$0xff]
  %v3245 = vld [vmem:[%s3 + $0x48b8] sm:$0xff]
  %v3246 = vld [vmem:[%s3 + $0x48c0] sm:$0xff]
  %v3247 = vld [vmem:[%s3 + $0x48c8] sm:$0xff]
  %v3248 = vld [vmem:[%s3 + $0x48d0] sm:$0xff]
  %v3249 = vld [vmem:[%s3 + $0x48d8] sm:$0xff]
  %v3250 = vld [vmem:[%s3 + $0x48e0] sm:$0xff]
  %v3251 = vld [vmem:[%s3 + $0x48e8] sm:$0xff]
  %v3252 = vld [vmem:[%s3 + $0x48f0] sm:$0xff]
  %v3253 = vld [vmem:[%s3 + $0x48f8] sm:$0xff]
  %v3254 = vld [vmem:[%s3 + $0x4900] sm:$0xff]
  %v3255 = vld [vmem:[%s3 + $0x4908] sm:$0xff]
  %v3256 = vld [vmem:[%s3 + $0x4910] sm:$0xff]
  %v3257 = vld [vmem:[%s3 + $0x4918] sm:$0xff]
  %v3258 = vld [vmem:[%s3 + $0x4920] sm:$0xff]
  %v3259 = vld [vmem:[%s3 + $0x4928] sm:$0xff]
  %v3260 = vld [vmem:[%s3 + $0x4930] sm:$0xff]
  %v3261 = vld [vmem:[%s3 + $0x4938] sm:$0xff]
  %v3262 = vld [vmem:[%s3 + $0x4940] sm:$0xff]
  %v3263 = vld [vmem:[%s3 + $0x4948] sm:$0xff]
  %v3264 = vld [vmem:[%s3 + $0x4950] sm:$0xff]
  %v3265 = vld [vmem:[%s3 + $0x4958] sm:$0xff]
  %v3266 = vld [vmem:[%s3 + $0x4960] sm:$0xff]
  %v3267 = vld [vmem:[%s3 + $0x4968] sm:$0xff]
  %v3268 = vld [vmem:[%s3 + $0x4970] sm:$0xff]
  %v3269 = vld [vmem:[%s3 + $0x4978] sm:$0xff]
  %v3270 = vld [vmem:[%s3 + $0x4980] sm:$0xff]
  %v3271 = vld [vmem:[%s3 + $0x4988] sm:$0xff]
  %v3272 = vld [vmem:[%s3 + $0x4990] sm:$0xff]
  %v3273 = vld [vmem:[%s3 + $0x4998] sm:$0xff]
  %v3274 = vld [vmem:[%s3 + $0x49a0] sm:$0xff]
  %v3275 = vld [vmem:[%s3 + $0x49a8] sm:$0xff]
  %v3276 = vld [vmem:[%s3 + $0x49b0] sm:$0xff]
  %v3277 = vld [vmem:[%s3 + $0x49b8] sm:$0xff]
  %v3278 = vld [vmem:[%s3 + $0x49c0] sm:$0xff]
  %v3279 = vld [vmem:[%s3 + $0x49c8] sm:$0xff]
  %v3280 = vld [vmem:[%s3 + $0x49d0] sm:$0xff]
  %v3281 = vld [vmem:[%s3 + $0x49d8] sm:$0xff]
  %v3282 = vld [vmem:[%s3 + $0x49e0] sm:$0xff]
  %v3283 = vld [vmem:[%s3 + $0x49e8] sm:$0xff]
  %v3284 = vld [vmem:[%s3 + $0x49f0] sm:$0xff]
  %v3285 = vld [vmem:[%s3 + $0x49f8] sm:$0xff]
  %v3286 = vld [vmem:[%s3 + $0x4a00] sm:$0xff]
  %v3287 = vld [vmem:[%s3 + $0x4a08] sm:$0xff]
  %v3288 = vld [vmem:[%s3 + $0x4a10] sm:$0xff]
  %v3289 = vld [vmem:[%s3 + $0x4a18] sm:$0xff]
  %v3290 = vld [vmem:[%s3 + $0x4a20] sm:$0xff]
  %v3291 = vld [vmem:[%s3 + $0x4a28] sm:$0xff]
  %v3292 = vld [vmem:[%s3 + $0x4a30] sm:$0xff]
  %v3293 = vld [vmem:[%s3 + $0x4a38] sm:$0xff]
  %v3294 = vld [vmem:[%s3 + $0x4a40] sm:$0xff]
  %v3295 = vld [vmem:[%s3 + $0x4a48] sm:$0xff]
  %v3296 = vld [vmem:[%s3 + $0x4a50] sm:$0xff]
  %v3297 = vld [vmem:[%s3 + $0x4a58] sm:$0xff]
  %v3298 = vld [vmem:[%s3 + $0x4a60] sm:$0xff]
  %v3299 = vld [vmem:[%s3 + $0x4a68] sm:$0xff]
  %v3300 = vld [vmem:[%s3 + $0x4a70] sm:$0xff]
  %v3301 = vld [vmem:[%s3 + $0x4a78] sm:$0xff]
  %v3302 = vld [vmem:[%s3 + $0x4a80] sm:$0xff]
  %v3303 = vld [vmem:[%s3 + $0x4a88] sm:$0xff]
  %v3304 = vld [vmem:[%s3 + $0x4a90] sm:$0xff]
  %v3305 = vld [vmem:[%s3 + $0x4a98] sm:$0xff]
  %v3306 = vld [vmem:[%s3 + $0x4aa0] sm:$0xff]
  %v3307 = vld [vmem:[%s3 + $0x4aa8] sm:$0xff]
  %v3308 = vld [vmem:[%s3 + $0x4ab0] sm:$0xff]
  %v3309 = vld [vmem:[%s3 + $0x4ab8] sm:$0xff]
  %v3310 = vld [vmem:[%s3 + $0x4ac0] sm:$0xff]
  %v3311 = vld [vmem:[%s3 + $0x4ac8] sm:$0xff]
  %v3312 = vld [vmem:[%s3 + $0x4ad0] sm:$0xff]
  %v3313 = vld [vmem:[%s3 + $0x4ad8] sm:$0xff]
  %v3314 = vld [vmem:[%s3 + $0x4ae0] sm:$0xff]
  %v3315 = vld [vmem:[%s3 + $0x4ae8] sm:$0xff]
  %v3316 = vld [vmem:[%s3 + $0x4af0] sm:$0xff]
  %v3317 = vld [vmem:[%s3 + $0x4af8] sm:$0xff]
  %v3318 = vld [vmem:[%s3 + $0x4b00] sm:$0xff]
  %v3319 = vld [vmem:[%s3 + $0x4b08] sm:$0xff]
  %v3320 = vld [vmem:[%s3 + $0x4b10] sm:$0xff]
  %v3321 = vld [vmem:[%s3 + $0x4b18] sm:$0xff]
  %v3322 = vld [vmem:[%s3 + $0x4b20] sm:$0xff]
  %v3323 = vld [vmem:[%s3 + $0x4b28] sm:$0xff]
  %v3324 = vld [vmem:[%s3 + $0x4b30] sm:$0xff]
  %v3325 = vld [vmem:[%s3 + $0x4b38] sm:$0xff]
  %v3326 = vld [vmem:[%s3 + $0x4b40] sm:$0xff]
  %v3327 = vld [vmem:[%s3 + $0x4b48] sm:$0xff]
  %v3328 = vld [vmem:[%s3 + $0x4b50] sm:$0xff]
  %v3329 = vld [vmem:[%s3 + $0x4b58] sm:$0xff]
  %v3330 = vld [vmem:[%s3 + $0x4b60] sm:$0xff]
  %v3331 = vld [vmem:[%s3 + $0x4b68] sm:$0xff]
  %v3332 = vld [vmem:[%s3 + $0x4b70] sm:$0xff]
  %v3333 = vld [vmem:[%s3 + $0x4b78] sm:$0xff]
  %v3334 = vld [vmem:[%s3 + $0x4b80] sm:$0xff]
  %v3335 = vld [vmem:[%s3 + $0x4b88] sm:$0xff]
  %v3336 = vld [vmem:[%s3 + $0x4b90] sm:$0xff]
  %v3337 = vld [vmem:[%s3 + $0x4b98] sm:$0xff]
  %v3338 = vld [vmem:[%s3 + $0x4ba0] sm:$0xff]
  %v3339 = vld [vmem:[%s3 + $0x4ba8] sm:$0xff]
  %v3340 = vld [vmem:[%s3 + $0x4bb0] sm:$0xff]
  %v3341 = vld [vmem:[%s3 + $0x4bb8] sm:$0xff]
  %v3342 = vld [vmem:[%s3 + $0x4bc0] sm:$0xff]
  %v3343 = vld [vmem:[%s3 + $0x4bc8] sm:$0xff]
  %v3344 = vld [vmem:[%s3 + $0x4bd0] sm:$0xff]
  %v3345 = vld [vmem:[%s3 + $0x4bd8] sm:$0xff]
  %v3346 = vld [vmem:[%s3 + $0x4be0] sm:$0xff]
  %v3347 = vld [vmem:[%s3 + $0x4be8] sm:$0xff]
  %v3348 = vld [vmem:[%s3 + $0x4bf0] sm:$0xff]
  %v3349 = vld [vmem:[%s3 + $0x4bf8] sm:$0xff]
  %v3350 = vld [vmem:[%s3 + $0x4c00] sm:$0xff]
  %v3351 = vld [vmem:[%s3 + $0x4c08] sm:$0xff]
  %v3352 = vld [vmem:[%s3 + $0x4c10] sm:$0xff]
  %v3353 = vld [vmem:[%s3 + $0x4c18] sm:$0xff]
  %v3354 = vld [vmem:[%s3 + $0x4c20] sm:$0xff]
  %v3355 = vld [vmem:[%s3 + $0x4c28] sm:$0xff]
  %v3356 = vld [vmem:[%s3 + $0x4c30] sm:$0xff]
  %v3357 = vld [vmem:[%s3 + $0x4c38] sm:$0xff]
  %v3358 = vld [vmem:[%s3 + $0x4c40] sm:$0xff]
  %v3359 = vld [vmem:[%s3 + $0x4c48] sm:$0xff]
  %v3360 = vld [vmem:[%s3 + $0x4c50] sm:$0xff]
  %v3361 = vld [vmem:[%s3 + $0x4c58] sm:$0xff]
  %v3362 = vld [vmem:[%s3 + $0x4c60] sm:$0xff]
  %v3363 = vld [vmem:[%s3 + $0x4c68] sm:$0xff]
  %v3364 = vld [vmem:[%s3 + $0x4c70] sm:$0xff]
  %v3365 = vld [vmem:[%s3 + $0x4c78] sm:$0xff]
  %v3366 = vld [vmem:[%s3 + $0x4c80] sm:$0xff]
  %v3367 = vld [vmem:[%s3 + $0x4c88] sm:$0xff]
  %v3368 = vld [vmem:[%s3 + $0x4c90] sm:$0xff]
  %v3369 = vld [vmem:[%s3 + $0x4c98] sm:$0xff]
  %v3370 = vld [vmem:[%s3 + $0x4ca0] sm:$0xff]
  %v3371 = vld [vmem:[%s3 + $0x4ca8] sm:$0xff]
  %v3372 = vld [vmem:[%s3 + $0x4cb0] sm:$0xff]
  %v3373 = vld [vmem:[%s3 + $0x4cb8] sm:$0xff]
  %v3374 = vld [vmem:[%s3 + $0x4cc0] sm:$0xff]
  %v3375 = vld [vmem:[%s3 + $0x4cc8] sm:$0xff]
  %v3376 = vld [vmem:[%s3 + $0x4cd0] sm:$0xff]
  %v3377 = vld [vmem:[%s3 + $0x4cd8] sm:$0xff]
  %v3378 = vld [vmem:[%s3 + $0x4ce0] sm:$0xff]
  %v3379 = vld [vmem:[%s3 + $0x4ce8] sm:$0xff]
  %v3380 = vld [vmem:[%s3 + $0x4cf0] sm:$0xff]
  %v3381 = vld [vmem:[%s3 + $0x4cf8] sm:$0xff]
  %v3382 = vld [vmem:[%s3 + $0x4d00] sm:$0xff]
  %v3383 = vld [vmem:[%s3 + $0x4d08] sm:$0xff]
  %v3384 = vld [vmem:[%s3 + $0x4d10] sm:$0xff]
  %v3385 = vld [vmem:[%s3 + $0x4d18] sm:$0xff]
  %v3386 = vld [vmem:[%s3 + $0x4d20] sm:$0xff]
  %v3387 = vld [vmem:[%s3 + $0x4d28] sm:$0xff]
  %v3388 = vld [vmem:[%s3 + $0x4d30] sm:$0xff]
  %v3389 = vld [vmem:[%s3 + $0x4d38] sm:$0xff]
  %v3390 = vld [vmem:[%s3 + $0x4d40] sm:$0xff]
  %v3391 = vld [vmem:[%s3 + $0x4d48] sm:$0xff]
  %v3392 = vld [vmem:[%s3 + $0x4d50] sm:$0xff]
  %v3393 = vld [vmem:[%s3 + $0x4d58] sm:$0xff]
  %v3394 = vld [vmem:[%s3 + $0x4d60] sm:$0xff]
  %v3395 = vld [vmem:[%s3 + $0x4d68] sm:$0xff]
  %v3396 = vld [vmem:[%s3 + $0x4d70] sm:$0xff]
  %v3397 = vld [vmem:[%s3 + $0x4d78] sm:$0xff]
  %v3398 = vld [vmem:[%s3 + $0x4d80] sm:$0xff]
  %v3399 = vld [vmem:[%s3 + $0x4d88] sm:$0xff]
  %v3400 = vld [vmem:[%s3 + $0x4d90] sm:$0xff]
  %v3401 = vld [vmem:[%s3 + $0x4d98] sm:$0xff]
  %v3402 = vld [vmem:[%s3 + $0x4da0] sm:$0xff]
  %v3403 = vld [vmem:[%s3 + $0x4da8] sm:$0xff]
  %v3404 = vld [vmem:[%s3 + $0x4db0] sm:$0xff]
  %v3405 = vld [vmem:[%s3 + $0x4db8] sm:$0xff]
  %v3406 = vld [vmem:[%s3 + $0x4dc0] sm:$0xff]
  %v3407 = vld [vmem:[%s3 + $0x4dc8] sm:$0xff]
  %v3408 = vld [vmem:[%s3 + $0x4dd0] sm:$0xff]
  %v3409 = vld [vmem:[%s3 + $0x4dd8] sm:$0xff]
  %v3410 = vld [vmem:[%s3 + $0x4de0] sm:$0xff]
  %v3411 = vld [vmem:[%s3 + $0x4de8] sm:$0xff]
  %v3412 = vld [vmem:[%s3 + $0x4df0] sm:$0xff]
  %v3413 = vld [vmem:[%s3 + $0x4df8] sm:$0xff]
  %v3414 = vld [vmem:[%s3 + $0x4e00] sm:$0xff]
  %v3415 = vld [vmem:[%s3 + $0x4e08] sm:$0xff]
  %v3416 = vld [vmem:[%s3 + $0x4e10] sm:$0xff]
  %v3417 = vld [vmem:[%s3 + $0x4e18] sm:$0xff]
  %v3418 = vld [vmem:[%s3 + $0x4e20] sm:$0xff]
  %v3419 = vld [vmem:[%s3 + $0x4e28] sm:$0xff]
  %v3420 = vld [vmem:[%s3 + $0x4e30] sm:$0xff]
  %v3421 = vld [vmem:[%s3 + $0x4e38] sm:$0xff]
  %v3422 = vld [vmem:[%s3 + $0x4e40] sm:$0xff]
  %v3423 = vld [vmem:[%s3 + $0x4e48] sm:$0xff]
  %v3424 = vld [vmem:[%s3 + $0x4e50] sm:$0xff]
  %v3425 = vld [vmem:[%s3 + $0x4e58] sm:$0xff]
  %v3426 = vld [vmem:[%s3 + $0x4e60] sm:$0xff]
  %v3427 = vld [vmem:[%s3 + $0x4e68] sm:$0xff]
  %v3428 = vld [vmem:[%s3 + $0x4e70] sm:$0xff]
  %v3429 = vld [vmem:[%s3 + $0x4e78] sm:$0xff]
  %v3430 = vld [vmem:[%s3 + $0x4e80] sm:$0xff]
  %v3431 = vld [vmem:[%s3 + $0x4e88] sm:$0xff]
  %v3432 = vld [vmem:[%s3 + $0x4e90] sm:$0xff]
  %v3433 = vld [vmem:[%s3 + $0x4e98] sm:$0xff]
  %v3434 = vld [vmem:[%s3 + $0x4ea0] sm:$0xff]
  %v3435 = vld [vmem:[%s3 + $0x4ea8] sm:$0xff]
  %v3436 = vld [vmem:[%s3 + $0x4eb0] sm:$0xff]
  %v3437 = vld [vmem:[%s3 + $0x4eb8] sm:$0xff]
  %v3438 = vld [vmem:[%s3 + $0x4ec0] sm:$0xff]
  %v3439 = vld [vmem:[%s3 + $0x4ec8] sm:$0xff]
  %v3440 = vld [vmem:[%s3 + $0x4ed0] sm:$0xff]
  %v3441 = vld [vmem:[%s3 + $0x4ed8] sm:$0xff]
  %v3442 = vld [vmem:[%s3 + $0x4ee0] sm:$0xff]
  %v3443 = vld [vmem:[%s3 + $0x4ee8] sm:$0xff]
  %v3444 = vld [vmem:[%s3 + $0x4ef0] sm:$0xff]
  %v3445 = vld [vmem:[%s3 + $0x4ef8] sm:$0xff]
  %v3446 = vld [vmem:[%s3 + $0x4f00] sm:$0xff]
  %v3447 = vld [vmem:[%s3 + $0x4f08] sm:$0xff]
  %v3448 = vld [vmem:[%s3 + $0x4f10] sm:$0xff]
  %v3449 = vld [vmem:[%s3 + $0x4f18] sm:$0xff]
  %v3450 = vld [vmem:[%s3 + $0x4f20] sm:$0xff]
  %v3451 = vld [vmem:[%s3 + $0x4f28] sm:$0xff]
  %v3452 = vld [vmem:[%s3 + $0x4f30] sm:$0xff]
  %v3453 = vld [vmem:[%s3 + $0x4f38] sm:$0xff]
  %v3454 = vld [vmem:[%s3 + $0x4f40] sm:$0xff]
  %v3455 = vld [vmem:[%s3 + $0x4f48] sm:$0xff]
  %v3456 = vld [vmem:[%s3 + $0x4f50] sm:$0xff]
  %v3457 = vld [vmem:[%s3 + $0x4f58] sm:$0xff]
  %v3458 = vld [vmem:[%s3 + $0x4f60] sm:$0xff]
  %v3459 = vld [vmem:[%s3 + $0x4f68] sm:$0xff]
  %v3460 = vld [vmem:[%s3 + $0x4f70] sm:$0xff]
  %v3461 = vld [vmem:[%s3 + $0x4f78] sm:$0xff]
  %v3462 = vld [vmem:[%s3 + $0x4f80] sm:$0xff]
  %v3463 = vld [vmem:[%s3 + $0x4f88] sm:$0xff]
  %v3464 = vld [vmem:[%s3 + $0x4f90] sm:$0xff]
  %v3465 = vld [vmem:[%s3 + $0x4f98] sm:$0xff]
  %v3466 = vld [vmem:[%s3 + $0x4fa0] sm:$0xff]
  %v3467 = vld [vmem:[%s3 + $0x4fa8] sm:$0xff]
  %v3468 = vld [vmem:[%s3 + $0x4fb0] sm:$0xff]
  %v3469 = vld [vmem:[%s3 + $0x4fb8] sm:$0xff]
  %v3470 = vld [vmem:[%s3 + $0x4fc0] sm:$0xff]
  %v3471 = vld [vmem:[%s3 + $0x4fc8] sm:$0xff]
  %v3472 = vld [vmem:[%s3 + $0x4fd0] sm:$0xff]
  %v3473 = vld [vmem:[%s3 + $0x4fd8] sm:$0xff]
  %v3474 = vld [vmem:[%s3 + $0x4fe0] sm:$0xff]
  %v3475 = vld [vmem:[%s3 + $0x4fe8] sm:$0xff]
  %v3476 = vld [vmem:[%s3 + $0x4ff0] sm:$0xff]
  %v3477 = vld [vmem:[%s3 + $0x4ff8] sm:$0xff]
  %v3478 = vld [vmem:[%s4] sm:$0xff]
  %v3479 = vld [vmem:[%s4 + $0x8] sm:$0x3]
  %v3482 = vlaneseq
  %v3483 = vshrl.u32 %v3482, 7
  %v3484 = vsub.s32 0, %v3483
  %v3485 = vrot.slane %v3478, %v3484
  %v3486 = vlaneseq
  %v3487 = vshrl.u32 %v3486, 7
  %v3488 = vsub.s32 1, %v3487
  %v3489 = vrot.slane %v3478, %v3488
  %v3490 = vlaneseq
  %v3491 = vshrl.u32 %v3490, 7
  %v3492 = vsub.s32 2, %v3491
  %v3493 = vrot.slane %v3478, %v3492
  %v3494 = vlaneseq
  %v3495 = vshrl.u32 %v3494, 7
  %v3496 = vsub.s32 3, %v3495
  %v3497 = vrot.slane %v3478, %v3496
  %v3498 = vlaneseq
  %v3499 = vshrl.u32 %v3498, 7
  %v3500 = vsub.s32 4, %v3499
  %v3501 = vrot.slane %v3478, %v3500
  %v3502 = vlaneseq
  %v3503 = vshrl.u32 %v3502, 7
  %v3504 = vsub.s32 5, %v3503
  %v3505 = vrot.slane %v3478, %v3504
  %v3506 = vlaneseq
  %v3507 = vshrl.u32 %v3506, 7
  %v3508 = vsub.s32 6, %v3507
  %v3509 = vrot.slane %v3478, %v3508
  %v3510 = vlaneseq
  %v3511 = vshrl.u32 %v3510, 7
  %v3512 = vsub.s32 7, %v3511
  %v3513 = vrot.slane %v3478, %v3512
  %v3514 = vlaneseq
  %v3515 = vshrl.u32 %v3514, 7
  %v3516 = vsub.s32 0, %v3515
  %v3517 = vrot.slane %v3479, %v3516
  %v3518 = vlaneseq
  %v3519 = vshrl.u32 %v3518, 7
  %v3520 = vsub.s32 1, %v3519
  %v3521 = vrot.slane %v3479, %v3520
  %3532 = vmatprep.subr.mxu0 %v919
  %3533 = vmatpush1.msra.mxu0 %v918
  %3534 = vmatprep.subr.mxu0 %v929
  %3535 = vmatpush1.msra.mxu0 %v928
  %3536 = vmatprep.subr.mxu0 %v939
  %3537 = vmatpush1.msra.mxu0 %v938
  %3538 = vmatprep.subr.mxu0 %v949
  %3539 = vmatpush1.msra.mxu0 %v948
  %3540 = vmatprep.subr.mxu0 %v959
  %3541 = vmatpush1.msra.mxu0 %v958
  %3542 = vmatprep.subr.mxu0 %v969
  %3543 = vmatpush1.msra.mxu0 %v968
  %3544 = vmatprep.subr.mxu0 %v979
  %3545 = vmatpush1.msra.mxu0 %v978
  %3546 = vmatprep.subr.mxu0 %v989
  %3547 = vmatpush1.msra.mxu0 %v988
  %3548 = vmatprep.subr.mxu0 %v999
  %3549 = vmatpush1.msra.mxu0 %v998
  %3550 = vmatprep.subr.mxu0 %v1009
  %3551 = vmatpush1.msra.mxu0 %v1008
  %3552 = vmatprep.subr.mxu0 %v1019
  %3553 = vmatpush1.msra.mxu0 %v1018
  %3554 = vmatprep.subr.mxu0 %v1029
  %3555 = vmatpush1.msra.mxu0 %v1028
  %3556 = vmatprep.subr.mxu0 %v1039
  %3557 = vmatpush1.msra.mxu0 %v1038
  %3558 = vmatprep.subr.mxu0 %v1049
  %3559 = vmatpush1.msra.mxu0 %v1048
  %3560 = vmatprep.subr.mxu0 %v1059
  %3561 = vmatpush1.msra.mxu0 %v1058
  %3562 = vmatprep.subr.mxu0 %v1069
  %3563 = vmatpush1.msra.mxu0 %v1068
  %3564 = vmatprep.subr.mxu0 %v1079
  %3565 = vmatpush1.msra.mxu0 %v1078
  %3566 = vmatprep.subr.mxu0 %v1089
  %3567 = vmatpush1.msra.mxu0 %v1088
  %3568 = vmatprep.subr.mxu0 %v1099
  %3569 = vmatpush1.msra.mxu0 %v1098
  %3570 = vmatprep.subr.mxu0 %v1109
  %3571 = vmatpush1.msra.mxu0 %v1108
  %3572 = vmatprep.subr.mxu0 %v1119
  %3573 = vmatpush1.msra.mxu0 %v1118
  %3574 = vmatprep.subr.mxu0 %v1129
  %3575 = vmatpush1.msra.mxu0 %v1128
  %3576 = vmatprep.subr.mxu0 %v1139
  %3577 = vmatpush1.msra.mxu0 %v1138
  %3578 = vmatprep.subr.mxu0 %v1149
  %3579 = vmatpush1.msra.mxu0 %v1148
  %3580 = vmatprep.subr.mxu0 %v1159
  %3581 = vmatpush1.msra.mxu0 %v1158
  %3582 = vmatprep.subr.mxu0 %v1169
  %3583 = vmatpush1.msra.mxu0 %v1168
  %3584 = vmatprep.subr.mxu0 %v1179
  %3585 = vmatpush1.msra.mxu0 %v1178
  %3586 = vmatprep.subr.mxu0 %v1189
  %3587 = vmatpush1.msra.mxu0 %v1188
  %3588 = vmatprep.subr.mxu0 %v1199
  %3589 = vmatpush1.msra.mxu0 %v1198
  %3590 = vmatprep.subr.mxu0 %v1209
  %3591 = vmatpush1.msra.mxu0 %v1208
  %3592 = vmatprep.subr.mxu0 %v1219
  %3593 = vmatpush1.msra.mxu0 %v1218
  %3594 = vmatprep.subr.mxu0 %v1229
  %3595 = vmatpush1.msra.mxu0 %v1228
  %3596 = vmatprep.mubr.f32.mxu0 %v887
  %3597 = vmatmul.mubr.f32.gmra.mrb[0].mxu0 %v886
  %v3598 = vpop.f32.mrb[0].mxu0
  %v3599 = vadd.f32 %v3485, %v3598
  %v3600 = vpop.f32.mrb[0].mxu0
  %v3601 = vadd.f32 %v3489, %v3600
  %3602 = vdwg.mxu0
  %3603 = vmatprep.subr.mxu0 %v1239
  %3604 = vmatpush1.msra.mxu0 %v1238
  %3605 = vmatprep.subr.mxu0 %v1249
  %3606 = vmatpush1.msra.mxu0 %v1248
  %3607 = vmatprep.subr.mxu0 %v1259
  %3608 = vmatpush1.msra.mxu0 %v1258
  %3609 = vmatprep.subr.mxu0 %v1269
  %3610 = vmatpush1.msra.mxu0 %v1268
  %3611 = vmatprep.subr.mxu0 %v1279
  %3612 = vmatpush1.msra.mxu0 %v1278
  %3613 = vmatprep.subr.mxu0 %v1289
  %3614 = vmatpush1.msra.mxu0 %v1288
  %3615 = vmatprep.subr.mxu0 %v1299
  %3616 = vmatpush1.msra.mxu0 %v1298
  %3617 = vmatprep.subr.mxu0 %v1309
  %3618 = vmatpush1.msra.mxu0 %v1308
  %3619 = vmatprep.subr.mxu0 %v1319
  %3620 = vmatpush1.msra.mxu0 %v1318
  %3621 = vmatprep.subr.mxu0 %v1329
  %3622 = vmatpush1.msra.mxu0 %v1328
  %3623 = vmatprep.subr.mxu0 %v1339
  %3624 = vmatpush1.msra.mxu0 %v1338
  %3625 = vmatprep.subr.mxu0 %v1349
  %3626 = vmatpush1.msra.mxu0 %v1348
  %3627 = vmatprep.subr.mxu0 %v1359
  %3628 = vmatpush1.msra.mxu0 %v1358
  %3629 = vmatprep.subr.mxu0 %v1369
  %3630 = vmatpush1.msra.mxu0 %v1368
  %3631 = vmatprep.subr.mxu0 %v1379
  %3632 = vmatpush1.msra.mxu0 %v1378
  %3633 = vmatprep.subr.mxu0 %v1389
  %3634 = vmatpush1.msra.mxu0 %v1388
  %3635 = vmatprep.subr.mxu0 %v1399
  %3636 = vmatpush1.msra.mxu0 %v1398
  %3637 = vmatprep.subr.mxu0 %v1409
  %3638 = vmatpush1.msra.mxu0 %v1408
  %3639 = vmatprep.subr.mxu0 %v1419
  %3640 = vmatpush1.msra.mxu0 %v1418
  %3641 = vmatprep.subr.mxu0 %v1429
  %3642 = vmatpush1.msra.mxu0 %v1428
  %3643 = vmatprep.subr.mxu0 %v1439
  %3644 = vmatpush1.msra.mxu0 %v1438
  %3645 = vmatprep.subr.mxu0 %v1449
  %3646 = vmatpush1.msra.mxu0 %v1448
  %3647 = vmatprep.subr.mxu0 %v1459
  %3648 = vmatpush1.msra.mxu0 %v1458
  %3649 = vmatprep.subr.mxu0 %v1469
  %3650 = vmatpush1.msra.mxu0 %v1468
  %3651 = vmatprep.subr.mxu0 %v1479
  %3652 = vmatpush1.msra.mxu0 %v1478
  %3653 = vmatprep.subr.mxu0 %v1489
  %3654 = vmatpush1.msra.mxu0 %v1488
  %3655 = vmatprep.subr.mxu0 %v1499
  %3656 = vmatpush1.msra.mxu0 %v1498
  %3657 = vmatprep.subr.mxu0 %v1509
  %3658 = vmatpush1.msra.mxu0 %v1508
  %3659 = vmatprep.subr.mxu0 %v1519
  %3660 = vmatpush1.msra.mxu0 %v1518
  %3661 = vmatprep.subr.mxu0 %v1529
  %3662 = vmatpush1.msra.mxu0 %v1528
  %3663 = vmatprep.subr.mxu0 %v1539
  %3664 = vmatpush1.msra.mxu0 %v1538
  %3665 = vmatprep.subr.mxu0 %v1549
  %3666 = vmatpush1.msra.mxu0 %v1548
  %3667 = vmatprep.mubr.f32.mxu0 %v889
  %3668 = vmatmul.mubr.f32.gmra.mrb[0].mxu0 %v888
  %v3669 = vpop.f32.mrb[0].mxu0
  %v3670 = vadd.f32 %v3599, %v3669
  %v3671 = vpop.f32.mrb[0].mxu0
  %v3672 = vadd.f32 %v3601, %v3671
  %3673 = vdwg.mxu0
  %3674 = vmatprep.subr.mxu0 %v1559
  %3675 = vmatpush1.msra.mxu0 %v1558
  %3676 = vmatprep.subr.mxu0 %v1569
  %3677 = vmatpush1.msra.mxu0 %v1568
  %3678 = vmatprep.subr.mxu0 %v1579
  %3679 = vmatpush1.msra.mxu0 %v1578
  %3680 = vmatprep.subr.mxu0 %v1589
  %3681 = vmatpush1.msra.mxu0 %v1588
  %3682 = vmatprep.subr.mxu0 %v1599
  %3683 = vmatpush1.msra.mxu0 %v1598
  %3684 = vmatprep.subr.mxu0 %v1609
  %3685 = vmatpush1.msra.mxu0 %v1608
  %3686 = vmatprep.subr.mxu0 %v1619
  %3687 = vmatpush1.msra.mxu0 %v1618
  %3688 = vmatprep.subr.mxu0 %v1629
  %3689 = vmatpush1.msra.mxu0 %v1628
  %3690 = vmatprep.subr.mxu0 %v1639
  %3691 = vmatpush1.msra.mxu0 %v1638
  %3692 = vmatprep.subr.mxu0 %v1649
  %3693 = vmatpush1.msra.mxu0 %v1648
  %3694 = vmatprep.subr.mxu0 %v1659
  %3695 = vmatpush1.msra.mxu0 %v1658
  %3696 = vmatprep.subr.mxu0 %v1669
  %3697 = vmatpush1.msra.mxu0 %v1668
  %3698 = vmatprep.subr.mxu0 %v1679
  %3699 = vmatpush1.msra.mxu0 %v1678
  %3700 = vmatprep.subr.mxu0 %v1689
  %3701 = vmatpush1.msra.mxu0 %v1688
  %3702 = vmatprep.subr.mxu0 %v1699
  %3703 = vmatpush1.msra.mxu0 %v1698
  %3704 = vmatprep.subr.mxu0 %v1709
  %3705 = vmatpush1.msra.mxu0 %v1708
  %3706 = vmatprep.subr.mxu0 %v1719
  %3707 = vmatpush1.msra.mxu0 %v1718
  %3708 = vmatprep.subr.mxu0 %v1729
  %3709 = vmatpush1.msra.mxu0 %v1728
  %3710 = vmatprep.subr.mxu0 %v1739
  %3711 = vmatpush1.msra.mxu0 %v1738
  %3712 = vmatprep.subr.mxu0 %v1749
  %3713 = vmatpush1.msra.mxu0 %v1748
  %3714 = vmatprep.subr.mxu0 %v1759
  %3715 = vmatpush1.msra.mxu0 %v1758
  %3716 = vmatprep.subr.mxu0 %v1769
  %3717 = vmatpush1.msra.mxu0 %v1768
  %3718 = vmatprep.subr.mxu0 %v1779
  %3719 = vmatpush1.msra.mxu0 %v1778
  %3720 = vmatprep.subr.mxu0 %v1789
  %3721 = vmatpush1.msra.mxu0 %v1788
  %3722 = vmatprep.subr.mxu0 %v1799
  %3723 = vmatpush1.msra.mxu0 %v1798
  %3724 = vmatprep.subr.mxu0 %v1809
  %3725 = vmatpush1.msra.mxu0 %v1808
  %3726 = vmatprep.subr.mxu0 %v1819
  %3727 = vmatpush1.msra.mxu0 %v1818
  %3728 = vmatprep.subr.mxu0 %v1829
  %3729 = vmatpush1.msra.mxu0 %v1828
  %3730 = vmatprep.subr.mxu0 %v1839
  %3731 = vmatpush1.msra.mxu0 %v1838
  %3732 = vmatprep.subr.mxu0 %v1849
  %3733 = vmatpush1.msra.mxu0 %v1848
  %3734 = vmatprep.subr.mxu0 %v1859
  %3735 = vmatpush1.msra.mxu0 %v1858
  %3736 = vmatprep.subr.mxu0 %v1869
  %3737 = vmatpush1.msra.mxu0 %v1868
  %3738 = vmatprep.mubr.f32.mxu0 %v891
  %3739 = vmatmul.mubr.f32.gmra.mrb[0].mxu0 %v890
  %v3740 = vpop.f32.mrb[0].mxu0
  %v3741 = vadd.f32 %v3670, %v3740
  %v3742 = vpop.f32.mrb[0].mxu0
  %v3743 = vadd.f32 %v3672, %v3742
  %3744 = vdwg.mxu0
  %3745 = vmatprep.subr.mxu0 %v1879
  %3746 = vmatpush1.msra.mxu0 %v1878
  %3747 = vmatprep.subr.mxu0 %v1889
  %3748 = vmatpush1.msra.mxu0 %v1888
  %3749 = vmatprep.subr.mxu0 %v1899
  %3750 = vmatpush1.msra.mxu0 %v1898
  %3751 = vmatprep.subr.mxu0 %v1909
  %3752 = vmatpush1.msra.mxu0 %v1908
  %3753 = vmatprep.subr.mxu0 %v1919
  %3754 = vmatpush1.msra.mxu0 %v1918
  %3755 = vmatprep.subr.mxu0 %v1929
  %3756 = vmatpush1.msra.mxu0 %v1928
  %3757 = vmatprep.subr.mxu0 %v1939
  %3758 = vmatpush1.msra.mxu0 %v1938
  %3759 = vmatprep.subr.mxu0 %v1949
  %3760 = vmatpush1.msra.mxu0 %v1948
  %3761 = vmatprep.subr.mxu0 %v1959
  %3762 = vmatpush1.msra.mxu0 %v1958
  %3763 = vmatprep.subr.mxu0 %v1969
  %3764 = vmatpush1.msra.mxu0 %v1968
  %3765 = vmatprep.subr.mxu0 %v1979
  %3766 = vmatpush1.msra.mxu0 %v1978
  %3767 = vmatprep.subr.mxu0 %v1989
  %3768 = vmatpush1.msra.mxu0 %v1988
  %3769 = vmatprep.subr.mxu0 %v1999
  %3770 = vmatpush1.msra.mxu0 %v1998
  %3771 = vmatprep.subr.mxu0 %v2009
  %3772 = vmatpush1.msra.mxu0 %v2008
  %3773 = vmatprep.subr.mxu0 %v2019
  %3774 = vmatpush1.msra.mxu0 %v2018
  %3775 = vmatprep.subr.mxu0 %v2029
  %3776 = vmatpush1.msra.mxu0 %v2028
  %3777 = vmatprep.subr.mxu0 %v2039
  %3778 = vmatpush1.msra.mxu0 %v2038
  %3779 = vmatprep.subr.mxu0 %v2049
  %3780 = vmatpush1.msra.mxu0 %v2048
  %3781 = vmatprep.subr.mxu0 %v2059
  %3782 = vmatpush1.msra.mxu0 %v2058
  %3783 = vmatprep.subr.mxu0 %v2069
  %3784 = vmatpush1.msra.mxu0 %v2068
  %3785 = vmatprep.subr.mxu0 %v2079
  %3786 = vmatpush1.msra.mxu0 %v2078
  %3787 = vmatprep.subr.mxu0 %v2089
  %3788 = vmatpush1.msra.mxu0 %v2088
  %3789 = vmatprep.subr.mxu0 %v2099
  %3790 = vmatpush1.msra.mxu0 %v2098
  %3791 = vmatprep.subr.mxu0 %v2109
  %3792 = vmatpush1.msra.mxu0 %v2108
  %3793 = vmatprep.subr.mxu0 %v2119
  %3794 = vmatpush1.msra.mxu0 %v2118
  %3795 = vmatprep.subr.mxu0 %v2129
  %3796 = vmatpush1.msra.mxu0 %v2128
  %3797 = vmatprep.subr.mxu0 %v2139
  %3798 = vmatpush1.msra.mxu0 %v2138
  %3799 = vmatprep.subr.mxu0 %v2149
  %3800 = vmatpush1.msra.mxu0 %v2148
  %3801 = vmatprep.subr.mxu0 %v2159
  %3802 = vmatpush1.msra.mxu0 %v2158
  %3803 = vmatprep.subr.mxu0 %v2169
  %3804 = vmatpush1.msra.mxu0 %v2168
  %3805 = vmatprep.subr.mxu0 %v2179
  %3806 = vmatpush1.msra.mxu0 %v2178
  %3807 = vmatprep.subr.mxu0 %v2189
  %3808 = vmatpush1.msra.mxu0 %v2188
  %3809 = vmatprep.mubr.f32.mxu0 %v893
  %3810 = vmatmul.mubr.f32.gmra.mrb[0].mxu0 %v892
  %v3811 = vpop.f32.mrb[0].mxu0
  %v3812 = vadd.f32 %v3741, %v3811
  %v3813 = vpop.f32.mrb[0].mxu0
  %v3814 = vadd.f32 %v3743, %v3813
  %3815 = vdwg.mxu0
  %3816 = vmatprep.subr.mxu0 %v2199
  %3817 = vmatpush1.msra.mxu0 %v2198
  %3818 = vmatprep.subr.mxu0 %v2209
  %3819 = vmatpush1.msra.mxu0 %v2208
  %3820 = vmatprep.subr.mxu0 %v2219
  %3821 = vmatpush1.msra.mxu0 %v2218
  %3822 = vmatprep.subr.mxu0 %v2229
  %3823 = vmatpush1.msra.mxu0 %v2228
  %3824 = vmatprep.subr.mxu0 %v2239
  %3825 = vmatpush1.msra.mxu0 %v2238
  %3826 = vmatprep.subr.mxu0 %v2249
  %3827 = vmatpush1.msra.mxu0 %v2248
  %3828 = vmatprep.subr.mxu0 %v2259
  %3829 = vmatpush1.msra.mxu0 %v2258
  %3830 = vmatprep.subr.mxu0 %v2269
  %3831 = vmatpush1.msra.mxu0 %v2268
  %3832 = vmatprep.subr.mxu0 %v2279
  %3833 = vmatpush1.msra.mxu0 %v2278
  %3834 = vmatprep.subr.mxu0 %v2289
  %3835 = vmatpush1.msra.mxu0 %v2288
  %3836 = vmatprep.subr.mxu0 %v2299
  %3837 = vmatpush1.msra.mxu0 %v2298
  %3838 = vmatprep.subr.mxu0 %v2309
  %3839 = vmatpush1.msra.mxu0 %v2308
  %3840 = vmatprep.subr.mxu0 %v2319
  %3841 = vmatpush1.msra.mxu0 %v2318
  %3842 = vmatprep.subr.mxu0 %v2329
  %3843 = vmatpush1.msra.mxu0 %v2328
  %3844 = vmatprep.subr.mxu0 %v2339
  %3845 = vmatpush1.msra.mxu0 %v2338
  %3846 = vmatprep.subr.mxu0 %v2349
  %3847 = vmatpush1.msra.mxu0 %v2348
  %3848 = vmatprep.subr.mxu0 %v2359
  %3849 = vmatpush1.msra.mxu0 %v2358
  %3850 = vmatprep.subr.mxu0 %v2369
  %3851 = vmatpush1.msra.mxu0 %v2368
  %3852 = vmatprep.subr.mxu0 %v2379
  %3853 = vmatpush1.msra.mxu0 %v2378
  %3854 = vmatprep.subr.mxu0 %v2389
  %3855 = vmatpush1.msra.mxu0 %v2388
  %3856 = vmatprep.subr.mxu0 %v2399
  %3857 = vmatpush1.msra.mxu0 %v2398
  %3858 = vmatprep.subr.mxu0 %v2409
  %3859 = vmatpush1.msra.mxu0 %v2408
  %3860 = vmatprep.subr.mxu0 %v2419
  %3861 = vmatpush1.msra.mxu0 %v2418
  %3862 = vmatprep.subr.mxu0 %v2429
  %3863 = vmatpush1.msra.mxu0 %v2428
  %3864 = vmatprep.subr.mxu0 %v2439
  %3865 = vmatpush1.msra.mxu0 %v2438
  %3866 = vmatprep.subr.mxu0 %v2449
  %3867 = vmatpush1.msra.mxu0 %v2448
  %3868 = vmatprep.subr.mxu0 %v2459
  %3869 = vmatpush1.msra.mxu0 %v2458
  %3870 = vmatprep.subr.mxu0 %v2469
  %3871 = vmatpush1.msra.mxu0 %v2468
  %3872 = vmatprep.subr.mxu0 %v2479
  %3873 = vmatpush1.msra.mxu0 %v2478
  %3874 = vmatprep.subr.mxu0 %v2489
  %3875 = vmatpush1.msra.mxu0 %v2488
  %3876 = vmatprep.subr.mxu0 %v2499
  %3877 = vmatpush1.msra.mxu0 %v2498
  %3878 = vmatprep.subr.mxu0 %v2509
  %3879 = vmatpush1.msra.mxu0 %v2508
  %3880 = vmatprep.mubr.f32.mxu0 %v895
  %3881 = vmatmul.mubr.f32.gmra.mrb[0].mxu0 %v894
  %v3882 = vpop.f32.mrb[0].mxu0
  %v3883 = vadd.f32 %v3812, %v3882
  %v3884 = vpop.f32.mrb[0].mxu0
  %v3885 = vadd.f32 %v3814, %v3884
  %3886 = vdwg.mxu0
  %3887 = vmatprep.subr.mxu0 %v2519
  %3888 = vmatpush1.msra.mxu0 %v2518
  %3889 = vmatprep.subr.mxu0 %v2529
  %3890 = vmatpush1.msra.mxu0 %v2528
  %3891 = vmatprep.subr.mxu0 %v2539
  %3892 = vmatpush1.msra.mxu0 %v2538
  %3893 = vmatprep.subr.mxu0 %v2549
  %3894 = vmatpush1.msra.mxu0 %v2548
  %3895 = vmatprep.subr.mxu0 %v2559
  %3896 = vmatpush1.msra.mxu0 %v2558
  %3897 = vmatprep.subr.mxu0 %v2569
  %3898 = vmatpush1.msra.mxu0 %v2568
  %3899 = vmatprep.subr.mxu0 %v2579
  %3900 = vmatpush1.msra.mxu0 %v2578
  %3901 = vmatprep.subr.mxu0 %v2589
  %3902 = vmatpush1.msra.mxu0 %v2588
  %3903 = vmatprep.subr.mxu0 %v2599
  %3904 = vmatpush1.msra.mxu0 %v2598
  %3905 = vmatprep.subr.mxu0 %v2609
  %3906 = vmatpush1.msra.mxu0 %v2608
  %3907 = vmatprep.subr.mxu0 %v2619
  %3908 = vmatpush1.msra.mxu0 %v2618
  %3909 = vmatprep.subr.mxu0 %v2629
  %3910 = vmatpush1.msra.mxu0 %v2628
  %3911 = vmatprep.subr.mxu0 %v2639
  %3912 = vmatpush1.msra.mxu0 %v2638
  %3913 = vmatprep.subr.mxu0 %v2649
  %3914 = vmatpush1.msra.mxu0 %v2648
  %3915 = vmatprep.subr.mxu0 %v2659
  %3916 = vmatpush1.msra.mxu0 %v2658
  %3917 = vmatprep.subr.mxu0 %v2669
  %3918 = vmatpush1.msra.mxu0 %v2668
  %3919 = vmatprep.subr.mxu0 %v2679
  %3920 = vmatpush1.msra.mxu0 %v2678
  %3921 = vmatprep.subr.mxu0 %v2689
  %3922 = vmatpush1.msra.mxu0 %v2688
  %3923 = vmatprep.subr.mxu0 %v2699
  %3924 = vmatpush1.msra.mxu0 %v2698
  %3925 = vmatprep.subr.mxu0 %v2709
  %3926 = vmatpush1.msra.mxu0 %v2708
  %3927 = vmatprep.subr.mxu0 %v2719
  %3928 = vmatpush1.msra.mxu0 %v2718
  %3929 = vmatprep.subr.mxu0 %v2729
  %3930 = vmatpush1.msra.mxu0 %v2728
  %3931 = vmatprep.subr.mxu0 %v2739
  %3932 = vmatpush1.msra.mxu0 %v2738
  %3933 = vmatprep.subr.mxu0 %v2749
  %3934 = vmatpush1.msra.mxu0 %v2748
  %3935 = vmatprep.subr.mxu0 %v2759
  %3936 = vmatpush1.msra.mxu0 %v2758
  %3937 = vmatprep.subr.mxu0 %v2769
  %3938 = vmatpush1.msra.mxu0 %v2768
  %3939 = vmatprep.subr.mxu0 %v2779
  %3940 = vmatpush1.msra.mxu0 %v2778
  %3941 = vmatprep.subr.mxu0 %v2789
  %3942 = vmatpush1.msra.mxu0 %v2788
  %3943 = vmatprep.subr.mxu0 %v2799
  %3944 = vmatpush1.msra.mxu0 %v2798
  %3945 = vmatprep.subr.mxu0 %v2809
  %3946 = vmatpush1.msra.mxu0 %v2808
  %3947 = vmatprep.subr.mxu0 %v2819
  %3948 = vmatpush1.msra.mxu0 %v2818
  %3949 = vmatprep.subr.mxu0 %v2829
  %3950 = vmatpush1.msra.mxu0 %v2828
  %3951 = vmatprep.mubr.f32.mxu0 %v897
  %3952 = vmatmul.mubr.f32.gmra.mrb[0].mxu0 %v896
  %v3953 = vpop.f32.mrb[0].mxu0
  %v3954 = vadd.f32 %v3883, %v3953
  %v3955 = vpop.f32.mrb[0].mxu0
  %v3956 = vadd.f32 %v3885, %v3955
  %3957 = vdwg.mxu0
  %3958 = vmatprep.subr.mxu0 %v2839
  %3959 = vmatpush1.msra.mxu0 %v2838
  %3960 = vmatprep.subr.mxu0 %v2849
  %3961 = vmatpush1.msra.mxu0 %v2848
  %3962 = vmatprep.subr.mxu0 %v2859
  %3963 = vmatpush1.msra.mxu0 %v2858
  %3964 = vmatprep.subr.mxu0 %v2869
  %3965 = vmatpush1.msra.mxu0 %v2868
  %3966 = vmatprep.subr.mxu0 %v2879
  %3967 = vmatpush1.msra.mxu0 %v2878
  %3968 = vmatprep.subr.mxu0 %v2889
  %3969 = vmatpush1.msra.mxu0 %v2888
  %3970 = vmatprep.subr.mxu0 %v2899
  %3971 = vmatpush1.msra.mxu0 %v2898
  %3972 = vmatprep.subr.mxu0 %v2909
  %3973 = vmatpush1.msra.mxu0 %v2908
  %3974 = vmatprep.subr.mxu0 %v2919
  %3975 = vmatpush1.msra.mxu0 %v2918
  %3976 = vmatprep.subr.mxu0 %v2929
  %3977 = vmatpush1.msra.mxu0 %v2928
  %3978 = vmatprep.subr.mxu0 %v2939
  %3979 = vmatpush1.msra.mxu0 %v2938
  %3980 = vmatprep.subr.mxu0 %v2949
  %3981 = vmatpush1.msra.mxu0 %v2948
  %3982 = vmatprep.subr.mxu0 %v2959
  %3983 = vmatpush1.msra.mxu0 %v2958
  %3984 = vmatprep.subr.mxu0 %v2969
  %3985 = vmatpush1.msra.mxu0 %v2968
  %3986 = vmatprep.subr.mxu0 %v2979
  %3987 = vmatpush1.msra.mxu0 %v2978
  %3988 = vmatprep.subr.mxu0 %v2989
  %3989 = vmatpush1.msra.mxu0 %v2988
  %3990 = vmatprep.subr.mxu0 %v2999
  %3991 = vmatpush1.msra.mxu0 %v2998
  %3992 = vmatprep.subr.mxu0 %v3009
  %3993 = vmatpush1.msra.mxu0 %v3008
  %3994 = vmatprep.subr.mxu0 %v3019
  %3995 = vmatpush1.msra.mxu0 %v3018
  %3996 = vmatprep.subr.mxu0 %v3029
  %3997 = vmatpush1.msra.mxu0 %v3028
  %3998 = vmatprep.subr.mxu0 %v3039
  %3999 = vmatpush1.msra.mxu0 %v3038
  %4000 = vmatprep.subr.mxu0 %v3049
  %4001 = vmatpush1.msra.mxu0 %v3048
  %4002 = vmatprep.subr.mxu0 %v3059
  %4003 = vmatpush1.msra.mxu0 %v3058
  %4004 = vmatprep.subr.mxu0 %v3069
  %4005 = vmatpush1.msra.mxu0 %v3068
  %4006 = vmatprep.subr.mxu0 %v3079
  %4007 = vmatpush1.msra.mxu0 %v3078
  %4008 = vmatprep.subr.mxu0 %v3089
  %4009 = vmatpush1.msra.mxu0 %v3088
  %4010 = vmatprep.subr.mxu0 %v3099
  %4011 = vmatpush1.msra.mxu0 %v3098
  %4012 = vmatprep.subr.mxu0 %v3109
  %4013 = vmatpush1.msra.mxu0 %v3108
  %4014 = vmatprep.subr.mxu0 %v3119
  %4015 = vmatpush1.msra.mxu0 %v3118
  %4016 = vmatprep.subr.mxu0 %v3129
  %4017 = vmatpush1.msra.mxu0 %v3128
  %4018 = vmatprep.subr.mxu0 %v3139
  %4019 = vmatpush1.msra.mxu0 %v3138
  %4020 = vmatprep.subr.mxu0 %v3149
  %4021 = vmatpush1.msra.mxu0 %v3148
  %4022 = vmatprep.mubr.f32.mxu0 %v899
  %4023 = vmatmul.mubr.f32.gmra.mrb[0].mxu0 %v898
  %v4024 = vpop.f32.mrb[0].mxu0
  %v4025 = vadd.f32 %v3954, %v4024
  %v4026 = vpop.f32.mrb[0].mxu0
  %v4027 = vadd.f32 %v3956, %v4026
  %4028 = vdwg.mxu0
  %4029 = vmatprep.subr.mxu0 %v3159
  %4030 = vmatpush1.msra.mxu0 %v3158
  %4031 = vmatprep.subr.mxu0 %v3169
  %4032 = vmatpush1.msra.mxu0 %v3168
  %4033 = vmatprep.subr.mxu0 %v3179
  %4034 = vmatpush1.msra.mxu0 %v3178
  %4035 = vmatprep.subr.mxu0 %v3189
  %4036 = vmatpush1.msra.mxu0 %v3188
  %4037 = vmatprep.subr.mxu0 %v3199
  %4038 = vmatpush1.msra.mxu0 %v3198
  %4039 = vmatprep.subr.mxu0 %v3209
  %4040 = vmatpush1.msra.mxu0 %v3208
  %4041 = vmatprep.subr.mxu0 %v3219
  %4042 = vmatpush1.msra.mxu0 %v3218
  %4043 = vmatprep.subr.mxu0 %v3229
  %4044 = vmatpush1.msra.mxu0 %v3228
  %4045 = vmatprep.subr.mxu0 %v3239
  %4046 = vmatpush1.msra.mxu0 %v3238
  %4047 = vmatprep.subr.mxu0 %v3249
  %4048 = vmatpush1.msra.mxu0 %v3248
  %4049 = vmatprep.subr.mxu0 %v3259
  %4050 = vmatpush1.msra.mxu0 %v3258
  %4051 = vmatprep.subr.mxu0 %v3269
  %4052 = vmatpush1.msra.mxu0 %v3268
  %4053 = vmatprep.subr.mxu0 %v3279
  %4054 = vmatpush1.msra.mxu0 %v3278
  %4055 = vmatprep.subr.mxu0 %v3289
  %4056 = vmatpush1.msra.mxu0 %v3288
  %4057 = vmatprep.subr.mxu0 %v3299
  %4058 = vmatpush1.msra.mxu0 %v3298
  %4059 = vmatprep.subr.mxu0 %v3309
  %4060 = vmatpush1.msra.mxu0 %v3308
  %4061 = vmatprep.subr.mxu0 %v3319
  %4062 = vmatpush1.msra.mxu0 %v3318
  %4063 = vmatprep.subr.mxu0 %v3329
  %4064 = vmatpush1.msra.mxu0 %v3328
  %4065 = vmatprep.subr.mxu0 %v3339
  %4066 = vmatpush1.msra.mxu0 %v3338
  %4067 = vmatprep.subr.mxu0 %v3349
  %4068 = vmatpush1.msra.mxu0 %v3348
  %4069 = vmatprep.subr.mxu0 %v3359
  %4070 = vmatpush1.msra.mxu0 %v3358
  %4071 = vmatprep.subr.mxu0 %v3369
  %4072 = vmatpush1.msra.mxu0 %v3368
  %4073 = vmatprep.subr.mxu0 %v3379
  %4074 = vmatpush1.msra.mxu0 %v3378
  %4075 = vmatprep.subr.mxu0 %v3389
  %4076 = vmatpush1.msra.mxu0 %v3388
  %4077 = vmatprep.subr.mxu0 %v3399
  %4078 = vmatpush1.msra.mxu0 %v3398
  %4079 = vmatprep.subr.mxu0 %v3409
  %4080 = vmatpush1.msra.mxu0 %v3408
  %4081 = vmatprep.subr.mxu0 %v3419
  %4082 = vmatpush1.msra.mxu0 %v3418
  %4083 = vmatprep.subr.mxu0 %v3429
  %4084 = vmatpush1.msra.mxu0 %v3428
  %4085 = vmatprep.subr.mxu0 %v3439
  %4086 = vmatpush1.msra.mxu0 %v3438
  %4087 = vmatprep.subr.mxu0 %v3449
  %4088 = vmatpush1.msra.mxu0 %v3448
  %4089 = vmatprep.subr.mxu0 %v3459
  %4090 = vmatpush1.msra.mxu0 %v3458
  %4091 = vmatprep.subr.mxu0 %v3469
  %4092 = vmatpush1.msra.mxu0 %v3468
  %4093 = vmatprep.mubr.f32.mxu0 %v901
  %4094 = vmatmul.mubr.f32.gmra.mrb[0].mxu0 %v900
  %v4095 = vpop.f32.mrb[0].mxu0
  %v4096 = vadd.f32 %v4025, %v4095
  %v4097 = vpop.f32.mrb[0].mxu0
  %v4098 = vadd.f32 %v4027, %v4097
  %4099 = vdwg.mxu0
  %4100 = vmatprep.subr.mxu0 %v921
  %4101 = vmatpush1.msra.mxu0 %v920
  %4102 = vmatprep.subr.mxu0 %v931
  %4103 = vmatpush1.msra.mxu0 %v930
  %4104 = vmatprep.subr.mxu0 %v941
  %4105 = vmatpush1.msra.mxu0 %v940
  %4106 = vmatprep.subr.mxu0 %v951
  %4107 = vmatpush1.msra.mxu0 %v950
  %4108 = vmatprep.subr.mxu0 %v961
  %4109 = vmatpush1.msra.mxu0 %v960
  %4110 = vmatprep.subr.mxu0 %v971
  %4111 = vmatpush1.msra.mxu0 %v970
  %4112 = vmatprep.subr.mxu0 %v981
  %4113 = vmatpush1.msra.mxu0 %v980
  %4114 = vmatprep.subr.mxu0 %v991
  %4115 = vmatpush1.msra.mxu0 %v990
  %4116 = vmatprep.subr.mxu0 %v1001
  %4117 = vmatpush1.msra.mxu0 %v1000
  %4118 = vmatprep.subr.mxu0 %v1011
  %4119 = vmatpush1.msra.mxu0 %v1010
  %4120 = vmatprep.subr.mxu0 %v1021
  %4121 = vmatpush1.msra.mxu0 %v1020
  %4122 = vmatprep.subr.mxu0 %v1031
  %4123 = vmatpush1.msra.mxu0 %v1030
  %4124 = vmatprep.subr.mxu0 %v1041
  %4125 = vmatpush1.msra.mxu0 %v1040
  %4126 = vmatprep.subr.mxu0 %v1051
  %4127 = vmatpush1.msra.mxu0 %v1050
  %4128 = vmatprep.subr.mxu0 %v1061
  %4129 = vmatpush1.msra.mxu0 %v1060
  %4130 = vmatprep.subr.mxu0 %v1071
  %4131 = vmatpush1.msra.mxu0 %v1070
  %4132 = vmatprep.subr.mxu0 %v1081
  %4133 = vmatpush1.msra.mxu0 %v1080
  %4134 = vmatprep.subr.mxu0 %v1091
  %4135 = vmatpush1.msra.mxu0 %v1090
  %4136 = vmatprep.subr.mxu0 %v1101
  %4137 = vmatpush1.msra.mxu0 %v1100
  %4138 = vmatprep.subr.mxu0 %v1111
  %4139 = vmatpush1.msra.mxu0 %v1110
  %4140 = vmatprep.subr.mxu0 %v1121
  %4141 = vmatpush1.msra.mxu0 %v1120
  %4142 = vmatprep.subr.mxu0 %v1131
  %4143 = vmatpush1.msra.mxu0 %v1130
  %4144 = vmatprep.subr.mxu0 %v1141
  %4145 = vmatpush1.msra.mxu0 %v1140
  %4146 = vmatprep.subr.mxu0 %v1151
  %4147 = vmatpush1.msra.mxu0 %v1150
  %4148 = vmatprep.subr.mxu0 %v1161
  %4149 = vmatpush1.msra.mxu0 %v1160
  %4150 = vmatprep.subr.mxu0 %v1171
  %4151 = vmatpush1.msra.mxu0 %v1170
  %4152 = vmatprep.subr.mxu0 %v1181
  %4153 = vmatpush1.msra.mxu0 %v1180
  %4154 = vmatprep.subr.mxu0 %v1191
  %4155 = vmatpush1.msra.mxu0 %v1190
  %4156 = vmatprep.subr.mxu0 %v1201
  %4157 = vmatpush1.msra.mxu0 %v1200
  %4158 = vmatprep.subr.mxu0 %v1211
  %4159 = vmatpush1.msra.mxu0 %v1210
  %4160 = vmatprep.subr.mxu0 %v1221
  %4161 = vmatpush1.msra.mxu0 %v1220
  %4162 = vmatprep.subr.mxu0 %v1231
  %4163 = vmatpush1.msra.mxu0 %v1230
  %4164 = vmatprep.mubr.f32.mxu0 %v887
  %4165 = vmatmul.mubr.f32.gmra.mrb[0].mxu0 %v886
  %v4166 = vpop.f32.mrb[0].mxu0
  %v4167 = vadd.f32 %v3493, %v4166
  %v4168 = vpop.f32.mrb[0].mxu0
  %v4169 = vadd.f32 %v3497, %v4168
  %4170 = vdwg.mxu0
  %4171 = vmatprep.subr.mxu0 %v1241
  %4172 = vmatpush1.msra.mxu0 %v1240
  %4173 = vmatprep.subr.mxu0 %v1251
  %4174 = vmatpush1.msra.mxu0 %v1250
  %4175 = vmatprep.subr.mxu0 %v1261
  %4176 = vmatpush1.msra.mxu0 %v1260
  %4177 = vmatprep.subr.mxu0 %v1271
  %4178 = vmatpush1.msra.mxu0 %v1270
  %4179 = vmatprep.subr.mxu0 %v1281
  %4180 = vmatpush1.msra.mxu0 %v1280
  %4181 = vmatprep.subr.mxu0 %v1291
  %4182 = vmatpush1.msra.mxu0 %v1290
  %4183 = vmatprep.subr.mxu0 %v1301
  %4184 = vmatpush1.msra.mxu0 %v1300
  %4185 = vmatprep.subr.mxu0 %v1311
  %4186 = vmatpush1.msra.mxu0 %v1310
  %4187 = vmatprep.subr.mxu0 %v1321
  %4188 = vmatpush1.msra.mxu0 %v1320
  %4189 = vmatprep.subr.mxu0 %v1331
  %4190 = vmatpush1.msra.mxu0 %v1330
  %4191 = vmatprep.subr.mxu0 %v1341
  %4192 = vmatpush1.msra.mxu0 %v1340
  %4193 = vmatprep.subr.mxu0 %v1351
  %4194 = vmatpush1.msra.mxu0 %v1350
  %4195 = vmatprep.subr.mxu0 %v1361
  %4196 = vmatpush1.msra.mxu0 %v1360
  %4197 = vmatprep.subr.mxu0 %v1371
  %4198 = vmatpush1.msra.mxu0 %v1370
  %4199 = vmatprep.subr.mxu0 %v1381
  %4200 = vmatpush1.msra.mxu0 %v1380
  %4201 = vmatprep.subr.mxu0 %v1391
  %4202 = vmatpush1.msra.mxu0 %v1390
  %4203 = vmatprep.subr.mxu0 %v1401
  %4204 = vmatpush1.msra.mxu0 %v1400
  %4205 = vmatprep.subr.mxu0 %v1411
  %4206 = vmatpush1.msra.mxu0 %v1410
  %4207 = vmatprep.subr.mxu0 %v1421
  %4208 = vmatpush1.msra.mxu0 %v1420
  %4209 = vmatprep.subr.mxu0 %v1431
  %4210 = vmatpush1.msra.mxu0 %v1430
  %4211 = vmatprep.subr.mxu0 %v1441
  %4212 = vmatpush1.msra.mxu0 %v1440
  %4213 = vmatprep.subr.mxu0 %v1451
  %4214 = vmatpush1.msra.mxu0 %v1450
  %4215 = vmatprep.subr.mxu0 %v1461
  %4216 = vmatpush1.msra.mxu0 %v1460
  %4217 = vmatprep.subr.mxu0 %v1471
  %4218 = vmatpush1.msra.mxu0 %v1470
  %4219 = vmatprep.subr.mxu0 %v1481
  %4220 = vmatpush1.msra.mxu0 %v1480
  %4221 = vmatprep.subr.mxu0 %v1491
  %4222 = vmatpush1.msra.mxu0 %v1490
  %4223 = vmatprep.subr.mxu0 %v1501
  %4224 = vmatpush1.msra.mxu0 %v1500
  %4225 = vmatprep.subr.mxu0 %v1511
  %4226 = vmatpush1.msra.mxu0 %v1510
  %4227 = vmatprep.subr.mxu0 %v1521
  %4228 = vmatpush1.msra.mxu0 %v1520
  %4229 = vmatprep.subr.mxu0 %v1531
  %4230 = vmatpush1.msra.mxu0 %v1530
  %4231 = vmatprep.subr.mxu0 %v1541
  %4232 = vmatpush1.msra.mxu0 %v1540
  %4233 = vmatprep.subr.mxu0 %v1551
  %4234 = vmatpush1.msra.mxu0 %v1550
  %4235 = vmatprep.mubr.f32.mxu0 %v889
  %4236 = vmatmul.mubr.f32.gmra.mrb[0].mxu0 %v888
  %v4237 = vpop.f32.mrb[0].mxu0
  %v4238 = vadd.f32 %v4167, %v4237
  %v4239 = vpop.f32.mrb[0].mxu0
  %v4240 = vadd.f32 %v4169, %v4239
  %4241 = vdwg.mxu0
  %4242 = vmatprep.subr.mxu0 %v1561
  %4243 = vmatpush1.msra.mxu0 %v1560
  %4244 = vmatprep.subr.mxu0 %v1571
  %4245 = vmatpush1.msra.mxu0 %v1570
  %4246 = vmatprep.subr.mxu0 %v1581
  %4247 = vmatpush1.msra.mxu0 %v1580
  %4248 = vmatprep.subr.mxu0 %v1591
  %4249 = vmatpush1.msra.mxu0 %v1590
  %4250 = vmatprep.subr.mxu0 %v1601
  %4251 = vmatpush1.msra.mxu0 %v1600
  %4252 = vmatprep.subr.mxu0 %v1611
  %4253 = vmatpush1.msra.mxu0 %v1610
  %4254 = vmatprep.subr.mxu0 %v1621
  %4255 = vmatpush1.msra.mxu0 %v1620
  %4256 = vmatprep.subr.mxu0 %v1631
  %4257 = vmatpush1.msra.mxu0 %v1630
  %4258 = vmatprep.subr.mxu0 %v1641
  %4259 = vmatpush1.msra.mxu0 %v1640
  %4260 = vmatprep.subr.mxu0 %v1651
  %4261 = vmatpush1.msra.mxu0 %v1650
  %4262 = vmatprep.subr.mxu0 %v1661
  %4263 = vmatpush1.msra.mxu0 %v1660
  %4264 = vmatprep.subr.mxu0 %v1671
  %4265 = vmatpush1.msra.mxu0 %v1670
  %4266 = vmatprep.subr.mxu0 %v1681
  %4267 = vmatpush1.msra.mxu0 %v1680
  %4268 = vmatprep.subr.mxu0 %v1691
  %4269 = vmatpush1.msra.mxu0 %v1690
  %4270 = vmatprep.subr.mxu0 %v1701
  %4271 = vmatpush1.msra.mxu0 %v1700
  %4272 = vmatprep.subr.mxu0 %v1711
  %4273 = vmatpush1.msra.mxu0 %v1710
  %4274 = vmatprep.subr.mxu0 %v1721
  %4275 = vmatpush1.msra.mxu0 %v1720
  %4276 = vmatprep.subr.mxu0 %v1731
  %4277 = vmatpush1.msra.mxu0 %v1730
  %4278 = vmatprep.subr.mxu0 %v1741
  %4279 = vmatpush1.msra.mxu0 %v1740
  %4280 = vmatprep.subr.mxu0 %v1751
  %4281 = vmatpush1.msra.mxu0 %v1750
  %4282 = vmatprep.subr.mxu0 %v1761
  %4283 = vmatpush1.msra.mxu0 %v1760
  %4284 = vmatprep.subr.mxu0 %v1771
  %4285 = vmatpush1.msra.mxu0 %v1770
  %4286 = vmatprep.subr.mxu0 %v1781
  %4287 = vmatpush1.msra.mxu0 %v1780
  %4288 = vmatprep.subr.mxu0 %v1791
  %4289 = vmatpush1.msra.mxu0 %v1790
  %4290 = vmatprep.subr.mxu0 %v1801
  %4291 = vmatpush1.msra.mxu0 %v1800
  %4292 = vmatprep.subr.mxu0 %v1811
  %4293 = vmatpush1.msra.mxu0 %v1810
  %4294 = vmatprep.subr.mxu0 %v1821
  %4295 = vmatpush1.msra.mxu0 %v1820
  %4296 = vmatprep.subr.mxu0 %v1831
  %4297 = vmatpush1.msra.mxu0 %v1830
  %4298 = vmatprep.subr.mxu0 %v1841
  %4299 = vmatpush1.msra.mxu0 %v1840
  %4300 = vmatprep.subr.mxu0 %v1851
  %4301 = vmatpush1.msra.mxu0 %v1850
  %4302 = vmatprep.subr.mxu0 %v1861
  %4303 = vmatpush1.msra.mxu0 %v1860
  %4304 = vmatprep.subr.mxu0 %v1871
  %4305 = vmatpush1.msra.mxu0 %v1870
  %4306 = vmatprep.mubr.f32.mxu0 %v891
  %4307 = vmatmul.mubr.f32.gmra.mrb[0].mxu0 %v890
  %v4308 = vpop.f32.mrb[0].mxu0
  %v4309 = vadd.f32 %v4238, %v4308
  %v4310 = vpop.f32.mrb[0].mxu0
  %v4311 = vadd.f32 %v4240, %v4310
  %4312 = vdwg.mxu0
  %4313 = vmatprep.subr.mxu0 %v1881
  %4314 = vmatpush1.msra.mxu0 %v1880
  %4315 = vmatprep.subr.mxu0 %v1891
  %4316 = vmatpush1.msra.mxu0 %v1890
  %4317 = vmatprep.subr.mxu0 %v1901
  %4318 = vmatpush1.msra.mxu0 %v1900
  %4319 = vmatprep.subr.mxu0 %v1911
  %4320 = vmatpush1.msra.mxu0 %v1910
  %4321 = vmatprep.subr.mxu0 %v1921
  %4322 = vmatpush1.msra.mxu0 %v1920
  %4323 = vmatprep.subr.mxu0 %v1931
  %4324 = vmatpush1.msra.mxu0 %v1930
  %4325 = vmatprep.subr.mxu0 %v1941
  %4326 = vmatpush1.msra.mxu0 %v1940
  %4327 = vmatprep.subr.mxu0 %v1951
  %4328 = vmatpush1.msra.mxu0 %v1950
  %4329 = vmatprep.subr.mxu0 %v1961
  %4330 = vmatpush1.msra.mxu0 %v1960
  %4331 = vmatprep.subr.mxu0 %v1971
  %4332 = vmatpush1.msra.mxu0 %v1970
  %4333 = vmatprep.subr.mxu0 %v1981
  %4334 = vmatpush1.msra.mxu0 %v1980
  %4335 = vmatprep.subr.mxu0 %v1991
  %4336 = vmatpush1.msra.mxu0 %v1990
  %4337 = vmatprep.subr.mxu0 %v2001
  %4338 = vmatpush1.msra.mxu0 %v2000
  %4339 = vmatprep.subr.mxu0 %v2011
  %4340 = vmatpush1.msra.mxu0 %v2010
  %4341 = vmatprep.subr.mxu0 %v2021
  %4342 = vmatpush1.msra.mxu0 %v2020
  %4343 = vmatprep.subr.mxu0 %v2031
  %4344 = vmatpush1.msra.mxu0 %v2030
  %4345 = vmatprep.subr.mxu0 %v2041
  %4346 = vmatpush1.msra.mxu0 %v2040
  %4347 = vmatprep.subr.mxu0 %v2051
  %4348 = vmatpush1.msra.mxu0 %v2050
  %4349 = vmatprep.subr.mxu0 %v2061
  %4350 = vmatpush1.msra.mxu0 %v2060
  %4351 = vmatprep.subr.mxu0 %v2071
  %4352 = vmatpush1.msra.mxu0 %v2070
  %4353 = vmatprep.subr.mxu0 %v2081
  %4354 = vmatpush1.msra.mxu0 %v2080
  %4355 = vmatprep.subr.mxu0 %v2091
  %4356 = vmatpush1.msra.mxu0 %v2090
  %4357 = vmatprep.subr.mxu0 %v2101
  %4358 = vmatpush1.msra.mxu0 %v2100
  %4359 = vmatprep.subr.mxu0 %v2111
  %4360 = vmatpush1.msra.mxu0 %v2110
  %4361 = vmatprep.subr.mxu0 %v2121
  %4362 = vmatpush1.msra.mxu0 %v2120
  %4363 = vmatprep.subr.mxu0 %v2131
  %4364 = vmatpush1.msra.mxu0 %v2130
  %4365 = vmatprep.subr.mxu0 %v2141
  %4366 = vmatpush1.msra.mxu0 %v2140
  %4367 = vmatprep.subr.mxu0 %v2151
  %4368 = vmatpush1.msra.mxu0 %v2150
  %4369 = vmatprep.subr.mxu0 %v2161
  %4370 = vmatpush1.msra.mxu0 %v2160
  %4371 = vmatprep.subr.mxu0 %v2171
  %4372 = vmatpush1.msra.mxu0 %v2170
  %4373 = vmatprep.subr.mxu0 %v2181
  %4374 = vmatpush1.msra.mxu0 %v2180
  %4375 = vmatprep.subr.mxu0 %v2191
  %4376 = vmatpush1.msra.mxu0 %v2190
  %4377 = vmatprep.mubr.f32.mxu0 %v893
  %4378 = vmatmul.mubr.f32.gmra.mrb[0].mxu0 %v892
  %v4379 = vpop.f32.mrb[0].mxu0
  %v4380 = vadd.f32 %v4309, %v4379
  %v4381 = vpop.f32.mrb[0].mxu0
  %v4382 = vadd.f32 %v4311, %v4381
  %4383 = vdwg.mxu0
  %4384 = vmatprep.subr.mxu0 %v2201
  %4385 = vmatpush1.msra.mxu0 %v2200
  %4386 = vmatprep.subr.mxu0 %v2211
  %4387 = vmatpush1.msra.mxu0 %v2210
  %4388 = vmatprep.subr.mxu0 %v2221
  %4389 = vmatpush1.msra.mxu0 %v2220
  %4390 = vmatprep.subr.mxu0 %v2231
  %4391 = vmatpush1.msra.mxu0 %v2230
  %4392 = vmatprep.subr.mxu0 %v2241
  %4393 = vmatpush1.msra.mxu0 %v2240
  %4394 = vmatprep.subr.mxu0 %v2251
  %4395 = vmatpush1.msra.mxu0 %v2250
  %4396 = vmatprep.subr.mxu0 %v2261
  %4397 = vmatpush1.msra.mxu0 %v2260
  %4398 = vmatprep.subr.mxu0 %v2271
  %4399 = vmatpush1.msra.mxu0 %v2270
  %4400 = vmatprep.subr.mxu0 %v2281
  %4401 = vmatpush1.msra.mxu0 %v2280
  %4402 = vmatprep.subr.mxu0 %v2291
  %4403 = vmatpush1.msra.mxu0 %v2290
  %4404 = vmatprep.subr.mxu0 %v2301
  %4405 = vmatpush1.msra.mxu0 %v2300
  %4406 = vmatprep.subr.mxu0 %v2311
  %4407 = vmatpush1.msra.mxu0 %v2310
  %4408 = vmatprep.subr.mxu0 %v2321
  %4409 = vmatpush1.msra.mxu0 %v2320
  %4410 = vmatprep.subr.mxu0 %v2331
  %4411 = vmatpush1.msra.mxu0 %v2330
  %4412 = vmatprep.subr.mxu0 %v2341
  %4413 = vmatpush1.msra.mxu0 %v2340
  %4414 = vmatprep.subr.mxu0 %v2351
  %4415 = vmatpush1.msra.mxu0 %v2350
  %4416 = vmatprep.subr.mxu0 %v2361
  %4417 = vmatpush1.msra.mxu0 %v2360
  %4418 = vmatprep.subr.mxu0 %v2371
  %4419 = vmatpush1.msra.mxu0 %v2370
  %4420 = vmatprep.subr.mxu0 %v2381
  %4421 = vmatpush1.msra.mxu0 %v2380
  %4422 = vmatprep.subr.mxu0 %v2391
  %4423 = vmatpush1.msra.mxu0 %v2390
  %4424 = vmatprep.subr.mxu0 %v2401
  %4425 = vmatpush1.msra.mxu0 %v2400
  %4426 = vmatprep.subr.mxu0 %v2411
  %4427 = vmatpush1.msra.mxu0 %v2410
  %4428 = vmatprep.subr.mxu0 %v2421
  %4429 = vmatpush1.msra.mxu0 %v2420
  %4430 = vmatprep.subr.mxu0 %v2431
  %4431 = vmatpush1.msra.mxu0 %v2430
  %4432 = vmatprep.subr.mxu0 %v2441
  %4433 = vmatpush1.msra.mxu0 %v2440
  %4434 = vmatprep.subr.mxu0 %v2451
  %4435 = vmatpush1.msra.mxu0 %v2450
  %4436 = vmatprep.subr.mxu0 %v2461
  %4437 = vmatpush1.msra.mxu0 %v2460
  %4438 = vmatprep.subr.mxu0 %v2471
  %4439 = vmatpush1.msra.mxu0 %v2470
  %4440 = vmatprep.subr.mxu0 %v2481
  %4441 = vmatpush1.msra.mxu0 %v2480
  %4442 = vmatprep.subr.mxu0 %v2491
  %4443 = vmatpush1.msra.mxu0 %v2490
  %4444 = vmatprep.subr.mxu0 %v2501
  %4445 = vmatpush1.msra.mxu0 %v2500
  %4446 = vmatprep.subr.mxu0 %v2511
  %4447 = vmatpush1.msra.mxu0 %v2510
  %4448 = vmatprep.mubr.f32.mxu0 %v895
  %4449 = vmatmul.mubr.f32.gmra.mrb[0].mxu0 %v894
  %v4450 = vpop.f32.mrb[0].mxu0
  %v4451 = vadd.f32 %v4380, %v4450
  %v4452 = vpop.f32.mrb[0].mxu0
  %v4453 = vadd.f32 %v4382, %v4452
  %4454 = vdwg.mxu0
  %4455 = vmatprep.subr.mxu0 %v2521
  %4456 = vmatpush1.msra.mxu0 %v2520
  %4457 = vmatprep.subr.mxu0 %v2531
  %4458 = vmatpush1.msra.mxu0 %v2530
  %4459 = vmatprep.subr.mxu0 %v2541
  %4460 = vmatpush1.msra.mxu0 %v2540
  %4461 = vmatprep.subr.mxu0 %v2551
  %4462 = vmatpush1.msra.mxu0 %v2550
  %4463 = vmatprep.subr.mxu0 %v2561
  %4464 = vmatpush1.msra.mxu0 %v2560
  %4465 = vmatprep.subr.mxu0 %v2571
  %4466 = vmatpush1.msra.mxu0 %v2570
  %4467 = vmatprep.subr.mxu0 %v2581
  %4468 = vmatpush1.msra.mxu0 %v2580
  %4469 = vmatprep.subr.mxu0 %v2591
  %4470 = vmatpush1.msra.mxu0 %v2590
  %4471 = vmatprep.subr.mxu0 %v2601
  %4472 = vmatpush1.msra.mxu0 %v2600
  %4473 = vmatprep.subr.mxu0 %v2611
  %4474 = vmatpush1.msra.mxu0 %v2610
  %4475 = vmatprep.subr.mxu0 %v2621
  %4476 = vmatpush1.msra.mxu0 %v2620
  %4477 = vmatprep.subr.mxu0 %v2631
  %4478 = vmatpush1.msra.mxu0 %v2630
  %4479 = vmatprep.subr.mxu0 %v2641
  %4480 = vmatpush1.msra.mxu0 %v2640
  %4481 = vmatprep.subr.mxu0 %v2651
  %4482 = vmatpush1.msra.mxu0 %v2650
  %4483 = vmatprep.subr.mxu0 %v2661
  %4484 = vmatpush1.msra.mxu0 %v2660
  %4485 = vmatprep.subr.mxu0 %v2671
  %4486 = vmatpush1.msra.mxu0 %v2670
  %4487 = vmatprep.subr.mxu0 %v2681
  %4488 = vmatpush1.msra.mxu0 %v2680
  %4489 = vmatprep.subr.mxu0 %v2691
  %4490 = vmatpush1.msra.mxu0 %v2690
  %4491 = vmatprep.subr.mxu0 %v2701
  %4492 = vmatpush1.msra.mxu0 %v2700
  %4493 = vmatprep.subr.mxu0 %v2711
  %4494 = vmatpush1.msra.mxu0 %v2710
  %4495 = vmatprep.subr.mxu0 %v2721
  %4496 = vmatpush1.msra.mxu0 %v2720
  %4497 = vmatprep.subr.mxu0 %v2731
  %4498 = vmatpush1.msra.mxu0 %v2730
  %4499 = vmatprep.subr.mxu0 %v2741
  %4500 = vmatpush1.msra.mxu0 %v2740
  %4501 = vmatprep.subr.mxu0 %v2751
  %4502 = vmatpush1.msra.mxu0 %v2750
  %4503 = vmatprep.subr.mxu0 %v2761
  %4504 = vmatpush1.msra.mxu0 %v2760
  %4505 = vmatprep.subr.mxu0 %v2771
  %4506 = vmatpush1.msra.mxu0 %v2770
  %4507 = vmatprep.subr.mxu0 %v2781
  %4508 = vmatpush1.msra.mxu0 %v2780
  %4509 = vmatprep.subr.mxu0 %v2791
  %4510 = vmatpush1.msra.mxu0 %v2790
  %4511 = vmatprep.subr.mxu0 %v2801
  %4512 = vmatpush1.msra.mxu0 %v2800
  %4513 = vmatprep.subr.mxu0 %v2811
  %4514 = vmatpush1.msra.mxu0 %v2810
  %4515 = vmatprep.subr.mxu0 %v2821
  %4516 = vmatpush1.msra.mxu0 %v2820
  %4517 = vmatprep.subr.mxu0 %v2831
  %4518 = vmatpush1.msra.mxu0 %v2830
  %4519 = vmatprep.mubr.f32.mxu0 %v897
  %4520 = vmatmul.mubr.f32.gmra.mrb[0].mxu0 %v896
  %v4521 = vpop.f32.mrb[0].mxu0
  %v4522 = vadd.f32 %v4451, %v4521
  %v4523 = vpop.f32.mrb[0].mxu0
  %v4524 = vadd.f32 %v4453, %v4523
  %4525 = vdwg.mxu0
  %4526 = vmatprep.subr.mxu0 %v2841
  %4527 = vmatpush1.msra.mxu0 %v2840
  %4528 = vmatprep.subr.mxu0 %v2851
  %4529 = vmatpush1.msra.mxu0 %v2850
  %4530 = vmatprep.subr.mxu0 %v2861
  %4531 = vmatpush1.msra.mxu0 %v2860
  %4532 = vmatprep.subr.mxu0 %v2871
  %4533 = vmatpush1.msra.mxu0 %v2870
  %4534 = vmatprep.subr.mxu0 %v2881
  %4535 = vmatpush1.msra.mxu0 %v2880
  %4536 = vmatprep.subr.mxu0 %v2891
  %4537 = vmatpush1.msra.mxu0 %v2890
  %4538 = vmatprep.subr.mxu0 %v2901
  %4539 = vmatpush1.msra.mxu0 %v2900
  %4540 = vmatprep.subr.mxu0 %v2911
  %4541 = vmatpush1.msra.mxu0 %v2910
  %4542 = vmatprep.subr.mxu0 %v2921
  %4543 = vmatpush1.msra.mxu0 %v2920
  %4544 = vmatprep.subr.mxu0 %v2931
  %4545 = vmatpush1.msra.mxu0 %v2930
  %4546 = vmatprep.subr.mxu0 %v2941
  %4547 = vmatpush1.msra.mxu0 %v2940
  %4548 = vmatprep.subr.mxu0 %v2951
  %4549 = vmatpush1.msra.mxu0 %v2950
  %4550 = vmatprep.subr.mxu0 %v2961
  %4551 = vmatpush1.msra.mxu0 %v2960
  %4552 = vmatprep.subr.mxu0 %v2971
  %4553 = vmatpush1.msra.mxu0 %v2970
  %4554 = vmatprep.subr.mxu0 %v2981
  %4555 = vmatpush1.msra.mxu0 %v2980
  %4556 = vmatprep.subr.mxu0 %v2991
  %4557 = vmatpush1.msra.mxu0 %v2990
  %4558 = vmatprep.subr.mxu0 %v3001
  %4559 = vmatpush1.msra.mxu0 %v3000
  %4560 = vmatprep.subr.mxu0 %v3011
  %4561 = vmatpush1.msra.mxu0 %v3010
  %4562 = vmatprep.subr.mxu0 %v3021
  %4563 = vmatpush1.msra.mxu0 %v3020
  %4564 = vmatprep.subr.mxu0 %v3031
  %4565 = vmatpush1.msra.mxu0 %v3030
  %4566 = vmatprep.subr.mxu0 %v3041
  %4567 = vmatpush1.msra.mxu0 %v3040
  %4568 = vmatprep.subr.mxu0 %v3051
  %4569 = vmatpush1.msra.mxu0 %v3050
  %4570 = vmatprep.subr.mxu0 %v3061
  %4571 = vmatpush1.msra.mxu0 %v3060
  %4572 = vmatprep.subr.mxu0 %v3071
  %4573 = vmatpush1.msra.mxu0 %v3070
  %4574 = vmatprep.subr.mxu0 %v3081
  %4575 = vmatpush1.msra.mxu0 %v3080
  %4576 = vmatprep.subr.mxu0 %v3091
  %4577 = vmatpush1.msra.mxu0 %v3090
  %4578 = vmatprep.subr.mxu0 %v3101
  %4579 = vmatpush1.msra.mxu0 %v3100
  %4580 = vmatprep.subr.mxu0 %v3111
  %4581 = vmatpush1.msra.mxu0 %v3110
  %4582 = vmatprep.subr.mxu0 %v3121
  %4583 = vmatpush1.msra.mxu0 %v3120
  %4584 = vmatprep.subr.mxu0 %v3131
  %4585 = vmatpush1.msra.mxu0 %v3130
  %4586 = vmatprep.subr.mxu0 %v3141
  %4587 = vmatpush1.msra.mxu0 %v3140
  %4588 = vmatprep.subr.mxu0 %v3151
  %4589 = vmatpush1.msra.mxu0 %v3150
  %4590 = vmatprep.mubr.f32.mxu0 %v899
  %4591 = vmatmul.mubr.f32.gmra.mrb[0].mxu0 %v898
  %v4592 = vpop.f32.mrb[0].mxu0
  %v4593 = vadd.f32 %v4522, %v4592
  %v4594 = vpop.f32.mrb[0].mxu0
  %v4595 = vadd.f32 %v4524, %v4594
  %4596 = vdwg.mxu0
  %4597 = vmatprep.subr.mxu0 %v3161
  %4598 = vmatpush1.msra.mxu0 %v3160
  %4599 = vmatprep.subr.mxu0 %v3171
  %4600 = vmatpush1.msra.mxu0 %v3170
  %4601 = vmatprep.subr.mxu0 %v3181
  %4602 = vmatpush1.msra.mxu0 %v3180
  %4603 = vmatprep.subr.mxu0 %v3191
  %4604 = vmatpush1.msra.mxu0 %v3190
  %4605 = vmatprep.subr.mxu0 %v3201
  %4606 = vmatpush1.msra.mxu0 %v3200
  %4607 = vmatprep.subr.mxu0 %v3211
  %4608 = vmatpush1.msra.mxu0 %v3210
  %4609 = vmatprep.subr.mxu0 %v3221
  %4610 = vmatpush1.msra.mxu0 %v3220
  %4611 = vmatprep.subr.mxu0 %v3231
  %4612 = vmatpush1.msra.mxu0 %v3230
  %4613 = vmatprep.subr.mxu0 %v3241
  %4614 = vmatpush1.msra.mxu0 %v3240
  %4615 = vmatprep.subr.mxu0 %v3251
  %4616 = vmatpush1.msra.mxu0 %v3250
  %4617 = vmatprep.subr.mxu0 %v3261
  %4618 = vmatpush1.msra.mxu0 %v3260
  %4619 = vmatprep.subr.mxu0 %v3271
  %4620 = vmatpush1.msra.mxu0 %v3270
  %4621 = vmatprep.subr.mxu0 %v3281
  %4622 = vmatpush1.msra.mxu0 %v3280
  %4623 = vmatprep.subr.mxu0 %v3291
  %4624 = vmatpush1.msra.mxu0 %v3290
  %4625 = vmatprep.subr.mxu0 %v3301
  %4626 = vmatpush1.msra.mxu0 %v3300
  %4627 = vmatprep.subr.mxu0 %v3311
  %4628 = vmatpush1.msra.mxu0 %v3310
  %4629 = vmatprep.subr.mxu0 %v3321
  %4630 = vmatpush1.msra.mxu0 %v3320
  %4631 = vmatprep.subr.mxu0 %v3331
  %4632 = vmatpush1.msra.mxu0 %v3330
  %4633 = vmatprep.subr.mxu0 %v3341
  %4634 = vmatpush1.msra.mxu0 %v3340
  %4635 = vmatprep.subr.mxu0 %v3351
  %4636 = vmatpush1.msra.mxu0 %v3350
  %4637 = vmatprep.subr.mxu0 %v3361
  %4638 = vmatpush1.msra.mxu0 %v3360
  %4639 = vmatprep.subr.mxu0 %v3371
  %4640 = vmatpush1.msra.mxu0 %v3370
  %4641 = vmatprep.subr.mxu0 %v3381
  %4642 = vmatpush1.msra.mxu0 %v3380
  %4643 = vmatprep.subr.mxu0 %v3391
  %4644 = vmatpush1.msra.mxu0 %v3390
  %4645 = vmatprep.subr.mxu0 %v3401
  %4646 = vmatpush1.msra.mxu0 %v3400
  %4647 = vmatprep.subr.mxu0 %v3411
  %4648 = vmatpush1.msra.mxu0 %v3410
  %4649 = vmatprep.subr.mxu0 %v3421
  %4650 = vmatpush1.msra.mxu0 %v3420
  %4651 = vmatprep.subr.mxu0 %v3431
  %4652 = vmatpush1.msra.mxu0 %v3430
  %4653 = vmatprep.subr.mxu0 %v3441
  %4654 = vmatpush1.msra.mxu0 %v3440
  %4655 = vmatprep.subr.mxu0 %v3451
  %4656 = vmatpush1.msra.mxu0 %v3450
  %4657 = vmatprep.subr.mxu0 %v3461
  %4658 = vmatpush1.msra.mxu0 %v3460
  %4659 = vmatprep.subr.mxu0 %v3471
  %4660 = vmatpush1.msra.mxu0 %v3470
  %4661 = vmatprep.mubr.f32.mxu0 %v901
  %4662 = vmatmul.mubr.f32.gmra.mrb[0].mxu0 %v900
  %v4663 = vpop.f32.mrb[0].mxu0
  %v4664 = vadd.f32 %v4593, %v4663
  %v4665 = vpop.f32.mrb[0].mxu0
  %v4666 = vadd.f32 %v4595, %v4665
  %4667 = vdwg.mxu0
  %4668 = vmatprep.subr.mxu0 %v923
  %4669 = vmatpush1.msra.mxu0 %v922
  %4670 = vmatprep.subr.mxu0 %v933
  %4671 = vmatpush1.msra.mxu0 %v932
  %4672 = vmatprep.subr.mxu0 %v943
  %4673 = vmatpush1.msra.mxu0 %v942
  %4674 = vmatprep.subr.mxu0 %v953
  %4675 = vmatpush1.msra.mxu0 %v952
  %4676 = vmatprep.subr.mxu0 %v963
  %4677 = vmatpush1.msra.mxu0 %v962
  %4678 = vmatprep.subr.mxu0 %v973
  %4679 = vmatpush1.msra.mxu0 %v972
  %4680 = vmatprep.subr.mxu0 %v983
  %4681 = vmatpush1.msra.mxu0 %v982
  %4682 = vmatprep.subr.mxu0 %v993
  %4683 = vmatpush1.msra.mxu0 %v992
  %4684 = vmatprep.subr.mxu0 %v1003
  %4685 = vmatpush1.msra.mxu0 %v1002
  %4686 = vmatprep.subr.mxu0 %v1013
  %4687 = vmatpush1.msra.mxu0 %v1012
  %4688 = vmatprep.subr.mxu0 %v1023
  %4689 = vmatpush1.msra.mxu0 %v1022
  %4690 = vmatprep.subr.mxu0 %v1033
  %4691 = vmatpush1.msra.mxu0 %v1032
  %4692 = vmatprep.subr.mxu0 %v1043
  %4693 = vmatpush1.msra.mxu0 %v1042
  %4694 = vmatprep.subr.mxu0 %v1053
  %4695 = vmatpush1.msra.mxu0 %v1052
  %4696 = vmatprep.subr.mxu0 %v1063
  %4697 = vmatpush1.msra.mxu0 %v1062
  %4698 = vmatprep.subr.mxu0 %v1073
  %4699 = vmatpush1.msra.mxu0 %v1072
  %4700 = vmatprep.subr.mxu0 %v1083
  %4701 = vmatpush1.msra.mxu0 %v1082
  %4702 = vmatprep.subr.mxu0 %v1093
  %4703 = vmatpush1.msra.mxu0 %v1092
  %4704 = vmatprep.subr.mxu0 %v1103
  %4705 = vmatpush1.msra.mxu0 %v1102
  %4706 = vmatprep.subr.mxu0 %v1113
  %4707 = vmatpush1.msra.mxu0 %v1112
  %4708 = vmatprep.subr.mxu0 %v1123
  %4709 = vmatpush1.msra.mxu0 %v1122
  %4710 = vmatprep.subr.mxu0 %v1133
  %4711 = vmatpush1.msra.mxu0 %v1132
  %4712 = vmatprep.subr.mxu0 %v1143
  %4713 = vmatpush1.msra.mxu0 %v1142
  %4714 = vmatprep.subr.mxu0 %v1153
  %4715 = vmatpush1.msra.mxu0 %v1152
  %4716 = vmatprep.subr.mxu0 %v1163
  %4717 = vmatpush1.msra.mxu0 %v1162
  %4718 = vmatprep.subr.mxu0 %v1173
  %4719 = vmatpush1.msra.mxu0 %v1172
  %4720 = vmatprep.subr.mxu0 %v1183
  %4721 = vmatpush1.msra.mxu0 %v1182
  %4722 = vmatprep.subr.mxu0 %v1193
  %4723 = vmatpush1.msra.mxu0 %v1192
  %4724 = vmatprep.subr.mxu0 %v1203
  %4725 = vmatpush1.msra.mxu0 %v1202
  %4726 = vmatprep.subr.mxu0 %v1213
  %4727 = vmatpush1.msra.mxu0 %v1212
  %4728 = vmatprep.subr.mxu0 %v1223
  %4729 = vmatpush1.msra.mxu0 %v1222
  %4730 = vmatprep.subr.mxu0 %v1233
  %4731 = vmatpush1.msra.mxu0 %v1232
  %4732 = vmatprep.mubr.f32.mxu0 %v887
  %4733 = vmatmul.mubr.f32.gmra.mrb[0].mxu0 %v886
  %v4734 = vpop.f32.mrb[0].mxu0
  %v4735 = vadd.f32 %v3501, %v4734
  %v4736 = vpop.f32.mrb[0].mxu0
  %v4737 = vadd.f32 %v3505, %v4736
  %4738 = vdwg.mxu0
  %4739 = vmatprep.subr.mxu0 %v1243
  %4740 = vmatpush1.msra.mxu0 %v1242
  %4741 = vmatprep.subr.mxu0 %v1253
  %4742 = vmatpush1.msra.mxu0 %v1252
  %4743 = vmatprep.subr.mxu0 %v1263
  %4744 = vmatpush1.msra.mxu0 %v1262
  %4745 = vmatprep.subr.mxu0 %v1273
  %4746 = vmatpush1.msra.mxu0 %v1272
  %4747 = vmatprep.subr.mxu0 %v1283
  %4748 = vmatpush1.msra.mxu0 %v1282
  %4749 = vmatprep.subr.mxu0 %v1293
  %4750 = vmatpush1.msra.mxu0 %v1292
  %4751 = vmatprep.subr.mxu0 %v1303
  %4752 = vmatpush1.msra.mxu0 %v1302
  %4753 = vmatprep.subr.mxu0 %v1313
  %4754 = vmatpush1.msra.mxu0 %v1312
  %4755 = vmatprep.subr.mxu0 %v1323
  %4756 = vmatpush1.msra.mxu0 %v1322
  %4757 = vmatprep.subr.mxu0 %v1333
  %4758 = vmatpush1.msra.mxu0 %v1332
  %4759 = vmatprep.subr.mxu0 %v1343
  %4760 = vmatpush1.msra.mxu0 %v1342
  %4761 = vmatprep.subr.mxu0 %v1353
  %4762 = vmatpush1.msra.mxu0 %v1352
  %4763 = vmatprep.subr.mxu0 %v1363
  %4764 = vmatpush1.msra.mxu0 %v1362
  %4765 = vmatprep.subr.mxu0 %v1373
  %4766 = vmatpush1.msra.mxu0 %v1372
  %4767 = vmatprep.subr.mxu0 %v1383
  %4768 = vmatpush1.msra.mxu0 %v1382
  %4769 = vmatprep.subr.mxu0 %v1393
  %4770 = vmatpush1.msra.mxu0 %v1392
  %4771 = vmatprep.subr.mxu0 %v1403
  %4772 = vmatpush1.msra.mxu0 %v1402
  %4773 = vmatprep.subr.mxu0 %v1413
  %4774 = vmatpush1.msra.mxu0 %v1412
  %4775 = vmatprep.subr.mxu0 %v1423
  %4776 = vmatpush1.msra.mxu0 %v1422
  %4777 = vmatprep.subr.mxu0 %v1433
  %4778 = vmatpush1.msra.mxu0 %v1432
  %4779 = vmatprep.subr.mxu0 %v1443
  %4780 = vmatpush1.msra.mxu0 %v1442
  %4781 = vmatprep.subr.mxu0 %v1453
  %4782 = vmatpush1.msra.mxu0 %v1452
  %4783 = vmatprep.subr.mxu0 %v1463
  %4784 = vmatpush1.msra.mxu0 %v1462
  %4785 = vmatprep.subr.mxu0 %v1473
  %4786 = vmatpush1.msra.mxu0 %v1472
  %4787 = vmatprep.subr.mxu0 %v1483
  %4788 = vmatpush1.msra.mxu0 %v1482
  %4789 = vmatprep.subr.mxu0 %v1493
  %4790 = vmatpush1.msra.mxu0 %v1492
  %4791 = vmatprep.subr.mxu0 %v1503
  %4792 = vmatpush1.msra.mxu0 %v1502
  %4793 = vmatprep.subr.mxu0 %v1513
  %4794 = vmatpush1.msra.mxu0 %v1512
  %4795 = vmatprep.subr.mxu0 %v1523
  %4796 = vmatpush1.msra.mxu0 %v1522
  %4797 = vmatprep.subr.mxu0 %v1533
  %4798 = vmatpush1.msra.mxu0 %v1532
  %4799 = vmatprep.subr.mxu0 %v1543
  %4800 = vmatpush1.msra.mxu0 %v1542
  %4801 = vmatprep.subr.mxu0 %v1553
  %4802 = vmatpush1.msra.mxu0 %v1552
  %4803 = vmatprep.mubr.f32.mxu0 %v889
  %4804 = vmatmul.mubr.f32.gmra.mrb[0].mxu0 %v888
  %v4805 = vpop.f32.mrb[0].mxu0
  %v4806 = vadd.f32 %v4735, %v4805
  %v4807 = vpop.f32.mrb[0].mxu0
  %v4808 = vadd.f32 %v4737, %v4807
  %4809 = vdwg.mxu0
  %4810 = vmatprep.subr.mxu0 %v1563
  %4811 = vmatpush1.msra.mxu0 %v1562
  %4812 = vmatprep.subr.mxu0 %v1573
  %4813 = vmatpush1.msra.mxu0 %v1572
  %4814 = vmatprep.subr.mxu0 %v1583
  %4815 = vmatpush1.msra.mxu0 %v1582
  %4816 = vmatprep.subr.mxu0 %v1593
  %4817 = vmatpush1.msra.mxu0 %v1592
  %4818 = vmatprep.subr.mxu0 %v1603
  %4819 = vmatpush1.msra.mxu0 %v1602
  %4820 = vmatprep.subr.mxu0 %v1613
  %4821 = vmatpush1.msra.mxu0 %v1612
  %4822 = vmatprep.subr.mxu0 %v1623
  %4823 = vmatpush1.msra.mxu0 %v1622
  %4824 = vmatprep.subr.mxu0 %v1633
  %4825 = vmatpush1.msra.mxu0 %v1632
  %4826 = vmatprep.subr.mxu0 %v1643
  %4827 = vmatpush1.msra.mxu0 %v1642
  %4828 = vmatprep.subr.mxu0 %v1653
  %4829 = vmatpush1.msra.mxu0 %v1652
  %4830 = vmatprep.subr.mxu0 %v1663
  %4831 = vmatpush1.msra.mxu0 %v1662
  %4832 = vmatprep.subr.mxu0 %v1673
  %4833 = vmatpush1.msra.mxu0 %v1672
  %4834 = vmatprep.subr.mxu0 %v1683
  %4835 = vmatpush1.msra.mxu0 %v1682
  %4836 = vmatprep.subr.mxu0 %v1693
  %4837 = vmatpush1.msra.mxu0 %v1692
  %4838 = vmatprep.subr.mxu0 %v1703
  %4839 = vmatpush1.msra.mxu0 %v1702
  %4840 = vmatprep.subr.mxu0 %v1713
  %4841 = vmatpush1.msra.mxu0 %v1712
  %4842 = vmatprep.subr.mxu0 %v1723
  %4843 = vmatpush1.msra.mxu0 %v1722
  %4844 = vmatprep.subr.mxu0 %v1733
  %4845 = vmatpush1.msra.mxu0 %v1732
  %4846 = vmatprep.subr.mxu0 %v1743
  %4847 = vmatpush1.msra.mxu0 %v1742
  %4848 = vmatprep.subr.mxu0 %v1753
  %4849 = vmatpush1.msra.mxu0 %v1752
  %4850 = vmatprep.subr.mxu0 %v1763
  %4851 = vmatpush1.msra.mxu0 %v1762
  %4852 = vmatprep.subr.mxu0 %v1773
  %4853 = vmatpush1.msra.mxu0 %v1772
  %4854 = vmatprep.subr.mxu0 %v1783
  %4855 = vmatpush1.msra.mxu0 %v1782
  %4856 = vmatprep.subr.mxu0 %v1793
  %4857 = vmatpush1.msra.mxu0 %v1792
  %4858 = vmatprep.subr.mxu0 %v1803
  %4859 = vmatpush1.msra.mxu0 %v1802
  %4860 = vmatprep.subr.mxu0 %v1813
  %4861 = vmatpush1.msra.mxu0 %v1812
  %4862 = vmatprep.subr.mxu0 %v1823
  %4863 = vmatpush1.msra.mxu0 %v1822
  %4864 = vmatprep.subr.mxu0 %v1833
  %4865 = vmatpush1.msra.mxu0 %v1832
  %4866 = vmatprep.subr.mxu0 %v1843
  %4867 = vmatpush1.msra.mxu0 %v1842
  %4868 = vmatprep.subr.mxu0 %v1853
  %4869 = vmatpush1.msra.mxu0 %v1852
  %4870 = vmatprep.subr.mxu0 %v1863
  %4871 = vmatpush1.msra.mxu0 %v1862
  %4872 = vmatprep.subr.mxu0 %v1873
  %4873 = vmatpush1.msra.mxu0 %v1872
  %4874 = vmatprep.mubr.f32.mxu0 %v891
  %4875 = vmatmul.mubr.f32.gmra.mrb[0].mxu0 %v890
  %v4876 = vpop.f32.mrb[0].mxu0
  %v4877 = vadd.f32 %v4806, %v4876
  %v4878 = vpop.f32.mrb[0].mxu0
  %v4879 = vadd.f32 %v4808, %v4878
  %4880 = vdwg.mxu0
  %4881 = vmatprep.subr.mxu0 %v1883
  %4882 = vmatpush1.msra.mxu0 %v1882
  %4883 = vmatprep.subr.mxu0 %v1893
  %4884 = vmatpush1.msra.mxu0 %v1892
  %4885 = vmatprep.subr.mxu0 %v1903
  %4886 = vmatpush1.msra.mxu0 %v1902
  %4887 = vmatprep.subr.mxu0 %v1913
  %4888 = vmatpush1.msra.mxu0 %v1912
  %4889 = vmatprep.subr.mxu0 %v1923
  %4890 = vmatpush1.msra.mxu0 %v1922
  %4891 = vmatprep.subr.mxu0 %v1933
  %4892 = vmatpush1.msra.mxu0 %v1932
  %4893 = vmatprep.subr.mxu0 %v1943
  %4894 = vmatpush1.msra.mxu0 %v1942
  %4895 = vmatprep.subr.mxu0 %v1953
  %4896 = vmatpush1.msra.mxu0 %v1952
  %4897 = vmatprep.subr.mxu0 %v1963
  %4898 = vmatpush1.msra.mxu0 %v1962
  %4899 = vmatprep.subr.mxu0 %v1973
  %4900 = vmatpush1.msra.mxu0 %v1972
  %4901 = vmatprep.subr.mxu0 %v1983
  %4902 = vmatpush1.msra.mxu0 %v1982
  %4903 = vmatprep.subr.mxu0 %v1993
  %4904 = vmatpush1.msra.mxu0 %v1992
  %4905 = vmatprep.subr.mxu0 %v2003
  %4906 = vmatpush1.msra.mxu0 %v2002
  %4907 = vmatprep.subr.mxu0 %v2013
  %4908 = vmatpush1.msra.mxu0 %v2012
  %4909 = vmatprep.subr.mxu0 %v2023
  %4910 = vmatpush1.msra.mxu0 %v2022
  %4911 = vmatprep.subr.mxu0 %v2033
  %4912 = vmatpush1.msra.mxu0 %v2032
  %4913 = vmatprep.subr.mxu0 %v2043
  %4914 = vmatpush1.msra.mxu0 %v2042
  %4915 = vmatprep.subr.mxu0 %v2053
  %4916 = vmatpush1.msra.mxu0 %v2052
  %4917 = vmatprep.subr.mxu0 %v2063
  %4918 = vmatpush1.msra.mxu0 %v2062
  %4919 = vmatprep.subr.mxu0 %v2073
  %4920 = vmatpush1.msra.mxu0 %v2072
  %4921 = vmatprep.subr.mxu0 %v2083
  %4922 = vmatpush1.msra.mxu0 %v2082
  %4923 = vmatprep.subr.mxu0 %v2093
  %4924 = vmatpush1.msra.mxu0 %v2092
  %4925 = vmatprep.subr.mxu0 %v2103
  %4926 = vmatpush1.msra.mxu0 %v2102
  %4927 = vmatprep.subr.mxu0 %v2113
  %4928 = vmatpush1.msra.mxu0 %v2112
  %4929 = vmatprep.subr.mxu0 %v2123
  %4930 = vmatpush1.msra.mxu0 %v2122
  %4931 = vmatprep.subr.mxu0 %v2133
  %4932 = vmatpush1.msra.mxu0 %v2132
  %4933 = vmatprep.subr.mxu0 %v2143
  %4934 = vmatpush1.msra.mxu0 %v2142
  %4935 = vmatprep.subr.mxu0 %v2153
  %4936 = vmatpush1.msra.mxu0 %v2152
  %4937 = vmatprep.subr.mxu0 %v2163
  %4938 = vmatpush1.msra.mxu0 %v2162
  %4939 = vmatprep.subr.mxu0 %v2173
  %4940 = vmatpush1.msra.mxu0 %v2172
  %4941 = vmatprep.subr.mxu0 %v2183
  %4942 = vmatpush1.msra.mxu0 %v2182
  %4943 = vmatprep.subr.mxu0 %v2193
  %4944 = vmatpush1.msra.mxu0 %v2192
  %4945 = vmatprep.mubr.f32.mxu0 %v893
  %4946 = vmatmul.mubr.f32.gmra.mrb[0].mxu0 %v892
  %v4947 = vpop.f32.mrb[0].mxu0
  %v4948 = vadd.f32 %v4877, %v4947
  %v4949 = vpop.f32.mrb[0].mxu0
  %v4950 = vadd.f32 %v4879, %v4949
  %4951 = vdwg.mxu0
  %4952 = vmatprep.subr.mxu0 %v2203
  %4953 = vmatpush1.msra.mxu0 %v2202
  %4954 = vmatprep.subr.mxu0 %v2213
  %4955 = vmatpush1.msra.mxu0 %v2212
  %4956 = vmatprep.subr.mxu0 %v2223
  %4957 = vmatpush1.msra.mxu0 %v2222
  %4958 = vmatprep.subr.mxu0 %v2233
  %4959 = vmatpush1.msra.mxu0 %v2232
  %4960 = vmatprep.subr.mxu0 %v2243
  %4961 = vmatpush1.msra.mxu0 %v2242
  %4962 = vmatprep.subr.mxu0 %v2253
  %4963 = vmatpush1.msra.mxu0 %v2252
  %4964 = vmatprep.subr.mxu0 %v2263
  %4965 = vmatpush1.msra.mxu0 %v2262
  %4966 = vmatprep.subr.mxu0 %v2273
  %4967 = vmatpush1.msra.mxu0 %v2272
  %4968 = vmatprep.subr.mxu0 %v2283
  %4969 = vmatpush1.msra.mxu0 %v2282
  %4970 = vmatprep.subr.mxu0 %v2293
  %4971 = vmatpush1.msra.mxu0 %v2292
  %4972 = vmatprep.subr.mxu0 %v2303
  %4973 = vmatpush1.msra.mxu0 %v2302
  %4974 = vmatprep.subr.mxu0 %v2313
  %4975 = vmatpush1.msra.mxu0 %v2312
  %4976 = vmatprep.subr.mxu0 %v2323
  %4977 = vmatpush1.msra.mxu0 %v2322
  %4978 = vmatprep.subr.mxu0 %v2333
  %4979 = vmatpush1.msra.mxu0 %v2332
  %4980 = vmatprep.subr.mxu0 %v2343
  %4981 = vmatpush1.msra.mxu0 %v2342
  %4982 = vmatprep.subr.mxu0 %v2353
  %4983 = vmatpush1.msra.mxu0 %v2352
  %4984 = vmatprep.subr.mxu0 %v2363
  %4985 = vmatpush1.msra.mxu0 %v2362
  %4986 = vmatprep.subr.mxu0 %v2373
  %4987 = vmatpush1.msra.mxu0 %v2372
  %4988 = vmatprep.subr.mxu0 %v2383
  %4989 = vmatpush1.msra.mxu0 %v2382
  %4990 = vmatprep.subr.mxu0 %v2393
  %4991 = vmatpush1.msra.mxu0 %v2392
  %4992 = vmatprep.subr.mxu0 %v2403
  %4993 = vmatpush1.msra.mxu0 %v2402
  %4994 = vmatprep.subr.mxu0 %v2413
  %4995 = vmatpush1.msra.mxu0 %v2412
  %4996 = vmatprep.subr.mxu0 %v2423
  %4997 = vmatpush1.msra.mxu0 %v2422
  %4998 = vmatprep.subr.mxu0 %v2433
  %4999 = vmatpush1.msra.mxu0 %v2432
  %5000 = vmatprep.subr.mxu0 %v2443
  %5001 = vmatpush1.msra.mxu0 %v2442
  %5002 = vmatprep.subr.mxu0 %v2453
  %5003 = vmatpush1.msra.mxu0 %v2452
  %5004 = vmatprep.subr.mxu0 %v2463
  %5005 = vmatpush1.msra.mxu0 %v2462
  %5006 = vmatprep.subr.mxu0 %v2473
  %5007 = vmatpush1.msra.mxu0 %v2472
  %5008 = vmatprep.subr.mxu0 %v2483
  %5009 = vmatpush1.msra.mxu0 %v2482
  %5010 = vmatprep.subr.mxu0 %v2493
  %5011 = vmatpush1.msra.mxu0 %v2492
  %5012 = vmatprep.subr.mxu0 %v2503
  %5013 = vmatpush1.msra.mxu0 %v2502
  %5014 = vmatprep.subr.mxu0 %v2513
  %5015 = vmatpush1.msra.mxu0 %v2512
  %5016 = vmatprep.mubr.f32.mxu0 %v895
  %5017 = vmatmul.mubr.f32.gmra.mrb[0].mxu0 %v894
  %v5018 = vpop.f32.mrb[0].mxu0
  %v5019 = vadd.f32 %v4948, %v5018
  %v5020 = vpop.f32.mrb[0].mxu0
  %v5021 = vadd.f32 %v4950, %v5020
  %5022 = vdwg.mxu0
  %5023 = vmatprep.subr.mxu0 %v2523
  %5024 = vmatpush1.msra.mxu0 %v2522
  %5025 = vmatprep.subr.mxu0 %v2533
  %5026 = vmatpush1.msra.mxu0 %v2532
  %5027 = vmatprep.subr.mxu0 %v2543
  %5028 = vmatpush1.msra.mxu0 %v2542
  %5029 = vmatprep.subr.mxu0 %v2553
  %5030 = vmatpush1.msra.mxu0 %v2552
  %5031 = vmatprep.subr.mxu0 %v2563
  %5032 = vmatpush1.msra.mxu0 %v2562
  %5033 = vmatprep.subr.mxu0 %v2573
  %5034 = vmatpush1.msra.mxu0 %v2572
  %5035 = vmatprep.subr.mxu0 %v2583
  %5036 = vmatpush1.msra.mxu0 %v2582
  %5037 = vmatprep.subr.mxu0 %v2593
  %5038 = vmatpush1.msra.mxu0 %v2592
  %5039 = vmatprep.subr.mxu0 %v2603
  %5040 = vmatpush1.msra.mxu0 %v2602
  %5041 = vmatprep.subr.mxu0 %v2613
  %5042 = vmatpush1.msra.mxu0 %v2612
  %5043 = vmatprep.subr.mxu0 %v2623
  %5044 = vmatpush1.msra.mxu0 %v2622
  %5045 = vmatprep.subr.mxu0 %v2633
  %5046 = vmatpush1.msra.mxu0 %v2632
  %5047 = vmatprep.subr.mxu0 %v2643
  %5048 = vmatpush1.msra.mxu0 %v2642
  %5049 = vmatprep.subr.mxu0 %v2653
  %5050 = vmatpush1.msra.mxu0 %v2652
  %5051 = vmatprep.subr.mxu0 %v2663
  %5052 = vmatpush1.msra.mxu0 %v2662
  %5053 = vmatprep.subr.mxu0 %v2673
  %5054 = vmatpush1.msra.mxu0 %v2672
  %5055 = vmatprep.subr.mxu0 %v2683
  %5056 = vmatpush1.msra.mxu0 %v2682
  %5057 = vmatprep.subr.mxu0 %v2693
  %5058 = vmatpush1.msra.mxu0 %v2692
  %5059 = vmatprep.subr.mxu0 %v2703
  %5060 = vmatpush1.msra.mxu0 %v2702
  %5061 = vmatprep.subr.mxu0 %v2713
  %5062 = vmatpush1.msra.mxu0 %v2712
  %5063 = vmatprep.subr.mxu0 %v2723
  %5064 = vmatpush1.msra.mxu0 %v2722
  %5065 = vmatprep.subr.mxu0 %v2733
  %5066 = vmatpush1.msra.mxu0 %v2732
  %5067 = vmatprep.subr.mxu0 %v2743
  %5068 = vmatpush1.msra.mxu0 %v2742
  %5069 = vmatprep.subr.mxu0 %v2753
  %5070 = vmatpush1.msra.mxu0 %v2752
  %5071 = vmatprep.subr.mxu0 %v2763
  %5072 = vmatpush1.msra.mxu0 %v2762
  %5073 = vmatprep.subr.mxu0 %v2773
  %5074 = vmatpush1.msra.mxu0 %v2772
  %5075 = vmatprep.subr.mxu0 %v2783
  %5076 = vmatpush1.msra.mxu0 %v2782
  %5077 = vmatprep.subr.mxu0 %v2793
  %5078 = vmatpush1.msra.mxu0 %v2792
  %5079 = vmatprep.subr.mxu0 %v2803
  %5080 = vmatpush1.msra.mxu0 %v2802
  %5081 = vmatprep.subr.mxu0 %v2813
  %5082 = vmatpush1.msra.mxu0 %v2812
  %5083 = vmatprep.subr.mxu0 %v2823
  %5084 = vmatpush1.msra.mxu0 %v2822
  %5085 = vmatprep.subr.mxu0 %v2833
  %5086 = vmatpush1.msra.mxu0 %v2832
  %5087 = vmatprep.mubr.f32.mxu0 %v897
  %5088 = vmatmul.mubr.f32.gmra.mrb[0].mxu0 %v896
  %v5089 = vpop.f32.mrb[0].mxu0
  %v5090 = vadd.f32 %v5019, %v5089
  %v5091 = vpop.f32.mrb[0].mxu0
  %v5092 = vadd.f32 %v5021, %v5091
  %5093 = vdwg.mxu0
  %5094 = vmatprep.subr.mxu0 %v2843
  %5095 = vmatpush1.msra.mxu0 %v2842
  %5096 = vmatprep.subr.mxu0 %v2853
  %5097 = vmatpush1.msra.mxu0 %v2852
  %5098 = vmatprep.subr.mxu0 %v2863
  %5099 = vmatpush1.msra.mxu0 %v2862
  %5100 = vmatprep.subr.mxu0 %v2873
  %5101 = vmatpush1.msra.mxu0 %v2872
  %5102 = vmatprep.subr.mxu0 %v2883
  %5103 = vmatpush1.msra.mxu0 %v2882
  %5104 = vmatprep.subr.mxu0 %v2893
  %5105 = vmatpush1.msra.mxu0 %v2892
  %5106 = vmatprep.subr.mxu0 %v2903
  %5107 = vmatpush1.msra.mxu0 %v2902
  %5108 = vmatprep.subr.mxu0 %v2913
  %5109 = vmatpush1.msra.mxu0 %v2912
  %5110 = vmatprep.subr.mxu0 %v2923
  %5111 = vmatpush1.msra.mxu0 %v2922
  %5112 = vmatprep.subr.mxu0 %v2933
  %5113 = vmatpush1.msra.mxu0 %v2932
  %5114 = vmatprep.subr.mxu0 %v2943
  %5115 = vmatpush1.msra.mxu0 %v2942
  %5116 = vmatprep.subr.mxu0 %v2953
  %5117 = vmatpush1.msra.mxu0 %v2952
  %5118 = vmatprep.subr.mxu0 %v2963
  %5119 = vmatpush1.msra.mxu0 %v2962
  %5120 = vmatprep.subr.mxu0 %v2973
  %5121 = vmatpush1.msra.mxu0 %v2972
  %5122 = vmatprep.subr.mxu0 %v2983
  %5123 = vmatpush1.msra.mxu0 %v2982
  %5124 = vmatprep.subr.mxu0 %v2993
  %5125 = vmatpush1.msra.mxu0 %v2992
  %5126 = vmatprep.subr.mxu0 %v3003
  %5127 = vmatpush1.msra.mxu0 %v3002
  %5128 = vmatprep.subr.mxu0 %v3013
  %5129 = vmatpush1.msra.mxu0 %v3012
  %5130 = vmatprep.subr.mxu0 %v3023
  %5131 = vmatpush1.msra.mxu0 %v3022
  %5132 = vmatprep.subr.mxu0 %v3033
  %5133 = vmatpush1.msra.mxu0 %v3032
  %5134 = vmatprep.subr.mxu0 %v3043
  %5135 = vmatpush1.msra.mxu0 %v3042
  %5136 = vmatprep.subr.mxu0 %v3053
  %5137 = vmatpush1.msra.mxu0 %v3052
  %5138 = vmatprep.subr.mxu0 %v3063
  %5139 = vmatpush1.msra.mxu0 %v3062
  %5140 = vmatprep.subr.mxu0 %v3073
  %5141 = vmatpush1.msra.mxu0 %v3072
  %5142 = vmatprep.subr.mxu0 %v3083
  %5143 = vmatpush1.msra.mxu0 %v3082
  %5144 = vmatprep.subr.mxu0 %v3093
  %5145 = vmatpush1.msra.mxu0 %v3092
  %5146 = vmatprep.subr.mxu0 %v3103
  %5147 = vmatpush1.msra.mxu0 %v3102
  %5148 = vmatprep.subr.mxu0 %v3113
  %5149 = vmatpush1.msra.mxu0 %v3112
  %5150 = vmatprep.subr.mxu0 %v3123
  %5151 = vmatpush1.msra.mxu0 %v3122
  %5152 = vmatprep.subr.mxu0 %v3133
  %5153 = vmatpush1.msra.mxu0 %v3132
  %5154 = vmatprep.subr.mxu0 %v3143
  %5155 = vmatpush1.msra.mxu0 %v3142
  %5156 = vmatprep.subr.mxu0 %v3153
  %5157 = vmatpush1.msra.mxu0 %v3152
  %5158 = vmatprep.mubr.f32.mxu0 %v899
  %5159 = vmatmul.mubr.f32.gmra.mrb[0].mxu0 %v898
  %v5160 = vpop.f32.mrb[0].mxu0
  %v5161 = vadd.f32 %v5090, %v5160
  %v5162 = vpop.f32.mrb[0].mxu0
  %v5163 = vadd.f32 %v5092, %v5162
  %5164 = vdwg.mxu0
  %5165 = vmatprep.subr.mxu0 %v3163
  %5166 = vmatpush1.msra.mxu0 %v3162
  %5167 = vmatprep.subr.mxu0 %v3173
  %5168 = vmatpush1.msra.mxu0 %v3172
  %5169 = vmatprep.subr.mxu0 %v3183
  %5170 = vmatpush1.msra.mxu0 %v3182
  %5171 = vmatprep.subr.mxu0 %v3193
  %5172 = vmatpush1.msra.mxu0 %v3192
  %5173 = vmatprep.subr.mxu0 %v3203
  %5174 = vmatpush1.msra.mxu0 %v3202
  %5175 = vmatprep.subr.mxu0 %v3213
  %5176 = vmatpush1.msra.mxu0 %v3212
  %5177 = vmatprep.subr.mxu0 %v3223
  %5178 = vmatpush1.msra.mxu0 %v3222
  %5179 = vmatprep.subr.mxu0 %v3233
  %5180 = vmatpush1.msra.mxu0 %v3232
  %5181 = vmatprep.subr.mxu0 %v3243
  %5182 = vmatpush1.msra.mxu0 %v3242
  %5183 = vmatprep.subr.mxu0 %v3253
  %5184 = vmatpush1.msra.mxu0 %v3252
  %5185 = vmatprep.subr.mxu0 %v3263
  %5186 = vmatpush1.msra.mxu0 %v3262
  %5187 = vmatprep.subr.mxu0 %v3273
  %5188 = vmatpush1.msra.mxu0 %v3272
  %5189 = vmatprep.subr.mxu0 %v3283
  %5190 = vmatpush1.msra.mxu0 %v3282
  %5191 = vmatprep.subr.mxu0 %v3293
  %5192 = vmatpush1.msra.mxu0 %v3292
  %5193 = vmatprep.subr.mxu0 %v3303
  %5194 = vmatpush1.msra.mxu0 %v3302
  %5195 = vmatprep.subr.mxu0 %v3313
  %5196 = vmatpush1.msra.mxu0 %v3312
  %5197 = vmatprep.subr.mxu0 %v3323
  %5198 = vmatpush1.msra.mxu0 %v3322
  %5199 = vmatprep.subr.mxu0 %v3333
  %5200 = vmatpush1.msra.mxu0 %v3332
  %5201 = vmatprep.subr.mxu0 %v3343
  %5202 = vmatpush1.msra.mxu0 %v3342
  %5203 = vmatprep.subr.mxu0 %v3353
  %5204 = vmatpush1.msra.mxu0 %v3352
  %5205 = vmatprep.subr.mxu0 %v3363
  %5206 = vmatpush1.msra.mxu0 %v3362
  %5207 = vmatprep.subr.mxu0 %v3373
  %5208 = vmatpush1.msra.mxu0 %v3372
  %5209 = vmatprep.subr.mxu0 %v3383
  %5210 = vmatpush1.msra.mxu0 %v3382
  %5211 = vmatprep.subr.mxu0 %v3393
  %5212 = vmatpush1.msra.mxu0 %v3392
  %5213 = vmatprep.subr.mxu0 %v3403
  %5214 = vmatpush1.msra.mxu0 %v3402
  %5215 = vmatprep.subr.mxu0 %v3413
  %5216 = vmatpush1.msra.mxu0 %v3412
  %5217 = vmatprep.subr.mxu0 %v3423
  %5218 = vmatpush1.msra.mxu0 %v3422
  %5219 = vmatprep.subr.mxu0 %v3433
  %5220 = vmatpush1.msra.mxu0 %v3432
  %5221 = vmatprep.subr.mxu0 %v3443
  %5222 = vmatpush1.msra.mxu0 %v3442
  %5223 = vmatprep.subr.mxu0 %v3453
  %5224 = vmatpush1.msra.mxu0 %v3452
  %5225 = vmatprep.subr.mxu0 %v3463
  %5226 = vmatpush1.msra.mxu0 %v3462
  %5227 = vmatprep.subr.mxu0 %v3473
  %5228 = vmatpush1.msra.mxu0 %v3472
  %5229 = vmatprep.mubr.f32.mxu0 %v901
  %5230 = vmatmul.mubr.f32.gmra.mrb[0].mxu0 %v900
  %v5231 = vpop.f32.mrb[0].mxu0
  %v5232 = vadd.f32 %v5161, %v5231
  %v5233 = vpop.f32.mrb[0].mxu0
  %v5234 = vadd.f32 %v5163, %v5233
  %5235 = vdwg.mxu0
  %5236 = vmatprep.subr.mxu0 %v925
  %5237 = vmatpush1.msra.mxu0 %v924
  %5238 = vmatprep.subr.mxu0 %v935
  %5239 = vmatpush1.msra.mxu0 %v934
  %5240 = vmatprep.subr.mxu0 %v945
  %5241 = vmatpush1.msra.mxu0 %v944
  %5242 = vmatprep.subr.mxu0 %v955
  %5243 = vmatpush1.msra.mxu0 %v954
  %5244 = vmatprep.subr.mxu0 %v965
  %5245 = vmatpush1.msra.mxu0 %v964
  %5246 = vmatprep.subr.mxu0 %v975
  %5247 = vmatpush1.msra.mxu0 %v974
  %5248 = vmatprep.subr.mxu0 %v985
  %5249 = vmatpush1.msra.mxu0 %v984
  %5250 = vmatprep.subr.mxu0 %v995
  %5251 = vmatpush1.msra.mxu0 %v994
  %5252 = vmatprep.subr.mxu0 %v1005
  %5253 = vmatpush1.msra.mxu0 %v1004
  %5254 = vmatprep.subr.mxu0 %v1015
  %5255 = vmatpush1.msra.mxu0 %v1014
  %5256 = vmatprep.subr.mxu0 %v1025
  %5257 = vmatpush1.msra.mxu0 %v1024
  %5258 = vmatprep.subr.mxu0 %v1035
  %5259 = vmatpush1.msra.mxu0 %v1034
  %5260 = vmatprep.subr.mxu0 %v1045
  %5261 = vmatpush1.msra.mxu0 %v1044
  %5262 = vmatprep.subr.mxu0 %v1055
  %5263 = vmatpush1.msra.mxu0 %v1054
  %5264 = vmatprep.subr.mxu0 %v1065
  %5265 = vmatpush1.msra.mxu0 %v1064
  %5266 = vmatprep.subr.mxu0 %v1075
  %5267 = vmatpush1.msra.mxu0 %v1074
  %5268 = vmatprep.subr.mxu0 %v1085
  %5269 = vmatpush1.msra.mxu0 %v1084
  %5270 = vmatprep.subr.mxu0 %v1095
  %5271 = vmatpush1.msra.mxu0 %v1094
  %5272 = vmatprep.subr.mxu0 %v1105
  %5273 = vmatpush1.msra.mxu0 %v1104
  %5274 = vmatprep.subr.mxu0 %v1115
  %5275 = vmatpush1.msra.mxu0 %v1114
  %5276 = vmatprep.subr.mxu0 %v1125
  %5277 = vmatpush1.msra.mxu0 %v1124
  %5278 = vmatprep.subr.mxu0 %v1135
  %5279 = vmatpush1.msra.mxu0 %v1134
  %5280 = vmatprep.subr.mxu0 %v1145
  %5281 = vmatpush1.msra.mxu0 %v1144
  %5282 = vmatprep.subr.mxu0 %v1155
  %5283 = vmatpush1.msra.mxu0 %v1154
  %5284 = vmatprep.subr.mxu0 %v1165
  %5285 = vmatpush1.msra.mxu0 %v1164
  %5286 = vmatprep.subr.mxu0 %v1175
  %5287 = vmatpush1.msra.mxu0 %v1174
  %5288 = vmatprep.subr.mxu0 %v1185
  %5289 = vmatpush1.msra.mxu0 %v1184
  %5290 = vmatprep.subr.mxu0 %v1195
  %5291 = vmatpush1.msra.mxu0 %v1194
  %5292 = vmatprep.subr.mxu0 %v1205
  %5293 = vmatpush1.msra.mxu0 %v1204
  %5294 = vmatprep.subr.mxu0 %v1215
  %5295 = vmatpush1.msra.mxu0 %v1214
  %5296 = vmatprep.subr.mxu0 %v1225
  %5297 = vmatpush1.msra.mxu0 %v1224
  %5298 = vmatprep.subr.mxu0 %v1235
  %5299 = vmatpush1.msra.mxu0 %v1234
  %5300 = vmatprep.mubr.f32.mxu0 %v887
  %5301 = vmatmul.mubr.f32.gmra.mrb[0].mxu0 %v886
  %v5302 = vpop.f32.mrb[0].mxu0
  %v5303 = vadd.f32 %v3509, %v5302
  %v5304 = vpop.f32.mrb[0].mxu0
  %v5305 = vadd.f32 %v3513, %v5304
  %5306 = vdwg.mxu0
  %5307 = vmatprep.subr.mxu0 %v1245
  %5308 = vmatpush1.msra.mxu0 %v1244
  %5309 = vmatprep.subr.mxu0 %v1255
  %5310 = vmatpush1.msra.mxu0 %v1254
  %5311 = vmatprep.subr.mxu0 %v1265
  %5312 = vmatpush1.msra.mxu0 %v1264
  %5313 = vmatprep.subr.mxu0 %v1275
  %5314 = vmatpush1.msra.mxu0 %v1274
  %5315 = vmatprep.subr.mxu0 %v1285
  %5316 = vmatpush1.msra.mxu0 %v1284
  %5317 = vmatprep.subr.mxu0 %v1295
  %5318 = vmatpush1.msra.mxu0 %v1294
  %5319 = vmatprep.subr.mxu0 %v1305
  %5320 = vmatpush1.msra.mxu0 %v1304
  %5321 = vmatprep.subr.mxu0 %v1315
  %5322 = vmatpush1.msra.mxu0 %v1314
  %5323 = vmatprep.subr.mxu0 %v1325
  %5324 = vmatpush1.msra.mxu0 %v1324
  %5325 = vmatprep.subr.mxu0 %v1335
  %5326 = vmatpush1.msra.mxu0 %v1334
  %5327 = vmatprep.subr.mxu0 %v1345
  %5328 = vmatpush1.msra.mxu0 %v1344
  %5329 = vmatprep.subr.mxu0 %v1355
  %5330 = vmatpush1.msra.mxu0 %v1354
  %5331 = vmatprep.subr.mxu0 %v1365
  %5332 = vmatpush1.msra.mxu0 %v1364
  %5333 = vmatprep.subr.mxu0 %v1375
  %5334 = vmatpush1.msra.mxu0 %v1374
  %5335 = vmatprep.subr.mxu0 %v1385
  %5336 = vmatpush1.msra.mxu0 %v1384
  %5337 = vmatprep.subr.mxu0 %v1395
  %5338 = vmatpush1.msra.mxu0 %v1394
  %5339 = vmatprep.subr.mxu0 %v1405
  %5340 = vmatpush1.msra.mxu0 %v1404
  %5341 = vmatprep.subr.mxu0 %v1415
  %5342 = vmatpush1.msra.mxu0 %v1414
  %5343 = vmatprep.subr.mxu0 %v1425
  %5344 = vmatpush1.msra.mxu0 %v1424
  %5345 = vmatprep.subr.mxu0 %v1435
  %5346 = vmatpush1.msra.mxu0 %v1434
  %5347 = vmatprep.subr.mxu0 %v1445
  %5348 = vmatpush1.msra.mxu0 %v1444
  %5349 = vmatprep.subr.mxu0 %v1455
  %5350 = vmatpush1.msra.mxu0 %v1454
  %5351 = vmatprep.subr.mxu0 %v1465
  %5352 = vmatpush1.msra.mxu0 %v1464
  %5353 = vmatprep.subr.mxu0 %v1475
  %5354 = vmatpush1.msra.mxu0 %v1474
  %5355 = vmatprep.subr.mxu0 %v1485
  %5356 = vmatpush1.msra.mxu0 %v1484
  %5357 = vmatprep.subr.mxu0 %v1495
  %5358 = vmatpush1.msra.mxu0 %v1494
  %5359 = vmatprep.subr.mxu0 %v1505
  %5360 = vmatpush1.msra.mxu0 %v1504
  %5361 = vmatprep.subr.mxu0 %v1515
  %5362 = vmatpush1.msra.mxu0 %v1514
  %5363 = vmatprep.subr.mxu0 %v1525
  %5364 = vmatpush1.msra.mxu0 %v1524
  %5365 = vmatprep.subr.mxu0 %v1535
  %5366 = vmatpush1.msra.mxu0 %v1534
  %5367 = vmatprep.subr.mxu0 %v1545
  %5368 = vmatpush1.msra.mxu0 %v1544
  %5369 = vmatprep.subr.mxu0 %v1555
  %5370 = vmatpush1.msra.mxu0 %v1554
  %5371 = vmatprep.mubr.f32.mxu0 %v889
  %5372 = vmatmul.mubr.f32.gmra.mrb[0].mxu0 %v888
  %v5373 = vpop.f32.mrb[0].mxu0
  %v5374 = vadd.f32 %v5303, %v5373
  %v5375 = vpop.f32.mrb[0].mxu0
  %v5376 = vadd.f32 %v5305, %v5375
  %5377 = vdwg.mxu0
  %5378 = vmatprep.subr.mxu0 %v1565
  %5379 = vmatpush1.msra.mxu0 %v1564
  %5380 = vmatprep.subr.mxu0 %v1575
  %5381 = vmatpush1.msra.mxu0 %v1574
  %5382 = vmatprep.subr.mxu0 %v1585
  %5383 = vmatpush1.msra.mxu0 %v1584
  %5384 = vmatprep.subr.mxu0 %v1595
  %5385 = vmatpush1.msra.mxu0 %v1594
  %5386 = vmatprep.subr.mxu0 %v1605
  %5387 = vmatpush1.msra.mxu0 %v1604
  %5388 = vmatprep.subr.mxu0 %v1615
  %5389 = vmatpush1.msra.mxu0 %v1614
  %5390 = vmatprep.subr.mxu0 %v1625
  %5391 = vmatpush1.msra.mxu0 %v1624
  %5392 = vmatprep.subr.mxu0 %v1635
  %5393 = vmatpush1.msra.mxu0 %v1634
  %5394 = vmatprep.subr.mxu0 %v1645
  %5395 = vmatpush1.msra.mxu0 %v1644
  %5396 = vmatprep.subr.mxu0 %v1655
  %5397 = vmatpush1.msra.mxu0 %v1654
  %5398 = vmatprep.subr.mxu0 %v1665
  %5399 = vmatpush1.msra.mxu0 %v1664
  %5400 = vmatprep.subr.mxu0 %v1675
  %5401 = vmatpush1.msra.mxu0 %v1674
  %5402 = vmatprep.subr.mxu0 %v1685
  %5403 = vmatpush1.msra.mxu0 %v1684
  %5404 = vmatprep.subr.mxu0 %v1695
  %5405 = vmatpush1.msra.mxu0 %v1694
  %5406 = vmatprep.subr.mxu0 %v1705
  %5407 = vmatpush1.msra.mxu0 %v1704
  %5408 = vmatprep.subr.mxu0 %v1715
  %5409 = vmatpush1.msra.mxu0 %v1714
  %5410 = vmatprep.subr.mxu0 %v1725
  %5411 = vmatpush1.msra.mxu0 %v1724
  %5412 = vmatprep.subr.mxu0 %v1735
  %5413 = vmatpush1.msra.mxu0 %v1734
  %5414 = vmatprep.subr.mxu0 %v1745
  %5415 = vmatpush1.msra.mxu0 %v1744
  %5416 = vmatprep.subr.mxu0 %v1755
  %5417 = vmatpush1.msra.mxu0 %v1754
  %5418 = vmatprep.subr.mxu0 %v1765
  %5419 = vmatpush1.msra.mxu0 %v1764
  %5420 = vmatprep.subr.mxu0 %v1775
  %5421 = vmatpush1.msra.mxu0 %v1774
  %5422 = vmatprep.subr.mxu0 %v1785
  %5423 = vmatpush1.msra.mxu0 %v1784
  %5424 = vmatprep.subr.mxu0 %v1795
  %5425 = vmatpush1.msra.mxu0 %v1794
  %5426 = vmatprep.subr.mxu0 %v1805
  %5427 = vmatpush1.msra.mxu0 %v1804
  %5428 = vmatprep.subr.mxu0 %v1815
  %5429 = vmatpush1.msra.mxu0 %v1814
  %5430 = vmatprep.subr.mxu0 %v1825
  %5431 = vmatpush1.msra.mxu0 %v1824
  %5432 = vmatprep.subr.mxu0 %v1835
  %5433 = vmatpush1.msra.mxu0 %v1834
  %5434 = vmatprep.subr.mxu0 %v1845
  %5435 = vmatpush1.msra.mxu0 %v1844
  %5436 = vmatprep.subr.mxu0 %v1855
  %5437 = vmatpush1.msra.mxu0 %v1854
  %5438 = vmatprep.subr.mxu0 %v1865
  %5439 = vmatpush1.msra.mxu0 %v1864
  %5440 = vmatprep.subr.mxu0 %v1875
  %5441 = vmatpush1.msra.mxu0 %v1874
  %5442 = vmatprep.mubr.f32.mxu0 %v891
  %5443 = vmatmul.mubr.f32.gmra.mrb[0].mxu0 %v890
  %v5444 = vpop.f32.mrb[0].mxu0
  %v5445 = vadd.f32 %v5374, %v5444
  %v5446 = vpop.f32.mrb[0].mxu0
  %v5447 = vadd.f32 %v5376, %v5446
  %5448 = vdwg.mxu0
  %5449 = vmatprep.subr.mxu0 %v1885
  %5450 = vmatpush1.msra.mxu0 %v1884
  %5451 = vmatprep.subr.mxu0 %v1895
  %5452 = vmatpush1.msra.mxu0 %v1894
  %5453 = vmatprep.subr.mxu0 %v1905
  %5454 = vmatpush1.msra.mxu0 %v1904
  %5455 = vmatprep.subr.mxu0 %v1915
  %5456 = vmatpush1.msra.mxu0 %v1914
  %5457 = vmatprep.subr.mxu0 %v1925
  %5458 = vmatpush1.msra.mxu0 %v1924
  %5459 = vmatprep.subr.mxu0 %v1935
  %5460 = vmatpush1.msra.mxu0 %v1934
  %5461 = vmatprep.subr.mxu0 %v1945
  %5462 = vmatpush1.msra.mxu0 %v1944
  %5463 = vmatprep.subr.mxu0 %v1955
  %5464 = vmatpush1.msra.mxu0 %v1954
  %5465 = vmatprep.subr.mxu0 %v1965
  %5466 = vmatpush1.msra.mxu0 %v1964
  %5467 = vmatprep.subr.mxu0 %v1975
  %5468 = vmatpush1.msra.mxu0 %v1974
  %5469 = vmatprep.subr.mxu0 %v1985
  %5470 = vmatpush1.msra.mxu0 %v1984
  %5471 = vmatprep.subr.mxu0 %v1995
  %5472 = vmatpush1.msra.mxu0 %v1994
  %5473 = vmatprep.subr.mxu0 %v2005
  %5474 = vmatpush1.msra.mxu0 %v2004
  %5475 = vmatprep.subr.mxu0 %v2015
  %5476 = vmatpush1.msra.mxu0 %v2014
  %5477 = vmatprep.subr.mxu0 %v2025
  %5478 = vmatpush1.msra.mxu0 %v2024
  %5479 = vmatprep.subr.mxu0 %v2035
  %5480 = vmatpush1.msra.mxu0 %v2034
  %5481 = vmatprep.subr.mxu0 %v2045
  %5482 = vmatpush1.msra.mxu0 %v2044
  %5483 = vmatprep.subr.mxu0 %v2055
  %5484 = vmatpush1.msra.mxu0 %v2054
  %5485 = vmatprep.subr.mxu0 %v2065
  %5486 = vmatpush1.msra.mxu0 %v2064
  %5487 = vmatprep.subr.mxu0 %v2075
  %5488 = vmatpush1.msra.mxu0 %v2074
  %5489 = vmatprep.subr.mxu0 %v2085
  %5490 = vmatpush1.msra.mxu0 %v2084
  %5491 = vmatprep.subr.mxu0 %v2095
  %5492 = vmatpush1.msra.mxu0 %v2094
  %5493 = vmatprep.subr.mxu0 %v2105
  %5494 = vmatpush1.msra.mxu0 %v2104
  %5495 = vmatprep.subr.mxu0 %v2115
  %5496 = vmatpush1.msra.mxu0 %v2114
  %5497 = vmatprep.subr.mxu0 %v2125
  %5498 = vmatpush1.msra.mxu0 %v2124
  %5499 = vmatprep.subr.mxu0 %v2135
  %5500 = vmatpush1.msra.mxu0 %v2134
  %5501 = vmatprep.subr.mxu0 %v2145
  %5502 = vmatpush1.msra.mxu0 %v2144
  %5503 = vmatprep.subr.mxu0 %v2155
  %5504 = vmatpush1.msra.mxu0 %v2154
  %5505 = vmatprep.subr.mxu0 %v2165
  %5506 = vmatpush1.msra.mxu0 %v2164
  %5507 = vmatprep.subr.mxu0 %v2175
  %5508 = vmatpush1.msra.mxu0 %v2174
  %5509 = vmatprep.subr.mxu0 %v2185
  %5510 = vmatpush1.msra.mxu0 %v2184
  %5511 = vmatprep.subr.mxu0 %v2195
  %5512 = vmatpush1.msra.mxu0 %v2194
  %5513 = vmatprep.mubr.f32.mxu0 %v893
  %5514 = vmatmul.mubr.f32.gmra.mrb[0].mxu0 %v892
  %v5515 = vpop.f32.mrb[0].mxu0
  %v5516 = vadd.f32 %v5445, %v5515
  %v5517 = vpop.f32.mrb[0].mxu0
  %v5518 = vadd.f32 %v5447, %v5517
  %5519 = vdwg.mxu0
  %5520 = vmatprep.subr.mxu0 %v2205
  %5521 = vmatpush1.msra.mxu0 %v2204
  %5522 = vmatprep.subr.mxu0 %v2215
  %5523 = vmatpush1.msra.mxu0 %v2214
  %5524 = vmatprep.subr.mxu0 %v2225
  %5525 = vmatpush1.msra.mxu0 %v2224
  %5526 = vmatprep.subr.mxu0 %v2235
  %5527 = vmatpush1.msra.mxu0 %v2234
  %5528 = vmatprep.subr.mxu0 %v2245
  %5529 = vmatpush1.msra.mxu0 %v2244
  %5530 = vmatprep.subr.mxu0 %v2255
  %5531 = vmatpush1.msra.mxu0 %v2254
  %5532 = vmatprep.subr.mxu0 %v2265
  %5533 = vmatpush1.msra.mxu0 %v2264
  %5534 = vmatprep.subr.mxu0 %v2275
  %5535 = vmatpush1.msra.mxu0 %v2274
  %5536 = vmatprep.subr.mxu0 %v2285
  %5537 = vmatpush1.msra.mxu0 %v2284
  %5538 = vmatprep.subr.mxu0 %v2295
  %5539 = vmatpush1.msra.mxu0 %v2294
  %5540 = vmatprep.subr.mxu0 %v2305
  %5541 = vmatpush1.msra.mxu0 %v2304
  %5542 = vmatprep.subr.mxu0 %v2315
  %5543 = vmatpush1.msra.mxu0 %v2314
  %5544 = vmatprep.subr.mxu0 %v2325
  %5545 = vmatpush1.msra.mxu0 %v2324
  %5546 = vmatprep.subr.mxu0 %v2335
  %5547 = vmatpush1.msra.mxu0 %v2334
  %5548 = vmatprep.subr.mxu0 %v2345
  %5549 = vmatpush1.msra.mxu0 %v2344
  %5550 = vmatprep.subr.mxu0 %v2355
  %5551 = vmatpush1.msra.mxu0 %v2354
  %5552 = vmatprep.subr.mxu0 %v2365
  %5553 = vmatpush1.msra.mxu0 %v2364
  %5554 = vmatprep.subr.mxu0 %v2375
  %5555 = vmatpush1.msra.mxu0 %v2374
  %5556 = vmatprep.subr.mxu0 %v2385
  %5557 = vmatpush1.msra.mxu0 %v2384
  %5558 = vmatprep.subr.mxu0 %v2395
  %5559 = vmatpush1.msra.mxu0 %v2394
  %5560 = vmatprep.subr.mxu0 %v2405
  %5561 = vmatpush1.msra.mxu0 %v2404
  %5562 = vmatprep.subr.mxu0 %v2415
  %5563 = vmatpush1.msra.mxu0 %v2414
  %5564 = vmatprep.subr.mxu0 %v2425
  %5565 = vmatpush1.msra.mxu0 %v2424
  %5566 = vmatprep.subr.mxu0 %v2435
  %5567 = vmatpush1.msra.mxu0 %v2434
  %5568 = vmatprep.subr.mxu0 %v2445
  %5569 = vmatpush1.msra.mxu0 %v2444
  %5570 = vmatprep.subr.mxu0 %v2455
  %5571 = vmatpush1.msra.mxu0 %v2454
  %5572 = vmatprep.subr.mxu0 %v2465
  %5573 = vmatpush1.msra.mxu0 %v2464
  %5574 = vmatprep.subr.mxu0 %v2475
  %5575 = vmatpush1.msra.mxu0 %v2474
  %5576 = vmatprep.subr.mxu0 %v2485
  %5577 = vmatpush1.msra.mxu0 %v2484
  %5578 = vmatprep.subr.mxu0 %v2495
  %5579 = vmatpush1.msra.mxu0 %v2494
  %5580 = vmatprep.subr.mxu0 %v2505
  %5581 = vmatpush1.msra.mxu0 %v2504
  %5582 = vmatprep.subr.mxu0 %v2515
  %5583 = vmatpush1.msra.mxu0 %v2514
  %5584 = vmatprep.mubr.f32.mxu0 %v895
  %5585 = vmatmul.mubr.f32.gmra.mrb[0].mxu0 %v894
  %v5586 = vpop.f32.mrb[0].mxu0
  %v5587 = vadd.f32 %v5516, %v5586
  %v5588 = vpop.f32.mrb[0].mxu0
  %v5589 = vadd.f32 %v5518, %v5588
  %5590 = vdwg.mxu0
  %5591 = vmatprep.subr.mxu0 %v2525
  %5592 = vmatpush1.msra.mxu0 %v2524
  %5593 = vmatprep.subr.mxu0 %v2535
  %5594 = vmatpush1.msra.mxu0 %v2534
  %5595 = vmatprep.subr.mxu0 %v2545
  %5596 = vmatpush1.msra.mxu0 %v2544
  %5597 = vmatprep.subr.mxu0 %v2555
  %5598 = vmatpush1.msra.mxu0 %v2554
  %5599 = vmatprep.subr.mxu0 %v2565
  %5600 = vmatpush1.msra.mxu0 %v2564
  %5601 = vmatprep.subr.mxu0 %v2575
  %5602 = vmatpush1.msra.mxu0 %v2574
  %5603 = vmatprep.subr.mxu0 %v2585
  %5604 = vmatpush1.msra.mxu0 %v2584
  %5605 = vmatprep.subr.mxu0 %v2595
  %5606 = vmatpush1.msra.mxu0 %v2594
  %5607 = vmatprep.subr.mxu0 %v2605
  %5608 = vmatpush1.msra.mxu0 %v2604
  %5609 = vmatprep.subr.mxu0 %v2615
  %5610 = vmatpush1.msra.mxu0 %v2614
  %5611 = vmatprep.subr.mxu0 %v2625
  %5612 = vmatpush1.msra.mxu0 %v2624
  %5613 = vmatprep.subr.mxu0 %v2635
  %5614 = vmatpush1.msra.mxu0 %v2634
  %5615 = vmatprep.subr.mxu0 %v2645
  %5616 = vmatpush1.msra.mxu0 %v2644
  %5617 = vmatprep.subr.mxu0 %v2655
  %5618 = vmatpush1.msra.mxu0 %v2654
  %5619 = vmatprep.subr.mxu0 %v2665
  %5620 = vmatpush1.msra.mxu0 %v2664
  %5621 = vmatprep.subr.mxu0 %v2675
  %5622 = vmatpush1.msra.mxu0 %v2674
  %5623 = vmatprep.subr.mxu0 %v2685
  %5624 = vmatpush1.msra.mxu0 %v2684
  %5625 = vmatprep.subr.mxu0 %v2695
  %5626 = vmatpush1.msra.mxu0 %v2694
  %5627 = vmatprep.subr.mxu0 %v2705
  %5628 = vmatpush1.msra.mxu0 %v2704
  %5629 = vmatprep.subr.mxu0 %v2715
  %5630 = vmatpush1.msra.mxu0 %v2714
  %5631 = vmatprep.subr.mxu0 %v2725
  %5632 = vmatpush1.msra.mxu0 %v2724
  %5633 = vmatprep.subr.mxu0 %v2735
  %5634 = vmatpush1.msra.mxu0 %v2734
  %5635 = vmatprep.subr.mxu0 %v2745
  %5636 = vmatpush1.msra.mxu0 %v2744
  %5637 = vmatprep.subr.mxu0 %v2755
  %5638 = vmatpush1.msra.mxu0 %v2754
  %5639 = vmatprep.subr.mxu0 %v2765
  %5640 = vmatpush1.msra.mxu0 %v2764
  %5641 = vmatprep.subr.mxu0 %v2775
  %5642 = vmatpush1.msra.mxu0 %v2774
  %5643 = vmatprep.subr.mxu0 %v2785
  %5644 = vmatpush1.msra.mxu0 %v2784
  %5645 = vmatprep.subr.mxu0 %v2795
  %5646 = vmatpush1.msra.mxu0 %v2794
  %5647 = vmatprep.subr.mxu0 %v2805
  %5648 = vmatpush1.msra.mxu0 %v2804
  %5649 = vmatprep.subr.mxu0 %v2815
  %5650 = vmatpush1.msra.mxu0 %v2814
  %5651 = vmatprep.subr.mxu0 %v2825
  %5652 = vmatpush1.msra.mxu0 %v2824
  %5653 = vmatprep.subr.mxu0 %v2835
  %5654 = vmatpush1.msra.mxu0 %v2834
  %5655 = vmatprep.mubr.f32.mxu0 %v897
  %5656 = vmatmul.mubr.f32.gmra.mrb[0].mxu0 %v896
  %v5657 = vpop.f32.mrb[0].mxu0
  %v5658 = vadd.f32 %v5587, %v5657
  %v5659 = vpop.f32.mrb[0].mxu0
  %v5660 = vadd.f32 %v5589, %v5659
  %5661 = vdwg.mxu0
  %5662 = vmatprep.subr.mxu0 %v2845
  %5663 = vmatpush1.msra.mxu0 %v2844
  %5664 = vmatprep.subr.mxu0 %v2855
  %5665 = vmatpush1.msra.mxu0 %v2854
  %5666 = vmatprep.subr.mxu0 %v2865
  %5667 = vmatpush1.msra.mxu0 %v2864
  %5668 = vmatprep.subr.mxu0 %v2875
  %5669 = vmatpush1.msra.mxu0 %v2874
  %5670 = vmatprep.subr.mxu0 %v2885
  %5671 = vmatpush1.msra.mxu0 %v2884
  %5672 = vmatprep.subr.mxu0 %v2895
  %5673 = vmatpush1.msra.mxu0 %v2894
  %5674 = vmatprep.subr.mxu0 %v2905
  %5675 = vmatpush1.msra.mxu0 %v2904
  %5676 = vmatprep.subr.mxu0 %v2915
  %5677 = vmatpush1.msra.mxu0 %v2914
  %5678 = vmatprep.subr.mxu0 %v2925
  %5679 = vmatpush1.msra.mxu0 %v2924
  %5680 = vmatprep.subr.mxu0 %v2935
  %5681 = vmatpush1.msra.mxu0 %v2934
  %5682 = vmatprep.subr.mxu0 %v2945
  %5683 = vmatpush1.msra.mxu0 %v2944
  %5684 = vmatprep.subr.mxu0 %v2955
  %5685 = vmatpush1.msra.mxu0 %v2954
  %5686 = vmatprep.subr.mxu0 %v2965
  %5687 = vmatpush1.msra.mxu0 %v2964
  %5688 = vmatprep.subr.mxu0 %v2975
  %5689 = vmatpush1.msra.mxu0 %v2974
  %5690 = vmatprep.subr.mxu0 %v2985
  %5691 = vmatpush1.msra.mxu0 %v2984
  %5692 = vmatprep.subr.mxu0 %v2995
  %5693 = vmatpush1.msra.mxu0 %v2994
  %5694 = vmatprep.subr.mxu0 %v3005
  %5695 = vmatpush1.msra.mxu0 %v3004
  %5696 = vmatprep.subr.mxu0 %v3015
  %5697 = vmatpush1.msra.mxu0 %v3014
  %5698 = vmatprep.subr.mxu0 %v3025
  %5699 = vmatpush1.msra.mxu0 %v3024
  %5700 = vmatprep.subr.mxu0 %v3035
  %5701 = vmatpush1.msra.mxu0 %v3034
  %5702 = vmatprep.subr.mxu0 %v3045
  %5703 = vmatpush1.msra.mxu0 %v3044
  %5704 = vmatprep.subr.mxu0 %v3055
  %5705 = vmatpush1.msra.mxu0 %v3054
  %5706 = vmatprep.subr.mxu0 %v3065
  %5707 = vmatpush1.msra.mxu0 %v3064
  %5708 = vmatprep.subr.mxu0 %v3075
  %5709 = vmatpush1.msra.mxu0 %v3074
  %5710 = vmatprep.subr.mxu0 %v3085
  %5711 = vmatpush1.msra.mxu0 %v3084
  %5712 = vmatprep.subr.mxu0 %v3095
  %5713 = vmatpush1.msra.mxu0 %v3094
  %5714 = vmatprep.subr.mxu0 %v3105
  %5715 = vmatpush1.msra.mxu0 %v3104
  %5716 = vmatprep.subr.mxu0 %v3115
  %5717 = vmatpush1.msra.mxu0 %v3114
  %5718 = vmatprep.subr.mxu0 %v3125
  %5719 = vmatpush1.msra.mxu0 %v3124
  %5720 = vmatprep.subr.mxu0 %v3135
  %5721 = vmatpush1.msra.mxu0 %v3134
  %5722 = vmatprep.subr.mxu0 %v3145
  %5723 = vmatpush1.msra.mxu0 %v3144
  %5724 = vmatprep.subr.mxu0 %v3155
  %5725 = vmatpush1.msra.mxu0 %v3154
  %5726 = vmatprep.mubr.f32.mxu0 %v899
  %5727 = vmatmul.mubr.f32.gmra.mrb[0].mxu0 %v898
  %v5728 = vpop.f32.mrb[0].mxu0
  %v5729 = vadd.f32 %v5658, %v5728
  %v5730 = vpop.f32.mrb[0].mxu0
  %v5731 = vadd.f32 %v5660, %v5730
  %5732 = vdwg.mxu0
  %5733 = vmatprep.subr.mxu0 %v3165
  %5734 = vmatpush1.msra.mxu0 %v3164
  %5735 = vmatprep.subr.mxu0 %v3175
  %5736 = vmatpush1.msra.mxu0 %v3174
  %5737 = vmatprep.subr.mxu0 %v3185
  %5738 = vmatpush1.msra.mxu0 %v3184
  %5739 = vmatprep.subr.mxu0 %v3195
  %5740 = vmatpush1.msra.mxu0 %v3194
  %5741 = vmatprep.subr.mxu0 %v3205
  %5742 = vmatpush1.msra.mxu0 %v3204
  %5743 = vmatprep.subr.mxu0 %v3215
  %5744 = vmatpush1.msra.mxu0 %v3214
  %5745 = vmatprep.subr.mxu0 %v3225
  %5746 = vmatpush1.msra.mxu0 %v3224
  %5747 = vmatprep.subr.mxu0 %v3235
  %5748 = vmatpush1.msra.mxu0 %v3234
  %5749 = vmatprep.subr.mxu0 %v3245
  %5750 = vmatpush1.msra.mxu0 %v3244
  %5751 = vmatprep.subr.mxu0 %v3255
  %5752 = vmatpush1.msra.mxu0 %v3254
  %5753 = vmatprep.subr.mxu0 %v3265
  %5754 = vmatpush1.msra.mxu0 %v3264
  %5755 = vmatprep.subr.mxu0 %v3275
  %5756 = vmatpush1.msra.mxu0 %v3274
  %5757 = vmatprep.subr.mxu0 %v3285
  %5758 = vmatpush1.msra.mxu0 %v3284
  %5759 = vmatprep.subr.mxu0 %v3295
  %5760 = vmatpush1.msra.mxu0 %v3294
  %5761 = vmatprep.subr.mxu0 %v3305
  %5762 = vmatpush1.msra.mxu0 %v3304
  %5763 = vmatprep.subr.mxu0 %v3315
  %5764 = vmatpush1.msra.mxu0 %v3314
  %5765 = vmatprep.subr.mxu0 %v3325
  %5766 = vmatpush1.msra.mxu0 %v3324
  %5767 = vmatprep.subr.mxu0 %v3335
  %5768 = vmatpush1.msra.mxu0 %v3334
  %5769 = vmatprep.subr.mxu0 %v3345
  %5770 = vmatpush1.msra.mxu0 %v3344
  %5771 = vmatprep.subr.mxu0 %v3355
  %5772 = vmatpush1.msra.mxu0 %v3354
  %5773 = vmatprep.subr.mxu0 %v3365
  %5774 = vmatpush1.msra.mxu0 %v3364
  %5775 = vmatprep.subr.mxu0 %v3375
  %5776 = vmatpush1.msra.mxu0 %v3374
  %5777 = vmatprep.subr.mxu0 %v3385
  %5778 = vmatpush1.msra.mxu0 %v3384
  %5779 = vmatprep.subr.mxu0 %v3395
  %5780 = vmatpush1.msra.mxu0 %v3394
  %5781 = vmatprep.subr.mxu0 %v3405
  %5782 = vmatpush1.msra.mxu0 %v3404
  %5783 = vmatprep.subr.mxu0 %v3415
  %5784 = vmatpush1.msra.mxu0 %v3414
  %5785 = vmatprep.subr.mxu0 %v3425
  %5786 = vmatpush1.msra.mxu0 %v3424
  %5787 = vmatprep.subr.mxu0 %v3435
  %5788 = vmatpush1.msra.mxu0 %v3434
  %5789 = vmatprep.subr.mxu0 %v3445
  %5790 = vmatpush1.msra.mxu0 %v3444
  %5791 = vmatprep.subr.mxu0 %v3455
  %5792 = vmatpush1.msra.mxu0 %v3454
  %5793 = vmatprep.subr.mxu0 %v3465
  %5794 = vmatpush1.msra.mxu0 %v3464
  %5795 = vmatprep.subr.mxu0 %v3475
  %5796 = vmatpush1.msra.mxu0 %v3474
  %5797 = vmatprep.mubr.f32.mxu0 %v901
  %5798 = vmatmul.mubr.f32.gmra.mrb[0].mxu0 %v900
  %v5799 = vpop.f32.mrb[0].mxu0
  %v5800 = vadd.f32 %v5729, %v5799
  %v5801 = vpop.f32.mrb[0].mxu0
  %v5802 = vadd.f32 %v5731, %v5801
  %5803 = vdwg.mxu0
  %5804 = vmatprep.subr.mxu0 %v927
  %5805 = vmatpush1.msra.mxu0 %v926
  %5806 = vmatprep.subr.mxu0 %v937
  %5807 = vmatpush1.msra.mxu0 %v936
  %5808 = vmatprep.subr.mxu0 %v947
  %5809 = vmatpush1.msra.mxu0 %v946
  %5810 = vmatprep.subr.mxu0 %v957
  %5811 = vmatpush1.msra.mxu0 %v956
  %5812 = vmatprep.subr.mxu0 %v967
  %5813 = vmatpush1.msra.mxu0 %v966
  %5814 = vmatprep.subr.mxu0 %v977
  %5815 = vmatpush1.msra.mxu0 %v976
  %5816 = vmatprep.subr.mxu0 %v987
  %5817 = vmatpush1.msra.mxu0 %v986
  %5818 = vmatprep.subr.mxu0 %v997
  %5819 = vmatpush1.msra.mxu0 %v996
  %5820 = vmatprep.subr.mxu0 %v1007
  %5821 = vmatpush1.msra.mxu0 %v1006
  %5822 = vmatprep.subr.mxu0 %v1017
  %5823 = vmatpush1.msra.mxu0 %v1016
  %5824 = vmatprep.subr.mxu0 %v1027
  %5825 = vmatpush1.msra.mxu0 %v1026
  %5826 = vmatprep.subr.mxu0 %v1037
  %5827 = vmatpush1.msra.mxu0 %v1036
  %5828 = vmatprep.subr.mxu0 %v1047
  %5829 = vmatpush1.msra.mxu0 %v1046
  %5830 = vmatprep.subr.mxu0 %v1057
  %5831 = vmatpush1.msra.mxu0 %v1056
  %5832 = vmatprep.subr.mxu0 %v1067
  %5833 = vmatpush1.msra.mxu0 %v1066
  %5834 = vmatprep.subr.mxu0 %v1077
  %5835 = vmatpush1.msra.mxu0 %v1076
  %5836 = vmatprep.subr.mxu0 %v1087
  %5837 = vmatpush1.msra.mxu0 %v1086
  %5838 = vmatprep.subr.mxu0 %v1097
  %5839 = vmatpush1.msra.mxu0 %v1096
  %5840 = vmatprep.subr.mxu0 %v1107
  %5841 = vmatpush1.msra.mxu0 %v1106
  %5842 = vmatprep.subr.mxu0 %v1117
  %5843 = vmatpush1.msra.mxu0 %v1116
  %5844 = vmatprep.subr.mxu0 %v1127
  %5845 = vmatpush1.msra.mxu0 %v1126
  %5846 = vmatprep.subr.mxu0 %v1137
  %5847 = vmatpush1.msra.mxu0 %v1136
  %5848 = vmatprep.subr.mxu0 %v1147
  %5849 = vmatpush1.msra.mxu0 %v1146
  %5850 = vmatprep.subr.mxu0 %v1157
  %5851 = vmatpush1.msra.mxu0 %v1156
  %5852 = vmatprep.subr.mxu0 %v1167
  %5853 = vmatpush1.msra.mxu0 %v1166
  %5854 = vmatprep.subr.mxu0 %v1177
  %5855 = vmatpush1.msra.mxu0 %v1176
  %5856 = vmatprep.subr.mxu0 %v1187
  %5857 = vmatpush1.msra.mxu0 %v1186
  %5858 = vmatprep.subr.mxu0 %v1197
  %5859 = vmatpush1.msra.mxu0 %v1196
  %5860 = vmatprep.subr.mxu0 %v1207
  %5861 = vmatpush1.msra.mxu0 %v1206
  %5862 = vmatprep.subr.mxu0 %v1217
  %5863 = vmatpush1.msra.mxu0 %v1216
  %5864 = vmatprep.subr.mxu0 %v1227
  %5865 = vmatpush1.msra.mxu0 %v1226
  %5866 = vmatprep.subr.mxu0 %v1237
  %5867 = vmatpush1.msra.mxu0 %v1236
  %5868 = vmatprep.mubr.f32.mxu0 %v887
  %5869 = vmatmul.mubr.f32.gmra.mrb[0].mxu0 %v886
  %v5870 = vpop.f32.mrb[0].mxu0
  %v5871 = vadd.f32 %v3517, %v5870
  %v5872 = vpop.f32.mrb[0].mxu0
  %v5873 = vadd.f32 %v3521, %v5872
  %5874 = vdwg.mxu0
  %5875 = vmatprep.subr.mxu0 %v1247
  %5876 = vmatpush1.msra.mxu0 %v1246
  %5877 = vmatprep.subr.mxu0 %v1257
  %5878 = vmatpush1.msra.mxu0 %v1256
  %5879 = vmatprep.subr.mxu0 %v1267
  %5880 = vmatpush1.msra.mxu0 %v1266
  %5881 = vmatprep.subr.mxu0 %v1277
  %5882 = vmatpush1.msra.mxu0 %v1276
  %5883 = vmatprep.subr.mxu0 %v1287
  %5884 = vmatpush1.msra.mxu0 %v1286
  %5885 = vmatprep.subr.mxu0 %v1297
  %5886 = vmatpush1.msra.mxu0 %v1296
  %5887 = vmatprep.subr.mxu0 %v1307
  %5888 = vmatpush1.msra.mxu0 %v1306
  %5889 = vmatprep.subr.mxu0 %v1317
  %5890 = vmatpush1.msra.mxu0 %v1316
  %5891 = vmatprep.subr.mxu0 %v1327
  %5892 = vmatpush1.msra.mxu0 %v1326
  %5893 = vmatprep.subr.mxu0 %v1337
  %5894 = vmatpush1.msra.mxu0 %v1336
  %5895 = vmatprep.subr.mxu0 %v1347
  %5896 = vmatpush1.msra.mxu0 %v1346
  %5897 = vmatprep.subr.mxu0 %v1357
  %5898 = vmatpush1.msra.mxu0 %v1356
  %5899 = vmatprep.subr.mxu0 %v1367
  %5900 = vmatpush1.msra.mxu0 %v1366
  %5901 = vmatprep.subr.mxu0 %v1377
  %5902 = vmatpush1.msra.mxu0 %v1376
  %5903 = vmatprep.subr.mxu0 %v1387
  %5904 = vmatpush1.msra.mxu0 %v1386
  %5905 = vmatprep.subr.mxu0 %v1397
  %5906 = vmatpush1.msra.mxu0 %v1396
  %5907 = vmatprep.subr.mxu0 %v1407
  %5908 = vmatpush1.msra.mxu0 %v1406
  %5909 = vmatprep.subr.mxu0 %v1417
  %5910 = vmatpush1.msra.mxu0 %v1416
  %5911 = vmatprep.subr.mxu0 %v1427
  %5912 = vmatpush1.msra.mxu0 %v1426
  %5913 = vmatprep.subr.mxu0 %v1437
  %5914 = vmatpush1.msra.mxu0 %v1436
  %5915 = vmatprep.subr.mxu0 %v1447
  %5916 = vmatpush1.msra.mxu0 %v1446
  %5917 = vmatprep.subr.mxu0 %v1457
  %5918 = vmatpush1.msra.mxu0 %v1456
  %5919 = vmatprep.subr.mxu0 %v1467
  %5920 = vmatpush1.msra.mxu0 %v1466
  %5921 = vmatprep.subr.mxu0 %v1477
  %5922 = vmatpush1.msra.mxu0 %v1476
  %5923 = vmatprep.subr.mxu0 %v1487
  %5924 = vmatpush1.msra.mxu0 %v1486
  %5925 = vmatprep.subr.mxu0 %v1497
  %5926 = vmatpush1.msra.mxu0 %v1496
  %5927 = vmatprep.subr.mxu0 %v1507
  %5928 = vmatpush1.msra.mxu0 %v1506
  %5929 = vmatprep.subr.mxu0 %v1517
  %5930 = vmatpush1.msra.mxu0 %v1516
  %5931 = vmatprep.subr.mxu0 %v1527
  %5932 = vmatpush1.msra.mxu0 %v1526
  %5933 = vmatprep.subr.mxu0 %v1537
  %5934 = vmatpush1.msra.mxu0 %v1536
  %5935 = vmatprep.subr.mxu0 %v1547
  %5936 = vmatpush1.msra.mxu0 %v1546
  %5937 = vmatprep.subr.mxu0 %v1557
  %5938 = vmatpush1.msra.mxu0 %v1556
  %5939 = vmatprep.mubr.f32.mxu0 %v889
  %5940 = vmatmul.mubr.f32.gmra.mrb[0].mxu0 %v888
  %v5941 = vpop.f32.mrb[0].mxu0
  %v5942 = vadd.f32 %v5871, %v5941
  %v5943 = vpop.f32.mrb[0].mxu0
  %v5944 = vadd.f32 %v5873, %v5943
  %5945 = vdwg.mxu0
  %5946 = vmatprep.subr.mxu0 %v1567
  %5947 = vmatpush1.msra.mxu0 %v1566
  %5948 = vmatprep.subr.mxu0 %v1577
  %5949 = vmatpush1.msra.mxu0 %v1576
  %5950 = vmatprep.subr.mxu0 %v1587
  %5951 = vmatpush1.msra.mxu0 %v1586
  %5952 = vmatprep.subr.mxu0 %v1597
  %5953 = vmatpush1.msra.mxu0 %v1596
  %5954 = vmatprep.subr.mxu0 %v1607
  %5955 = vmatpush1.msra.mxu0 %v1606
  %5956 = vmatprep.subr.mxu0 %v1617
  %5957 = vmatpush1.msra.mxu0 %v1616
  %5958 = vmatprep.subr.mxu0 %v1627
  %5959 = vmatpush1.msra.mxu0 %v1626
  %5960 = vmatprep.subr.mxu0 %v1637
  %5961 = vmatpush1.msra.mxu0 %v1636
  %5962 = vmatprep.subr.mxu0 %v1647
  %5963 = vmatpush1.msra.mxu0 %v1646
  %5964 = vmatprep.subr.mxu0 %v1657
  %5965 = vmatpush1.msra.mxu0 %v1656
  %5966 = vmatprep.subr.mxu0 %v1667
  %5967 = vmatpush1.msra.mxu0 %v1666
  %5968 = vmatprep.subr.mxu0 %v1677
  %5969 = vmatpush1.msra.mxu0 %v1676
  %5970 = vmatprep.subr.mxu0 %v1687
  %5971 = vmatpush1.msra.mxu0 %v1686
  %5972 = vmatprep.subr.mxu0 %v1697
  %5973 = vmatpush1.msra.mxu0 %v1696
  %5974 = vmatprep.subr.mxu0 %v1707
  %5975 = vmatpush1.msra.mxu0 %v1706
  %5976 = vmatprep.subr.mxu0 %v1717
  %5977 = vmatpush1.msra.mxu0 %v1716
  %5978 = vmatprep.subr.mxu0 %v1727
  %5979 = vmatpush1.msra.mxu0 %v1726
  %5980 = vmatprep.subr.mxu0 %v1737
  %5981 = vmatpush1.msra.mxu0 %v1736
  %5982 = vmatprep.subr.mxu0 %v1747
  %5983 = vmatpush1.msra.mxu0 %v1746
  %5984 = vmatprep.subr.mxu0 %v1757
  %5985 = vmatpush1.msra.mxu0 %v1756
  %5986 = vmatprep.subr.mxu0 %v1767
  %5987 = vmatpush1.msra.mxu0 %v1766
  %5988 = vmatprep.subr.mxu0 %v1777
  %5989 = vmatpush1.msra.mxu0 %v1776
  %5990 = vmatprep.subr.mxu0 %v1787
  %5991 = vmatpush1.msra.mxu0 %v1786
  %5992 = vmatprep.subr.mxu0 %v1797
  %5993 = vmatpush1.msra.mxu0 %v1796
  %5994 = vmatprep.subr.mxu0 %v1807
  %5995 = vmatpush1.msra.mxu0 %v1806
  %5996 = vmatprep.subr.mxu0 %v1817
  %5997 = vmatpush1.msra.mxu0 %v1816
  %5998 = vmatprep.subr.mxu0 %v1827
  %5999 = vmatpush1.msra.mxu0 %v1826
  %6000 = vmatprep.subr.mxu0 %v1837
  %6001 = vmatpush1.msra.mxu0 %v1836
  %6002 = vmatprep.subr.mxu0 %v1847
  %6003 = vmatpush1.msra.mxu0 %v1846
  %6004 = vmatprep.subr.mxu0 %v1857
  %6005 = vmatpush1.msra.mxu0 %v1856
  %6006 = vmatprep.subr.mxu0 %v1867
  %6007 = vmatpush1.msra.mxu0 %v1866
  %6008 = vmatprep.subr.mxu0 %v1877
  %6009 = vmatpush1.msra.mxu0 %v1876
  %6010 = vmatprep.mubr.f32.mxu0 %v891
  %6011 = vmatmul.mubr.f32.gmra.mrb[0].mxu0 %v890
  %v6012 = vpop.f32.mrb[0].mxu0
  %v6013 = vadd.f32 %v5942, %v6012
  %v6014 = vpop.f32.mrb[0].mxu0
  %v6015 = vadd.f32 %v5944, %v6014
  %6016 = vdwg.mxu0
  %6017 = vmatprep.subr.mxu0 %v1887
  %6018 = vmatpush1.msra.mxu0 %v1886
  %6019 = vmatprep.subr.mxu0 %v1897
  %6020 = vmatpush1.msra.mxu0 %v1896
  %6021 = vmatprep.subr.mxu0 %v1907
  %6022 = vmatpush1.msra.mxu0 %v1906
  %6023 = vmatprep.subr.mxu0 %v1917
  %6024 = vmatpush1.msra.mxu0 %v1916
  %6025 = vmatprep.subr.mxu0 %v1927
  %6026 = vmatpush1.msra.mxu0 %v1926
  %6027 = vmatprep.subr.mxu0 %v1937
  %6028 = vmatpush1.msra.mxu0 %v1936
  %6029 = vmatprep.subr.mxu0 %v1947
  %6030 = vmatpush1.msra.mxu0 %v1946
  %6031 = vmatprep.subr.mxu0 %v1957
  %6032 = vmatpush1.msra.mxu0 %v1956
  %6033 = vmatprep.subr.mxu0 %v1967
  %6034 = vmatpush1.msra.mxu0 %v1966
  %6035 = vmatprep.subr.mxu0 %v1977
  %6036 = vmatpush1.msra.mxu0 %v1976
  %6037 = vmatprep.subr.mxu0 %v1987
  %6038 = vmatpush1.msra.mxu0 %v1986
  %6039 = vmatprep.subr.mxu0 %v1997
  %6040 = vmatpush1.msra.mxu0 %v1996
  %6041 = vmatprep.subr.mxu0 %v2007
  %6042 = vmatpush1.msra.mxu0 %v2006
  %6043 = vmatprep.subr.mxu0 %v2017
  %6044 = vmatpush1.msra.mxu0 %v2016
  %6045 = vmatprep.subr.mxu0 %v2027
  %6046 = vmatpush1.msra.mxu0 %v2026
  %6047 = vmatprep.subr.mxu0 %v2037
  %6048 = vmatpush1.msra.mxu0 %v2036
  %6049 = vmatprep.subr.mxu0 %v2047
  %6050 = vmatpush1.msra.mxu0 %v2046
  %6051 = vmatprep.subr.mxu0 %v2057
  %6052 = vmatpush1.msra.mxu0 %v2056
  %6053 = vmatprep.subr.mxu0 %v2067
  %6054 = vmatpush1.msra.mxu0 %v2066
  %6055 = vmatprep.subr.mxu0 %v2077
  %6056 = vmatpush1.msra.mxu0 %v2076
  %6057 = vmatprep.subr.mxu0 %v2087
  %6058 = vmatpush1.msra.mxu0 %v2086
  %6059 = vmatprep.subr.mxu0 %v2097
  %6060 = vmatpush1.msra.mxu0 %v2096
  %6061 = vmatprep.subr.mxu0 %v2107
  %6062 = vmatpush1.msra.mxu0 %v2106
  %6063 = vmatprep.subr.mxu0 %v2117
  %6064 = vmatpush1.msra.mxu0 %v2116
  %6065 = vmatprep.subr.mxu0 %v2127
  %6066 = vmatpush1.msra.mxu0 %v2126
  %6067 = vmatprep.subr.mxu0 %v2137
  %6068 = vmatpush1.msra.mxu0 %v2136
  %6069 = vmatprep.subr.mxu0 %v2147
  %6070 = vmatpush1.msra.mxu0 %v2146
  %6071 = vmatprep.subr.mxu0 %v2157
  %6072 = vmatpush1.msra.mxu0 %v2156
  %6073 = vmatprep.subr.mxu0 %v2167
  %6074 = vmatpush1.msra.mxu0 %v2166
  %6075 = vmatprep.subr.mxu0 %v2177
  %6076 = vmatpush1.msra.mxu0 %v2176
  %6077 = vmatprep.subr.mxu0 %v2187
  %6078 = vmatpush1.msra.mxu0 %v2186
  %6079 = vmatprep.subr.mxu0 %v2197
  %6080 = vmatpush1.msra.mxu0 %v2196
  %6081 = vmatprep.mubr.f32.mxu0 %v893
  %6082 = vmatmul.mubr.f32.gmra.mrb[0].mxu0 %v892
  %v6083 = vpop.f32.mrb[0].mxu0
  %v6084 = vadd.f32 %v6013, %v6083
  %v6085 = vpop.f32.mrb[0].mxu0
  %v6086 = vadd.f32 %v6015, %v6085
  %6087 = vdwg.mxu0
  %6088 = vmatprep.subr.mxu0 %v2207
  %6089 = vmatpush1.msra.mxu0 %v2206
  %6090 = vmatprep.subr.mxu0 %v2217
  %6091 = vmatpush1.msra.mxu0 %v2216
  %6092 = vmatprep.subr.mxu0 %v2227
  %6093 = vmatpush1.msra.mxu0 %v2226
  %6094 = vmatprep.subr.mxu0 %v2237
  %6095 = vmatpush1.msra.mxu0 %v2236
  %6096 = vmatprep.subr.mxu0 %v2247
  %6097 = vmatpush1.msra.mxu0 %v2246
  %6098 = vmatprep.subr.mxu0 %v2257
  %6099 = vmatpush1.msra.mxu0 %v2256
  %6100 = vmatprep.subr.mxu0 %v2267
  %6101 = vmatpush1.msra.mxu0 %v2266
  %6102 = vmatprep.subr.mxu0 %v2277
  %6103 = vmatpush1.msra.mxu0 %v2276
  %6104 = vmatprep.subr.mxu0 %v2287
  %6105 = vmatpush1.msra.mxu0 %v2286
  %6106 = vmatprep.subr.mxu0 %v2297
  %6107 = vmatpush1.msra.mxu0 %v2296
  %6108 = vmatprep.subr.mxu0 %v2307
  %6109 = vmatpush1.msra.mxu0 %v2306
  %6110 = vmatprep.subr.mxu0 %v2317
  %6111 = vmatpush1.msra.mxu0 %v2316
  %6112 = vmatprep.subr.mxu0 %v2327
  %6113 = vmatpush1.msra.mxu0 %v2326
  %6114 = vmatprep.subr.mxu0 %v2337
  %6115 = vmatpush1.msra.mxu0 %v2336
  %6116 = vmatprep.subr.mxu0 %v2347
  %6117 = vmatpush1.msra.mxu0 %v2346
  %6118 = vmatprep.subr.mxu0 %v2357
  %6119 = vmatpush1.msra.mxu0 %v2356
  %6120 = vmatprep.subr.mxu0 %v2367
  %6121 = vmatpush1.msra.mxu0 %v2366
  %6122 = vmatprep.subr.mxu0 %v2377
  %6123 = vmatpush1.msra.mxu0 %v2376
  %6124 = vmatprep.subr.mxu0 %v2387
  %6125 = vmatpush1.msra.mxu0 %v2386
  %6126 = vmatprep.subr.mxu0 %v2397
  %6127 = vmatpush1.msra.mxu0 %v2396
  %6128 = vmatprep.subr.mxu0 %v2407
  %6129 = vmatpush1.msra.mxu0 %v2406
  %6130 = vmatprep.subr.mxu0 %v2417
  %6131 = vmatpush1.msra.mxu0 %v2416
  %6132 = vmatprep.subr.mxu0 %v2427
  %6133 = vmatpush1.msra.mxu0 %v2426
  %6134 = vmatprep.subr.mxu0 %v2437
  %6135 = vmatpush1.msra.mxu0 %v2436
  %6136 = vmatprep.subr.mxu0 %v2447
  %6137 = vmatpush1.msra.mxu0 %v2446
  %6138 = vmatprep.subr.mxu0 %v2457
  %6139 = vmatpush1.msra.mxu0 %v2456
  %6140 = vmatprep.subr.mxu0 %v2467
  %6141 = vmatpush1.msra.mxu0 %v2466
  %6142 = vmatprep.subr.mxu0 %v2477
  %6143 = vmatpush1.msra.mxu0 %v2476
  %6144 = vmatprep.subr.mxu0 %v2487
  %6145 = vmatpush1.msra.mxu0 %v2486
  %6146 = vmatprep.subr.mxu0 %v2497
  %6147 = vmatpush1.msra.mxu0 %v2496
  %6148 = vmatprep.subr.mxu0 %v2507
  %6149 = vmatpush1.msra.mxu0 %v2506
  %6150 = vmatprep.subr.mxu0 %v2517
  %6151 = vmatpush1.msra.mxu0 %v2516
  %6152 = vmatprep.mubr.f32.mxu0 %v895
  %6153 = vmatmul.mubr.f32.gmra.mrb[0].mxu0 %v894
  %v6154 = vpop.f32.mrb[0].mxu0
  %v6155 = vadd.f32 %v6084, %v6154
  %v6156 = vpop.f32.mrb[0].mxu0
  %v6157 = vadd.f32 %v6086, %v6156
  %6158 = vdwg.mxu0
  %6159 = vmatprep.subr.mxu0 %v2527
  %6160 = vmatpush1.msra.mxu0 %v2526
  %6161 = vmatprep.subr.mxu0 %v2537
  %6162 = vmatpush1.msra.mxu0 %v2536
  %6163 = vmatprep.subr.mxu0 %v2547
  %6164 = vmatpush1.msra.mxu0 %v2546
  %6165 = vmatprep.subr.mxu0 %v2557
  %6166 = vmatpush1.msra.mxu0 %v2556
  %6167 = vmatprep.subr.mxu0 %v2567
  %6168 = vmatpush1.msra.mxu0 %v2566
  %6169 = vmatprep.subr.mxu0 %v2577
  %6170 = vmatpush1.msra.mxu0 %v2576
  %6171 = vmatprep.subr.mxu0 %v2587
  %6172 = vmatpush1.msra.mxu0 %v2586
  %6173 = vmatprep.subr.mxu0 %v2597
  %6174 = vmatpush1.msra.mxu0 %v2596
  %6175 = vmatprep.subr.mxu0 %v2607
  %6176 = vmatpush1.msra.mxu0 %v2606
  %6177 = vmatprep.subr.mxu0 %v2617
  %6178 = vmatpush1.msra.mxu0 %v2616
  %6179 = vmatprep.subr.mxu0 %v2627
  %6180 = vmatpush1.msra.mxu0 %v2626
  %6181 = vmatprep.subr.mxu0 %v2637
  %6182 = vmatpush1.msra.mxu0 %v2636
  %6183 = vmatprep.subr.mxu0 %v2647
  %6184 = vmatpush1.msra.mxu0 %v2646
  %6185 = vmatprep.subr.mxu0 %v2657
  %6186 = vmatpush1.msra.mxu0 %v2656
  %6187 = vmatprep.subr.mxu0 %v2667
  %6188 = vmatpush1.msra.mxu0 %v2666
  %6189 = vmatprep.subr.mxu0 %v2677
  %6190 = vmatpush1.msra.mxu0 %v2676
  %6191 = vmatprep.subr.mxu0 %v2687
  %6192 = vmatpush1.msra.mxu0 %v2686
  %6193 = vmatprep.subr.mxu0 %v2697
  %6194 = vmatpush1.msra.mxu0 %v2696
  %6195 = vmatprep.subr.mxu0 %v2707
  %6196 = vmatpush1.msra.mxu0 %v2706
  %6197 = vmatprep.subr.mxu0 %v2717
  %6198 = vmatpush1.msra.mxu0 %v2716
  %6199 = vmatprep.subr.mxu0 %v2727
  %6200 = vmatpush1.msra.mxu0 %v2726
  %6201 = vmatprep.subr.mxu0 %v2737
  %6202 = vmatpush1.msra.mxu0 %v2736
  %6203 = vmatprep.subr.mxu0 %v2747
  %6204 = vmatpush1.msra.mxu0 %v2746
  %6205 = vmatprep.subr.mxu0 %v2757
  %6206 = vmatpush1.msra.mxu0 %v2756
  %6207 = vmatprep.subr.mxu0 %v2767
  %6208 = vmatpush1.msra.mxu0 %v2766
  %6209 = vmatprep.subr.mxu0 %v2777
  %6210 = vmatpush1.msra.mxu0 %v2776
  %6211 = vmatprep.subr.mxu0 %v2787
  %6212 = vmatpush1.msra.mxu0 %v2786
  %6213 = vmatprep.subr.mxu0 %v2797
  %6214 = vmatpush1.msra.mxu0 %v2796
  %6215 = vmatprep.subr.mxu0 %v2807
  %6216 = vmatpush1.msra.mxu0 %v2806
  %6217 = vmatprep.subr.mxu0 %v2817
  %6218 = vmatpush1.msra.mxu0 %v2816
  %6219 = vmatprep.subr.mxu0 %v2827
  %6220 = vmatpush1.msra.mxu0 %v2826
  %6221 = vmatprep.subr.mxu0 %v2837
  %6222 = vmatpush1.msra.mxu0 %v2836
  %6223 = vmatprep.mubr.f32.mxu0 %v897
  %6224 = vmatmul.mubr.f32.gmra.mrb[0].mxu0 %v896
  %v6225 = vpop.f32.mrb[0].mxu0
  %v6226 = vadd.f32 %v6155, %v6225
  %v6227 = vpop.f32.mrb[0].mxu0
  %v6228 = vadd.f32 %v6157, %v6227
  %6229 = vdwg.mxu0
  %6230 = vmatprep.subr.mxu0 %v2847
  %6231 = vmatpush1.msra.mxu0 %v2846
  %6232 = vmatprep.subr.mxu0 %v2857
  %6233 = vmatpush1.msra.mxu0 %v2856
  %6234 = vmatprep.subr.mxu0 %v2867
  %6235 = vmatpush1.msra.mxu0 %v2866
  %6236 = vmatprep.subr.mxu0 %v2877
  %6237 = vmatpush1.msra.mxu0 %v2876
  %6238 = vmatprep.subr.mxu0 %v2887
  %6239 = vmatpush1.msra.mxu0 %v2886
  %6240 = vmatprep.subr.mxu0 %v2897
  %6241 = vmatpush1.msra.mxu0 %v2896
  %6242 = vmatprep.subr.mxu0 %v2907
  %6243 = vmatpush1.msra.mxu0 %v2906
  %6244 = vmatprep.subr.mxu0 %v2917
  %6245 = vmatpush1.msra.mxu0 %v2916
  %6246 = vmatprep.subr.mxu0 %v2927
  %6247 = vmatpush1.msra.mxu0 %v2926
  %6248 = vmatprep.subr.mxu0 %v2937
  %6249 = vmatpush1.msra.mxu0 %v2936
  %6250 = vmatprep.subr.mxu0 %v2947
  %6251 = vmatpush1.msra.mxu0 %v2946
  %6252 = vmatprep.subr.mxu0 %v2957
  %6253 = vmatpush1.msra.mxu0 %v2956
  %6254 = vmatprep.subr.mxu0 %v2967
  %6255 = vmatpush1.msra.mxu0 %v2966
  %6256 = vmatprep.subr.mxu0 %v2977
  %6257 = vmatpush1.msra.mxu0 %v2976
  %6258 = vmatprep.subr.mxu0 %v2987
  %6259 = vmatpush1.msra.mxu0 %v2986
  %6260 = vmatprep.subr.mxu0 %v2997
  %6261 = vmatpush1.msra.mxu0 %v2996
  %6262 = vmatprep.subr.mxu0 %v3007
  %6263 = vmatpush1.msra.mxu0 %v3006
  %6264 = vmatprep.subr.mxu0 %v3017
  %6265 = vmatpush1.msra.mxu0 %v3016
  %6266 = vmatprep.subr.mxu0 %v3027
  %6267 = vmatpush1.msra.mxu0 %v3026
  %6268 = vmatprep.subr.mxu0 %v3037
  %6269 = vmatpush1.msra.mxu0 %v3036
  %6270 = vmatprep.subr.mxu0 %v3047
  %6271 = vmatpush1.msra.mxu0 %v3046
  %6272 = vmatprep.subr.mxu0 %v3057
  %6273 = vmatpush1.msra.mxu0 %v3056
  %6274 = vmatprep.subr.mxu0 %v3067
  %6275 = vmatpush1.msra.mxu0 %v3066
  %6276 = vmatprep.subr.mxu0 %v3077
  %6277 = vmatpush1.msra.mxu0 %v3076
  %6278 = vmatprep.subr.mxu0 %v3087
  %6279 = vmatpush1.msra.mxu0 %v3086
  %6280 = vmatprep.subr.mxu0 %v3097
  %6281 = vmatpush1.msra.mxu0 %v3096
  %6282 = vmatprep.subr.mxu0 %v3107
  %6283 = vmatpush1.msra.mxu0 %v3106
  %6284 = vmatprep.subr.mxu0 %v3117
  %6285 = vmatpush1.msra.mxu0 %v3116
  %6286 = vmatprep.subr.mxu0 %v3127
  %6287 = vmatpush1.msra.mxu0 %v3126
  %6288 = vmatprep.subr.mxu0 %v3137
  %6289 = vmatpush1.msra.mxu0 %v3136
  %6290 = vmatprep.subr.mxu0 %v3147
  %6291 = vmatpush1.msra.mxu0 %v3146
  %6292 = vmatprep.subr.mxu0 %v3157
  %6293 = vmatpush1.msra.mxu0 %v3156
  %6294 = vmatprep.mubr.f32.mxu0 %v899
  %6295 = vmatmul.mubr.f32.gmra.mrb[0].mxu0 %v898
  %v6296 = vpop.f32.mrb[0].mxu0
  %v6297 = vadd.f32 %v6226, %v6296
  %v6298 = vpop.f32.mrb[0].mxu0
  %v6299 = vadd.f32 %v6228, %v6298
  %6300 = vdwg.mxu0
  %6301 = vmatprep.subr.mxu0 %v3167
  %6302 = vmatpush1.msra.mxu0 %v3166
  %6303 = vmatprep.subr.mxu0 %v3177
  %6304 = vmatpush1.msra.mxu0 %v3176
  %6305 = vmatprep.subr.mxu0 %v3187
  %6306 = vmatpush1.msra.mxu0 %v3186
  %6307 = vmatprep.subr.mxu0 %v3197
  %6308 = vmatpush1.msra.mxu0 %v3196
  %6309 = vmatprep.subr.mxu0 %v3207
  %6310 = vmatpush1.msra.mxu0 %v3206
  %6311 = vmatprep.subr.mxu0 %v3217
  %6312 = vmatpush1.msra.mxu0 %v3216
  %6313 = vmatprep.subr.mxu0 %v3227
  %6314 = vmatpush1.msra.mxu0 %v3226
  %6315 = vmatprep.subr.mxu0 %v3237
  %6316 = vmatpush1.msra.mxu0 %v3236
  %6317 = vmatprep.subr.mxu0 %v3247
  %6318 = vmatpush1.msra.mxu0 %v3246
  %6319 = vmatprep.subr.mxu0 %v3257
  %6320 = vmatpush1.msra.mxu0 %v3256
  %6321 = vmatprep.subr.mxu0 %v3267
  %6322 = vmatpush1.msra.mxu0 %v3266
  %6323 = vmatprep.subr.mxu0 %v3277
  %6324 = vmatpush1.msra.mxu0 %v3276
  %6325 = vmatprep.subr.mxu0 %v3287
  %6326 = vmatpush1.msra.mxu0 %v3286
  %6327 = vmatprep.subr.mxu0 %v3297
  %6328 = vmatpush1.msra.mxu0 %v3296
  %6329 = vmatprep.subr.mxu0 %v3307
  %6330 = vmatpush1.msra.mxu0 %v3306
  %6331 = vmatprep.subr.mxu0 %v3317
  %6332 = vmatpush1.msra.mxu0 %v3316
  %6333 = vmatprep.subr.mxu0 %v3327
  %6334 = vmatpush1.msra.mxu0 %v3326
  %6335 = vmatprep.subr.mxu0 %v3337
  %6336 = vmatpush1.msra.mxu0 %v3336
  %6337 = vmatprep.subr.mxu0 %v3347
  %6338 = vmatpush1.msra.mxu0 %v3346
  %6339 = vmatprep.subr.mxu0 %v3357
  %6340 = vmatpush1.msra.mxu0 %v3356
  %6341 = vmatprep.subr.mxu0 %v3367
  %6342 = vmatpush1.msra.mxu0 %v3366
  %6343 = vmatprep.subr.mxu0 %v3377
  %6344 = vmatpush1.msra.mxu0 %v3376
  %6345 = vmatprep.subr.mxu0 %v3387
  %6346 = vmatpush1.msra.mxu0 %v3386
  %6347 = vmatprep.subr.mxu0 %v3397
  %6348 = vmatpush1.msra.mxu0 %v3396
  %6349 = vmatprep.subr.mxu0 %v3407
  %6350 = vmatpush1.msra.mxu0 %v3406
  %6351 = vmatprep.subr.mxu0 %v3417
  %6352 = vmatpush1.msra.mxu0 %v3416
  %6353 = vmatprep.subr.mxu0 %v3427
  %6354 = vmatpush1.msra.mxu0 %v3426
  %6355 = vmatprep.subr.mxu0 %v3437
  %6356 = vmatpush1.msra.mxu0 %v3436
  %6357 = vmatprep.subr.mxu0 %v3447
  %6358 = vmatpush1.msra.mxu0 %v3446
  %6359 = vmatprep.subr.mxu0 %v3457
  %6360 = vmatpush1.msra.mxu0 %v3456
  %6361 = vmatprep.subr.mxu0 %v3467
  %6362 = vmatpush1.msra.mxu0 %v3466
  %6363 = vmatprep.subr.mxu0 %v3477
  %6364 = vmatpush1.msra.mxu0 %v3476
  %6365 = vmatprep.mubr.f32.mxu0 %v901
  %6366 = vmatmul.mubr.f32.gmra.mrb[0].mxu0 %v900
  %v6367 = vpop.f32.mrb[0].mxu0
  %v6368 = vadd.f32 %v6297, %v6367
  %v6369 = vpop.f32.mrb[0].mxu0
  %v6370 = vadd.f32 %v6299, %v6369
  %6371 = vdwg.mxu0
  %v6372 = vmax.f32 %v4096, 0.0
  %v6373 = vmax.f32 %v4098, 0.0
  %v6374 = vmax.f32 %v4664, 0.0
  %v6375 = vmax.f32 %v4666, 0.0
  %v6376 = vmax.f32 %v5232, 0.0
  %v6377 = vmax.f32 %v5234, 0.0
  %v6378 = vmax.f32 %v5800, 0.0
  %v6379 = vmax.f32 %v5802, 0.0
  %v6380 = vmax.f32 %v6368, 0.0
  %v6381 = vmax.f32 %v6370, 0.0
  %6382 = vst [vmem:[%s10] sm:$0xff] %v6372
  %6383 = vst [vmem:[%s10 + $0x8] sm:$0xff] %v6373
  %6384 = vst [vmem:[%s10 + $0x10] sm:$0xff] %v6374
  %6385 = vst [vmem:[%s10 + $0x18] sm:$0xff] %v6375
  %6386 = vst [vmem:[%s10 + $0x20] sm:$0xff] %v6376
  %6387 = vst [vmem:[%s10 + $0x28] sm:$0xff] %v6377
  %6388 = vst [vmem:[%s10 + $0x30] sm:$0xff] %v6378
  %6389 = vst [vmem:[%s10 + $0x38] sm:$0xff] %v6379
  %6390 = vst [vmem:[%s10 + $0x40] sm:$0xff] %v6380
  %6391 = vst [vmem:[%s10 + $0x48] sm:$0xff] %v6381
  %v6392 = vld [vmem:[%s5] sm:$0xff]
  %v6393 = vld [vmem:[%s5 + $0x8] sm:$0x3]
  %v6396 = vlaneseq
  %v6397 = vshrl.u32 %v6396, 7
  %v6398 = vsub.s32 0, %v6397
  %v6399 = vrot.slane %v6392, %v6398
  %v6400 = vlaneseq
  %v6401 = vshrl.u32 %v6400, 7
  %v6402 = vsub.s32 1, %v6401
  %v6403 = vrot.slane %v6392, %v6402
  %v6404 = vlaneseq
  %v6405 = vshrl.u32 %v6404, 7
  %v6406 = vsub.s32 2, %v6405
  %v6407 = vrot.slane %v6392, %v6406
  %v6408 = vlaneseq
  %v6409 = vshrl.u32 %v6408, 7
  %v6410 = vsub.s32 3, %v6409
  %v6411 = vrot.slane %v6392, %v6410
  %v6412 = vlaneseq
  %v6413 = vshrl.u32 %v6412, 7
  %v6414 = vsub.s32 4, %v6413
  %v6415 = vrot.slane %v6392, %v6414
  %v6416 = vlaneseq
  %v6417 = vshrl.u32 %v6416, 7
  %v6418 = vsub.s32 5, %v6417
  %v6419 = vrot.slane %v6392, %v6418
  %v6420 = vlaneseq
  %v6421 = vshrl.u32 %v6420, 7
  %v6422 = vsub.s32 6, %v6421
  %v6423 = vrot.slane %v6392, %v6422
  %v6424 = vlaneseq
  %v6425 = vshrl.u32 %v6424, 7
  %v6426 = vsub.s32 7, %v6425
  %v6427 = vrot.slane %v6392, %v6426
  %v6428 = vlaneseq
  %v6429 = vshrl.u32 %v6428, 7
  %v6430 = vsub.s32 0, %v6429
  %v6431 = vrot.slane %v6393, %v6430
  %v6432 = vlaneseq
  %v6433 = vshrl.u32 %v6432, 7
  %v6434 = vsub.s32 1, %v6433
  %v6435 = vrot.slane %v6393, %v6434
  %v6446 = vmul.f32 %v6372, %v6399
  %v6447 = vmul.f32 %v6373, %v6403
  %v6448 = vmul.f32 %v6374, %v6407
  %v6449 = vmul.f32 %v6375, %v6411
  %v6450 = vmul.f32 %v6376, %v6415
  %v6451 = vmul.f32 %v6377, %v6419
  %v6452 = vmul.f32 %v6378, %v6423
  %v6453 = vmul.f32 %v6379, %v6427
  %v6454 = vmul.f32 %v6380, %v6431
  %v6455 = vmul.f32 %v6381, %v6435
  %v6456 = vadd.f32 %v6446, %v6447
  %6457 = vadd.xlane.f32.xlu0 %v6456
  %v6458 = vpop.xlane.xlu0 %6457
  %vm6459 = vcmp.eq.s32.totalorder %v220, 0
  %v6460 = vsel %vm6459, %v6458, 0.0
  %v6461 = vadd.f32 %v6448, %v6449
  %6462 = vadd.xlane.f32.xlu0 %v6461
  %v6463 = vpop.xlane.xlu0 %6462
  %vm6464 = vcmp.eq.s32.totalorder %v220, 1
  %v6465 = vsel %vm6464, %v6463, %v6460
  %v6466 = vadd.f32 %v6450, %v6451
  %6467 = vadd.xlane.f32.xlu0 %v6466
  %v6468 = vpop.xlane.xlu0 %6467
  %vm6469 = vcmp.eq.s32.totalorder %v220, 2
  %v6470 = vsel %vm6469, %v6468, %v6465
  %v6471 = vadd.f32 %v6452, %v6453
  %6472 = vadd.xlane.f32.xlu0 %v6471
  %v6473 = vpop.xlane.xlu0 %6472
  %vm6474 = vcmp.eq.s32.totalorder %v220, 3
  %v6475 = vsel %vm6474, %v6473, %v6470
  %v6476 = vadd.f32 %v6454, %v6455
  %6477 = vadd.xlane.f32.xlu0 %v6476
  %v6478 = vpop.xlane.xlu0 %6477
  %vm6479 = vcmp.eq.s32.totalorder %v220, 4
  %v6480 = vsel %vm6479, %v6478, %v6475
  %v6481 = vld [vmem:[%s6] sm:$0x1]
  %v6483 = vlaneseq
  %v6484 = vshrl.u32 %v6483, 7
  %v6485 = vsub.s32 0, %v6484
  %v6486 = vrot.slane %v6481, %v6485
  %v6488 = vadd.f32 %v6480, %v6486
  %vm6489 = vcmask 64512
  %6490 = vst.msk [vmem:[%s11] sm:$0xff] %vm6489, %v6488
  %v6491 = vld [vmem:[%s7] sm:$0x1]
  %v6493 = vlaneseq
  %v6494 = vshrl.u32 %v6493, 7
  %v6495 = vsub.s32 0, %v6494
  %v6496 = vrot.slane %v6491, %v6495
  %v6498 = vmul.f32 %v6488, %v6496
  %v6499 = vsel %vm6489, %v6498, 0.0
  %6500 = vadd.xlane.f32.xlu0 %v6499
  %v6501 = vpop.xlane.xlu0 %6500
  %v6502 = vld [vmem:[#allocation2] sm:$0x1]
  %v6504 = vlaneseq
  %v6505 = vshrl.u32 %v6504, 7
  %v6506 = vsub.s32 0, %v6505
  %v6507 = vrot.slane %v6502, %v6506
  %v6509 = vadd.f32 %v6501, %v6507
  %vm6510 = vcmask 7168
  %6511 = vst.msk [vmem:[%s12] sm:$0xff] %vm6510, %v6509
  // Predicated region
  $region38: #{lbm_dimension_net_features.1} parent=0 // pred_check
    _
  $region39: #{lbm_dimension_net_features.1} parent=0 // pred_check_branch
    %6513 = sbr.rel (0) target = $region41
  $region40: #{lbm_dimension_net_features.1} parent=0 // pred_region
    _
  $region41: #{lbm_dimension_net_features.1} parent=0 // pred_fallthru
    _
  // Predicated region
  $region42: #{lbm_dimension_net_features.1} parent=0 // pred_check
    _
  $region43: #{lbm_dimension_net_features.1} parent=0 // pred_check_branch
    %6515 = sbr.rel (0) target = $region45
  $region44: #{lbm_dimension_net_features.1} parent=0 // pred_region
    _
  $region45: #{lbm_dimension_net_features.1} parent=0 // pred_fallthru
    _
  // Predicated region
  $region46: #{lbm_dimension_net_features.1} parent=0 // pred_check
    _
  $region47: #{lbm_dimension_net_features.1} parent=0 // pred_check_branch
    %6517 = sbr.rel (0) target = $region49
  $region48: #{lbm_dimension_net_features.1} parent=0 // pred_region
    _
  $region49: #{lbm_dimension_net_features.1} parent=0 // pred_fallthru
    _
  // Predicated region
  $region50: #{lbm_dimension_net_features.1} parent=0 // pred_check
    _
  $region51: #{lbm_dimension_net_features.1} parent=0 // pred_check_branch
    %6519 = sbr.rel (0) target = $region53
  $region52: #{lbm_dimension_net_features.1} parent=0 // pred_region
    _
  $region53: #{lbm_dimension_net_features.1} parent=0 // pred_fallthru
    _
  // Predicated region
  $region54: #{lbm_dimension_net_features.1} parent=0 // pred_check
    _
  $region55: #{lbm_dimension_net_features.1} parent=0 // pred_check_branch
    %6521 = sbr.rel (0) target = $region57
  $region56: #{lbm_dimension_net_features.1} parent=0 // pred_region
    _
  $region57: #{lbm_dimension_net_features.1} parent=0 // pred_fallthru
    _
  // Predicated region
  $region58: #{lbm_dimension_net_features.1} parent=0 // pred_check
    _
  $region59: #{lbm_dimension_net_features.1} parent=0 // pred_check_branch
    %6523 = sbr.rel (0) target = $region61
  $region60: #{lbm_dimension_net_features.1} parent=0 // pred_region
    _
  $region61: #{lbm_dimension_net_features.1} parent=0 // pred_fallthru
    _
  // Predicated region
  $region62: #{lbm_dimension_net_features.1} parent=0 // pred_check
    _
  $region63: #{lbm_dimension_net_features.1} parent=0 // pred_check_branch
    %6525 = sbr.rel (0) target = $region65
  $region64: #{lbm_dimension_net_features.1} parent=0 // pred_region
    _
  $region65: #{lbm_dimension_net_features.1} parent=0 // pred_fallthru
    _
  // Predicated region
  $region66: #{lbm_dimension_net_features.1} parent=0 // pred_check
    _
  $region67: #{lbm_dimension_net_features.1} parent=0 // pred_check_branch
    %6527 = sbr.rel (0) target = $region69
  $region68: #{lbm_dimension_net_features.1} parent=0 // pred_region
    _
  $region69: #{lbm_dimension_net_features.1} parent=0 // pred_fallthru
    _

</llo_original>
